<compile_context>
chip_gen: v7x
topology: tpu7x:2x2x1
jax: 0.10.0
libtpu: 0.0.40
codegen_flags: <defaults>
</compile_context>

<pallas_src>
import functools

import numpy as np
import jax
import jax.numpy as jnp
from jax.experimental import pallas as pl
from jax.experimental.pallas import tpu as pltpu

LEAK = 0.2                       # imaginaire uses LeakyReLU(0.2)
BN_EPS = 1e-5                    # BatchNorm eps
FLOW_OUTPUT_MULTIPLIER = 20.0
CIN_FIRST = 16                   # 4 + 4 + 3 = 11 concat channels, zero-padded to 16

# Stride-2 conv taps on the phase-split input (phase p = 2*row_parity + col_parity,
# p0=ee, p1=eo, p2=oe, p3=oo).  Each entry: (phase, ky, kx, dy, dx): original 3x3
# tap (ky, kx) reads phase block p shifted by (dy, dx) at output resolution.
_DOWN_TAPS = (
    (0, 1, 1, 0, 0),
    (1, 1, 0, 0, -1), (1, 1, 2, 0, 0),
    (2, 0, 1, -1, 0), (2, 2, 1, 0, 0),
    (3, 0, 0, -1, -1), (3, 0, 2, -1, 0), (3, 2, 0, 0, -1), (3, 2, 2, 0, 0),
)

# nearest-2x upsample + 3x3 conv: which original kernel rows ky land on low-res row
# r+dy for output-row phase a.  The same table applies to columns (kx / dx / b).
_UP_KMAP = {0: {-1: (0,), 0: (1, 2), 1: ()},
            1: {-1: (), 0: (0, 1), 1: (2,)}}


# ------------------------------ Pallas kernels -------------------------------

def _same_spec(cin):
    """Standard 3x3 / pad-1 tap spec: (row_start, rows, dy, dx) in (ky, kx) order."""
    return tuple((0, cin, dy, dx) for dy in (-1, 0, 1) for dx in (-1, 0, 1))


def _build_taps(x, Wc, spec):
    """Build the im2col patch matrix from a row-major (C, H*W) f32 tile.

    spec is a static tuple of (row_start, rows, dy, dx): each entry contributes the
    channel block x[row_start:row_start+rows] shifted by (dy, dx), with exact zeros
    at image borders (lane zero-pad handles row over/underflow; a hoisted per-dx
    column-validity mask kills the row-wrap of +/-1 column shifts).  Each distinct
    channel block is cast to bf16 and zero-padded exactly once.  Returns
    (sum(rows), H*W) bf16.
    """
    HW = x.shape[1]
    pad = Wc + 1

    # Column-validity masks, hoisted: at most one iota/compare per distinct dx.
    col = jax.lax.broadcasted_iota(jnp.int32, (1, HW), 1) % Wc
    masks = {}
    for (_r0, _nr, _dy, dx) in spec:
        if dx != 0 and dx not in masks:
            masks[dx] = (col + dx >= 0) & (col + dx < Wc)

    padded = {}
    taps = []
    for (r0, nr, dy, dx) in spec:
        key = (r0, nr)
        if key not in padded:
            blk = x[r0:r0 + nr].astype(jnp.bfloat16)       # cast once per block
            z = jnp.zeros((nr, pad), jnp.bfloat16)
            padded[key] = jnp.concatenate([z, blk, z], axis=1)
        off = pad + dy * Wc + dx
        t = padded[key][:, off:off + HW]
        if dx != 0:
            t = jnp.where(masks[dx], t, jnp.zeros_like(t))
        taps.append(t)
    return jnp.concatenate(taps, axis=0)


def _make_conv_kernel(*, Wc, tap_spec, pre_act, add_residual, emit_stats, head):
    """Fused (affine+leaky) -> im2col -> single MXU matmul -> bias -> (residual)
    -> {store | flow*20 & sigmoid head}, plus packed (sum, sumsq) stats output."""

    def kernel(*refs):
        it = iter(refs)
        x_ref = next(it)
        scale_ref = next(it) if pre_act else None
        shift_ref = next(it) if pre_act else None
        w_ref = next(it)
        b_ref = next(it)
        res_ref = next(it) if add_residual else None
        y_ref = next(it)
        stats_ref = next(it) if emit_stats else None

        x = x_ref[0]                                        # (Cin_eff, hw) f32
        if pre_act:
            # previous block's folded sync-batch-norm + LeakyReLU(0.2)
            x = x * scale_ref[...] + shift_ref[...]
            x = jnp.where(x >= 0, x, LEAK * x)

        patches = _build_taps(x, Wc, tap_spec)              # (K, hw) bf16
        out = jnp.dot(w_ref[...], patches,
                      preferred_element_type=jnp.float32)   # (Cout, hw) f32
        out = out + b_ref[...]
        if add_residual:
            out = out + res_ref[0]

        if head:
            # rows 0-1: flow (*20); row 2: occlusion mask (sigmoid); rows 3-7: pad.
            ridx = jax.lax.broadcasted_iota(jnp.int32, out.shape, 0)
            out = jnp.where(ridx < 2, out * FLOW_OUTPUT_MULTIPLIER,
                            jnp.where(ridx == 2, jax.nn.sigmoid(out), out))
            y_ref[0] = out
        else:
            y_ref[0] = out
            if emit_stats:
                stats_ref[0] = jnp.concatenate(
                    [jnp.sum(out, axis=1, keepdims=True),
                     jnp.sum(out * out, axis=1, keepdims=True)], axis=1)

    return kernel


def _affine_act_stats_kernel(x_ref, s_ref, t_ref, y_ref, stats_ref):
    """Folded BatchNorm affine + LeakyReLU + packed per-channel (sum, sumsq)."""
    y = x_ref[0] * s_ref[...] + t_ref[...]
    y = jnp.where(y >= 0, y, LEAK * y)
    y_ref[0] = y
    stats_ref[0] = jnp.concatenate([jnp.sum(y, axis=1, keepdims=True),
                                    jnp.sum(y * y, axis=1, keepdims=True)], axis=1)


# --------------------------- pallas_call wrappers -----------------------------

def _compiler_params():
    # Batch axis stays a "parallel" grid axis so v7x's two TensorCores split samples.
    # Explicit VMEM budget above the 32 MiB scoped default, below v7x's 64 MiB.
    return pltpu.CompilerParams(dimension_semantics=("parallel",),
                                vmem_limit_bytes=48 * 1024 * 1024)


def _conv_call(x, wmat, bias, Wc, tap_spec, *, pre=None, residual=None,
               emit_stats=True, head=False):
    """One fused conv layer on (N, Cin_eff, hw) activations via a single pallas_call."""
    N, cin_eff, hw = x.shape
    cout = wmat.shape[0]
    kern = _make_conv_kernel(Wc=Wc, tap_spec=tap_spec, pre_act=pre is not None,
                             add_residual=residual is not None,
                             emit_stats=emit_stats, head=head)

    inputs = [x]
    in_specs = [pl.BlockSpec((1, cin_eff, hw), lambda n: (n, 0, 0))]
    if pre is not None:
        scale, shift = pre
        inputs += [scale, shift]
        in_specs += [pl.BlockSpec((cin_eff, 1), lambda n: (0, 0)),
                     pl.BlockSpec((cin_eff, 1), lambda n: (0, 0))]
    inputs += [wmat, bias]
    in_specs += [pl.BlockSpec(wmat.shape, lambda n: (0, 0)),
                 pl.BlockSpec((cout, 1), lambda n: (0, 0))]
    if residual is not None:
        inputs.append(residual)
        in_specs.append(pl.BlockSpec((1, cout, hw), lambda n: (n, 0, 0)))

    out_shape = [jax.ShapeDtypeStruct((N, cout, hw), jnp.float32)]
    out_specs = [pl.BlockSpec((1, cout, hw), lambda n: (n, 0, 0))]
    if emit_stats and not head:
        out_shape.append(jax.ShapeDtypeStruct((N, cout, 2), jnp.float32))
        out_specs.append(pl.BlockSpec((1, cout, 2), lambda n: (n, 0, 0)))

    outs = pl.pallas_call(
        kern,
        grid=(N,),
        in_specs=in_specs,
        out_specs=tuple(out_specs),
        out_shape=tuple(out_shape),
        compiler_params=_compiler_params(),
    )(*inputs)

    if emit_stats and not head:
        y, st = outs
        return y, jnp.sum(st, axis=0)            # (cout, 2) batch-summed stats
    return outs[0]


def conv_same(x, p, w_img, *, pre=None, residual=None):
    """Stride-1 3x3 conv (pad 1)."""
    _, cin, _ = x.shape
    return _conv_call(x, p['w'], p['b'], w_img, _same_spec(cin),
                      pre=pre, residual=residual)


def conv_down2(y, p, h, w, *, pre):
    """Fused (folded BN+LeakyReLU) -> stride-2 3x3 conv, evaluated directly at
    output resolution on a phase-split view of the input (wrapper-side layout
    plumbing): no selection matrix, no conv FLOPs on discarded odd positions."""
    N, cin, hw = y.shape
    ho, wo = h // 2, w // 2
    z = y.reshape(N, cin, ho, 2, wo, 2)
    z = jnp.transpose(z, (0, 3, 5, 1, 2, 4)).reshape(N, 4 * cin, ho * wo)
    scale, shift = pre
    pre4 = (jnp.tile(scale, (4, 1)), jnp.tile(shift, (4, 1)))
    spec = tuple((ph * cin, cin, dy, dx) for (ph, _ky, _kx, dy, dx) in _DOWN_TAPS)
    yo, st = _conv_call(z, p['w'], p['b'], wo, spec, pre=pre4)
    return yo, st, ho, wo


def conv_up2(x, p, h, w, *, pre=None):
    """Fused nearest-2x upsample + 3x3 conv as 4 output-phase convs whose weights
    are pre-combined into one (4*Cout, 9*Cin) matrix -> plain 'same' kernel on the
    LOW-RES input; phase outputs are interleaved back to row-major in the wrapper."""
    N, cin, hw = x.shape
    cout = p['w'].shape[0] // 4
    yph, st4 = _conv_call(x, p['w'], p['b'], w, _same_spec(cin), pre=pre)
    u = yph.reshape(N, 2, 2, cout, h, w)
    u = jnp.transpose(u, (0, 3, 4, 1, 5, 2)).reshape(N, cout, (2 * h) * (2 * w))
    st = jnp.sum(st4.reshape(4, cout, 2), axis=0)
    return u, st, 2 * h, 2 * w


def conv_head(x, p, w_img, *, pre):
    """Shared flow (*20) + mask (sigmoid) head, output padded to 8 sublanes."""
    _, cin, _ = x.shape
    return _conv_call(x, p['w'], p['b'], w_img, _same_spec(cin), pre=pre,
                      emit_stats=False, head=True)


def affine_act_stats(x, pre):
    """Standalone fused affine + LeakyReLU + stats.  Used once, at the
    down_flow -> res_flow boundary (the activated tensor is the residual shortcut)."""
    N, C, hw = x.shape
    scale, shift = pre
    y, st = pl.pallas_call(
        _affine_act_stats_kernel,
        grid=(N,),
        in_specs=[pl.BlockSpec((1, C, hw), lambda n: (n, 0, 0)),
                  pl.BlockSpec((C, 1), lambda n: (0, 0)),
                  pl.BlockSpec((C, 1), lambda n: (0, 0))],
        out_specs=(pl.BlockSpec((1, C, hw), lambda n: (n, 0, 0)),
                   pl.BlockSpec((1, C, 2), lambda n: (n, 0, 0))),
        out_shape=(jax.ShapeDtypeStruct((N, C, hw), jnp.float32),
                   jax.ShapeDtypeStruct((N, C, 2), jnp.float32)),
        compiler_params=_compiler_params(),
    )(x, scale, shift)
    return y, jnp.sum(st, axis=0)


def _bn_fold(stats, count, gamma, beta):
    """Fold training-mode sync-batch-norm (biased variance) into scale / shift.
    TODO(synk): inference-mode running statistics are not modeled."""
    mean = stats[:, 0] / count
    var = jnp.maximum(stats[:, 1] / count - mean * mean, 0.0)
    scale = gamma * jax.lax.rsqrt(var + BN_EPS)
    shift = beta - mean * scale
    return scale.reshape(-1, 1), shift.reshape(-1, 1)


# -------------------------------- parameters ----------------------------------

def _init_conv(key, cin, cout, *, spectral):
    kw, kb = jax.random.split(key)
    w = jax.random.normal(kw, (3, 3, cin, cout), jnp.float32) * jnp.float32(
        1.0 / float(np.sqrt(9.0 * cin)))
    b = 0.01 * jax.random.normal(kb, (cout,), jnp.float32)
    if spectral:
        # weight_norm_type='spectral': W_used = W / sigma_max(W.reshape(Cout, -1)).
        # TODO(synk): exact sigma instead of PyTorch's one-step power iteration.
        wm = np.asarray(w).transpose(3, 2, 0, 1).reshape(cout, -1)
        sigma = float(np.linalg.norm(wm, 2))
        w = w / jnp.float32(sigma)
    return w, b


def _pack_same(w, b, *, cin_pad=None):
    """(3,3,Cin,Cout) HWIO -> (Cout, 9*Cin) bf16 in (ky,kx,cin) column order."""
    _, _, cin, cout = w.shape
    if cin_pad is not None and cin_pad != cin:
        w = jnp.pad(w, ((0, 0), (0, 0), (0, cin_pad - cin), (0, 0)))
        cin = cin_pad
    wmat = jnp.transpose(w, (3, 0, 1, 2)).reshape(cout, 9 * cin)
    return {'w': wmat.astype(jnp.bfloat16),
            'b': jnp.asarray(b, jnp.float32).reshape(cout, 1)}


def _pack_down(w, b):
    """Pack a stride-2 conv weight in the _DOWN_TAPS column order."""
    _, _, cin, cout = w.shape
    blocks = [jnp.transpose(w[ky, kx], (1, 0))
              for (_p, ky, kx, _dy, _dx) in _DOWN_TAPS]          # each (cout, cin)
    wmat = jnp.concatenate(blocks, axis=1)                        # (cout, 9*cin)
    return {'w': wmat.astype(jnp.bfloat16),
            'b': jnp.asarray(b, jnp.float32).reshape(cout, 1)}


def _pack_up(w, b):
    """Pre-combine nearest-up2 + conv into a (4*Cout, 9*Cin) matrix (row block q =
    2*row_phase + col_phase); summation is done in f32 before the bf16 cast."""
    _, _, cin, cout = w.shape
    rows, bias = [], []
    for a in (0, 1):
        for bb in (0, 1):
            taps = []
            for dy in (-1, 0, 1):
                for dx in (-1, 0, 1):
                    acc = jnp.zeros((cin, cout), jnp.float32)
                    for ky in _UP_KMAP[a][dy]:
                        for kx in _UP_KMAP[bb][dx]:
                            acc = acc + w[ky, kx]
                    taps.append(jnp.transpose(acc, (1, 0)))       # (cout, cin)
            rows.append(jnp.concatenate(taps, axis=1))            # (cout, 9*cin)
            bias.append(jnp.asarray(b, jnp.float32))
    wmat = jnp.concatenate(rows, axis=0)                          # (4*cout, 9*cin)
    bvec = jnp.concatenate(bias).reshape(4 * cout, 1)
    return {'w': wmat.astype(jnp.bfloat16), 'b': bvec}


def init_params(seed=0):
    """Small synthetic flow_cfg: num_downsamples=2, num_blocks=2, num_filters=8,
    max_num_filters=32, kernel_size=3, flow_output_multiplier=20.
    Data: num_input_channels=4, image channels=3, num_frames=2
      -> first conv input channels = 4*2 + 3*(2-1) = 11 (zero-padded to 16)."""
    nf = [8, 16, 32]
    cin_concat = 11
    num_blocks = 2
    keys = jax.random.split(jax.random.PRNGKey(seed), 16)
    kit = iter(keys)

    def make(cin, cout, pack, **kw):
        w, b = _init_conv(next(kit), cin, cout, spectral=True)
        gamma = jnp.ones((cout,), jnp.float32)            # BatchNorm affine defaults
        beta = jnp.zeros((cout,), jnp.float32)
        packed = pack(w, b, **kw)
        packed['gamma'], packed['beta'] = gamma, beta
        raw = {'w': w, 'b': b, 'gamma': gamma, 'beta': beta}
        return packed, raw

    params, raw = {}, {}
    d = [make(cin_concat, nf[0], _pack_same, cin_pad=CIN_FIRST),
         make(nf[0], nf[1], _pack_down),
         make(nf[1], nf[2], _pack_down)]
    params['down'], raw['down'] = [p for p, _ in d], [r for _, r in d]
    rs = [(make(nf[2], nf[2], _pack_same), make(nf[2], nf[2], _pack_same))
          for _ in range(num_blocks)]
    params['res'] = [(a[0], b_[0]) for a, b_ in rs]
    raw['res'] = [(a[1], b_[1]) for a, b_ in rs]
    u = [make(nf[2], nf[1], _pack_up), make(nf[1], nf[0], _pack_up)]
    params['up'], raw['up'] = [p for p, _ in u], [r for _, r in u]

    # heads: plain Conv2dBlock (no weight / activation norm).  conv_flow (2 ch) and
    # conv_mask (1 ch) packed into ONE weight matrix (rows 0-1 / 2; rows 3-7 zero
    # pad to 8 sublanes) so both heads share a single fused, lane/sublane-dense call.
    wf, bf = _init_conv(next(kit), nf[0], 2, spectral=False)
    wm, bm = _init_conv(next(kit), nf[0], 1, spectral=False)
    raw['flow'], raw['mask'] = {'w': wf, 'b': bf}, {'w': wm, 'b': bm}
    w_head = jnp.concatenate([wf, wm, jnp.zeros((3, 3, nf[0], 5), jnp.float32)],
                             axis=-1)
    b_head = jnp.concatenate([bf, bm, jnp.zeros((5,), jnp.float32)])
    params['head'] = _pack_same(w_head, b_head)
    return params, raw


# --------------------------------- forward ------------------------------------

def flow_generator_forward(params, label, ref_label, ref_image):
    """FlowGenerator.forward.  Inputs / outputs use PyTorch's NCHW convention."""
    N, _, H, W = label.shape
    x = jnp.concatenate([label, ref_label, ref_image], axis=1).astype(jnp.float32)
    c0 = x.shape[1]
    x = jnp.pad(x, ((0, 0), (0, CIN_FIRST - c0), (0, 0), (0, 0)))
    x = x.reshape(N, CIN_FIRST, H * W)

    pd = params['down']
    # ---- down_flow: CNA blocks; every BN + LeakyReLU is folded into the next conv
    y0, st0 = conv_same(x, pd[0], W)
    a0 = _bn_fold(st0, N * H * W, pd[0]['gamma'], pd[0]['beta'])
    y1, st1, h1, w1 = conv_down2(y0, pd[1], H, W, pre=a0)
    a1 = _bn_fold(st1, N * h1 * w1, pd[1]['gamma'], pd[1]['beta'])
    y2, st2, h2, w2 = conv_down2(y1, pd[2], h1, w1, pre=a1)
    a2 = _bn_fold(st2, N * h2 * w2, pd[2]['gamma'], pd[2]['beta'])

    # activated down-flow output: residual shortcut of the first Res2dBlock and the
    # source of that block's first-norm batch statistics.
    xr, str_ = affine_act_stats(y2, a2)
    cnt = N * h2 * w2

    # ---- res_flow: Res2dBlock, order 'NACNAC', identity shortcut
    for pa, pb in params['res']:
        aA = _bn_fold(str_, cnt, pa['gamma'], pa['beta'])
        ya, sta = conv_same(xr, pa, w2, pre=aA)
        aB = _bn_fold(sta, cnt, pb['gamma'], pb['beta'])
        xr, str_ = conv_same(ya, pb, w2, pre=aB, residual=xr)

    # ---- up_flow: nearest 2x upsample fused into each conv (output-phase weights)
    pu0, pu1 = params['up']
    y3, st3, h3, w3 = conv_up2(xr, pu0, h2, w2)
    a3 = _bn_fold(st3, N * h3 * w3, pu0['gamma'], pu0['beta'])
    y4, st4, h4, w4 = conv_up2(y3, pu1, h3, w3, pre=a3)
    a4 = _bn_fold(st4, N * h4 * w4, pu1['gamma'], pu1['beta'])

    # ---- heads: conv_flow (*20) and conv_mask (sigmoid) share one fused call
    ho = conv_head(y4, params['head'], w4, pre=a4)          # (N, 8, H*W)
    flow = ho[:, 0:2].reshape(N, 2, H, W)
    mask = ho[:, 2:3].reshape(N, 1, H, W)
    return flow, mask


# ------------------------- pure-JAX reference (f32) ----------------------------

def _ref_conv(x, w, b, stride=1):
    out = jax.lax.conv_general_dilated(
        x, w, window_strides=(stride, stride), padding=((1, 1), (1, 1)),
        dimension_numbers=('NCHW', 'HWIO', 'NCHW'),
        precision=jax.lax.Precision.HIGHEST)
    return out + b.reshape(1, -1, 1, 1)


def _ref_bn_leaky(x, gamma, beta):
    mean = jnp.mean(x, axis=(0, 2, 3), keepdims=True)
    var = jnp.mean(jnp.square(x - mean), axis=(0, 2, 3), keepdims=True)
    y = (x - mean) * jax.lax.rsqrt(var + BN_EPS)
    y = y * gamma.reshape(1, -1, 1, 1) + beta.reshape(1, -1, 1, 1)
    return jnp.where(y >= 0, y, LEAK * y)


def flow_generator_reference(raw, label, ref_label, ref_image):
    x = jnp.concatenate([label, ref_label, ref_image], axis=1).astype(jnp.float32)
    for i, p in enumerate(raw['down']):
        x = _ref_conv(x, p['w'], p['b'], stride=1 if i == 0 else 2)
        x = _ref_bn_leaky(x, p['gamma'], p['beta'])
    for pa, pb in raw['res']:
        d = _ref_bn_leaky(x, pa['gamma'], pa['beta'])
        d = _ref_conv(d, pa['w'], pa['b'])
        d = _ref_bn_leaky(d, pb['gamma'], pb['beta'])
        d = _ref_conv(d, pb['w'], pb['b'])
        x = x + d
    for p in raw['up']:
        x = jnp.repeat(jnp.repeat(x, 2, axis=2), 2, axis=3)
        x = _ref_conv(x, p['w'], p['b'])
        x = _ref_bn_leaky(x, p['gamma'], p['beta'])
    flow = _ref_conv(x, raw['flow']['w'], raw['flow']['b']) * FLOW_OUTPUT_MULTIPLIER
    mask = jax.nn.sigmoid(_ref_conv(x, raw['mask']['w'], raw['mask']['b']))
    return flow, mask


if __name__ == "__main__":
    key = jax.random.PRNGKey(0)
    k1, k2, k3 = jax.random.split(key, 3)
    N, H, W = 2, 16, 16
    label = jax.random.normal(k1, (N, 4, H, W), jnp.float32)      # current-frame labels
    ref_label = jax.random.normal(k2, (N, 4, H, W), jnp.float32)  # reference labels
    ref_image = jax.random.normal(k3, (N, 3, H, W), jnp.float32)  # reference image

    params, raw = init_params(0)
    fwd = jax.jit(functools.partial(flow_generator_forward, params))
    flow, mask = fwd(label, ref_label, ref_image)
    jax.block_until_ready((flow, mask))

    assert flow.shape == (N, 2, H, W), flow.shape
    assert mask.shape == (N, 1, H, W), mask.shape
    assert bool(jnp.all(jnp.isfinite(flow))) and bool(jnp.all(jnp.isfinite(mask)))
    assert bool(jnp.all((mask >= 0) & (mask <= 1)))

    # pure-JAX f32 reference of the same forward pass; loose tolerance because the
    # Pallas path feeds the MXU bf16 operands (f32 accumulation).
    flow_ref, mask_ref = jax.jit(functools.partial(flow_generator_reference, raw))(
        label, ref_label, ref_image)
    np.testing.assert_allclose(np.asarray(flow), np.asarray(flow_ref),
                               rtol=0.25, atol=2.5)
    np.testing.assert_allclose(np.asarray(mask), np.asarray(mask_ref),
                               rtol=0.25, atol=0.1)
    print("KERNEL_OK")
</pallas_src>

<mosaic_0001>
module attributes {stable_mosaic.version = 11 : i64} {
  func.func @kernel(%arg0: i32, %arg1: memref<1x16x256xf32, #tpu.memory_space<vmem>>, %arg2: memref<8x144xbf16, #tpu.memory_space<vmem>>, %arg3: memref<8x1xf32, #tpu.memory_space<vmem>>, %arg4: memref<1x8x256xf32, #tpu.memory_space<vmem>>, %arg5: memref<1x8x2xf32, #tpu.memory_space<vmem>>) attributes {dimension_semantics = [#tpu.dimension_semantics<parallel>], iteration_bounds = array<i64: 2>, scalar_prefetch = 0 : i64, scratch_operands = 0 : i64, tpu.core_type = #tpu.core_type<tc>, window_params = [{transform_indices = @transform_0, window_bounds = array<i64: 1, 16, 256>}, {pipeline_mode = #tpu.pipeline_mode<synchronous>, transform_indices = @transform_1, window_bounds = array<i64: 8, 144>}, {pipeline_mode = #tpu.pipeline_mode<synchronous>, transform_indices = @transform_2, window_bounds = array<i64: 8, 1>}, {transform_indices = @transform_3, window_bounds = array<i64: 1, 8, 256>}, {transform_indices = @transform_4, window_bounds = array<i64: 1, 8, 2>}]} {
    %c0 = arith.constant 0 : index
    %c0_0 = arith.constant 0 : index
    %c0_1 = arith.constant 0 : index
    %0 = vector.load %arg1[%c0, %c0_0, %c0_1] : memref<1x16x256xf32, #tpu.memory_space<vmem>>, vector<1x16x256xf32>
    %1 = vector.shape_cast %0 : vector<1x16x256xf32> to vector<16x256xf32>
    %2 = tpu.iota {dimensions = array<i32: 1>} : vector<1x256xi32>
    %c16_i32 = arith.constant 16 : i32
    %c0_i32 = arith.constant 0 : i32
    %3 = arith.cmpi eq, %c16_i32, %c0_i32 : i32
    %c1_i32 = arith.constant 1 : i32
    %4 = arith.select %3, %c1_i32, %c16_i32 : i32
    %5 = vector.broadcast %4 : i32 to vector<1x256xi32>
    %6 = arith.remsi %2, %5 : vector<1x256xi32>
    %c0_i32_2 = arith.constant 0 : i32
    %7 = vector.broadcast %c0_i32_2 : i32 to vector<1x256xi32>
    %8 = arith.cmpi ne, %6, %7 : vector<1x256xi32>
    %c0_i32_3 = arith.constant 0 : i32
    %9 = vector.broadcast %c0_i32_3 : i32 to vector<1x256xi32>
    %10 = arith.cmpi slt, %6, %9 : vector<1x256xi32>
    %c0_i32_4 = arith.constant 0 : i32
    %11 = arith.cmpi slt, %4, %c0_i32_4 : i32
    %12 = vector.broadcast %11 : i1 to vector<1x256xi1>
    %13 = vector.broadcast %12 : vector<1x256xi1> to vector<1x256xi1>
    %14 = arith.xori %10, %13 : vector<1x256xi1>
    %15 = arith.andi %14, %8 : vector<1x256xi1>
    %16 = vector.broadcast %4 : i32 to vector<1x256xi32>
    %17 = arith.addi %6, %16 : vector<1x256xi32>
    %18 = arith.select %15, %17, %6 : vector<1x256xi1>, vector<1x256xi32>
    %c-1_i32 = arith.constant -1 : i32
    %19 = vector.broadcast %c-1_i32 : i32 to vector<1x256xi32>
    %20 = arith.addi %18, %19 : vector<1x256xi32>
    %c0_i32_5 = arith.constant 0 : i32
    %21 = vector.broadcast %c0_i32_5 : i32 to vector<1x256xi32>
    %22 = arith.cmpi sge, %20, %21 : vector<1x256xi32>
    %c-1_i32_6 = arith.constant -1 : i32
    %23 = vector.broadcast %c-1_i32_6 : i32 to vector<1x256xi32>
    %24 = arith.addi %18, %23 : vector<1x256xi32>
    %c16_i32_7 = arith.constant 16 : i32
    %25 = vector.broadcast %c16_i32_7 : i32 to vector<1x256xi32>
    %26 = arith.cmpi slt, %24, %25 : vector<1x256xi32>
    %27 = arith.andi %22, %26 : vector<1x256xi1>
    %c1_i32_8 = arith.constant 1 : i32
    %28 = vector.broadcast %c1_i32_8 : i32 to vector<1x256xi32>
    %29 = arith.addi %18, %28 : vector<1x256xi32>
    %c0_i32_9 = arith.constant 0 : i32
    %30 = vector.broadcast %c0_i32_9 : i32 to vector<1x256xi32>
    %31 = arith.cmpi sge, %29, %30 : vector<1x256xi32>
    %c1_i32_10 = arith.constant 1 : i32
    %32 = vector.broadcast %c1_i32_10 : i32 to vector<1x256xi32>
    %33 = arith.addi %18, %32 : vector<1x256xi32>
    %c16_i32_11 = arith.constant 16 : i32
    %34 = vector.broadcast %c16_i32_11 : i32 to vector<1x256xi32>
    %35 = arith.cmpi slt, %33, %34 : vector<1x256xi32>
    %36 = arith.andi %31, %35 : vector<1x256xi1>
    %37 = arith.truncf %1 : vector<16x256xf32> to vector<16x256xbf16>
    %cst = arith.constant 0.000000e+00 : bf16
    %38 = vector.broadcast %cst : bf16 to vector<16x17xbf16>
    %39 = tpu.concatenate %38, %37, %38 in 1 : vector<16x17xbf16>, vector<16x256xbf16>, vector<16x17xbf16> -> vector<16x290xbf16>
    %40 = vector.extract_strided_slice %39 {offsets = [0, 0], sizes = [16, 256], strides = [1, 1]} : vector<16x290xbf16> to vector<16x256xbf16>
    %cst_12 = arith.constant 0.000000e+00 : bf16
    %41 = vector.broadcast %cst_12 : bf16 to vector<16x256xbf16>
    %42 = vector.shape_cast %27 : vector<1x256xi1> to vector<1x256xi1>
    %43 = vector.broadcast %42 : vector<1x256xi1> to vector<16x256xi1>
    %44 = arith.select %43, %40, %41 : vector<16x256xi1>, vector<16x256xbf16>
    %45 = vector.extract_strided_slice %39 {offsets = [0, 1], sizes = [16, 256], strides = [1, 1]} : vector<16x290xbf16> to vector<16x256xbf16>
    %46 = vector.extract_strided_slice %39 {offsets = [0, 2], sizes = [16, 256], strides = [1, 1]} : vector<16x290xbf16> to vector<16x256xbf16>
    %cst_13 = arith.constant 0.000000e+00 : bf16
    %47 = vector.broadcast %cst_13 : bf16 to vector<16x256xbf16>
    %48 = vector.shape_cast %36 : vector<1x256xi1> to vector<1x256xi1>
    %49 = vector.broadcast %48 : vector<1x256xi1> to vector<16x256xi1>
    %50 = arith.select %49, %46, %47 : vector<16x256xi1>, vector<16x256xbf16>
    %51 = vector.extract_strided_slice %39 {offsets = [0, 16], sizes = [16, 256], strides = [1, 1]} : vector<16x290xbf16> to vector<16x256xbf16>
    %cst_14 = arith.constant 0.000000e+00 : bf16
    %52 = vector.broadcast %cst_14 : bf16 to vector<16x256xbf16>
    %53 = vector.shape_cast %27 : vector<1x256xi1> to vector<1x256xi1>
    %54 = vector.broadcast %53 : vector<1x256xi1> to vector<16x256xi1>
    %55 = arith.select %54, %51, %52 : vector<16x256xi1>, vector<16x256xbf16>
    %56 = vector.extract_strided_slice %39 {offsets = [0, 17], sizes = [16, 256], strides = [1, 1]} : vector<16x290xbf16> to vector<16x256xbf16>
    %57 = vector.extract_strided_slice %39 {offsets = [0, 18], sizes = [16, 256], strides = [1, 1]} : vector<16x290xbf16> to vector<16x256xbf16>
    %cst_15 = arith.constant 0.000000e+00 : bf16
    %58 = vector.broadcast %cst_15 : bf16 to vector<16x256xbf16>
    %59 = vector.shape_cast %36 : vector<1x256xi1> to vector<1x256xi1>
    %60 = vector.broadcast %59 : vector<1x256xi1> to vector<16x256xi1>
    %61 = arith.select %60, %57, %58 : vector<16x256xi1>, vector<16x256xbf16>
    %62 = vector.extract_strided_slice %39 {offsets = [0, 32], sizes = [16, 256], strides = [1, 1]} : vector<16x290xbf16> to vector<16x256xbf16>
    %cst_16 = arith.constant 0.000000e+00 : bf16
    %63 = vector.broadcast %cst_16 : bf16 to vector<16x256xbf16>
    %64 = vector.shape_cast %27 : vector<1x256xi1> to vector<1x256xi1>
    %65 = vector.broadcast %64 : vector<1x256xi1> to vector<16x256xi1>
    %66 = arith.select %65, %62, %63 : vector<16x256xi1>, vector<16x256xbf16>
    %67 = vector.extract_strided_slice %39 {offsets = [0, 33], sizes = [16, 256], strides = [1, 1]} : vector<16x290xbf16> to vector<16x256xbf16>
    %68 = vector.extract_strided_slice %39 {offsets = [0, 34], sizes = [16, 256], strides = [1, 1]} : vector<16x290xbf16> to vector<16x256xbf16>
    %cst_17 = arith.constant 0.000000e+00 : bf16
    %69 = vector.broadcast %cst_17 : bf16 to vector<16x256xbf16>
    %70 = vector.shape_cast %36 : vector<1x256xi1> to vector<1x256xi1>
    %71 = vector.broadcast %70 : vector<1x256xi1> to vector<16x256xi1>
    %72 = arith.select %71, %68, %69 : vector<16x256xi1>, vector<16x256xbf16>
    %73 = tpu.concatenate %44, %45, %50, %55, %56, %61, %66, %67, %72 in 0 : vector<16x256xbf16>, vector<16x256xbf16>, vector<16x256xbf16>, vector<16x256xbf16>, vector<16x256xbf16>, vector<16x256xbf16>, vector<16x256xbf16>, vector<16x256xbf16>, vector<16x256xbf16> -> vector<144x256xbf16>
    %c0_18 = arith.constant 0 : index
    %c0_19 = arith.constant 0 : index
    %74 = vector.load %arg2[%c0_18, %c0_19] : memref<8x144xbf16, #tpu.memory_space<vmem>>, vector<8x144xbf16>
    %cst_20 = arith.constant dense<0.000000e+00> : vector<8x256xf32>
    %75 = tpu.matmul %74, %73, %cst_20 {dimension_numbers = #tpu.dot_dimension_numbers<[1], [0], [0], [1], [0, 0, 1, 1], [], []>} : vector<8x144xbf16>, vector<144x256xbf16>, vector<8x256xf32> -> vector<8x256xf32>
    %c0_21 = arith.constant 0 : index
    %c0_22 = arith.constant 0 : index
    %76 = vector.load %arg3[%c0_21, %c0_22] : memref<8x1xf32, #tpu.memory_space<vmem>>, vector<8x1xf32>
    %77 = vector.broadcast %76 : vector<8x1xf32> to vector<8x256xf32>
    %78 = arith.addf %75, %77 : vector<8x256xf32>
    %c0_23 = arith.constant 0 : index
    %c0_24 = arith.constant 0 : index
    %c0_25 = arith.constant 0 : index
    %79 = vector.load %arg4[%c0_23, %c0_24, %c0_25] : memref<1x8x256xf32, #tpu.memory_space<vmem>>, vector<1x8x256xf32>
    %80 = vector.shape_cast %79 : vector<1x8x256xf32> to vector<8x256xf32>
    %81 = vector.shape_cast %78 : vector<8x256xf32> to vector<1x8x256xf32>
    tpu.vector_store %arg4[%c0_23, %c0_24, %c0_25], %81 {strides = array<i32>} : memref<1x8x256xf32, #tpu.memory_space<vmem>>, vector<1x8x256xf32>,
    %cst_26 = arith.constant dense<0.000000e+00> : vector<8xf32>
    %82 = vector.multi_reduction <add>, %78, %cst_26 [1] : vector<8x256xf32> to vector<8xf32>
    %83 = vector.shape_cast %82 : vector<8xf32> to vector<8x1xf32>
    %84 = arith.mulf %78, %78 : vector<8x256xf32>
    %cst_27 = arith.constant dense<0.000000e+00> : vector<8xf32>
    %85 = vector.multi_reduction <add>, %84, %cst_27 [1] : vector<8x256xf32> to vector<8xf32>
    %86 = vector.shape_cast %85 : vector<8xf32> to vector<8x1xf32>
    %87 = tpu.concatenate %83, %86 in 1 : vector<8x1xf32>, vector<8x1xf32> -> vector<8x2xf32>
    %c0_28 = arith.constant 0 : index
    %c0_29 = arith.constant 0 : index
    %c0_30 = arith.constant 0 : index
    %88 = vector.load %arg5[%c0_28, %c0_29, %c0_30] : memref<1x8x2xf32, #tpu.memory_space<vmem>>, vector<1x8x2xf32>
    %89 = vector.shape_cast %88 : vector<1x8x2xf32> to vector<8x2xf32>
    %90 = vector.shape_cast %87 : vector<8x2xf32> to vector<1x8x2xf32>
    tpu.vector_store %arg5[%c0_28, %c0_29, %c0_30], %90 {strides = array<i32>} : memref<1x8x2xf32, #tpu.memory_space<vmem>>, vector<1x8x2xf32>,
    return
  }
  func.func @transform_0(%arg0: i32) -> (i32, i32, i32) {
    %c0_i32 = arith.constant 0 : i32
    %c0_i32_0 = arith.constant 0 : i32
    %c0_i32_1 = arith.constant 0 : i32
    return %arg0, %c0_i32, %c0_i32_0 : i32, i32, i32
  }
  func.func @transform_1(%arg0: i32) -> (i32, i32) {
    %c0_i32 = arith.constant 0 : i32
    %c0_i32_0 = arith.constant 0 : i32
    %c0_i32_1 = arith.constant 0 : i32
    return %c0_i32, %c0_i32_0 : i32, i32
  }
  func.func @transform_2(%arg0: i32) -> (i32, i32) {
    %c0_i32 = arith.constant 0 : i32
    %c0_i32_0 = arith.constant 0 : i32
    %c0_i32_1 = arith.constant 0 : i32
    return %c0_i32, %c0_i32_0 : i32, i32
  }
  func.func @transform_3(%arg0: i32) -> (i32, i32, i32) {
    %c0_i32 = arith.constant 0 : i32
    %c0_i32_0 = arith.constant 0 : i32
    %c0_i32_1 = arith.constant 0 : i32
    return %arg0, %c0_i32, %c0_i32_0 : i32, i32, i32
  }
  func.func @transform_4(%arg0: i32) -> (i32, i32, i32) {
    %c0_i32 = arith.constant 0 : i32
    %c0_i32_0 = arith.constant 0 : i32
    %c0_i32_1 = arith.constant 0 : i32
    return %arg0, %c0_i32, %c0_i32_0 : i32, i32, i32
  }
}

module attributes {stable_mosaic.version = 11 : i64} {
  func.func @kernel(%arg0: i32, %arg1: memref<1x32x64xf32, #tpu.memory_space<vmem>>, %arg2: memref<32x1xf32, #tpu.memory_space<vmem>>, %arg3: memref<32x1xf32, #tpu.memory_space<vmem>>, %arg4: memref<16x72xbf16, #tpu.memory_space<vmem>>, %arg5: memref<16x1xf32, #tpu.memory_space<vmem>>, %arg6: memref<1x16x64xf32, #tpu.memory_space<vmem>>, %arg7: memref<1x16x2xf32, #tpu.memory_space<vmem>>) attributes {dimension_semantics = [#tpu.dimension_semantics<parallel>], iteration_bounds = array<i64: 2>, scalar_prefetch = 0 : i64, scratch_operands = 0 : i64, tpu.core_type = #tpu.core_type<tc>, window_params = [{transform_indices = @transform_0, window_bounds = array<i64: 1, 32, 64>}, {pipeline_mode = #tpu.pipeline_mode<synchronous>, transform_indices = @transform_1, window_bounds = array<i64: 32, 1>}, {pipeline_mode = #tpu.pipeline_mode<synchronous>, transform_indices = @transform_2, window_bounds = array<i64: 32, 1>}, {pipeline_mode = #tpu.pipeline_mode<synchronous>, transform_indices = @transform_3, window_bounds = array<i64: 16, 72>}, {pipeline_mode = #tpu.pipeline_mode<synchronous>, transform_indices = @transform_4, window_bounds = array<i64: 16, 1>}, {transform_indices = @transform_5, window_bounds = array<i64: 1, 16, 64>}, {transform_indices = @transform_6, window_bounds = array<i64: 1, 16, 2>}]} {
    %c0 = arith.constant 0 : index
    %c0_0 = arith.constant 0 : index
    %c0_1 = arith.constant 0 : index
    %0 = vector.load %arg1[%c0, %c0_0, %c0_1] : memref<1x32x64xf32, #tpu.memory_space<vmem>>, vector<1x32x64xf32>
    %1 = vector.shape_cast %0 : vector<1x32x64xf32> to vector<32x64xf32>
    %c0_2 = arith.constant 0 : index
    %c0_3 = arith.constant 0 : index
    %2 = vector.load %arg2[%c0_2, %c0_3] : memref<32x1xf32, #tpu.memory_space<vmem>>, vector<32x1xf32>
    %3 = vector.broadcast %2 : vector<32x1xf32> to vector<32x64xf32>
    %4 = arith.mulf %1, %3 : vector<32x64xf32>
    %c0_4 = arith.constant 0 : index
    %c0_5 = arith.constant 0 : index
    %5 = vector.load %arg3[%c0_4, %c0_5] : memref<32x1xf32, #tpu.memory_space<vmem>>, vector<32x1xf32>
    %6 = vector.broadcast %5 : vector<32x1xf32> to vector<32x64xf32>
    %7 = arith.addf %4, %6 : vector<32x64xf32>
    %cst = arith.constant 0.000000e+00 : f32
    %8 = vector.broadcast %cst : f32 to vector<32x64xf32>
    %9 = arith.cmpf oge, %7, %8 : vector<32x64xf32>
    %cst_6 = arith.constant 2.000000e-01 : f32
    %10 = vector.broadcast %cst_6 : f32 to vector<32x64xf32>
    %11 = arith.mulf %10, %7 : vector<32x64xf32>
    %12 = arith.select %9, %7, %11 : vector<32x64xi1>, vector<32x64xf32>
    %13 = tpu.iota {dimensions = array<i32: 1>} : vector<1x64xi32>
    %c8_i32 = arith.constant 8 : i32
    %c0_i32 = arith.constant 0 : i32
    %14 = arith.cmpi eq, %c8_i32, %c0_i32 : i32
    %c1_i32 = arith.constant 1 : i32
    %15 = arith.select %14, %c1_i32, %c8_i32 : i32
    %16 = vector.broadcast %15 : i32 to vector<1x64xi32>
    %17 = arith.remsi %13, %16 : vector<1x64xi32>
    %c0_i32_7 = arith.constant 0 : i32
    %18 = vector.broadcast %c0_i32_7 : i32 to vector<1x64xi32>
    %19 = arith.cmpi ne, %17, %18 : vector<1x64xi32>
    %c0_i32_8 = arith.constant 0 : i32
    %20 = vector.broadcast %c0_i32_8 : i32 to vector<1x64xi32>
    %21 = arith.cmpi slt, %17, %20 : vector<1x64xi32>
    %c0_i32_9 = arith.constant 0 : i32
    %22 = arith.cmpi slt, %15, %c0_i32_9 : i32
    %23 = vector.broadcast %22 : i1 to vector<1x64xi1>
    %24 = vector.broadcast %23 : vector<1x64xi1> to vector<1x64xi1>
    %25 = arith.xori %21, %24 : vector<1x64xi1>
    %26 = arith.andi %25, %19 : vector<1x64xi1>
    %27 = vector.broadcast %15 : i32 to vector<1x64xi32>
    %28 = arith.addi %17, %27 : vector<1x64xi32>
    %29 = arith.select %26, %28, %17 : vector<1x64xi1>, vector<1x64xi32>
    %c-1_i32 = arith.constant -1 : i32
    %30 = vector.broadcast %c-1_i32 : i32 to vector<1x64xi32>
    %31 = arith.addi %29, %30 : vector<1x64xi32>
    %c0_i32_10 = arith.constant 0 : i32
    %32 = vector.broadcast %c0_i32_10 : i32 to vector<1x64xi32>
    %33 = arith.cmpi sge, %31, %32 : vector<1x64xi32>
    %c-1_i32_11 = arith.constant -1 : i32
    %34 = vector.broadcast %c-1_i32_11 : i32 to vector<1x64xi32>
    %35 = arith.addi %29, %34 : vector<1x64xi32>
    %c8_i32_12 = arith.constant 8 : i32
    %36 = vector.broadcast %c8_i32_12 : i32 to vector<1x64xi32>
    %37 = arith.cmpi slt, %35, %36 : vector<1x64xi32>
    %38 = arith.andi %33, %37 : vector<1x64xi1>
    %39 = vector.extract_strided_slice %12 {offsets = [0, 0], sizes = [8, 64], strides = [1, 1]} : vector<32x64xf32> to vector<8x64xf32>
    %40 = arith.truncf %39 : vector<8x64xf32> to vector<8x64xbf16>
    %cst_13 = arith.constant 0.000000e+00 : bf16
    %41 = vector.broadcast %cst_13 : bf16 to vector<8x9xbf16>
    %42 = tpu.concatenate %41, %40, %41 in 1 : vector<8x9xbf16>, vector<8x64xbf16>, vector<8x9xbf16> -> vector<8x82xbf16>
    %43 = vector.extract_strided_slice %42 {offsets = [0, 9], sizes = [8, 64], strides = [1, 1]} : vector<8x82xbf16> to vector<8x64xbf16>
    %44 = vector.extract_strided_slice %12 {offsets = [8, 0], sizes = [8, 64], strides = [1, 1]} : vector<32x64xf32> to vector<8x64xf32>
    %45 = arith.truncf %44 : vector<8x64xf32> to vector<8x64xbf16>
    %cst_14 = arith.constant 0.000000e+00 : bf16
    %46 = vector.broadcast %cst_14 : bf16 to vector<8x9xbf16>
    %47 = tpu.concatenate %46, %45, %46 in 1 : vector<8x9xbf16>, vector<8x64xbf16>, vector<8x9xbf16> -> vector<8x82xbf16>
    %48 = vector.extract_strided_slice %47 {offsets = [0, 8], sizes = [8, 64], strides = [1, 1]} : vector<8x82xbf16> to vector<8x64xbf16>
    %cst_15 = arith.constant 0.000000e+00 : bf16
    %49 = vector.broadcast %cst_15 : bf16 to vector<8x64xbf16>
    %50 = vector.shape_cast %38 : vector<1x64xi1> to vector<1x64xi1>
    %51 = vector.broadcast %50 : vector<1x64xi1> to vector<8x64xi1>
    %52 = arith.select %51, %48, %49 : vector<8x64xi1>, vector<8x64xbf16>
    %53 = vector.extract_strided_slice %47 {offsets = [0, 9], sizes = [8, 64], strides = [1, 1]} : vector<8x82xbf16> to vector<8x64xbf16>
    %54 = vector.extract_strided_slice %12 {offsets = [16, 0], sizes = [8, 64], strides = [1, 1]} : vector<32x64xf32> to vector<8x64xf32>
    %55 = arith.truncf %54 : vector<8x64xf32> to vector<8x64xbf16>
    %cst_16 = arith.constant 0.000000e+00 : bf16
    %56 = vector.broadcast %cst_16 : bf16 to vector<8x9xbf16>
    %57 = tpu.concatenate %56, %55, %56 in 1 : vector<8x9xbf16>, vector<8x64xbf16>, vector<8x9xbf16> -> vector<8x82xbf16>
    %58 = vector.extract_strided_slice %57 {offsets = [0, 1], sizes = [8, 64], strides = [1, 1]} : vector<8x82xbf16> to vector<8x64xbf16>
    %59 = vector.extract_strided_slice %57 {offsets = [0, 9], sizes = [8, 64], strides = [1, 1]} : vector<8x82xbf16> to vector<8x64xbf16>
    %60 = vector.extract_strided_slice %12 {offsets = [24, 0], sizes = [8, 64], strides = [1, 1]} : vector<32x64xf32> to vector<8x64xf32>
    %61 = arith.truncf %60 : vector<8x64xf32> to vector<8x64xbf16>
    %cst_17 = arith.constant 0.000000e+00 : bf16
    %62 = vector.broadcast %cst_17 : bf16 to vector<8x9xbf16>
    %63 = tpu.concatenate %62, %61, %62 in 1 : vector<8x9xbf16>, vector<8x64xbf16>, vector<8x9xbf16> -> vector<8x82xbf16>
    %64 = vector.extract_strided_slice %63 {offsets = [0, 0], sizes = [8, 64], strides = [1, 1]} : vector<8x82xbf16> to vector<8x64xbf16>
    %cst_18 = arith.constant 0.000000e+00 : bf16
    %65 = vector.broadcast %cst_18 : bf16 to vector<8x64xbf16>
    %66 = vector.shape_cast %38 : vector<1x64xi1> to vector<1x64xi1>
    %67 = vector.broadcast %66 : vector<1x64xi1> to vector<8x64xi1>
    %68 = arith.select %67, %64, %65 : vector<8x64xi1>, vector<8x64xbf16>
    %69 = vector.extract_strided_slice %63 {offsets = [0, 1], sizes = [8, 64], strides = [1, 1]} : vector<8x82xbf16> to vector<8x64xbf16>
    %70 = vector.extract_strided_slice %63 {offsets = [0, 8], sizes = [8, 64], strides = [1, 1]} : vector<8x82xbf16> to vector<8x64xbf16>
    %cst_19 = arith.constant 0.000000e+00 : bf16
    %71 = vector.broadcast %cst_19 : bf16 to vector<8x64xbf16>
    %72 = vector.shape_cast %38 : vector<1x64xi1> to vector<1x64xi1>
    %73 = vector.broadcast %72 : vector<1x64xi1> to vector<8x64xi1>
    %74 = arith.select %73, %70, %71 : vector<8x64xi1>, vector<8x64xbf16>
    %75 = vector.extract_strided_slice %63 {offsets = [0, 9], sizes = [8, 64], strides = [1, 1]} : vector<8x82xbf16> to vector<8x64xbf16>
    %76 = tpu.concatenate %43, %52, %53, %58, %59, %68, %69, %74, %75 in 0 : vector<8x64xbf16>, vector<8x64xbf16>, vector<8x64xbf16>, vector<8x64xbf16>, vector<8x64xbf16>, vector<8x64xbf16>, vector<8x64xbf16>, vector<8x64xbf16>, vector<8x64xbf16> -> vector<72x64xbf16>
    %c0_20 = arith.constant 0 : index
    %c0_21 = arith.constant 0 : index
    %77 = vector.load %arg4[%c0_20, %c0_21] : memref<16x72xbf16, #tpu.memory_space<vmem>>, vector<16x72xbf16>
    %cst_22 = arith.constant dense<0.000000e+00> : vector<16x64xf32>
    %78 = tpu.matmul %77, %76, %cst_22 {dimension_numbers = #tpu.dot_dimension_numbers<[1], [0], [0], [1], [0, 0, 1, 1], [], []>} : vector<16x72xbf16>, vector<72x64xbf16>, vector<16x64xf32> -> vector<16x64xf32>
    %c0_23 = arith.constant 0 : index
    %c0_24 = arith.constant 0 : index
    %79 = vector.load %arg5[%c0_23, %c0_24] : memref<16x1xf32, #tpu.memory_space<vmem>>, vector<16x1xf32>
    %80 = vector.broadcast %79 : vector<16x1xf32> to vector<16x64xf32>
    %81 = arith.addf %78, %80 : vector<16x64xf32>
    %c0_25 = arith.constant 0 : index
    %c0_26 = arith.constant 0 : index
    %c0_27 = arith.constant 0 : index
    %82 = vector.load %arg6[%c0_25, %c0_26, %c0_27] : memref<1x16x64xf32, #tpu.memory_space<vmem>>, vector<1x16x64xf32>
    %83 = vector.shape_cast %82 : vector<1x16x64xf32> to vector<16x64xf32>
    %84 = vector.shape_cast %81 : vector<16x64xf32> to vector<1x16x64xf32>
    tpu.vector_store %arg6[%c0_25, %c0_26, %c0_27], %84 {strides = array<i32>} : memref<1x16x64xf32, #tpu.memory_space<vmem>>, vector<1x16x64xf32>,
    %cst_28 = arith.constant dense<0.000000e+00> : vector<16xf32>
    %85 = vector.multi_reduction <add>, %81, %cst_28 [1] : vector<16x64xf32> to vector<16xf32>
    %86 = vector.shape_cast %85 : vector<16xf32> to vector<16x1xf32>
    %87 = arith.mulf %81, %81 : vector<16x64xf32>
    %cst_29 = arith.constant dense<0.000000e+00> : vector<16xf32>
    %88 = vector.multi_reduction <add>, %87, %cst_29 [1] : vector<16x64xf32> to vector<16xf32>
    %89 = vector.shape_cast %88 : vector<16xf32> to vector<16x1xf32>
    %90 = tpu.concatenate %86, %89 in 1 : vector<16x1xf32>, vector<16x1xf32> -> vector<16x2xf32>
    %c0_30 = arith.constant 0 : index
    %c0_31 = arith.constant 0 : index
    %c0_32 = arith.constant 0 : index
    %91 = vector.load %arg7[%c0_30, %c0_31, %c0_32] : memref<1x16x2xf32, #tpu.memory_space<vmem>>, vector<1x16x2xf32>
    %92 = vector.shape_cast %91 : vector<1x16x2xf32> to vector<16x2xf32>
    %93 = vector.shape_cast %90 : vector<16x2xf32> to vector<1x16x2xf32>
    tpu.vector_store %arg7[%c0_30, %c0_31, %c0_32], %93 {strides = array<i32>} : memref<1x16x2xf32, #tpu.memory_space<vmem>>, vector<1x16x2xf32>,
    return
  }
  func.func @transform_0(%arg0: i32) -> (i32, i32, i32) {
    %c0_i32 = arith.constant 0 : i32
    %c0_i32_0 = arith.constant 0 : i32
    %c0_i32_1 = arith.constant 0 : i32
    return %arg0, %c0_i32, %c0_i32_0 : i32, i32, i32
  }
  func.func @transform_1(%arg0: i32) -> (i32, i32) {
    %c0_i32 = arith.constant 0 : i32
    %c0_i32_0 = arith.constant 0 : i32
    %c0_i32_1 = arith.constant 0 : i32
    return %c0_i32, %c0_i32_0 : i32, i32
  }
  func.func @transform_2(%arg0: i32) -> (i32, i32) {
    %c0_i32 = arith.constant 0 : i32
    %c0_i32_0 = arith.constant 0 : i32
    %c0_i32_1 = arith.constant 0 : i32
    return %c0_i32, %c0_i32_0 : i32, i32
  }
  func.func @transform_3(%arg0: i32) -> (i32, i32) {
    %c0_i32 = arith.constant 0 : i32
    %c0_i32_0 = arith.constant 0 : i32
    %c0_i32_1 = arith.constant 0 : i32
    return %c0_i32, %c0_i32_0 : i32, i32
  }
  func.func @transform_4(%arg0: i32) -> (i32, i32) {
    %c0_i32 = arith.constant 0 : i32
    %c0_i32_0 = arith.constant 0 : i32
    %c0_i32_1 = arith.constant 0 : i32
    return %c0_i32, %c0_i32_0 : i32, i32
  }
  func.func @transform_5(%arg0: i32) -> (i32, i32, i32) {
    %c0_i32 = arith.constant 0 : i32
    %c0_i32_0 = arith.constant 0 : i32
    %c0_i32_1 = arith.constant 0 : i32
    return %arg0, %c0_i32, %c0_i32_0 : i32, i32, i32
  }
  func.func @transform_6(%arg0: i32) -> (i32, i32, i32) {
    %c0_i32 = arith.constant 0 : i32
    %c0_i32_0 = arith.constant 0 : i32
    %c0_i32_1 = arith.constant 0 : i32
    return %arg0, %c0_i32, %c0_i32_0 : i32, i32, i32
  }
}

module attributes {stable_mosaic.version = 11 : i64} {
  func.func @kernel(%arg0: i32, %arg1: memref<1x64x16xf32, #tpu.memory_space<vmem>>, %arg2: memref<64x1xf32, #tpu.memory_space<vmem>>, %arg3: memref<64x1xf32, #tpu.memory_space<vmem>>, %arg4: memref<32x144xbf16, #tpu.memory_space<vmem>>, %arg5: memref<32x1xf32, #tpu.memory_space<vmem>>, %arg6: memref<1x32x16xf32, #tpu.memory_space<vmem>>, %arg7: memref<1x32x2xf32, #tpu.memory_space<vmem>>) attributes {dimension_semantics = [#tpu.dimension_semantics<parallel>], iteration_bounds = array<i64: 2>, scalar_prefetch = 0 : i64, scratch_operands = 0 : i64, tpu.core_type = #tpu.core_type<tc>, window_params = [{transform_indices = @transform_0, window_bounds = array<i64: 1, 64, 16>}, {pipeline_mode = #tpu.pipeline_mode<synchronous>, transform_indices = @transform_1, window_bounds = array<i64: 64, 1>}, {pipeline_mode = #tpu.pipeline_mode<synchronous>, transform_indices = @transform_2, window_bounds = array<i64: 64, 1>}, {pipeline_mode = #tpu.pipeline_mode<synchronous>, transform_indices = @transform_3, window_bounds = array<i64: 32, 144>}, {pipeline_mode = #tpu.pipeline_mode<synchronous>, transform_indices = @transform_4, window_bounds = array<i64: 32, 1>}, {transform_indices = @transform_5, window_bounds = array<i64: 1, 32, 16>}, {transform_indices = @transform_6, window_bounds = array<i64: 1, 32, 2>}]} {
    %c0 = arith.constant 0 : index
    %c0_0 = arith.constant 0 : index
    %c0_1 = arith.constant 0 : index
    %0 = vector.load %arg1[%c0, %c0_0, %c0_1] : memref<1x64x16xf32, #tpu.memory_space<vmem>>, vector<1x64x16xf32>
    %1 = vector.shape_cast %0 : vector<1x64x16xf32> to vector<64x16xf32>
    %c0_2 = arith.constant 0 : index
    %c0_3 = arith.constant 0 : index
    %2 = vector.load %arg2[%c0_2, %c0_3] : memref<64x1xf32, #tpu.memory_space<vmem>>, vector<64x1xf32>
    %3 = vector.broadcast %2 : vector<64x1xf32> to vector<64x16xf32>
    %4 = arith.mulf %1, %3 : vector<64x16xf32>
    %c0_4 = arith.constant 0 : index
    %c0_5 = arith.constant 0 : index
    %5 = vector.load %arg3[%c0_4, %c0_5] : memref<64x1xf32, #tpu.memory_space<vmem>>, vector<64x1xf32>
    %6 = vector.broadcast %5 : vector<64x1xf32> to vector<64x16xf32>
    %7 = arith.addf %4, %6 : vector<64x16xf32>
    %cst = arith.constant 0.000000e+00 : f32
    %8 = vector.broadcast %cst : f32 to vector<64x16xf32>
    %9 = arith.cmpf oge, %7, %8 : vector<64x16xf32>
    %cst_6 = arith.constant 2.000000e-01 : f32
    %10 = vector.broadcast %cst_6 : f32 to vector<64x16xf32>
    %11 = arith.mulf %10, %7 : vector<64x16xf32>
    %12 = arith.select %9, %7, %11 : vector<64x16xi1>, vector<64x16xf32>
    %13 = tpu.iota {dimensions = array<i32: 1>} : vector<1x16xi32>
    %c4_i32 = arith.constant 4 : i32
    %c0_i32 = arith.constant 0 : i32
    %14 = arith.cmpi eq, %c4_i32, %c0_i32 : i32
    %c1_i32 = arith.constant 1 : i32
    %15 = arith.select %14, %c1_i32, %c4_i32 : i32
    %16 = vector.broadcast %15 : i32 to vector<1x16xi32>
    %17 = arith.remsi %13, %16 : vector<1x16xi32>
    %c0_i32_7 = arith.constant 0 : i32
    %18 = vector.broadcast %c0_i32_7 : i32 to vector<1x16xi32>
    %19 = arith.cmpi ne, %17, %18 : vector<1x16xi32>
    %c0_i32_8 = arith.constant 0 : i32
    %20 = vector.broadcast %c0_i32_8 : i32 to vector<1x16xi32>
    %21 = arith.cmpi slt, %17, %20 : vector<1x16xi32>
    %c0_i32_9 = arith.constant 0 : i32
    %22 = arith.cmpi slt, %15, %c0_i32_9 : i32
    %23 = vector.broadcast %22 : i1 to vector<1x16xi1>
    %24 = vector.broadcast %23 : vector<1x16xi1> to vector<1x16xi1>
    %25 = arith.xori %21, %24 : vector<1x16xi1>
    %26 = arith.andi %25, %19 : vector<1x16xi1>
    %27 = vector.broadcast %15 : i32 to vector<1x16xi32>
    %28 = arith.addi %17, %27 : vector<1x16xi32>
    %29 = arith.select %26, %28, %17 : vector<1x16xi1>, vector<1x16xi32>
    %c-1_i32 = arith.constant -1 : i32
    %30 = vector.broadcast %c-1_i32 : i32 to vector<1x16xi32>
    %31 = arith.addi %29, %30 : vector<1x16xi32>
    %c0_i32_10 = arith.constant 0 : i32
    %32 = vector.broadcast %c0_i32_10 : i32 to vector<1x16xi32>
    %33 = arith.cmpi sge, %31, %32 : vector<1x16xi32>
    %c-1_i32_11 = arith.constant -1 : i32
    %34 = vector.broadcast %c-1_i32_11 : i32 to vector<1x16xi32>
    %35 = arith.addi %29, %34 : vector<1x16xi32>
    %c4_i32_12 = arith.constant 4 : i32
    %36 = vector.broadcast %c4_i32_12 : i32 to vector<1x16xi32>
    %37 = arith.cmpi slt, %35, %36 : vector<1x16xi32>
    %38 = arith.andi %33, %37 : vector<1x16xi1>
    %39 = vector.extract_strided_slice %12 {offsets = [0, 0], sizes = [16, 16], strides = [1, 1]} : vector<64x16xf32> to vector<16x16xf32>
    %40 = arith.truncf %39 : vector<16x16xf32> to vector<16x16xbf16>
    %cst_13 = arith.constant 0.000000e+00 : bf16
    %41 = vector.broadcast %cst_13 : bf16 to vector<16x5xbf16>
    %42 = tpu.concatenate %41, %40, %41 in 1 : vector<16x5xbf16>, vector<16x16xbf16>, vector<16x5xbf16> -> vector<16x26xbf16>
    %43 = vector.extract_strided_slice %42 {offsets = [0, 5], sizes = [16, 16], strides = [1, 1]} : vector<16x26xbf16> to vector<16x16xbf16>
    %44 = vector.extract_strided_slice %12 {offsets = [16, 0], sizes = [16, 16], strides = [1, 1]} : vector<64x16xf32> to vector<16x16xf32>
    %45 = arith.truncf %44 : vector<16x16xf32> to vector<16x16xbf16>
    %cst_14 = arith.constant 0.000000e+00 : bf16
    %46 = vector.broadcast %cst_14 : bf16 to vector<16x5xbf16>
    %47 = tpu.concatenate %46, %45, %46 in 1 : vector<16x5xbf16>, vector<16x16xbf16>, vector<16x5xbf16> -> vector<16x26xbf16>
    %48 = vector.extract_strided_slice %47 {offsets = [0, 4], sizes = [16, 16], strides = [1, 1]} : vector<16x26xbf16> to vector<16x16xbf16>
    %cst_15 = arith.constant 0.000000e+00 : bf16
    %49 = vector.broadcast %cst_15 : bf16 to vector<16x16xbf16>
    %50 = vector.shape_cast %38 : vector<1x16xi1> to vector<1x16xi1>
    %51 = vector.broadcast %50 : vector<1x16xi1> to vector<16x16xi1>
    %52 = arith.select %51, %48, %49 : vector<16x16xi1>, vector<16x16xbf16>
    %53 = vector.extract_strided_slice %47 {offsets = [0, 5], sizes = [16, 16], strides = [1, 1]} : vector<16x26xbf16> to vector<16x16xbf16>
    %54 = vector.extract_strided_slice %12 {offsets = [32, 0], sizes = [16, 16], strides = [1, 1]} : vector<64x16xf32> to vector<16x16xf32>
    %55 = arith.truncf %54 : vector<16x16xf32> to vector<16x16xbf16>
    %cst_16 = arith.constant 0.000000e+00 : bf16
    %56 = vector.broadcast %cst_16 : bf16 to vector<16x5xbf16>
    %57 = tpu.concatenate %56, %55, %56 in 1 : vector<16x5xbf16>, vector<16x16xbf16>, vector<16x5xbf16> -> vector<16x26xbf16>
    %58 = vector.extract_strided_slice %57 {offsets = [0, 1], sizes = [16, 16], strides = [1, 1]} : vector<16x26xbf16> to vector<16x16xbf16>
    %59 = vector.extract_strided_slice %57 {offsets = [0, 5], sizes = [16, 16], strides = [1, 1]} : vector<16x26xbf16> to vector<16x16xbf16>
    %60 = vector.extract_strided_slice %12 {offsets = [48, 0], sizes = [16, 16], strides = [1, 1]} : vector<64x16xf32> to vector<16x16xf32>
    %61 = arith.truncf %60 : vector<16x16xf32> to vector<16x16xbf16>
    %cst_17 = arith.constant 0.000000e+00 : bf16
    %62 = vector.broadcast %cst_17 : bf16 to vector<16x5xbf16>
    %63 = tpu.concatenate %62, %61, %62 in 1 : vector<16x5xbf16>, vector<16x16xbf16>, vector<16x5xbf16> -> vector<16x26xbf16>
    %64 = vector.extract_strided_slice %63 {offsets = [0, 0], sizes = [16, 16], strides = [1, 1]} : vector<16x26xbf16> to vector<16x16xbf16>
    %cst_18 = arith.constant 0.000000e+00 : bf16
    %65 = vector.broadcast %cst_18 : bf16 to vector<16x16xbf16>
    %66 = vector.shape_cast %38 : vector<1x16xi1> to vector<1x16xi1>
    %67 = vector.broadcast %66 : vector<1x16xi1> to vector<16x16xi1>
    %68 = arith.select %67, %64, %65 : vector<16x16xi1>, vector<16x16xbf16>
    %69 = vector.extract_strided_slice %63 {offsets = [0, 1], sizes = [16, 16], strides = [1, 1]} : vector<16x26xbf16> to vector<16x16xbf16>
    %70 = vector.extract_strided_slice %63 {offsets = [0, 4], sizes = [16, 16], strides = [1, 1]} : vector<16x26xbf16> to vector<16x16xbf16>
    %cst_19 = arith.constant 0.000000e+00 : bf16
    %71 = vector.broadcast %cst_19 : bf16 to vector<16x16xbf16>
    %72 = vector.shape_cast %38 : vector<1x16xi1> to vector<1x16xi1>
    %73 = vector.broadcast %72 : vector<1x16xi1> to vector<16x16xi1>
    %74 = arith.select %73, %70, %71 : vector<16x16xi1>, vector<16x16xbf16>
    %75 = vector.extract_strided_slice %63 {offsets = [0, 5], sizes = [16, 16], strides = [1, 1]} : vector<16x26xbf16> to vector<16x16xbf16>
    %76 = tpu.concatenate %43, %52, %53, %58, %59, %68, %69, %74, %75 in 0 : vector<16x16xbf16>, vector<16x16xbf16>, vector<16x16xbf16>, vector<16x16xbf16>, vector<16x16xbf16>, vector<16x16xbf16>, vector<16x16xbf16>, vector<16x16xbf16>, vector<16x16xbf16> -> vector<144x16xbf16>
    %c0_20 = arith.constant 0 : index
    %c0_21 = arith.constant 0 : index
    %77 = vector.load %arg4[%c0_20, %c0_21] : memref<32x144xbf16, #tpu.memory_space<vmem>>, vector<32x144xbf16>
    %cst_22 = arith.constant dense<0.000000e+00> : vector<32x16xf32>
    %78 = tpu.matmul %77, %76, %cst_22 {dimension_numbers = #tpu.dot_dimension_numbers<[1], [0], [0], [1], [0, 0, 1, 1], [], []>} : vector<32x144xbf16>, vector<144x16xbf16>, vector<32x16xf32> -> vector<32x16xf32>
    %c0_23 = arith.constant 0 : index
    %c0_24 = arith.constant 0 : index
    %79 = vector.load %arg5[%c0_23, %c0_24] : memref<32x1xf32, #tpu.memory_space<vmem>>, vector<32x1xf32>
    %80 = vector.broadcast %79 : vector<32x1xf32> to vector<32x16xf32>
    %81 = arith.addf %78, %80 : vector<32x16xf32>
    %c0_25 = arith.constant 0 : index
    %c0_26 = arith.constant 0 : index
    %c0_27 = arith.constant 0 : index
    %82 = vector.load %arg6[%c0_25, %c0_26, %c0_27] : memref<1x32x16xf32, #tpu.memory_space<vmem>>, vector<1x32x16xf32>
    %83 = vector.shape_cast %82 : vector<1x32x16xf32> to vector<32x16xf32>
    %84 = vector.shape_cast %81 : vector<32x16xf32> to vector<1x32x16xf32>
    tpu.vector_store %arg6[%c0_25, %c0_26, %c0_27], %84 {strides = array<i32>} : memref<1x32x16xf32, #tpu.memory_space<vmem>>, vector<1x32x16xf32>,
    %cst_28 = arith.constant dense<0.000000e+00> : vector<32xf32>
    %85 = vector.multi_reduction <add>, %81, %cst_28 [1] : vector<32x16xf32> to vector<32xf32>
    %86 = vector.shape_cast %85 : vector<32xf32> to vector<32x1xf32>
    %87 = arith.mulf %81, %81 : vector<32x16xf32>
    %cst_29 = arith.constant dense<0.000000e+00> : vector<32xf32>
    %88 = vector.multi_reduction <add>, %87, %cst_29 [1] : vector<32x16xf32> to vector<32xf32>
    %89 = vector.shape_cast %88 : vector<32xf32> to vector<32x1xf32>
    %90 = tpu.concatenate %86, %89 in 1 : vector<32x1xf32>, vector<32x1xf32> -> vector<32x2xf32>
    %c0_30 = arith.constant 0 : index
    %c0_31 = arith.constant 0 : index
    %c0_32 = arith.constant 0 : index
    %91 = vector.load %arg7[%c0_30, %c0_31, %c0_32] : memref<1x32x2xf32, #tpu.memory_space<vmem>>, vector<1x32x2xf32>
    %92 = vector.shape_cast %91 : vector<1x32x2xf32> to vector<32x2xf32>
    %93 = vector.shape_cast %90 : vector<32x2xf32> to vector<1x32x2xf32>
    tpu.vector_store %arg7[%c0_30, %c0_31, %c0_32], %93 {strides = array<i32>} : memref<1x32x2xf32, #tpu.memory_space<vmem>>, vector<1x32x2xf32>,
    return
  }
  func.func @transform_0(%arg0: i32) -> (i32, i32, i32) {
    %c0_i32 = arith.constant 0 : i32
    %c0_i32_0 = arith.constant 0 : i32
    %c0_i32_1 = arith.constant 0 : i32
    return %arg0, %c0_i32, %c0_i32_0 : i32, i32, i32
  }
  func.func @transform_1(%arg0: i32) -> (i32, i32) {
    %c0_i32 = arith.constant 0 : i32
    %c0_i32_0 = arith.constant 0 : i32
    %c0_i32_1 = arith.constant 0 : i32
    return %c0_i32, %c0_i32_0 : i32, i32
  }
  func.func @transform_2(%arg0: i32) -> (i32, i32) {
    %c0_i32 = arith.constant 0 : i32
    %c0_i32_0 = arith.constant 0 : i32
    %c0_i32_1 = arith.constant 0 : i32
    return %c0_i32, %c0_i32_0 : i32, i32
  }
  func.func @transform_3(%arg0: i32) -> (i32, i32) {
    %c0_i32 = arith.constant 0 : i32
    %c0_i32_0 = arith.constant 0 : i32
    %c0_i32_1 = arith.constant 0 : i32
    return %c0_i32, %c0_i32_0 : i32, i32
  }
  func.func @transform_4(%arg0: i32) -> (i32, i32) {
    %c0_i32 = arith.constant 0 : i32
    %c0_i32_0 = arith.constant 0 : i32
    %c0_i32_1 = arith.constant 0 : i32
    return %c0_i32, %c0_i32_0 : i32, i32
  }
  func.func @transform_5(%arg0: i32) -> (i32, i32, i32) {
    %c0_i32 = arith.constant 0 : i32
    %c0_i32_0 = arith.constant 0 : i32
    %c0_i32_1 = arith.constant 0 : i32
    return %arg0, %c0_i32, %c0_i32_0 : i32, i32, i32
  }
  func.func @transform_6(%arg0: i32) -> (i32, i32, i32) {
    %c0_i32 = arith.constant 0 : i32
    %c0_i32_0 = arith.constant 0 : i32
    %c0_i32_1 = arith.constant 0 : i32
    return %arg0, %c0_i32, %c0_i32_0 : i32, i32, i32
  }
}

module attributes {stable_mosaic.version = 11 : i64} {
  func.func @kernel(%arg0: i32, %arg1: memref<1x32x16xf32, #tpu.memory_space<vmem>>, %arg2: memref<32x1xf32, #tpu.memory_space<vmem>>, %arg3: memref<32x1xf32, #tpu.memory_space<vmem>>, %arg4: memref<32x288xbf16, #tpu.memory_space<vmem>>, %arg5: memref<32x1xf32, #tpu.memory_space<vmem>>, %arg6: memref<1x32x16xf32, #tpu.memory_space<vmem>>, %arg7: memref<1x32x2xf32, #tpu.memory_space<vmem>>) attributes {dimension_semantics = [#tpu.dimension_semantics<parallel>], iteration_bounds = array<i64: 2>, scalar_prefetch = 0 : i64, scratch_operands = 0 : i64, tpu.core_type = #tpu.core_type<tc>, window_params = [{transform_indices = @transform_0, window_bounds = array<i64: 1, 32, 16>}, {pipeline_mode = #tpu.pipeline_mode<synchronous>, transform_indices = @transform_1, window_bounds = array<i64: 32, 1>}, {pipeline_mode = #tpu.pipeline_mode<synchronous>, transform_indices = @transform_2, window_bounds = array<i64: 32, 1>}, {pipeline_mode = #tpu.pipeline_mode<synchronous>, transform_indices = @transform_3, window_bounds = array<i64: 32, 288>}, {pipeline_mode = #tpu.pipeline_mode<synchronous>, transform_indices = @transform_4, window_bounds = array<i64: 32, 1>}, {transform_indices = @transform_5, window_bounds = array<i64: 1, 32, 16>}, {transform_indices = @transform_6, window_bounds = array<i64: 1, 32, 2>}]} {
    %c0 = arith.constant 0 : index
    %c0_0 = arith.constant 0 : index
    %c0_1 = arith.constant 0 : index
    %0 = vector.load %arg1[%c0, %c0_0, %c0_1] : memref<1x32x16xf32, #tpu.memory_space<vmem>>, vector<1x32x16xf32>
    %1 = vector.shape_cast %0 : vector<1x32x16xf32> to vector<32x16xf32>
    %c0_2 = arith.constant 0 : index
    %c0_3 = arith.constant 0 : index
    %2 = vector.load %arg2[%c0_2, %c0_3] : memref<32x1xf32, #tpu.memory_space<vmem>>, vector<32x1xf32>
    %3 = vector.broadcast %2 : vector<32x1xf32> to vector<32x16xf32>
    %4 = arith.mulf %1, %3 : vector<32x16xf32>
    %c0_4 = arith.constant 0 : index
    %c0_5 = arith.constant 0 : index
    %5 = vector.load %arg3[%c0_4, %c0_5] : memref<32x1xf32, #tpu.memory_space<vmem>>, vector<32x1xf32>
    %6 = vector.broadcast %5 : vector<32x1xf32> to vector<32x16xf32>
    %7 = arith.addf %4, %6 : vector<32x16xf32>
    %cst = arith.constant 0.000000e+00 : f32
    %8 = vector.broadcast %cst : f32 to vector<32x16xf32>
    %9 = arith.cmpf oge, %7, %8 : vector<32x16xf32>
    %cst_6 = arith.constant 2.000000e-01 : f32
    %10 = vector.broadcast %cst_6 : f32 to vector<32x16xf32>
    %11 = arith.mulf %10, %7 : vector<32x16xf32>
    %12 = arith.select %9, %7, %11 : vector<32x16xi1>, vector<32x16xf32>
    %13 = tpu.iota {dimensions = array<i32: 1>} : vector<1x16xi32>
    %c4_i32 = arith.constant 4 : i32
    %c0_i32 = arith.constant 0 : i32
    %14 = arith.cmpi eq, %c4_i32, %c0_i32 : i32
    %c1_i32 = arith.constant 1 : i32
    %15 = arith.select %14, %c1_i32, %c4_i32 : i32
    %16 = vector.broadcast %15 : i32 to vector<1x16xi32>
    %17 = arith.remsi %13, %16 : vector<1x16xi32>
    %c0_i32_7 = arith.constant 0 : i32
    %18 = vector.broadcast %c0_i32_7 : i32 to vector<1x16xi32>
    %19 = arith.cmpi ne, %17, %18 : vector<1x16xi32>
    %c0_i32_8 = arith.constant 0 : i32
    %20 = vector.broadcast %c0_i32_8 : i32 to vector<1x16xi32>
    %21 = arith.cmpi slt, %17, %20 : vector<1x16xi32>
    %c0_i32_9 = arith.constant 0 : i32
    %22 = arith.cmpi slt, %15, %c0_i32_9 : i32
    %23 = vector.broadcast %22 : i1 to vector<1x16xi1>
    %24 = vector.broadcast %23 : vector<1x16xi1> to vector<1x16xi1>
    %25 = arith.xori %21, %24 : vector<1x16xi1>
    %26 = arith.andi %25, %19 : vector<1x16xi1>
    %27 = vector.broadcast %15 : i32 to vector<1x16xi32>
    %28 = arith.addi %17, %27 : vector<1x16xi32>
    %29 = arith.select %26, %28, %17 : vector<1x16xi1>, vector<1x16xi32>
    %c-1_i32 = arith.constant -1 : i32
    %30 = vector.broadcast %c-1_i32 : i32 to vector<1x16xi32>
    %31 = arith.addi %29, %30 : vector<1x16xi32>
    %c0_i32_10 = arith.constant 0 : i32
    %32 = vector.broadcast %c0_i32_10 : i32 to vector<1x16xi32>
    %33 = arith.cmpi sge, %31, %32 : vector<1x16xi32>
    %c-1_i32_11 = arith.constant -1 : i32
    %34 = vector.broadcast %c-1_i32_11 : i32 to vector<1x16xi32>
    %35 = arith.addi %29, %34 : vector<1x16xi32>
    %c4_i32_12 = arith.constant 4 : i32
    %36 = vector.broadcast %c4_i32_12 : i32 to vector<1x16xi32>
    %37 = arith.cmpi slt, %35, %36 : vector<1x16xi32>
    %38 = arith.andi %33, %37 : vector<1x16xi1>
    %c1_i32_13 = arith.constant 1 : i32
    %39 = vector.broadcast %c1_i32_13 : i32 to vector<1x16xi32>
    %40 = arith.addi %29, %39 : vector<1x16xi32>
    %c0_i32_14 = arith.constant 0 : i32
    %41 = vector.broadcast %c0_i32_14 : i32 to vector<1x16xi32>
    %42 = arith.cmpi sge, %40, %41 : vector<1x16xi32>
    %c1_i32_15 = arith.constant 1 : i32
    %43 = vector.broadcast %c1_i32_15 : i32 to vector<1x16xi32>
    %44 = arith.addi %29, %43 : vector<1x16xi32>
    %c4_i32_16 = arith.constant 4 : i32
    %45 = vector.broadcast %c4_i32_16 : i32 to vector<1x16xi32>
    %46 = arith.cmpi slt, %44, %45 : vector<1x16xi32>
    %47 = arith.andi %42, %46 : vector<1x16xi1>
    %48 = arith.truncf %12 : vector<32x16xf32> to vector<32x16xbf16>
    %cst_17 = arith.constant 0.000000e+00 : bf16
    %49 = vector.broadcast %cst_17 : bf16 to vector<32x5xbf16>
    %50 = tpu.concatenate %49, %48, %49 in 1 : vector<32x5xbf16>, vector<32x16xbf16>, vector<32x5xbf16> -> vector<32x26xbf16>
    %51 = vector.extract_strided_slice %50 {offsets = [0, 0], sizes = [32, 16], strides = [1, 1]} : vector<32x26xbf16> to vector<32x16xbf16>
    %cst_18 = arith.constant 0.000000e+00 : bf16
    %52 = vector.broadcast %cst_18 : bf16 to vector<32x16xbf16>
    %53 = vector.shape_cast %38 : vector<1x16xi1> to vector<1x16xi1>
    %54 = vector.broadcast %53 : vector<1x16xi1> to vector<32x16xi1>
    %55 = arith.select %54, %51, %52 : vector<32x16xi1>, vector<32x16xbf16>
    %56 = vector.extract_strided_slice %50 {offsets = [0, 1], sizes = [32, 16], strides = [1, 1]} : vector<32x26xbf16> to vector<32x16xbf16>
    %57 = vector.extract_strided_slice %50 {offsets = [0, 2], sizes = [32, 16], strides = [1, 1]} : vector<32x26xbf16> to vector<32x16xbf16>
    %cst_19 = arith.constant 0.000000e+00 : bf16
    %58 = vector.broadcast %cst_19 : bf16 to vector<32x16xbf16>
    %59 = vector.shape_cast %47 : vector<1x16xi1> to vector<1x16xi1>
    %60 = vector.broadcast %59 : vector<1x16xi1> to vector<32x16xi1>
    %61 = arith.select %60, %57, %58 : vector<32x16xi1>, vector<32x16xbf16>
    %62 = vector.extract_strided_slice %50 {offsets = [0, 4], sizes = [32, 16], strides = [1, 1]} : vector<32x26xbf16> to vector<32x16xbf16>
    %cst_20 = arith.constant 0.000000e+00 : bf16
    %63 = vector.broadcast %cst_20 : bf16 to vector<32x16xbf16>
    %64 = vector.shape_cast %38 : vector<1x16xi1> to vector<1x16xi1>
    %65 = vector.broadcast %64 : vector<1x16xi1> to vector<32x16xi1>
    %66 = arith.select %65, %62, %63 : vector<32x16xi1>, vector<32x16xbf16>
    %67 = vector.extract_strided_slice %50 {offsets = [0, 5], sizes = [32, 16], strides = [1, 1]} : vector<32x26xbf16> to vector<32x16xbf16>
    %68 = vector.extract_strided_slice %50 {offsets = [0, 6], sizes = [32, 16], strides = [1, 1]} : vector<32x26xbf16> to vector<32x16xbf16>
    %cst_21 = arith.constant 0.000000e+00 : bf16
    %69 = vector.broadcast %cst_21 : bf16 to vector<32x16xbf16>
    %70 = vector.shape_cast %47 : vector<1x16xi1> to vector<1x16xi1>
    %71 = vector.broadcast %70 : vector<1x16xi1> to vector<32x16xi1>
    %72 = arith.select %71, %68, %69 : vector<32x16xi1>, vector<32x16xbf16>
    %73 = vector.extract_strided_slice %50 {offsets = [0, 8], sizes = [32, 16], strides = [1, 1]} : vector<32x26xbf16> to vector<32x16xbf16>
    %cst_22 = arith.constant 0.000000e+00 : bf16
    %74 = vector.broadcast %cst_22 : bf16 to vector<32x16xbf16>
    %75 = vector.shape_cast %38 : vector<1x16xi1> to vector<1x16xi1>
    %76 = vector.broadcast %75 : vector<1x16xi1> to vector<32x16xi1>
    %77 = arith.select %76, %73, %74 : vector<32x16xi1>, vector<32x16xbf16>
    %78 = vector.extract_strided_slice %50 {offsets = [0, 9], sizes = [32, 16], strides = [1, 1]} : vector<32x26xbf16> to vector<32x16xbf16>
    %79 = vector.extract_strided_slice %50 {offsets = [0, 10], sizes = [32, 16], strides = [1, 1]} : vector<32x26xbf16> to vector<32x16xbf16>
    %cst_23 = arith.constant 0.000000e+00 : bf16
    %80 = vector.broadcast %cst_23 : bf16 to vector<32x16xbf16>
    %81 = vector.shape_cast %47 : vector<1x16xi1> to vector<1x16xi1>
    %82 = vector.broadcast %81 : vector<1x16xi1> to vector<32x16xi1>
    %83 = arith.select %82, %79, %80 : vector<32x16xi1>, vector<32x16xbf16>
    %84 = tpu.concatenate %55, %56, %61, %66, %67, %72, %77, %78, %83 in 0 : vector<32x16xbf16>, vector<32x16xbf16>, vector<32x16xbf16>, vector<32x16xbf16>, vector<32x16xbf16>, vector<32x16xbf16>, vector<32x16xbf16>, vector<32x16xbf16>, vector<32x16xbf16> -> vector<288x16xbf16>
    %c0_24 = arith.constant 0 : index
    %c0_25 = arith.constant 0 : index
    %85 = vector.load %arg4[%c0_24, %c0_25] : memref<32x288xbf16, #tpu.memory_space<vmem>>, vector<32x288xbf16>
    %cst_26 = arith.constant dense<0.000000e+00> : vector<32x16xf32>
    %86 = tpu.matmul %85, %84, %cst_26 {dimension_numbers = #tpu.dot_dimension_numbers<[1], [0], [0], [1], [0, 0, 1, 1], [], []>} : vector<32x288xbf16>, vector<288x16xbf16>, vector<32x16xf32> -> vector<32x16xf32>
    %c0_27 = arith.constant 0 : index
    %c0_28 = arith.constant 0 : index
    %87 = vector.load %arg5[%c0_27, %c0_28] : memref<32x1xf32, #tpu.memory_space<vmem>>, vector<32x1xf32>
    %88 = vector.broadcast %87 : vector<32x1xf32> to vector<32x16xf32>
    %89 = arith.addf %86, %88 : vector<32x16xf32>
    %c0_29 = arith.constant 0 : index
    %c0_30 = arith.constant 0 : index
    %c0_31 = arith.constant 0 : index
    %90 = vector.load %arg6[%c0_29, %c0_30, %c0_31] : memref<1x32x16xf32, #tpu.memory_space<vmem>>, vector<1x32x16xf32>
    %91 = vector.shape_cast %90 : vector<1x32x16xf32> to vector<32x16xf32>
    %92 = vector.shape_cast %89 : vector<32x16xf32> to vector<1x32x16xf32>
    tpu.vector_store %arg6[%c0_29, %c0_30, %c0_31], %92 {strides = array<i32>} : memref<1x32x16xf32, #tpu.memory_space<vmem>>, vector<1x32x16xf32>,
    %cst_32 = arith.constant dense<0.000000e+00> : vector<32xf32>
    %93 = vector.multi_reduction <add>, %89, %cst_32 [1] : vector<32x16xf32> to vector<32xf32>
    %94 = vector.shape_cast %93 : vector<32xf32> to vector<32x1xf32>
    %95 = arith.mulf %89, %89 : vector<32x16xf32>
    %cst_33 = arith.constant dense<0.000000e+00> : vector<32xf32>
    %96 = vector.multi_reduction <add>, %95, %cst_33 [1] : vector<32x16xf32> to vector<32xf32>
    %97 = vector.shape_cast %96 : vector<32xf32> to vector<32x1xf32>
    %98 = tpu.concatenate %94, %97 in 1 : vector<32x1xf32>, vector<32x1xf32> -> vector<32x2xf32>
    %c0_34 = arith.constant 0 : index
    %c0_35 = arith.constant 0 : index
    %c0_36 = arith.constant 0 : index
    %99 = vector.load %arg7[%c0_34, %c0_35, %c0_36] : memref<1x32x2xf32, #tpu.memory_space<vmem>>, vector<1x32x2xf32>
    %100 = vector.shape_cast %99 : vector<1x32x2xf32> to vector<32x2xf32>
    %101 = vector.shape_cast %98 : vector<32x2xf32> to vector<1x32x2xf32>
    tpu.vector_store %arg7[%c0_34, %c0_35, %c0_36], %101 {strides = array<i32>} : memref<1x32x2xf32, #tpu.memory_space<vmem>>, vector<1x32x2xf32>,
    return
  }
  func.func @transform_0(%arg0: i32) -> (i32, i32, i32) {
    %c0_i32 = arith.constant 0 : i32
    %c0_i32_0 = arith.constant 0 : i32
    %c0_i32_1 = arith.constant 0 : i32
    return %arg0, %c0_i32, %c0_i32_0 : i32, i32, i32
  }
  func.func @transform_1(%arg0: i32) -> (i32, i32) {
    %c0_i32 = arith.constant 0 : i32
    %c0_i32_0 = arith.constant 0 : i32
    %c0_i32_1 = arith.constant 0 : i32
    return %c0_i32, %c0_i32_0 : i32, i32
  }
  func.func @transform_2(%arg0: i32) -> (i32, i32) {
    %c0_i32 = arith.constant 0 : i32
    %c0_i32_0 = arith.constant 0 : i32
    %c0_i32_1 = arith.constant 0 : i32
    return %c0_i32, %c0_i32_0 : i32, i32
  }
  func.func @transform_3(%arg0: i32) -> (i32, i32) {
    %c0_i32 = arith.constant 0 : i32
    %c0_i32_0 = arith.constant 0 : i32
    %c0_i32_1 = arith.constant 0 : i32
    return %c0_i32, %c0_i32_0 : i32, i32
  }
  func.func @transform_4(%arg0: i32) -> (i32, i32) {
    %c0_i32 = arith.constant 0 : i32
    %c0_i32_0 = arith.constant 0 : i32
    %c0_i32_1 = arith.constant 0 : i32
    return %c0_i32, %c0_i32_0 : i32, i32
  }
  func.func @transform_5(%arg0: i32) -> (i32, i32, i32) {
    %c0_i32 = arith.constant 0 : i32
    %c0_i32_0 = arith.constant 0 : i32
    %c0_i32_1 = arith.constant 0 : i32
    return %arg0, %c0_i32, %c0_i32_0 : i32, i32, i32
  }
  func.func @transform_6(%arg0: i32) -> (i32, i32, i32) {
    %c0_i32 = arith.constant 0 : i32
    %c0_i32_0 = arith.constant 0 : i32
    %c0_i32_1 = arith.constant 0 : i32
    return %arg0, %c0_i32, %c0_i32_0 : i32, i32, i32
  }
}

module attributes {stable_mosaic.version = 11 : i64} {
  func.func @_affine_act_stats_kernel(%arg0: i32, %arg1: memref<1x32x16xf32, #tpu.memory_space<vmem>>, %arg2: memref<32x1xf32, #tpu.memory_space<vmem>>, %arg3: memref<32x1xf32, #tpu.memory_space<vmem>>, %arg4: memref<1x32x16xf32, #tpu.memory_space<vmem>>, %arg5: memref<1x32x2xf32, #tpu.memory_space<vmem>>) attributes {dimension_semantics = [#tpu.dimension_semantics<parallel>], iteration_bounds = array<i64: 2>, scalar_prefetch = 0 : i64, scratch_operands = 0 : i64, tpu.core_type = #tpu.core_type<tc>, window_params = [{transform_indices = @transform_0, window_bounds = array<i64: 1, 32, 16>}, {pipeline_mode = #tpu.pipeline_mode<synchronous>, transform_indices = @transform_1, window_bounds = array<i64: 32, 1>}, {pipeline_mode = #tpu.pipeline_mode<synchronous>, transform_indices = @transform_2, window_bounds = array<i64: 32, 1>}, {transform_indices = @transform_3, window_bounds = array<i64: 1, 32, 16>}, {transform_indices = @transform_4, window_bounds = array<i64: 1, 32, 2>}]} {
    %c0 = arith.constant 0 : index
    %c0_0 = arith.constant 0 : index
    %c0_1 = arith.constant 0 : index
    %0 = vector.load %arg1[%c0, %c0_0, %c0_1] : memref<1x32x16xf32, #tpu.memory_space<vmem>>, vector<1x32x16xf32>
    %1 = vector.shape_cast %0 : vector<1x32x16xf32> to vector<32x16xf32>
    %c0_2 = arith.constant 0 : index
    %c0_3 = arith.constant 0 : index
    %2 = vector.load %arg2[%c0_2, %c0_3] : memref<32x1xf32, #tpu.memory_space<vmem>>, vector<32x1xf32>
    %3 = vector.broadcast %2 : vector<32x1xf32> to vector<32x16xf32>
    %4 = arith.mulf %1, %3 : vector<32x16xf32>
    %c0_4 = arith.constant 0 : index
    %c0_5 = arith.constant 0 : index
    %5 = vector.load %arg3[%c0_4, %c0_5] : memref<32x1xf32, #tpu.memory_space<vmem>>, vector<32x1xf32>
    %6 = vector.broadcast %5 : vector<32x1xf32> to vector<32x16xf32>
    %7 = arith.addf %4, %6 : vector<32x16xf32>
    %cst = arith.constant 0.000000e+00 : f32
    %8 = vector.broadcast %cst : f32 to vector<32x16xf32>
    %9 = arith.cmpf oge, %7, %8 : vector<32x16xf32>
    %cst_6 = arith.constant 2.000000e-01 : f32
    %10 = vector.broadcast %cst_6 : f32 to vector<32x16xf32>
    %11 = arith.mulf %10, %7 : vector<32x16xf32>
    %12 = arith.select %9, %7, %11 : vector<32x16xi1>, vector<32x16xf32>
    %c0_7 = arith.constant 0 : index
    %c0_8 = arith.constant 0 : index
    %c0_9 = arith.constant 0 : index
    %13 = vector.load %arg4[%c0_7, %c0_8, %c0_9] : memref<1x32x16xf32, #tpu.memory_space<vmem>>, vector<1x32x16xf32>
    %14 = vector.shape_cast %13 : vector<1x32x16xf32> to vector<32x16xf32>
    %15 = vector.shape_cast %12 : vector<32x16xf32> to vector<1x32x16xf32>
    tpu.vector_store %arg4[%c0_7, %c0_8, %c0_9], %15 {strides = array<i32>} : memref<1x32x16xf32, #tpu.memory_space<vmem>>, vector<1x32x16xf32>,
    %cst_10 = arith.constant dense<0.000000e+00> : vector<32xf32>
    %16 = vector.multi_reduction <add>, %12, %cst_10 [1] : vector<32x16xf32> to vector<32xf32>
    %17 = vector.shape_cast %16 : vector<32xf32> to vector<32x1xf32>
    %18 = arith.mulf %12, %12 : vector<32x16xf32>
    %cst_11 = arith.constant dense<0.000000e+00> : vector<32xf32>
    %19 = vector.multi_reduction <add>, %18, %cst_11 [1] : vector<32x16xf32> to vector<32xf32>
    %20 = vector.shape_cast %19 : vector<32xf32> to vector<32x1xf32>
    %21 = tpu.concatenate %17, %20 in 1 : vector<32x1xf32>, vector<32x1xf32> -> vector<32x2xf32>
    %c0_12 = arith.constant 0 : index
    %c0_13 = arith.constant 0 : index
    %c0_14 = arith.constant 0 : index
    %22 = vector.load %arg5[%c0_12, %c0_13, %c0_14] : memref<1x32x2xf32, #tpu.memory_space<vmem>>, vector<1x32x2xf32>
    %23 = vector.shape_cast %22 : vector<1x32x2xf32> to vector<32x2xf32>
    %24 = vector.shape_cast %21 : vector<32x2xf32> to vector<1x32x2xf32>
    tpu.vector_store %arg5[%c0_12, %c0_13, %c0_14], %24 {strides = array<i32>} : memref<1x32x2xf32, #tpu.memory_space<vmem>>, vector<1x32x2xf32>,
    return
  }
  func.func @transform_0(%arg0: i32) -> (i32, i32, i32) {
    %c0_i32 = arith.constant 0 : i32
    %c0_i32_0 = arith.constant 0 : i32
    %c0_i32_1 = arith.constant 0 : i32
    return %arg0, %c0_i32, %c0_i32_0 : i32, i32, i32
  }
  func.func @transform_1(%arg0: i32) -> (i32, i32) {
    %c0_i32 = arith.constant 0 : i32
    %c0_i32_0 = arith.constant 0 : i32
    %c0_i32_1 = arith.constant 0 : i32
    return %c0_i32, %c0_i32_0 : i32, i32
  }
  func.func @transform_2(%arg0: i32) -> (i32, i32) {
    %c0_i32 = arith.constant 0 : i32
    %c0_i32_0 = arith.constant 0 : i32
    %c0_i32_1 = arith.constant 0 : i32
    return %c0_i32, %c0_i32_0 : i32, i32
  }
  func.func @transform_3(%arg0: i32) -> (i32, i32, i32) {
    %c0_i32 = arith.constant 0 : i32
    %c0_i32_0 = arith.constant 0 : i32
    %c0_i32_1 = arith.constant 0 : i32
    return %arg0, %c0_i32, %c0_i32_0 : i32, i32, i32
  }
  func.func @transform_4(%arg0: i32) -> (i32, i32, i32) {
    %c0_i32 = arith.constant 0 : i32
    %c0_i32_0 = arith.constant 0 : i32
    %c0_i32_1 = arith.constant 0 : i32
    return %arg0, %c0_i32, %c0_i32_0 : i32, i32, i32
  }
}

module attributes {stable_mosaic.version = 11 : i64} {
  func.func @kernel(%arg0: i32, %arg1: memref<1x32x16xf32, #tpu.memory_space<vmem>>, %arg2: memref<32x1xf32, #tpu.memory_space<vmem>>, %arg3: memref<32x1xf32, #tpu.memory_space<vmem>>, %arg4: memref<32x288xbf16, #tpu.memory_space<vmem>>, %arg5: memref<32x1xf32, #tpu.memory_space<vmem>>, %arg6: memref<1x32x16xf32, #tpu.memory_space<vmem>>, %arg7: memref<1x32x16xf32, #tpu.memory_space<vmem>>, %arg8: memref<1x32x2xf32, #tpu.memory_space<vmem>>) attributes {dimension_semantics = [#tpu.dimension_semantics<parallel>], iteration_bounds = array<i64: 2>, scalar_prefetch = 0 : i64, scratch_operands = 0 : i64, tpu.core_type = #tpu.core_type<tc>, window_params = [{transform_indices = @transform_0, window_bounds = array<i64: 1, 32, 16>}, {pipeline_mode = #tpu.pipeline_mode<synchronous>, transform_indices = @transform_1, window_bounds = array<i64: 32, 1>}, {pipeline_mode = #tpu.pipeline_mode<synchronous>, transform_indices = @transform_2, window_bounds = array<i64: 32, 1>}, {pipeline_mode = #tpu.pipeline_mode<synchronous>, transform_indices = @transform_3, window_bounds = array<i64: 32, 288>}, {pipeline_mode = #tpu.pipeline_mode<synchronous>, transform_indices = @transform_4, window_bounds = array<i64: 32, 1>}, {transform_indices = @transform_5, window_bounds = array<i64: 1, 32, 16>}, {transform_indices = @transform_6, window_bounds = array<i64: 1, 32, 16>}, {transform_indices = @transform_7, window_bounds = array<i64: 1, 32, 2>}]} {
    %c0 = arith.constant 0 : index
    %c0_0 = arith.constant 0 : index
    %c0_1 = arith.constant 0 : index
    %0 = vector.load %arg1[%c0, %c0_0, %c0_1] : memref<1x32x16xf32, #tpu.memory_space<vmem>>, vector<1x32x16xf32>
    %1 = vector.shape_cast %0 : vector<1x32x16xf32> to vector<32x16xf32>
    %c0_2 = arith.constant 0 : index
    %c0_3 = arith.constant 0 : index
    %2 = vector.load %arg2[%c0_2, %c0_3] : memref<32x1xf32, #tpu.memory_space<vmem>>, vector<32x1xf32>
    %3 = vector.broadcast %2 : vector<32x1xf32> to vector<32x16xf32>
    %4 = arith.mulf %1, %3 : vector<32x16xf32>
    %c0_4 = arith.constant 0 : index
    %c0_5 = arith.constant 0 : index
    %5 = vector.load %arg3[%c0_4, %c0_5] : memref<32x1xf32, #tpu.memory_space<vmem>>, vector<32x1xf32>
    %6 = vector.broadcast %5 : vector<32x1xf32> to vector<32x16xf32>
    %7 = arith.addf %4, %6 : vector<32x16xf32>
    %cst = arith.constant 0.000000e+00 : f32
    %8 = vector.broadcast %cst : f32 to vector<32x16xf32>
    %9 = arith.cmpf oge, %7, %8 : vector<32x16xf32>
    %cst_6 = arith.constant 2.000000e-01 : f32
    %10 = vector.broadcast %cst_6 : f32 to vector<32x16xf32>
    %11 = arith.mulf %10, %7 : vector<32x16xf32>
    %12 = arith.select %9, %7, %11 : vector<32x16xi1>, vector<32x16xf32>
    %13 = tpu.iota {dimensions = array<i32: 1>} : vector<1x16xi32>
    %c4_i32 = arith.constant 4 : i32
    %c0_i32 = arith.constant 0 : i32
    %14 = arith.cmpi eq, %c4_i32, %c0_i32 : i32
    %c1_i32 = arith.constant 1 : i32
    %15 = arith.select %14, %c1_i32, %c4_i32 : i32
    %16 = vector.broadcast %15 : i32 to vector<1x16xi32>
    %17 = arith.remsi %13, %16 : vector<1x16xi32>
    %c0_i32_7 = arith.constant 0 : i32
    %18 = vector.broadcast %c0_i32_7 : i32 to vector<1x16xi32>
    %19 = arith.cmpi ne, %17, %18 : vector<1x16xi32>
    %c0_i32_8 = arith.constant 0 : i32
    %20 = vector.broadcast %c0_i32_8 : i32 to vector<1x16xi32>
    %21 = arith.cmpi slt, %17, %20 : vector<1x16xi32>
    %c0_i32_9 = arith.constant 0 : i32
    %22 = arith.cmpi slt, %15, %c0_i32_9 : i32
    %23 = vector.broadcast %22 : i1 to vector<1x16xi1>
    %24 = vector.broadcast %23 : vector<1x16xi1> to vector<1x16xi1>
    %25 = arith.xori %21, %24 : vector<1x16xi1>
    %26 = arith.andi %25, %19 : vector<1x16xi1>
    %27 = vector.broadcast %15 : i32 to vector<1x16xi32>
    %28 = arith.addi %17, %27 : vector<1x16xi32>
    %29 = arith.select %26, %28, %17 : vector<1x16xi1>, vector<1x16xi32>
    %c-1_i32 = arith.constant -1 : i32
    %30 = vector.broadcast %c-1_i32 : i32 to vector<1x16xi32>
    %31 = arith.addi %29, %30 : vector<1x16xi32>
    %c0_i32_10 = arith.constant 0 : i32
    %32 = vector.broadcast %c0_i32_10 : i32 to vector<1x16xi32>
    %33 = arith.cmpi sge, %31, %32 : vector<1x16xi32>
    %c-1_i32_11 = arith.constant -1 : i32
    %34 = vector.broadcast %c-1_i32_11 : i32 to vector<1x16xi32>
    %35 = arith.addi %29, %34 : vector<1x16xi32>
    %c4_i32_12 = arith.constant 4 : i32
    %36 = vector.broadcast %c4_i32_12 : i32 to vector<1x16xi32>
    %37 = arith.cmpi slt, %35, %36 : vector<1x16xi32>
    %38 = arith.andi %33, %37 : vector<1x16xi1>
    %c1_i32_13 = arith.constant 1 : i32
    %39 = vector.broadcast %c1_i32_13 : i32 to vector<1x16xi32>
    %40 = arith.addi %29, %39 : vector<1x16xi32>
    %c0_i32_14 = arith.constant 0 : i32
    %41 = vector.broadcast %c0_i32_14 : i32 to vector<1x16xi32>
    %42 = arith.cmpi sge, %40, %41 : vector<1x16xi32>
    %c1_i32_15 = arith.constant 1 : i32
    %43 = vector.broadcast %c1_i32_15 : i32 to vector<1x16xi32>
    %44 = arith.addi %29, %43 : vector<1x16xi32>
    %c4_i32_16 = arith.constant 4 : i32
    %45 = vector.broadcast %c4_i32_16 : i32 to vector<1x16xi32>
    %46 = arith.cmpi slt, %44, %45 : vector<1x16xi32>
    %47 = arith.andi %42, %46 : vector<1x16xi1>
    %48 = arith.truncf %12 : vector<32x16xf32> to vector<32x16xbf16>
    %cst_17 = arith.constant 0.000000e+00 : bf16
    %49 = vector.broadcast %cst_17 : bf16 to vector<32x5xbf16>
    %50 = tpu.concatenate %49, %48, %49 in 1 : vector<32x5xbf16>, vector<32x16xbf16>, vector<32x5xbf16> -> vector<32x26xbf16>
    %51 = vector.extract_strided_slice %50 {offsets = [0, 0], sizes = [32, 16], strides = [1, 1]} : vector<32x26xbf16> to vector<32x16xbf16>
    %cst_18 = arith.constant 0.000000e+00 : bf16
    %52 = vector.broadcast %cst_18 : bf16 to vector<32x16xbf16>
    %53 = vector.shape_cast %38 : vector<1x16xi1> to vector<1x16xi1>
    %54 = vector.broadcast %53 : vector<1x16xi1> to vector<32x16xi1>
    %55 = arith.select %54, %51, %52 : vector<32x16xi1>, vector<32x16xbf16>
    %56 = vector.extract_strided_slice %50 {offsets = [0, 1], sizes = [32, 16], strides = [1, 1]} : vector<32x26xbf16> to vector<32x16xbf16>
    %57 = vector.extract_strided_slice %50 {offsets = [0, 2], sizes = [32, 16], strides = [1, 1]} : vector<32x26xbf16> to vector<32x16xbf16>
    %cst_19 = arith.constant 0.000000e+00 : bf16
    %58 = vector.broadcast %cst_19 : bf16 to vector<32x16xbf16>
    %59 = vector.shape_cast %47 : vector<1x16xi1> to vector<1x16xi1>
    %60 = vector.broadcast %59 : vector<1x16xi1> to vector<32x16xi1>
    %61 = arith.select %60, %57, %58 : vector<32x16xi1>, vector<32x16xbf16>
    %62 = vector.extract_strided_slice %50 {offsets = [0, 4], sizes = [32, 16], strides = [1, 1]} : vector<32x26xbf16> to vector<32x16xbf16>
    %cst_20 = arith.constant 0.000000e+00 : bf16
    %63 = vector.broadcast %cst_20 : bf16 to vector<32x16xbf16>
    %64 = vector.shape_cast %38 : vector<1x16xi1> to vector<1x16xi1>
    %65 = vector.broadcast %64 : vector<1x16xi1> to vector<32x16xi1>
    %66 = arith.select %65, %62, %63 : vector<32x16xi1>, vector<32x16xbf16>
    %67 = vector.extract_strided_slice %50 {offsets = [0, 5], sizes = [32, 16], strides = [1, 1]} : vector<32x26xbf16> to vector<32x16xbf16>
    %68 = vector.extract_strided_slice %50 {offsets = [0, 6], sizes = [32, 16], strides = [1, 1]} : vector<32x26xbf16> to vector<32x16xbf16>
    %cst_21 = arith.constant 0.000000e+00 : bf16
    %69 = vector.broadcast %cst_21 : bf16 to vector<32x16xbf16>
    %70 = vector.shape_cast %47 : vector<1x16xi1> to vector<1x16xi1>
    %71 = vector.broadcast %70 : vector<1x16xi1> to vector<32x16xi1>
    %72 = arith.select %71, %68, %69 : vector<32x16xi1>, vector<32x16xbf16>
    %73 = vector.extract_strided_slice %50 {offsets = [0, 8], sizes = [32, 16], strides = [1, 1]} : vector<32x26xbf16> to vector<32x16xbf16>
    %cst_22 = arith.constant 0.000000e+00 : bf16
    %74 = vector.broadcast %cst_22 : bf16 to vector<32x16xbf16>
    %75 = vector.shape_cast %38 : vector<1x16xi1> to vector<1x16xi1>
    %76 = vector.broadcast %75 : vector<1x16xi1> to vector<32x16xi1>
    %77 = arith.select %76, %73, %74 : vector<32x16xi1>, vector<32x16xbf16>
    %78 = vector.extract_strided_slice %50 {offsets = [0, 9], sizes = [32, 16], strides = [1, 1]} : vector<32x26xbf16> to vector<32x16xbf16>
    %79 = vector.extract_strided_slice %50 {offsets = [0, 10], sizes = [32, 16], strides = [1, 1]} : vector<32x26xbf16> to vector<32x16xbf16>
    %cst_23 = arith.constant 0.000000e+00 : bf16
    %80 = vector.broadcast %cst_23 : bf16 to vector<32x16xbf16>
    %81 = vector.shape_cast %47 : vector<1x16xi1> to vector<1x16xi1>
    %82 = vector.broadcast %81 : vector<1x16xi1> to vector<32x16xi1>
    %83 = arith.select %82, %79, %80 : vector<32x16xi1>, vector<32x16xbf16>
    %84 = tpu.concatenate %55, %56, %61, %66, %67, %72, %77, %78, %83 in 0 : vector<32x16xbf16>, vector<32x16xbf16>, vector<32x16xbf16>, vector<32x16xbf16>, vector<32x16xbf16>, vector<32x16xbf16>, vector<32x16xbf16>, vector<32x16xbf16>, vector<32x16xbf16> -> vector<288x16xbf16>
    %c0_24 = arith.constant 0 : index
    %c0_25 = arith.constant 0 : index
    %85 = vector.load %arg4[%c0_24, %c0_25] : memref<32x288xbf16, #tpu.memory_space<vmem>>, vector<32x288xbf16>
    %cst_26 = arith.constant dense<0.000000e+00> : vector<32x16xf32>
    %86 = tpu.matmul %85, %84, %cst_26 {dimension_numbers = #tpu.dot_dimension_numbers<[1], [0], [0], [1], [0, 0, 1, 1], [], []>} : vector<32x288xbf16>, vector<288x16xbf16>, vector<32x16xf32> -> vector<32x16xf32>
    %c0_27 = arith.constant 0 : index
    %c0_28 = arith.constant 0 : index
    %87 = vector.load %arg5[%c0_27, %c0_28] : memref<32x1xf32, #tpu.memory_space<vmem>>, vector<32x1xf32>
    %88 = vector.broadcast %87 : vector<32x1xf32> to vector<32x16xf32>
    %89 = arith.addf %86, %88 : vector<32x16xf32>
    %c0_29 = arith.constant 0 : index
    %c0_30 = arith.constant 0 : index
    %c0_31 = arith.constant 0 : index
    %90 = vector.load %arg6[%c0_29, %c0_30, %c0_31] : memref<1x32x16xf32, #tpu.memory_space<vmem>>, vector<1x32x16xf32>
    %91 = vector.shape_cast %90 : vector<1x32x16xf32> to vector<32x16xf32>
    %92 = arith.addf %89, %91 : vector<32x16xf32>
    %c0_32 = arith.constant 0 : index
    %c0_33 = arith.constant 0 : index
    %c0_34 = arith.constant 0 : index
    %93 = vector.load %arg7[%c0_32, %c0_33, %c0_34] : memref<1x32x16xf32, #tpu.memory_space<vmem>>, vector<1x32x16xf32>
    %94 = vector.shape_cast %93 : vector<1x32x16xf32> to vector<32x16xf32>
    %95 = vector.shape_cast %92 : vector<32x16xf32> to vector<1x32x16xf32>
    tpu.vector_store %arg7[%c0_32, %c0_33, %c0_34], %95 {strides = array<i32>} : memref<1x32x16xf32, #tpu.memory_space<vmem>>, vector<1x32x16xf32>,
    %cst_35 = arith.constant dense<0.000000e+00> : vector<32xf32>
    %96 = vector.multi_reduction <add>, %92, %cst_35 [1] : vector<32x16xf32> to vector<32xf32>
    %97 = vector.shape_cast %96 : vector<32xf32> to vector<32x1xf32>
    %98 = arith.mulf %92, %92 : vector<32x16xf32>
    %cst_36 = arith.constant dense<0.000000e+00> : vector<32xf32>
    %99 = vector.multi_reduction <add>, %98, %cst_36 [1] : vector<32x16xf32> to vector<32xf32>
    %100 = vector.shape_cast %99 : vector<32xf32> to vector<32x1xf32>
    %101 = tpu.concatenate %97, %100 in 1 : vector<32x1xf32>, vector<32x1xf32> -> vector<32x2xf32>
    %c0_37 = arith.constant 0 : index
    %c0_38 = arith.constant 0 : index
    %c0_39 = arith.constant 0 : index
    %102 = vector.load %arg8[%c0_37, %c0_38, %c0_39] : memref<1x32x2xf32, #tpu.memory_space<vmem>>, vector<1x32x2xf32>
    %103 = vector.shape_cast %102 : vector<1x32x2xf32> to vector<32x2xf32>
    %104 = vector.shape_cast %101 : vector<32x2xf32> to vector<1x32x2xf32>
    tpu.vector_store %arg8[%c0_37, %c0_38, %c0_39], %104 {strides = array<i32>} : memref<1x32x2xf32, #tpu.memory_space<vmem>>, vector<1x32x2xf32>,
    return
  }
  func.func @transform_0(%arg0: i32) -> (i32, i32, i32) {
    %c0_i32 = arith.constant 0 : i32
    %c0_i32_0 = arith.constant 0 : i32
    %c0_i32_1 = arith.constant 0 : i32
    return %arg0, %c0_i32, %c0_i32_0 : i32, i32, i32
  }
  func.func @transform_1(%arg0: i32) -> (i32, i32) {
    %c0_i32 = arith.constant 0 : i32
    %c0_i32_0 = arith.constant 0 : i32
    %c0_i32_1 = arith.constant 0 : i32
    return %c0_i32, %c0_i32_0 : i32, i32
  }
  func.func @transform_2(%arg0: i32) -> (i32, i32) {
    %c0_i32 = arith.constant 0 : i32
    %c0_i32_0 = arith.constant 0 : i32
    %c0_i32_1 = arith.constant 0 : i32
    return %c0_i32, %c0_i32_0 : i32, i32
  }
  func.func @transform_3(%arg0: i32) -> (i32, i32) {
    %c0_i32 = arith.constant 0 : i32
    %c0_i32_0 = arith.constant 0 : i32
    %c0_i32_1 = arith.constant 0 : i32
    return %c0_i32, %c0_i32_0 : i32, i32
  }
  func.func @transform_4(%arg0: i32) -> (i32, i32) {
    %c0_i32 = arith.constant 0 : i32
    %c0_i32_0 = arith.constant 0 : i32
    %c0_i32_1 = arith.constant 0 : i32
    return %c0_i32, %c0_i32_0 : i32, i32
  }
  func.func @transform_5(%arg0: i32) -> (i32, i32, i32) {
    %c0_i32 = arith.constant 0 : i32
    %c0_i32_0 = arith.constant 0 : i32
    %c0_i32_1 = arith.constant 0 : i32
    return %arg0, %c0_i32, %c0_i32_0 : i32, i32, i32
  }
  func.func @transform_6(%arg0: i32) -> (i32, i32, i32) {
    %c0_i32 = arith.constant 0 : i32
    %c0_i32_0 = arith.constant 0 : i32
    %c0_i32_1 = arith.constant 0 : i32
    return %arg0, %c0_i32, %c0_i32_0 : i32, i32, i32
  }
  func.func @transform_7(%arg0: i32) -> (i32, i32, i32) {
    %c0_i32 = arith.constant 0 : i32
    %c0_i32_0 = arith.constant 0 : i32
    %c0_i32_1 = arith.constant 0 : i32
    return %arg0, %c0_i32, %c0_i32_0 : i32, i32, i32
  }
}

module attributes {stable_mosaic.version = 11 : i64} {
  func.func @kernel(%arg0: i32, %arg1: memref<1x32x16xf32, #tpu.memory_space<vmem>>, %arg2: memref<32x1xf32, #tpu.memory_space<vmem>>, %arg3: memref<32x1xf32, #tpu.memory_space<vmem>>, %arg4: memref<32x288xbf16, #tpu.memory_space<vmem>>, %arg5: memref<32x1xf32, #tpu.memory_space<vmem>>, %arg6: memref<1x32x16xf32, #tpu.memory_space<vmem>>, %arg7: memref<1x32x16xf32, #tpu.memory_space<vmem>>, %arg8: memref<1x32x2xf32, #tpu.memory_space<vmem>>) attributes {dimension_semantics = [#tpu.dimension_semantics<parallel>], iteration_bounds = array<i64: 2>, scalar_prefetch = 0 : i64, scratch_operands = 0 : i64, tpu.core_type = #tpu.core_type<tc>, window_params = [{transform_indices = @transform_0, window_bounds = array<i64: 1, 32, 16>}, {pipeline_mode = #tpu.pipeline_mode<synchronous>, transform_indices = @transform_1, window_bounds = array<i64: 32, 1>}, {pipeline_mode = #tpu.pipeline_mode<synchronous>, transform_indices = @transform_2, window_bounds = array<i64: 32, 1>}, {pipeline_mode = #tpu.pipeline_mode<synchronous>, transform_indices = @transform_3, window_bounds = array<i64: 32, 288>}, {pipeline_mode = #tpu.pipeline_mode<synchronous>, transform_indices = @transform_4, window_bounds = array<i64: 32, 1>}, {transform_indices = @transform_5, window_bounds = array<i64: 1, 32, 16>}, {transform_indices = @transform_6, window_bounds = array<i64: 1, 32, 16>}, {transform_indices = @transform_7, window_bounds = array<i64: 1, 32, 2>}]} {
    %c0 = arith.constant 0 : index
    %c0_0 = arith.constant 0 : index
    %c0_1 = arith.constant 0 : index
    %0 = vector.load %arg1[%c0, %c0_0, %c0_1] : memref<1x32x16xf32, #tpu.memory_space<vmem>>, vector<1x32x16xf32>
    %1 = vector.shape_cast %0 : vector<1x32x16xf32> to vector<32x16xf32>
    %c0_2 = arith.constant 0 : index
    %c0_3 = arith.constant 0 : index
    %2 = vector.load %arg2[%c0_2, %c0_3] : memref<32x1xf32, #tpu.memory_space<vmem>>, vector<32x1xf32>
    %3 = vector.broadcast %2 : vector<32x1xf32> to vector<32x16xf32>
    %4 = arith.mulf %1, %3 : vector<32x16xf32>
    %c0_4 = arith.constant 0 : index
    %c0_5 = arith.constant 0 : index
    %5 = vector.load %arg3[%c0_4, %c0_5] : memref<32x1xf32, #tpu.memory_space<vmem>>, vector<32x1xf32>
    %6 = vector.broadcast %5 : vector<32x1xf32> to vector<32x16xf32>
    %7 = arith.addf %4, %6 : vector<32x16xf32>
    %cst = arith.constant 0.000000e+00 : f32
    %8 = vector.broadcast %cst : f32 to vector<32x16xf32>
    %9 = arith.cmpf oge, %7, %8 : vector<32x16xf32>
    %cst_6 = arith.constant 2.000000e-01 : f32
    %10 = vector.broadcast %cst_6 : f32 to vector<32x16xf32>
    %11 = arith.mulf %10, %7 : vector<32x16xf32>
    %12 = arith.select %9, %7, %11 : vector<32x16xi1>, vector<32x16xf32>
    %13 = tpu.iota {dimensions = array<i32: 1>} : vector<1x16xi32>
    %c4_i32 = arith.constant 4 : i32
    %c0_i32 = arith.constant 0 : i32
    %14 = arith.cmpi eq, %c4_i32, %c0_i32 : i32
    %c1_i32 = arith.constant 1 : i32
    %15 = arith.select %14, %c1_i32, %c4_i32 : i32
    %16 = vector.broadcast %15 : i32 to vector<1x16xi32>
    %17 = arith.remsi %13, %16 : vector<1x16xi32>
    %c0_i32_7 = arith.constant 0 : i32
    %18 = vector.broadcast %c0_i32_7 : i32 to vector<1x16xi32>
    %19 = arith.cmpi ne, %17, %18 : vector<1x16xi32>
    %c0_i32_8 = arith.constant 0 : i32
    %20 = vector.broadcast %c0_i32_8 : i32 to vector<1x16xi32>
    %21 = arith.cmpi slt, %17, %20 : vector<1x16xi32>
    %c0_i32_9 = arith.constant 0 : i32
    %22 = arith.cmpi slt, %15, %c0_i32_9 : i32
    %23 = vector.broadcast %22 : i1 to vector<1x16xi1>
    %24 = vector.broadcast %23 : vector<1x16xi1> to vector<1x16xi1>
    %25 = arith.xori %21, %24 : vector<1x16xi1>
    %26 = arith.andi %25, %19 : vector<1x16xi1>
    %27 = vector.broadcast %15 : i32 to vector<1x16xi32>
    %28 = arith.addi %17, %27 : vector<1x16xi32>
    %29 = arith.select %26, %28, %17 : vector<1x16xi1>, vector<1x16xi32>
    %c-1_i32 = arith.constant -1 : i32
    %30 = vector.broadcast %c-1_i32 : i32 to vector<1x16xi32>
    %31 = arith.addi %29, %30 : vector<1x16xi32>
    %c0_i32_10 = arith.constant 0 : i32
    %32 = vector.broadcast %c0_i32_10 : i32 to vector<1x16xi32>
    %33 = arith.cmpi sge, %31, %32 : vector<1x16xi32>
    %c-1_i32_11 = arith.constant -1 : i32
    %34 = vector.broadcast %c-1_i32_11 : i32 to vector<1x16xi32>
    %35 = arith.addi %29, %34 : vector<1x16xi32>
    %c4_i32_12 = arith.constant 4 : i32
    %36 = vector.broadcast %c4_i32_12 : i32 to vector<1x16xi32>
    %37 = arith.cmpi slt, %35, %36 : vector<1x16xi32>
    %38 = arith.andi %33, %37 : vector<1x16xi1>
    %c1_i32_13 = arith.constant 1 : i32
    %39 = vector.broadcast %c1_i32_13 : i32 to vector<1x16xi32>
    %40 = arith.addi %29, %39 : vector<1x16xi32>
    %c0_i32_14 = arith.constant 0 : i32
    %41 = vector.broadcast %c0_i32_14 : i32 to vector<1x16xi32>
    %42 = arith.cmpi sge, %40, %41 : vector<1x16xi32>
    %c1_i32_15 = arith.constant 1 : i32
    %43 = vector.broadcast %c1_i32_15 : i32 to vector<1x16xi32>
    %44 = arith.addi %29, %43 : vector<1x16xi32>
    %c4_i32_16 = arith.constant 4 : i32
    %45 = vector.broadcast %c4_i32_16 : i32 to vector<1x16xi32>
    %46 = arith.cmpi slt, %44, %45 : vector<1x16xi32>
    %47 = arith.andi %42, %46 : vector<1x16xi1>
    %48 = arith.truncf %12 : vector<32x16xf32> to vector<32x16xbf16>
    %cst_17 = arith.constant 0.000000e+00 : bf16
    %49 = vector.broadcast %cst_17 : bf16 to vector<32x5xbf16>
    %50 = tpu.concatenate %49, %48, %49 in 1 : vector<32x5xbf16>, vector<32x16xbf16>, vector<32x5xbf16> -> vector<32x26xbf16>
    %51 = vector.extract_strided_slice %50 {offsets = [0, 0], sizes = [32, 16], strides = [1, 1]} : vector<32x26xbf16> to vector<32x16xbf16>
    %cst_18 = arith.constant 0.000000e+00 : bf16
    %52 = vector.broadcast %cst_18 : bf16 to vector<32x16xbf16>
    %53 = vector.shape_cast %38 : vector<1x16xi1> to vector<1x16xi1>
    %54 = vector.broadcast %53 : vector<1x16xi1> to vector<32x16xi1>
    %55 = arith.select %54, %51, %52 : vector<32x16xi1>, vector<32x16xbf16>
    %56 = vector.extract_strided_slice %50 {offsets = [0, 1], sizes = [32, 16], strides = [1, 1]} : vector<32x26xbf16> to vector<32x16xbf16>
    %57 = vector.extract_strided_slice %50 {offsets = [0, 2], sizes = [32, 16], strides = [1, 1]} : vector<32x26xbf16> to vector<32x16xbf16>
    %cst_19 = arith.constant 0.000000e+00 : bf16
    %58 = vector.broadcast %cst_19 : bf16 to vector<32x16xbf16>
    %59 = vector.shape_cast %47 : vector<1x16xi1> to vector<1x16xi1>
    %60 = vector.broadcast %59 : vector<1x16xi1> to vector<32x16xi1>
    %61 = arith.select %60, %57, %58 : vector<32x16xi1>, vector<32x16xbf16>
    %62 = vector.extract_strided_slice %50 {offsets = [0, 4], sizes = [32, 16], strides = [1, 1]} : vector<32x26xbf16> to vector<32x16xbf16>
    %cst_20 = arith.constant 0.000000e+00 : bf16
    %63 = vector.broadcast %cst_20 : bf16 to vector<32x16xbf16>
    %64 = vector.shape_cast %38 : vector<1x16xi1> to vector<1x16xi1>
    %65 = vector.broadcast %64 : vector<1x16xi1> to vector<32x16xi1>
    %66 = arith.select %65, %62, %63 : vector<32x16xi1>, vector<32x16xbf16>
    %67 = vector.extract_strided_slice %50 {offsets = [0, 5], sizes = [32, 16], strides = [1, 1]} : vector<32x26xbf16> to vector<32x16xbf16>
    %68 = vector.extract_strided_slice %50 {offsets = [0, 6], sizes = [32, 16], strides = [1, 1]} : vector<32x26xbf16> to vector<32x16xbf16>
    %cst_21 = arith.constant 0.000000e+00 : bf16
    %69 = vector.broadcast %cst_21 : bf16 to vector<32x16xbf16>
    %70 = vector.shape_cast %47 : vector<1x16xi1> to vector<1x16xi1>
    %71 = vector.broadcast %70 : vector<1x16xi1> to vector<32x16xi1>
    %72 = arith.select %71, %68, %69 : vector<32x16xi1>, vector<32x16xbf16>
    %73 = vector.extract_strided_slice %50 {offsets = [0, 8], sizes = [32, 16], strides = [1, 1]} : vector<32x26xbf16> to vector<32x16xbf16>
    %cst_22 = arith.constant 0.000000e+00 : bf16
    %74 = vector.broadcast %cst_22 : bf16 to vector<32x16xbf16>
    %75 = vector.shape_cast %38 : vector<1x16xi1> to vector<1x16xi1>
    %76 = vector.broadcast %75 : vector<1x16xi1> to vector<32x16xi1>
    %77 = arith.select %76, %73, %74 : vector<32x16xi1>, vector<32x16xbf16>
    %78 = vector.extract_strided_slice %50 {offsets = [0, 9], sizes = [32, 16], strides = [1, 1]} : vector<32x26xbf16> to vector<32x16xbf16>
    %79 = vector.extract_strided_slice %50 {offsets = [0, 10], sizes = [32, 16], strides = [1, 1]} : vector<32x26xbf16> to vector<32x16xbf16>
    %cst_23 = arith.constant 0.000000e+00 : bf16
    %80 = vector.broadcast %cst_23 : bf16 to vector<32x16xbf16>
    %81 = vector.shape_cast %47 : vector<1x16xi1> to vector<1x16xi1>
    %82 = vector.broadcast %81 : vector<1x16xi1> to vector<32x16xi1>
    %83 = arith.select %82, %79, %80 : vector<32x16xi1>, vector<32x16xbf16>
    %84 = tpu.concatenate %55, %56, %61, %66, %67, %72, %77, %78, %83 in 0 : vector<32x16xbf16>, vector<32x16xbf16>, vector<32x16xbf16>, vector<32x16xbf16>, vector<32x16xbf16>, vector<32x16xbf16>, vector<32x16xbf16>, vector<32x16xbf16>, vector<32x16xbf16> -> vector<288x16xbf16>
    %c0_24 = arith.constant 0 : index
    %c0_25 = arith.constant 0 : index
    %85 = vector.load %arg4[%c0_24, %c0_25] : memref<32x288xbf16, #tpu.memory_space<vmem>>, vector<32x288xbf16>
    %cst_26 = arith.constant dense<0.000000e+00> : vector<32x16xf32>
    %86 = tpu.matmul %85, %84, %cst_26 {dimension_numbers = #tpu.dot_dimension_numbers<[1], [0], [0], [1], [0, 0, 1, 1], [], []>} : vector<32x288xbf16>, vector<288x16xbf16>, vector<32x16xf32> -> vector<32x16xf32>
    %c0_27 = arith.constant 0 : index
    %c0_28 = arith.constant 0 : index
    %87 = vector.load %arg5[%c0_27, %c0_28] : memref<32x1xf32, #tpu.memory_space<vmem>>, vector<32x1xf32>
    %88 = vector.broadcast %87 : vector<32x1xf32> to vector<32x16xf32>
    %89 = arith.addf %86, %88 : vector<32x16xf32>
    %c0_29 = arith.constant 0 : index
    %c0_30 = arith.constant 0 : index
    %c0_31 = arith.constant 0 : index
    %90 = vector.load %arg6[%c0_29, %c0_30, %c0_31] : memref<1x32x16xf32, #tpu.memory_space<vmem>>, vector<1x32x16xf32>
    %91 = vector.shape_cast %90 : vector<1x32x16xf32> to vector<32x16xf32>
    %92 = arith.addf %89, %91 : vector<32x16xf32>
    %c0_32 = arith.constant 0 : index
    %c0_33 = arith.constant 0 : index
    %c0_34 = arith.constant 0 : index
    %93 = vector.load %arg7[%c0_32, %c0_33, %c0_34] : memref<1x32x16xf32, #tpu.memory_space<vmem>>, vector<1x32x16xf32>
    %94 = vector.shape_cast %93 : vector<1x32x16xf32> to vector<32x16xf32>
    %95 = vector.shape_cast %92 : vector<32x16xf32> to vector<1x32x16xf32>
    tpu.vector_store %arg7[%c0_32, %c0_33, %c0_34], %95 {strides = array<i32>} : memref<1x32x16xf32, #tpu.memory_space<vmem>>, vector<1x32x16xf32>,
    %cst_35 = arith.constant dense<0.000000e+00> : vector<32xf32>
    %96 = vector.multi_reduction <add>, %92, %cst_35 [1] : vector<32x16xf32> to vector<32xf32>
    %97 = vector.shape_cast %96 : vector<32xf32> to vector<32x1xf32>
    %98 = arith.mulf %92, %92 : vector<32x16xf32>
    %cst_36 = arith.constant dense<0.000000e+00> : vector<32xf32>
    %99 = vector.multi_reduction <add>, %98, %cst_36 [1] : vector<32x16xf32> to vector<32xf32>
    %100 = vector.shape_cast %99 : vector<32xf32> to vector<32x1xf32>
    %101 = tpu.concatenate %97, %100 in 1 : vector<32x1xf32>, vector<32x1xf32> -> vector<32x2xf32>
    %c0_37 = arith.constant 0 : index
    %c0_38 = arith.constant 0 : index
    %c0_39 = arith.constant 0 : index
    %102 = vector.load %arg8[%c0_37, %c0_38, %c0_39] : memref<1x32x2xf32, #tpu.memory_space<vmem>>, vector<1x32x2xf32>
    %103 = vector.shape_cast %102 : vector<1x32x2xf32> to vector<32x2xf32>
    %104 = vector.shape_cast %101 : vector<32x2xf32> to vector<1x32x2xf32>
    tpu.vector_store %arg8[%c0_37, %c0_38, %c0_39], %104 {strides = array<i32>} : memref<1x32x2xf32, #tpu.memory_space<vmem>>, vector<1x32x2xf32>,
    return
  }
  func.func @transform_0(%arg0: i32) -> (i32, i32, i32) {
    %c0_i32 = arith.constant 0 : i32
    %c0_i32_0 = arith.constant 0 : i32
    %c0_i32_1 = arith.constant 0 : i32
    return %arg0, %c0_i32, %c0_i32_0 : i32, i32, i32
  }
  func.func @transform_1(%arg0: i32) -> (i32, i32) {
    %c0_i32 = arith.constant 0 : i32
    %c0_i32_0 = arith.constant 0 : i32
    %c0_i32_1 = arith.constant 0 : i32
    return %c0_i32, %c0_i32_0 : i32, i32
  }
  func.func @transform_2(%arg0: i32) -> (i32, i32) {
    %c0_i32 = arith.constant 0 : i32
    %c0_i32_0 = arith.constant 0 : i32
    %c0_i32_1 = arith.constant 0 : i32
    return %c0_i32, %c0_i32_0 : i32, i32
  }
  func.func @transform_3(%arg0: i32) -> (i32, i32) {
    %c0_i32 = arith.constant 0 : i32
    %c0_i32_0 = arith.constant 0 : i32
    %c0_i32_1 = arith.constant 0 : i32
    return %c0_i32, %c0_i32_0 : i32, i32
  }
  func.func @transform_4(%arg0: i32) -> (i32, i32) {
    %c0_i32 = arith.constant 0 : i32
    %c0_i32_0 = arith.constant 0 : i32
    %c0_i32_1 = arith.constant 0 : i32
    return %c0_i32, %c0_i32_0 : i32, i32
  }
  func.func @transform_5(%arg0: i32) -> (i32, i32, i32) {
    %c0_i32 = arith.constant 0 : i32
    %c0_i32_0 = arith.constant 0 : i32
    %c0_i32_1 = arith.constant 0 : i32
    return %arg0, %c0_i32, %c0_i32_0 : i32, i32, i32
  }
  func.func @transform_6(%arg0: i32) -> (i32, i32, i32) {
    %c0_i32 = arith.constant 0 : i32
    %c0_i32_0 = arith.constant 0 : i32
    %c0_i32_1 = arith.constant 0 : i32
    return %arg0, %c0_i32, %c0_i32_0 : i32, i32, i32
  }
  func.func @transform_7(%arg0: i32) -> (i32, i32, i32) {
    %c0_i32 = arith.constant 0 : i32
    %c0_i32_0 = arith.constant 0 : i32
    %c0_i32_1 = arith.constant 0 : i32
    return %arg0, %c0_i32, %c0_i32_0 : i32, i32, i32
  }
}

module attributes {stable_mosaic.version = 11 : i64} {
  func.func @kernel(%arg0: i32, %arg1: memref<1x32x16xf32, #tpu.memory_space<vmem>>, %arg2: memref<64x288xbf16, #tpu.memory_space<vmem>>, %arg3: memref<64x1xf32, #tpu.memory_space<vmem>>, %arg4: memref<1x64x16xf32, #tpu.memory_space<vmem>>, %arg5: memref<1x64x2xf32, #tpu.memory_space<vmem>>) attributes {dimension_semantics = [#tpu.dimension_semantics<parallel>], iteration_bounds = array<i64: 2>, scalar_prefetch = 0 : i64, scratch_operands = 0 : i64, tpu.core_type = #tpu.core_type<tc>, window_params = [{transform_indices = @transform_0, window_bounds = array<i64: 1, 32, 16>}, {pipeline_mode = #tpu.pipeline_mode<synchronous>, transform_indices = @transform_1, window_bounds = array<i64: 64, 288>}, {pipeline_mode = #tpu.pipeline_mode<synchronous>, transform_indices = @transform_2, window_bounds = array<i64: 64, 1>}, {transform_indices = @transform_3, window_bounds = array<i64: 1, 64, 16>}, {transform_indices = @transform_4, window_bounds = array<i64: 1, 64, 2>}]} {
    %c0 = arith.constant 0 : index
    %c0_0 = arith.constant 0 : index
    %c0_1 = arith.constant 0 : index
    %0 = vector.load %arg1[%c0, %c0_0, %c0_1] : memref<1x32x16xf32, #tpu.memory_space<vmem>>, vector<1x32x16xf32>
    %1 = vector.shape_cast %0 : vector<1x32x16xf32> to vector<32x16xf32>
    %2 = tpu.iota {dimensions = array<i32: 1>} : vector<1x16xi32>
    %c4_i32 = arith.constant 4 : i32
    %c0_i32 = arith.constant 0 : i32
    %3 = arith.cmpi eq, %c4_i32, %c0_i32 : i32
    %c1_i32 = arith.constant 1 : i32
    %4 = arith.select %3, %c1_i32, %c4_i32 : i32
    %5 = vector.broadcast %4 : i32 to vector<1x16xi32>
    %6 = arith.remsi %2, %5 : vector<1x16xi32>
    %c0_i32_2 = arith.constant 0 : i32
    %7 = vector.broadcast %c0_i32_2 : i32 to vector<1x16xi32>
    %8 = arith.cmpi ne, %6, %7 : vector<1x16xi32>
    %c0_i32_3 = arith.constant 0 : i32
    %9 = vector.broadcast %c0_i32_3 : i32 to vector<1x16xi32>
    %10 = arith.cmpi slt, %6, %9 : vector<1x16xi32>
    %c0_i32_4 = arith.constant 0 : i32
    %11 = arith.cmpi slt, %4, %c0_i32_4 : i32
    %12 = vector.broadcast %11 : i1 to vector<1x16xi1>
    %13 = vector.broadcast %12 : vector<1x16xi1> to vector<1x16xi1>
    %14 = arith.xori %10, %13 : vector<1x16xi1>
    %15 = arith.andi %14, %8 : vector<1x16xi1>
    %16 = vector.broadcast %4 : i32 to vector<1x16xi32>
    %17 = arith.addi %6, %16 : vector<1x16xi32>
    %18 = arith.select %15, %17, %6 : vector<1x16xi1>, vector<1x16xi32>
    %c-1_i32 = arith.constant -1 : i32
    %19 = vector.broadcast %c-1_i32 : i32 to vector<1x16xi32>
    %20 = arith.addi %18, %19 : vector<1x16xi32>
    %c0_i32_5 = arith.constant 0 : i32
    %21 = vector.broadcast %c0_i32_5 : i32 to vector<1x16xi32>
    %22 = arith.cmpi sge, %20, %21 : vector<1x16xi32>
    %c-1_i32_6 = arith.constant -1 : i32
    %23 = vector.broadcast %c-1_i32_6 : i32 to vector<1x16xi32>
    %24 = arith.addi %18, %23 : vector<1x16xi32>
    %c4_i32_7 = arith.constant 4 : i32
    %25 = vector.broadcast %c4_i32_7 : i32 to vector<1x16xi32>
    %26 = arith.cmpi slt, %24, %25 : vector<1x16xi32>
    %27 = arith.andi %22, %26 : vector<1x16xi1>
    %c1_i32_8 = arith.constant 1 : i32
    %28 = vector.broadcast %c1_i32_8 : i32 to vector<1x16xi32>
    %29 = arith.addi %18, %28 : vector<1x16xi32>
    %c0_i32_9 = arith.constant 0 : i32
    %30 = vector.broadcast %c0_i32_9 : i32 to vector<1x16xi32>
    %31 = arith.cmpi sge, %29, %30 : vector<1x16xi32>
    %c1_i32_10 = arith.constant 1 : i32
    %32 = vector.broadcast %c1_i32_10 : i32 to vector<1x16xi32>
    %33 = arith.addi %18, %32 : vector<1x16xi32>
    %c4_i32_11 = arith.constant 4 : i32
    %34 = vector.broadcast %c4_i32_11 : i32 to vector<1x16xi32>
    %35 = arith.cmpi slt, %33, %34 : vector<1x16xi32>
    %36 = arith.andi %31, %35 : vector<1x16xi1>
    %37 = arith.truncf %1 : vector<32x16xf32> to vector<32x16xbf16>
    %cst = arith.constant 0.000000e+00 : bf16
    %38 = vector.broadcast %cst : bf16 to vector<32x5xbf16>
    %39 = tpu.concatenate %38, %37, %38 in 1 : vector<32x5xbf16>, vector<32x16xbf16>, vector<32x5xbf16> -> vector<32x26xbf16>
    %40 = vector.extract_strided_slice %39 {offsets = [0, 0], sizes = [32, 16], strides = [1, 1]} : vector<32x26xbf16> to vector<32x16xbf16>
    %cst_12 = arith.constant 0.000000e+00 : bf16
    %41 = vector.broadcast %cst_12 : bf16 to vector<32x16xbf16>
    %42 = vector.shape_cast %27 : vector<1x16xi1> to vector<1x16xi1>
    %43 = vector.broadcast %42 : vector<1x16xi1> to vector<32x16xi1>
    %44 = arith.select %43, %40, %41 : vector<32x16xi1>, vector<32x16xbf16>
    %45 = vector.extract_strided_slice %39 {offsets = [0, 1], sizes = [32, 16], strides = [1, 1]} : vector<32x26xbf16> to vector<32x16xbf16>
    %46 = vector.extract_strided_slice %39 {offsets = [0, 2], sizes = [32, 16], strides = [1, 1]} : vector<32x26xbf16> to vector<32x16xbf16>
    %cst_13 = arith.constant 0.000000e+00 : bf16
    %47 = vector.broadcast %cst_13 : bf16 to vector<32x16xbf16>
    %48 = vector.shape_cast %36 : vector<1x16xi1> to vector<1x16xi1>
    %49 = vector.broadcast %48 : vector<1x16xi1> to vector<32x16xi1>
    %50 = arith.select %49, %46, %47 : vector<32x16xi1>, vector<32x16xbf16>
    %51 = vector.extract_strided_slice %39 {offsets = [0, 4], sizes = [32, 16], strides = [1, 1]} : vector<32x26xbf16> to vector<32x16xbf16>
    %cst_14 = arith.constant 0.000000e+00 : bf16
    %52 = vector.broadcast %cst_14 : bf16 to vector<32x16xbf16>
    %53 = vector.shape_cast %27 : vector<1x16xi1> to vector<1x16xi1>
    %54 = vector.broadcast %53 : vector<1x16xi1> to vector<32x16xi1>
    %55 = arith.select %54, %51, %52 : vector<32x16xi1>, vector<32x16xbf16>
    %56 = vector.extract_strided_slice %39 {offsets = [0, 5], sizes = [32, 16], strides = [1, 1]} : vector<32x26xbf16> to vector<32x16xbf16>
    %57 = vector.extract_strided_slice %39 {offsets = [0, 6], sizes = [32, 16], strides = [1, 1]} : vector<32x26xbf16> to vector<32x16xbf16>
    %cst_15 = arith.constant 0.000000e+00 : bf16
    %58 = vector.broadcast %cst_15 : bf16 to vector<32x16xbf16>
    %59 = vector.shape_cast %36 : vector<1x16xi1> to vector<1x16xi1>
    %60 = vector.broadcast %59 : vector<1x16xi1> to vector<32x16xi1>
    %61 = arith.select %60, %57, %58 : vector<32x16xi1>, vector<32x16xbf16>
    %62 = vector.extract_strided_slice %39 {offsets = [0, 8], sizes = [32, 16], strides = [1, 1]} : vector<32x26xbf16> to vector<32x16xbf16>
    %cst_16 = arith.constant 0.000000e+00 : bf16
    %63 = vector.broadcast %cst_16 : bf16 to vector<32x16xbf16>
    %64 = vector.shape_cast %27 : vector<1x16xi1> to vector<1x16xi1>
    %65 = vector.broadcast %64 : vector<1x16xi1> to vector<32x16xi1>
    %66 = arith.select %65, %62, %63 : vector<32x16xi1>, vector<32x16xbf16>
    %67 = vector.extract_strided_slice %39 {offsets = [0, 9], sizes = [32, 16], strides = [1, 1]} : vector<32x26xbf16> to vector<32x16xbf16>
    %68 = vector.extract_strided_slice %39 {offsets = [0, 10], sizes = [32, 16], strides = [1, 1]} : vector<32x26xbf16> to vector<32x16xbf16>
    %cst_17 = arith.constant 0.000000e+00 : bf16
    %69 = vector.broadcast %cst_17 : bf16 to vector<32x16xbf16>
    %70 = vector.shape_cast %36 : vector<1x16xi1> to vector<1x16xi1>
    %71 = vector.broadcast %70 : vector<1x16xi1> to vector<32x16xi1>
    %72 = arith.select %71, %68, %69 : vector<32x16xi1>, vector<32x16xbf16>
    %73 = tpu.concatenate %44, %45, %50, %55, %56, %61, %66, %67, %72 in 0 : vector<32x16xbf16>, vector<32x16xbf16>, vector<32x16xbf16>, vector<32x16xbf16>, vector<32x16xbf16>, vector<32x16xbf16>, vector<32x16xbf16>, vector<32x16xbf16>, vector<32x16xbf16> -> vector<288x16xbf16>
    %c0_18 = arith.constant 0 : index
    %c0_19 = arith.constant 0 : index
    %74 = vector.load %arg2[%c0_18, %c0_19] : memref<64x288xbf16, #tpu.memory_space<vmem>>, vector<64x288xbf16>
    %cst_20 = arith.constant dense<0.000000e+00> : vector<64x16xf32>
    %75 = tpu.matmul %74, %73, %cst_20 {dimension_numbers = #tpu.dot_dimension_numbers<[1], [0], [0], [1], [0, 0, 1, 1], [], []>} : vector<64x288xbf16>, vector<288x16xbf16>, vector<64x16xf32> -> vector<64x16xf32>
    %c0_21 = arith.constant 0 : index
    %c0_22 = arith.constant 0 : index
    %76 = vector.load %arg3[%c0_21, %c0_22] : memref<64x1xf32, #tpu.memory_space<vmem>>, vector<64x1xf32>
    %77 = vector.broadcast %76 : vector<64x1xf32> to vector<64x16xf32>
    %78 = arith.addf %75, %77 : vector<64x16xf32>
    %c0_23 = arith.constant 0 : index
    %c0_24 = arith.constant 0 : index
    %c0_25 = arith.constant 0 : index
    %79 = vector.load %arg4[%c0_23, %c0_24, %c0_25] : memref<1x64x16xf32, #tpu.memory_space<vmem>>, vector<1x64x16xf32>
    %80 = vector.shape_cast %79 : vector<1x64x16xf32> to vector<64x16xf32>
    %81 = vector.shape_cast %78 : vector<64x16xf32> to vector<1x64x16xf32>
    tpu.vector_store %arg4[%c0_23, %c0_24, %c0_25], %81 {strides = array<i32>} : memref<1x64x16xf32, #tpu.memory_space<vmem>>, vector<1x64x16xf32>,
    %cst_26 = arith.constant dense<0.000000e+00> : vector<64xf32>
    %82 = vector.multi_reduction <add>, %78, %cst_26 [1] : vector<64x16xf32> to vector<64xf32>
    %83 = vector.shape_cast %82 : vector<64xf32> to vector<64x1xf32>
    %84 = arith.mulf %78, %78 : vector<64x16xf32>
    %cst_27 = arith.constant dense<0.000000e+00> : vector<64xf32>
    %85 = vector.multi_reduction <add>, %84, %cst_27 [1] : vector<64x16xf32> to vector<64xf32>
    %86 = vector.shape_cast %85 : vector<64xf32> to vector<64x1xf32>
    %87 = tpu.concatenate %83, %86 in 1 : vector<64x1xf32>, vector<64x1xf32> -> vector<64x2xf32>
    %c0_28 = arith.constant 0 : index
    %c0_29 = arith.constant 0 : index
    %c0_30 = arith.constant 0 : index
    %88 = vector.load %arg5[%c0_28, %c0_29, %c0_30] : memref<1x64x2xf32, #tpu.memory_space<vmem>>, vector<1x64x2xf32>
    %89 = vector.shape_cast %88 : vector<1x64x2xf32> to vector<64x2xf32>
    %90 = vector.shape_cast %87 : vector<64x2xf32> to vector<1x64x2xf32>
    tpu.vector_store %arg5[%c0_28, %c0_29, %c0_30], %90 {strides = array<i32>} : memref<1x64x2xf32, #tpu.memory_space<vmem>>, vector<1x64x2xf32>,
    return
  }
  func.func @transform_0(%arg0: i32) -> (i32, i32, i32) {
    %c0_i32 = arith.constant 0 : i32
    %c0_i32_0 = arith.constant 0 : i32
    %c0_i32_1 = arith.constant 0 : i32
    return %arg0, %c0_i32, %c0_i32_0 : i32, i32, i32
  }
  func.func @transform_1(%arg0: i32) -> (i32, i32) {
    %c0_i32 = arith.constant 0 : i32
    %c0_i32_0 = arith.constant 0 : i32
    %c0_i32_1 = arith.constant 0 : i32
    return %c0_i32, %c0_i32_0 : i32, i32
  }
  func.func @transform_2(%arg0: i32) -> (i32, i32) {
    %c0_i32 = arith.constant 0 : i32
    %c0_i32_0 = arith.constant 0 : i32
    %c0_i32_1 = arith.constant 0 : i32
    return %c0_i32, %c0_i32_0 : i32, i32
  }
  func.func @transform_3(%arg0: i32) -> (i32, i32, i32) {
    %c0_i32 = arith.constant 0 : i32
    %c0_i32_0 = arith.constant 0 : i32
    %c0_i32_1 = arith.constant 0 : i32
    return %arg0, %c0_i32, %c0_i32_0 : i32, i32, i32
  }
  func.func @transform_4(%arg0: i32) -> (i32, i32, i32) {
    %c0_i32 = arith.constant 0 : i32
    %c0_i32_0 = arith.constant 0 : i32
    %c0_i32_1 = arith.constant 0 : i32
    return %arg0, %c0_i32, %c0_i32_0 : i32, i32, i32
  }
}

module attributes {stable_mosaic.version = 11 : i64} {
  func.func @kernel(%arg0: i32, %arg1: memref<1x16x64xf32, #tpu.memory_space<vmem>>, %arg2: memref<16x1xf32, #tpu.memory_space<vmem>>, %arg3: memref<16x1xf32, #tpu.memory_space<vmem>>, %arg4: memref<32x144xbf16, #tpu.memory_space<vmem>>, %arg5: memref<32x1xf32, #tpu.memory_space<vmem>>, %arg6: memref<1x32x64xf32, #tpu.memory_space<vmem>>, %arg7: memref<1x32x2xf32, #tpu.memory_space<vmem>>) attributes {dimension_semantics = [#tpu.dimension_semantics<parallel>], iteration_bounds = array<i64: 2>, scalar_prefetch = 0 : i64, scratch_operands = 0 : i64, tpu.core_type = #tpu.core_type<tc>, window_params = [{transform_indices = @transform_0, window_bounds = array<i64: 1, 16, 64>}, {pipeline_mode = #tpu.pipeline_mode<synchronous>, transform_indices = @transform_1, window_bounds = array<i64: 16, 1>}, {pipeline_mode = #tpu.pipeline_mode<synchronous>, transform_indices = @transform_2, window_bounds = array<i64: 16, 1>}, {pipeline_mode = #tpu.pipeline_mode<synchronous>, transform_indices = @transform_3, window_bounds = array<i64: 32, 144>}, {pipeline_mode = #tpu.pipeline_mode<synchronous>, transform_indices = @transform_4, window_bounds = array<i64: 32, 1>}, {transform_indices = @transform_5, window_bounds = array<i64: 1, 32, 64>}, {transform_indices = @transform_6, window_bounds = array<i64: 1, 32, 2>}]} {
    %c0 = arith.constant 0 : index
    %c0_0 = arith.constant 0 : index
    %c0_1 = arith.constant 0 : index
    %0 = vector.load %arg1[%c0, %c0_0, %c0_1] : memref<1x16x64xf32, #tpu.memory_space<vmem>>, vector<1x16x64xf32>
    %1 = vector.shape_cast %0 : vector<1x16x64xf32> to vector<16x64xf32>
    %c0_2 = arith.constant 0 : index
    %c0_3 = arith.constant 0 : index
    %2 = vector.load %arg2[%c0_2, %c0_3] : memref<16x1xf32, #tpu.memory_space<vmem>>, vector<16x1xf32>
    %3 = vector.broadcast %2 : vector<16x1xf32> to vector<16x64xf32>
    %4 = arith.mulf %1, %3 : vector<16x64xf32>
    %c0_4 = arith.constant 0 : index
    %c0_5 = arith.constant 0 : index
    %5 = vector.load %arg3[%c0_4, %c0_5] : memref<16x1xf32, #tpu.memory_space<vmem>>, vector<16x1xf32>
    %6 = vector.broadcast %5 : vector<16x1xf32> to vector<16x64xf32>
    %7 = arith.addf %4, %6 : vector<16x64xf32>
    %cst = arith.constant 0.000000e+00 : f32
    %8 = vector.broadcast %cst : f32 to vector<16x64xf32>
    %9 = arith.cmpf oge, %7, %8 : vector<16x64xf32>
    %cst_6 = arith.constant 2.000000e-01 : f32
    %10 = vector.broadcast %cst_6 : f32 to vector<16x64xf32>
    %11 = arith.mulf %10, %7 : vector<16x64xf32>
    %12 = arith.select %9, %7, %11 : vector<16x64xi1>, vector<16x64xf32>
    %13 = tpu.iota {dimensions = array<i32: 1>} : vector<1x64xi32>
    %c8_i32 = arith.constant 8 : i32
    %c0_i32 = arith.constant 0 : i32
    %14 = arith.cmpi eq, %c8_i32, %c0_i32 : i32
    %c1_i32 = arith.constant 1 : i32
    %15 = arith.select %14, %c1_i32, %c8_i32 : i32
    %16 = vector.broadcast %15 : i32 to vector<1x64xi32>
    %17 = arith.remsi %13, %16 : vector<1x64xi32>
    %c0_i32_7 = arith.constant 0 : i32
    %18 = vector.broadcast %c0_i32_7 : i32 to vector<1x64xi32>
    %19 = arith.cmpi ne, %17, %18 : vector<1x64xi32>
    %c0_i32_8 = arith.constant 0 : i32
    %20 = vector.broadcast %c0_i32_8 : i32 to vector<1x64xi32>
    %21 = arith.cmpi slt, %17, %20 : vector<1x64xi32>
    %c0_i32_9 = arith.constant 0 : i32
    %22 = arith.cmpi slt, %15, %c0_i32_9 : i32
    %23 = vector.broadcast %22 : i1 to vector<1x64xi1>
    %24 = vector.broadcast %23 : vector<1x64xi1> to vector<1x64xi1>
    %25 = arith.xori %21, %24 : vector<1x64xi1>
    %26 = arith.andi %25, %19 : vector<1x64xi1>
    %27 = vector.broadcast %15 : i32 to vector<1x64xi32>
    %28 = arith.addi %17, %27 : vector<1x64xi32>
    %29 = arith.select %26, %28, %17 : vector<1x64xi1>, vector<1x64xi32>
    %c-1_i32 = arith.constant -1 : i32
    %30 = vector.broadcast %c-1_i32 : i32 to vector<1x64xi32>
    %31 = arith.addi %29, %30 : vector<1x64xi32>
    %c0_i32_10 = arith.constant 0 : i32
    %32 = vector.broadcast %c0_i32_10 : i32 to vector<1x64xi32>
    %33 = arith.cmpi sge, %31, %32 : vector<1x64xi32>
    %c-1_i32_11 = arith.constant -1 : i32
    %34 = vector.broadcast %c-1_i32_11 : i32 to vector<1x64xi32>
    %35 = arith.addi %29, %34 : vector<1x64xi32>
    %c8_i32_12 = arith.constant 8 : i32
    %36 = vector.broadcast %c8_i32_12 : i32 to vector<1x64xi32>
    %37 = arith.cmpi slt, %35, %36 : vector<1x64xi32>
    %38 = arith.andi %33, %37 : vector<1x64xi1>
    %c1_i32_13 = arith.constant 1 : i32
    %39 = vector.broadcast %c1_i32_13 : i32 to vector<1x64xi32>
    %40 = arith.addi %29, %39 : vector<1x64xi32>
    %c0_i32_14 = arith.constant 0 : i32
    %41 = vector.broadcast %c0_i32_14 : i32 to vector<1x64xi32>
    %42 = arith.cmpi sge, %40, %41 : vector<1x64xi32>
    %c1_i32_15 = arith.constant 1 : i32
    %43 = vector.broadcast %c1_i32_15 : i32 to vector<1x64xi32>
    %44 = arith.addi %29, %43 : vector<1x64xi32>
    %c8_i32_16 = arith.constant 8 : i32
    %45 = vector.broadcast %c8_i32_16 : i32 to vector<1x64xi32>
    %46 = arith.cmpi slt, %44, %45 : vector<1x64xi32>
    %47 = arith.andi %42, %46 : vector<1x64xi1>
    %48 = arith.truncf %12 : vector<16x64xf32> to vector<16x64xbf16>
    %cst_17 = arith.constant 0.000000e+00 : bf16
    %49 = vector.broadcast %cst_17 : bf16 to vector<16x9xbf16>
    %50 = tpu.concatenate %49, %48, %49 in 1 : vector<16x9xbf16>, vector<16x64xbf16>, vector<16x9xbf16> -> vector<16x82xbf16>
    %51 = vector.extract_strided_slice %50 {offsets = [0, 0], sizes = [16, 64], strides = [1, 1]} : vector<16x82xbf16> to vector<16x64xbf16>
    %cst_18 = arith.constant 0.000000e+00 : bf16
    %52 = vector.broadcast %cst_18 : bf16 to vector<16x64xbf16>
    %53 = vector.shape_cast %38 : vector<1x64xi1> to vector<1x64xi1>
    %54 = vector.broadcast %53 : vector<1x64xi1> to vector<16x64xi1>
    %55 = arith.select %54, %51, %52 : vector<16x64xi1>, vector<16x64xbf16>
    %56 = vector.extract_strided_slice %50 {offsets = [0, 1], sizes = [16, 64], strides = [1, 1]} : vector<16x82xbf16> to vector<16x64xbf16>
    %57 = vector.extract_strided_slice %50 {offsets = [0, 2], sizes = [16, 64], strides = [1, 1]} : vector<16x82xbf16> to vector<16x64xbf16>
    %cst_19 = arith.constant 0.000000e+00 : bf16
    %58 = vector.broadcast %cst_19 : bf16 to vector<16x64xbf16>
    %59 = vector.shape_cast %47 : vector<1x64xi1> to vector<1x64xi1>
    %60 = vector.broadcast %59 : vector<1x64xi1> to vector<16x64xi1>
    %61 = arith.select %60, %57, %58 : vector<16x64xi1>, vector<16x64xbf16>
    %62 = vector.extract_strided_slice %50 {offsets = [0, 8], sizes = [16, 64], strides = [1, 1]} : vector<16x82xbf16> to vector<16x64xbf16>
    %cst_20 = arith.constant 0.000000e+00 : bf16
    %63 = vector.broadcast %cst_20 : bf16 to vector<16x64xbf16>
    %64 = vector.shape_cast %38 : vector<1x64xi1> to vector<1x64xi1>
    %65 = vector.broadcast %64 : vector<1x64xi1> to vector<16x64xi1>
    %66 = arith.select %65, %62, %63 : vector<16x64xi1>, vector<16x64xbf16>
    %67 = vector.extract_strided_slice %50 {offsets = [0, 9], sizes = [16, 64], strides = [1, 1]} : vector<16x82xbf16> to vector<16x64xbf16>
    %68 = vector.extract_strided_slice %50 {offsets = [0, 10], sizes = [16, 64], strides = [1, 1]} : vector<16x82xbf16> to vector<16x64xbf16>
    %cst_21 = arith.constant 0.000000e+00 : bf16
    %69 = vector.broadcast %cst_21 : bf16 to vector<16x64xbf16>
    %70 = vector.shape_cast %47 : vector<1x64xi1> to vector<1x64xi1>
    %71 = vector.broadcast %70 : vector<1x64xi1> to vector<16x64xi1>
    %72 = arith.select %71, %68, %69 : vector<16x64xi1>, vector<16x64xbf16>
    %73 = vector.extract_strided_slice %50 {offsets = [0, 16], sizes = [16, 64], strides = [1, 1]} : vector<16x82xbf16> to vector<16x64xbf16>
    %cst_22 = arith.constant 0.000000e+00 : bf16
    %74 = vector.broadcast %cst_22 : bf16 to vector<16x64xbf16>
    %75 = vector.shape_cast %38 : vector<1x64xi1> to vector<1x64xi1>
    %76 = vector.broadcast %75 : vector<1x64xi1> to vector<16x64xi1>
    %77 = arith.select %76, %73, %74 : vector<16x64xi1>, vector<16x64xbf16>
    %78 = vector.extract_strided_slice %50 {offsets = [0, 17], sizes = [16, 64], strides = [1, 1]} : vector<16x82xbf16> to vector<16x64xbf16>
    %79 = vector.extract_strided_slice %50 {offsets = [0, 18], sizes = [16, 64], strides = [1, 1]} : vector<16x82xbf16> to vector<16x64xbf16>
    %cst_23 = arith.constant 0.000000e+00 : bf16
    %80 = vector.broadcast %cst_23 : bf16 to vector<16x64xbf16>
    %81 = vector.shape_cast %47 : vector<1x64xi1> to vector<1x64xi1>
    %82 = vector.broadcast %81 : vector<1x64xi1> to vector<16x64xi1>
    %83 = arith.select %82, %79, %80 : vector<16x64xi1>, vector<16x64xbf16>
    %84 = tpu.concatenate %55, %56, %61, %66, %67, %72, %77, %78, %83 in 0 : vector<16x64xbf16>, vector<16x64xbf16>, vector<16x64xbf16>, vector<16x64xbf16>, vector<16x64xbf16>, vector<16x64xbf16>, vector<16x64xbf16>, vector<16x64xbf16>, vector<16x64xbf16> -> vector<144x64xbf16>
    %c0_24 = arith.constant 0 : index
    %c0_25 = arith.constant 0 : index
    %85 = vector.load %arg4[%c0_24, %c0_25] : memref<32x144xbf16, #tpu.memory_space<vmem>>, vector<32x144xbf16>
    %cst_26 = arith.constant dense<0.000000e+00> : vector<32x64xf32>
    %86 = tpu.matmul %85, %84, %cst_26 {dimension_numbers = #tpu.dot_dimension_numbers<[1], [0], [0], [1], [0, 0, 1, 1], [], []>} : vector<32x144xbf16>, vector<144x64xbf16>, vector<32x64xf32> -> vector<32x64xf32>
    %c0_27 = arith.constant 0 : index
    %c0_28 = arith.constant 0 : index
    %87 = vector.load %arg5[%c0_27, %c0_28] : memref<32x1xf32, #tpu.memory_space<vmem>>, vector<32x1xf32>
    %88 = vector.broadcast %87 : vector<32x1xf32> to vector<32x64xf32>
    %89 = arith.addf %86, %88 : vector<32x64xf32>
    %c0_29 = arith.constant 0 : index
    %c0_30 = arith.constant 0 : index
    %c0_31 = arith.constant 0 : index
    %90 = vector.load %arg6[%c0_29, %c0_30, %c0_31] : memref<1x32x64xf32, #tpu.memory_space<vmem>>, vector<1x32x64xf32>
    %91 = vector.shape_cast %90 : vector<1x32x64xf32> to vector<32x64xf32>
    %92 = vector.shape_cast %89 : vector<32x64xf32> to vector<1x32x64xf32>
    tpu.vector_store %arg6[%c0_29, %c0_30, %c0_31], %92 {strides = array<i32>} : memref<1x32x64xf32, #tpu.memory_space<vmem>>, vector<1x32x64xf32>,
    %cst_32 = arith.constant dense<0.000000e+00> : vector<32xf32>
    %93 = vector.multi_reduction <add>, %89, %cst_32 [1] : vector<32x64xf32> to vector<32xf32>
    %94 = vector.shape_cast %93 : vector<32xf32> to vector<32x1xf32>
    %95 = arith.mulf %89, %89 : vector<32x64xf32>
    %cst_33 = arith.constant dense<0.000000e+00> : vector<32xf32>
    %96 = vector.multi_reduction <add>, %95, %cst_33 [1] : vector<32x64xf32> to vector<32xf32>
    %97 = vector.shape_cast %96 : vector<32xf32> to vector<32x1xf32>
    %98 = tpu.concatenate %94, %97 in 1 : vector<32x1xf32>, vector<32x1xf32> -> vector<32x2xf32>
    %c0_34 = arith.constant 0 : index
    %c0_35 = arith.constant 0 : index
    %c0_36 = arith.constant 0 : index
    %99 = vector.load %arg7[%c0_34, %c0_35, %c0_36] : memref<1x32x2xf32, #tpu.memory_space<vmem>>, vector<1x32x2xf32>
    %100 = vector.shape_cast %99 : vector<1x32x2xf32> to vector<32x2xf32>
    %101 = vector.shape_cast %98 : vector<32x2xf32> to vector<1x32x2xf32>
    tpu.vector_store %arg7[%c0_34, %c0_35, %c0_36], %101 {strides = array<i32>} : memref<1x32x2xf32, #tpu.memory_space<vmem>>, vector<1x32x2xf32>,
    return
  }
  func.func @transform_0(%arg0: i32) -> (i32, i32, i32) {
    %c0_i32 = arith.constant 0 : i32
    %c0_i32_0 = arith.constant 0 : i32
    %c0_i32_1 = arith.constant 0 : i32
    return %arg0, %c0_i32, %c0_i32_0 : i32, i32, i32
  }
  func.func @transform_1(%arg0: i32) -> (i32, i32) {
    %c0_i32 = arith.constant 0 : i32
    %c0_i32_0 = arith.constant 0 : i32
    %c0_i32_1 = arith.constant 0 : i32
    return %c0_i32, %c0_i32_0 : i32, i32
  }
  func.func @transform_2(%arg0: i32) -> (i32, i32) {
    %c0_i32 = arith.constant 0 : i32
    %c0_i32_0 = arith.constant 0 : i32
    %c0_i32_1 = arith.constant 0 : i32
    return %c0_i32, %c0_i32_0 : i32, i32
  }
  func.func @transform_3(%arg0: i32) -> (i32, i32) {
    %c0_i32 = arith.constant 0 : i32
    %c0_i32_0 = arith.constant 0 : i32
    %c0_i32_1 = arith.constant 0 : i32
    return %c0_i32, %c0_i32_0 : i32, i32
  }
  func.func @transform_4(%arg0: i32) -> (i32, i32) {
    %c0_i32 = arith.constant 0 : i32
    %c0_i32_0 = arith.constant 0 : i32
    %c0_i32_1 = arith.constant 0 : i32
    return %c0_i32, %c0_i32_0 : i32, i32
  }
  func.func @transform_5(%arg0: i32) -> (i32, i32, i32) {
    %c0_i32 = arith.constant 0 : i32
    %c0_i32_0 = arith.constant 0 : i32
    %c0_i32_1 = arith.constant 0 : i32
    return %arg0, %c0_i32, %c0_i32_0 : i32, i32, i32
  }
  func.func @transform_6(%arg0: i32) -> (i32, i32, i32) {
    %c0_i32 = arith.constant 0 : i32
    %c0_i32_0 = arith.constant 0 : i32
    %c0_i32_1 = arith.constant 0 : i32
    return %arg0, %c0_i32, %c0_i32_0 : i32, i32, i32
  }
}

module attributes {stable_mosaic.version = 11 : i64} {
  func.func @kernel(%arg0: i32, %arg1: memref<1x8x256xf32, #tpu.memory_space<vmem>>, %arg2: memref<8x1xf32, #tpu.memory_space<vmem>>, %arg3: memref<8x1xf32, #tpu.memory_space<vmem>>, %arg4: memref<8x72xbf16, #tpu.memory_space<vmem>>, %arg5: memref<8x1xf32, #tpu.memory_space<vmem>>, %arg6: memref<1x8x256xf32, #tpu.memory_space<vmem>>) attributes {dimension_semantics = [#tpu.dimension_semantics<parallel>], iteration_bounds = array<i64: 2>, scalar_prefetch = 0 : i64, scratch_operands = 0 : i64, tpu.core_type = #tpu.core_type<tc>, window_params = [{transform_indices = @transform_0, window_bounds = array<i64: 1, 8, 256>}, {pipeline_mode = #tpu.pipeline_mode<synchronous>, transform_indices = @transform_1, window_bounds = array<i64: 8, 1>}, {pipeline_mode = #tpu.pipeline_mode<synchronous>, transform_indices = @transform_2, window_bounds = array<i64: 8, 1>}, {pipeline_mode = #tpu.pipeline_mode<synchronous>, transform_indices = @transform_3, window_bounds = array<i64: 8, 72>}, {pipeline_mode = #tpu.pipeline_mode<synchronous>, transform_indices = @transform_4, window_bounds = array<i64: 8, 1>}, {transform_indices = @transform_5, window_bounds = array<i64: 1, 8, 256>}]} {
    %c0 = arith.constant 0 : index
    %c0_0 = arith.constant 0 : index
    %c0_1 = arith.constant 0 : index
    %0 = vector.load %arg1[%c0, %c0_0, %c0_1] : memref<1x8x256xf32, #tpu.memory_space<vmem>>, vector<1x8x256xf32>
    %1 = vector.shape_cast %0 : vector<1x8x256xf32> to vector<8x256xf32>
    %c0_2 = arith.constant 0 : index
    %c0_3 = arith.constant 0 : index
    %2 = vector.load %arg2[%c0_2, %c0_3] : memref<8x1xf32, #tpu.memory_space<vmem>>, vector<8x1xf32>
    %3 = vector.broadcast %2 : vector<8x1xf32> to vector<8x256xf32>
    %4 = arith.mulf %1, %3 : vector<8x256xf32>
    %c0_4 = arith.constant 0 : index
    %c0_5 = arith.constant 0 : index
    %5 = vector.load %arg3[%c0_4, %c0_5] : memref<8x1xf32, #tpu.memory_space<vmem>>, vector<8x1xf32>
    %6 = vector.broadcast %5 : vector<8x1xf32> to vector<8x256xf32>
    %7 = arith.addf %4, %6 : vector<8x256xf32>
    %cst = arith.constant 0.000000e+00 : f32
    %8 = vector.broadcast %cst : f32 to vector<8x256xf32>
    %9 = arith.cmpf oge, %7, %8 : vector<8x256xf32>
    %cst_6 = arith.constant 2.000000e-01 : f32
    %10 = vector.broadcast %cst_6 : f32 to vector<8x256xf32>
    %11 = arith.mulf %10, %7 : vector<8x256xf32>
    %12 = arith.select %9, %7, %11 : vector<8x256xi1>, vector<8x256xf32>
    %13 = tpu.iota {dimensions = array<i32: 1>} : vector<1x256xi32>
    %c16_i32 = arith.constant 16 : i32
    %c0_i32 = arith.constant 0 : i32
    %14 = arith.cmpi eq, %c16_i32, %c0_i32 : i32
    %c1_i32 = arith.constant 1 : i32
    %15 = arith.select %14, %c1_i32, %c16_i32 : i32
    %16 = vector.broadcast %15 : i32 to vector<1x256xi32>
    %17 = arith.remsi %13, %16 : vector<1x256xi32>
    %c0_i32_7 = arith.constant 0 : i32
    %18 = vector.broadcast %c0_i32_7 : i32 to vector<1x256xi32>
    %19 = arith.cmpi ne, %17, %18 : vector<1x256xi32>
    %c0_i32_8 = arith.constant 0 : i32
    %20 = vector.broadcast %c0_i32_8 : i32 to vector<1x256xi32>
    %21 = arith.cmpi slt, %17, %20 : vector<1x256xi32>
    %c0_i32_9 = arith.constant 0 : i32
    %22 = arith.cmpi slt, %15, %c0_i32_9 : i32
    %23 = vector.broadcast %22 : i1 to vector<1x256xi1>
    %24 = vector.broadcast %23 : vector<1x256xi1> to vector<1x256xi1>
    %25 = arith.xori %21, %24 : vector<1x256xi1>
    %26 = arith.andi %25, %19 : vector<1x256xi1>
    %27 = vector.broadcast %15 : i32 to vector<1x256xi32>
    %28 = arith.addi %17, %27 : vector<1x256xi32>
    %29 = arith.select %26, %28, %17 : vector<1x256xi1>, vector<1x256xi32>
    %c-1_i32 = arith.constant -1 : i32
    %30 = vector.broadcast %c-1_i32 : i32 to vector<1x256xi32>
    %31 = arith.addi %29, %30 : vector<1x256xi32>
    %c0_i32_10 = arith.constant 0 : i32
    %32 = vector.broadcast %c0_i32_10 : i32 to vector<1x256xi32>
    %33 = arith.cmpi sge, %31, %32 : vector<1x256xi32>
    %c-1_i32_11 = arith.constant -1 : i32
    %34 = vector.broadcast %c-1_i32_11 : i32 to vector<1x256xi32>
    %35 = arith.addi %29, %34 : vector<1x256xi32>
    %c16_i32_12 = arith.constant 16 : i32
    %36 = vector.broadcast %c16_i32_12 : i32 to vector<1x256xi32>
    %37 = arith.cmpi slt, %35, %36 : vector<1x256xi32>
    %38 = arith.andi %33, %37 : vector<1x256xi1>
    %c1_i32_13 = arith.constant 1 : i32
    %39 = vector.broadcast %c1_i32_13 : i32 to vector<1x256xi32>
    %40 = arith.addi %29, %39 : vector<1x256xi32>
    %c0_i32_14 = arith.constant 0 : i32
    %41 = vector.broadcast %c0_i32_14 : i32 to vector<1x256xi32>
    %42 = arith.cmpi sge, %40, %41 : vector<1x256xi32>
    %c1_i32_15 = arith.constant 1 : i32
    %43 = vector.broadcast %c1_i32_15 : i32 to vector<1x256xi32>
    %44 = arith.addi %29, %43 : vector<1x256xi32>
    %c16_i32_16 = arith.constant 16 : i32
    %45 = vector.broadcast %c16_i32_16 : i32 to vector<1x256xi32>
    %46 = arith.cmpi slt, %44, %45 : vector<1x256xi32>
    %47 = arith.andi %42, %46 : vector<1x256xi1>
    %48 = arith.truncf %12 : vector<8x256xf32> to vector<8x256xbf16>
    %cst_17 = arith.constant 0.000000e+00 : bf16
    %49 = vector.broadcast %cst_17 : bf16 to vector<8x17xbf16>
    %50 = tpu.concatenate %49, %48, %49 in 1 : vector<8x17xbf16>, vector<8x256xbf16>, vector<8x17xbf16> -> vector<8x290xbf16>
    %51 = vector.extract_strided_slice %50 {offsets = [0, 0], sizes = [8, 256], strides = [1, 1]} : vector<8x290xbf16> to vector<8x256xbf16>
    %cst_18 = arith.constant 0.000000e+00 : bf16
    %52 = vector.broadcast %cst_18 : bf16 to vector<8x256xbf16>
    %53 = vector.shape_cast %38 : vector<1x256xi1> to vector<1x256xi1>
    %54 = vector.broadcast %53 : vector<1x256xi1> to vector<8x256xi1>
    %55 = arith.select %54, %51, %52 : vector<8x256xi1>, vector<8x256xbf16>
    %56 = vector.extract_strided_slice %50 {offsets = [0, 1], sizes = [8, 256], strides = [1, 1]} : vector<8x290xbf16> to vector<8x256xbf16>
    %57 = vector.extract_strided_slice %50 {offsets = [0, 2], sizes = [8, 256], strides = [1, 1]} : vector<8x290xbf16> to vector<8x256xbf16>
    %cst_19 = arith.constant 0.000000e+00 : bf16
    %58 = vector.broadcast %cst_19 : bf16 to vector<8x256xbf16>
    %59 = vector.shape_cast %47 : vector<1x256xi1> to vector<1x256xi1>
    %60 = vector.broadcast %59 : vector<1x256xi1> to vector<8x256xi1>
    %61 = arith.select %60, %57, %58 : vector<8x256xi1>, vector<8x256xbf16>
    %62 = vector.extract_strided_slice %50 {offsets = [0, 16], sizes = [8, 256], strides = [1, 1]} : vector<8x290xbf16> to vector<8x256xbf16>
    %cst_20 = arith.constant 0.000000e+00 : bf16
    %63 = vector.broadcast %cst_20 : bf16 to vector<8x256xbf16>
    %64 = vector.shape_cast %38 : vector<1x256xi1> to vector<1x256xi1>
    %65 = vector.broadcast %64 : vector<1x256xi1> to vector<8x256xi1>
    %66 = arith.select %65, %62, %63 : vector<8x256xi1>, vector<8x256xbf16>
    %67 = vector.extract_strided_slice %50 {offsets = [0, 17], sizes = [8, 256], strides = [1, 1]} : vector<8x290xbf16> to vector<8x256xbf16>
    %68 = vector.extract_strided_slice %50 {offsets = [0, 18], sizes = [8, 256], strides = [1, 1]} : vector<8x290xbf16> to vector<8x256xbf16>
    %cst_21 = arith.constant 0.000000e+00 : bf16
    %69 = vector.broadcast %cst_21 : bf16 to vector<8x256xbf16>
    %70 = vector.shape_cast %47 : vector<1x256xi1> to vector<1x256xi1>
    %71 = vector.broadcast %70 : vector<1x256xi1> to vector<8x256xi1>
    %72 = arith.select %71, %68, %69 : vector<8x256xi1>, vector<8x256xbf16>
    %73 = vector.extract_strided_slice %50 {offsets = [0, 32], sizes = [8, 256], strides = [1, 1]} : vector<8x290xbf16> to vector<8x256xbf16>
    %cst_22 = arith.constant 0.000000e+00 : bf16
    %74 = vector.broadcast %cst_22 : bf16 to vector<8x256xbf16>
    %75 = vector.shape_cast %38 : vector<1x256xi1> to vector<1x256xi1>
    %76 = vector.broadcast %75 : vector<1x256xi1> to vector<8x256xi1>
    %77 = arith.select %76, %73, %74 : vector<8x256xi1>, vector<8x256xbf16>
    %78 = vector.extract_strided_slice %50 {offsets = [0, 33], sizes = [8, 256], strides = [1, 1]} : vector<8x290xbf16> to vector<8x256xbf16>
    %79 = vector.extract_strided_slice %50 {offsets = [0, 34], sizes = [8, 256], strides = [1, 1]} : vector<8x290xbf16> to vector<8x256xbf16>
    %cst_23 = arith.constant 0.000000e+00 : bf16
    %80 = vector.broadcast %cst_23 : bf16 to vector<8x256xbf16>
    %81 = vector.shape_cast %47 : vector<1x256xi1> to vector<1x256xi1>
    %82 = vector.broadcast %81 : vector<1x256xi1> to vector<8x256xi1>
    %83 = arith.select %82, %79, %80 : vector<8x256xi1>, vector<8x256xbf16>
    %84 = tpu.concatenate %55, %56, %61, %66, %67, %72, %77, %78, %83 in 0 : vector<8x256xbf16>, vector<8x256xbf16>, vector<8x256xbf16>, vector<8x256xbf16>, vector<8x256xbf16>, vector<8x256xbf16>, vector<8x256xbf16>, vector<8x256xbf16>, vector<8x256xbf16> -> vector<72x256xbf16>
    %c0_24 = arith.constant 0 : index
    %c0_25 = arith.constant 0 : index
    %85 = vector.load %arg4[%c0_24, %c0_25] : memref<8x72xbf16, #tpu.memory_space<vmem>>, vector<8x72xbf16>
    %cst_26 = arith.constant dense<0.000000e+00> : vector<8x256xf32>
    %86 = tpu.matmul %85, %84, %cst_26 {dimension_numbers = #tpu.dot_dimension_numbers<[1], [0], [0], [1], [0, 0, 1, 1], [], []>} : vector<8x72xbf16>, vector<72x256xbf16>, vector<8x256xf32> -> vector<8x256xf32>
    %c0_27 = arith.constant 0 : index
    %c0_28 = arith.constant 0 : index
    %87 = vector.load %arg5[%c0_27, %c0_28] : memref<8x1xf32, #tpu.memory_space<vmem>>, vector<8x1xf32>
    %88 = vector.broadcast %87 : vector<8x1xf32> to vector<8x256xf32>
    %89 = arith.addf %86, %88 : vector<8x256xf32>
    %90 = tpu.iota {dimensions = array<i32: 0>} : vector<8x256xi32>
    %c2_i32 = arith.constant 2 : i32
    %91 = vector.broadcast %c2_i32 : i32 to vector<8x256xi32>
    %92 = arith.cmpi slt, %90, %91 : vector<8x256xi32>
    %cst_29 = arith.constant 2.000000e+01 : f32
    %93 = vector.broadcast %cst_29 : f32 to vector<8x256xf32>
    %94 = arith.mulf %89, %93 : vector<8x256xf32>
    %c2_i32_30 = arith.constant 2 : i32
    %95 = vector.broadcast %c2_i32_30 : i32 to vector<8x256xi32>
    %96 = arith.cmpi eq, %90, %95 : vector<8x256xi32>
    %97 = arith.negf %89 : vector<8x256xf32>
    %98 = math.exp %97 : vector<8x256xf32>
    %cst_31 = arith.constant 1.000000e+00 : f32
    %99 = vector.broadcast %cst_31 : f32 to vector<8x256xf32>
    %100 = arith.addf %99, %98 : vector<8x256xf32>
    %101 = arith.divf %99, %100 : vector<8x256xf32>
    %102 = arith.select %96, %101, %89 : vector<8x256xi1>, vector<8x256xf32>
    %103 = arith.select %92, %94, %102 : vector<8x256xi1>, vector<8x256xf32>
    %c0_32 = arith.constant 0 : index
    %c0_33 = arith.constant 0 : index
    %c0_34 = arith.constant 0 : index
    %104 = vector.load %arg6[%c0_32, %c0_33, %c0_34] : memref<1x8x256xf32, #tpu.memory_space<vmem>>, vector<1x8x256xf32>
    %105 = vector.shape_cast %104 : vector<1x8x256xf32> to vector<8x256xf32>
    %106 = vector.shape_cast %103 : vector<8x256xf32> to vector<1x8x256xf32>
    tpu.vector_store %arg6[%c0_32, %c0_33, %c0_34], %106 {strides = array<i32>} : memref<1x8x256xf32, #tpu.memory_space<vmem>>, vector<1x8x256xf32>,
    return
  }
  func.func @transform_0(%arg0: i32) -> (i32, i32, i32) {
    %c0_i32 = arith.constant 0 : i32
    %c0_i32_0 = arith.constant 0 : i32
    %c0_i32_1 = arith.constant 0 : i32
    return %arg0, %c0_i32, %c0_i32_0 : i32, i32, i32
  }
  func.func @transform_1(%arg0: i32) -> (i32, i32) {
    %c0_i32 = arith.constant 0 : i32
    %c0_i32_0 = arith.constant 0 : i32
    %c0_i32_1 = arith.constant 0 : i32
    return %c0_i32, %c0_i32_0 : i32, i32
  }
  func.func @transform_2(%arg0: i32) -> (i32, i32) {
    %c0_i32 = arith.constant 0 : i32
    %c0_i32_0 = arith.constant 0 : i32
    %c0_i32_1 = arith.constant 0 : i32
    return %c0_i32, %c0_i32_0 : i32, i32
  }
  func.func @transform_3(%arg0: i32) -> (i32, i32) {
    %c0_i32 = arith.constant 0 : i32
    %c0_i32_0 = arith.constant 0 : i32
    %c0_i32_1 = arith.constant 0 : i32
    return %c0_i32, %c0_i32_0 : i32, i32
  }
  func.func @transform_4(%arg0: i32) -> (i32, i32) {
    %c0_i32 = arith.constant 0 : i32
    %c0_i32_0 = arith.constant 0 : i32
    %c0_i32_1 = arith.constant 0 : i32
    return %c0_i32, %c0_i32_0 : i32, i32
  }
  func.func @transform_5(%arg0: i32) -> (i32, i32, i32) {
    %c0_i32 = arith.constant 0 : i32
    %c0_i32_0 = arith.constant 0 : i32
    %c0_i32_1 = arith.constant 0 : i32
    return %arg0, %c0_i32, %c0_i32_0 : i32, i32, i32
  }
}

</mosaic_0001>

<llo_original>
// kernel: flow_generator_forward.11
$region0: #{flow_generator_forward.11}
  #allocation0 [shape = 'u32[]', space=smem, size = 0x4, offset = 0x4, fixed_abs, tag = 'smem constant byte address 0x4 - core index']
  #allocation1 [shape = 'u32[144,128]{1,0:T(1,128)}', space=vmem, size = 0x12000, scoped, tag = 'internal scratch']
  %s0 = inlined_call_operand.vmem [shape: f32[2,16,256], index: 0, kind: input, shape index: {}]
  %s1 = inlined_call_operand.vmem [shape: bf16[8,144], index: 1, kind: input, shape index: {}]
  %s2 = inlined_call_operand.vmem [shape: f32[8,1], index: 2, kind: input, shape index: {}]
  %s3 = inlined_call_operand.vmem [shape: f32[2,8,256], index: 3, kind: output, shape index: {0}]
  %s4 = inlined_call_operand.vmem [shape: f32[2,8,2], index: 4, kind: output, shape index: {1}]
  %5 = xla_tuple %s3, %s4
  %s6 = sld [smem:[#allocation0]]
  $region53: #{flow_generator_forward.11} parent=0
    _
  %s8 = ssub.s32 1, %s6
  %s9 = scalar_select 0, %s8, %s6
  loop: start=0, step=1, limit=4
  $region2: #{flow_generator_forward.11} parent=0 // loop_pre_header
    _
  $region3: #{flow_generator_forward.11} parent=0 // loop_header
    %s11 = sphi 0, %s15
    %p12 = scmp.ge.s32.totalorder %s11, 4
    %s21 = sphi 0, %s23
    %s24 = sphi 0, %s21
    %s25 = sphi 0, %s24
    %s41 = sphi 0, %s25
    %s45 = sphi 0, %s45
    %s47 = sphi 0, %s45
    %s48 = sphi 0, %s47
    %s62 = sphi 0, %s48
    %s66 = sphi 0, %s66
    %s68 = sphi 0, %s66
    %s69 = sphi 0, %s68
    %s83 = sphi 0, %s69
    %s89 = sphi 0, %s91
    %s92 = sphi 0, %s89
    %s93 = sphi 0, %s92
    %s109 = sphi 0, %s93
    %s115 = sphi 0, %s117
    %s118 = sphi 0, %s115
    %s119 = sphi 0, %s118
    %s135 = sphi 0, %s119
  $region4: #{flow_generator_forward.11} parent=0 // loop_header_branch
    %14 = sbr.rel (%p12) target = $region8
  $region5: #{flow_generator_forward.11} parent=0 // loop_body
    %s16 = ssub.s32 %s11, 1
    %s17 = ssub.s32 %s11, 2
    %s18 = sadd.s32 %s11, 1
    %s19 = ssub.s32 %s11, %s18
    %p20 = scmp.eq.s32.totalorder %s19, 0
    %s22 = sadd.s32 %s21, 1
    %s23 = scalar_select %p20, %s21, %s22
    %p26 = pneg %p20
    %p27 = scmp.eq.s32.totalorder %s11, 1
    %p28 = por %p26, %p27
    %p29 = scmp.ne.s32.totalorder %s21, %s24
    %p30 = scmp.eq.s32.totalorder %s11, 0
    %p31 = por %p29, %p30
    %p32 = scmp.ne.s32.totalorder %s21, %s24
    %p33 = scmp.eq.s32.totalorder %s16, 1
    %p34 = por %p32, %p33
    %p35 = scmp.ne.s32.totalorder %s24, %s25
    %p36 = scmp.eq.s32.totalorder %s16, 0
    %p37 = por %p35, %p36
    %p38 = scmp.ne.s32.totalorder %s24, %s25
    %p39 = scmp.eq.s32.totalorder %s17, 1
    %p40 = por %p38, %p39
    %p42 = scmp.ne.s32.totalorder %s25, %s41
    %p43 = scmp.eq.s32.totalorder %s17, 0
    %p44 = por %p42, %p43
    %s46 = sadd.s32 %s45, 1
    %p49 = scmp.eq.s32.totalorder %s11, 1
    %p50 = scmp.ne.s32.totalorder %s45, %s47
    %p51 = scmp.eq.s32.totalorder %s11, 0
    %p52 = por %p50, %p51
    %p53 = scmp.ne.s32.totalorder %s45, %s47
    %p54 = scmp.eq.s32.totalorder %s16, 1
    %p55 = por %p53, %p54
    %p56 = scmp.ne.s32.totalorder %s47, %s48
    %p57 = scmp.eq.s32.totalorder %s16, 0
    %p58 = por %p56, %p57
    %p59 = scmp.ne.s32.totalorder %s47, %s48
    %p60 = scmp.eq.s32.totalorder %s17, 1
    %p61 = por %p59, %p60
    %p63 = scmp.ne.s32.totalorder %s48, %s62
    %p64 = scmp.eq.s32.totalorder %s17, 0
    %p65 = por %p63, %p64
    %s67 = sadd.s32 %s66, 1
    %p70 = scmp.eq.s32.totalorder %s11, 1
    %p71 = scmp.ne.s32.totalorder %s66, %s68
    %p72 = scmp.eq.s32.totalorder %s11, 0
    %p73 = por %p71, %p72
    %p74 = scmp.ne.s32.totalorder %s66, %s68
    %p75 = scmp.eq.s32.totalorder %s16, 1
    %p76 = por %p74, %p75
    %p77 = scmp.ne.s32.totalorder %s68, %s69
    %p78 = scmp.eq.s32.totalorder %s16, 0
    %p79 = por %p77, %p78
    %p80 = scmp.ne.s32.totalorder %s68, %s69
    %p81 = scmp.eq.s32.totalorder %s17, 1
    %p82 = por %p80, %p81
    %p84 = scmp.ne.s32.totalorder %s69, %s83
    %p85 = scmp.eq.s32.totalorder %s17, 0
    %p86 = por %p84, %p85
    %s87 = ssub.s32 %s11, %s18
    %p88 = scmp.eq.s32.totalorder %s87, 0
    %s90 = sadd.s32 %s89, 1
    %s91 = scalar_select %p88, %s89, %s90
    %p94 = pneg %p88
    %p95 = scmp.eq.s32.totalorder %s11, 1
    %p96 = por %p94, %p95
    %p97 = scmp.ne.s32.totalorder %s89, %s92
    %p98 = scmp.eq.s32.totalorder %s11, 0
    %p99 = por %p97, %p98
    %p100 = scmp.ne.s32.totalorder %s89, %s92
    %p101 = scmp.eq.s32.totalorder %s16, 1
    %p102 = por %p100, %p101
    %p103 = scmp.ne.s32.totalorder %s92, %s93
    %p104 = scmp.eq.s32.totalorder %s16, 0
    %p105 = por %p103, %p104
    %p106 = scmp.ne.s32.totalorder %s92, %s93
    %p107 = scmp.eq.s32.totalorder %s17, 1
    %p108 = por %p106, %p107
    %p110 = scmp.ne.s32.totalorder %s93, %s109
    %p111 = scmp.eq.s32.totalorder %s17, 0
    %p112 = por %p110, %p111
    %s113 = ssub.s32 %s11, %s18
    %p114 = scmp.eq.s32.totalorder %s113, 0
    %s116 = sadd.s32 %s115, 1
    %s117 = scalar_select %p114, %s115, %s116
    %p120 = pneg %p114
    %p121 = scmp.eq.s32.totalorder %s11, 1
    %p122 = por %p120, %p121
    %p123 = scmp.ne.s32.totalorder %s115, %s118
    %p124 = scmp.eq.s32.totalorder %s11, 0
    %p125 = por %p123, %p124
    %p126 = scmp.ne.s32.totalorder %s115, %s118
    %p127 = scmp.eq.s32.totalorder %s16, 1
    %p128 = por %p126, %p127
    %p129 = scmp.ne.s32.totalorder %s118, %s119
    %p130 = scmp.eq.s32.totalorder %s16, 0
    %p131 = por %p129, %p130
    %p132 = scmp.ne.s32.totalorder %s118, %s119
    %p133 = scmp.eq.s32.totalorder %s17, 1
    %p134 = por %p132, %p133
    %p136 = scmp.ne.s32.totalorder %s119, %s135
    %p137 = scmp.eq.s32.totalorder %s17, 0
    %p138 = por %p136, %p137
    %p139 = scmp.le.s32.totalorder 1, %s11
    %p140 = scmp.lt.s32.totalorder %s11, 3
    %p141 = pnand %p139, %p140
    %p142 = pneg %p141
    // Predicated region
    $region9: #{flow_generator_forward.11} parent=5 // pred_check
      _
    $region10: #{flow_generator_forward.11} parent=5 // pred_check_branch
      %144 = sbr.rel (%p141) target = $region12
    $region11: #{flow_generator_forward.11} parent=5 // pred_region
      %s145 = ssub.s32 %s11, 1
      // Predicated region
      $region13: #{flow_generator_forward.11} parent=11 // pred_check
        %p146 = pneg %p58
      $region14: #{flow_generator_forward.11} parent=11 // pred_check_branch
        %148 = sbr.rel (%p146) target = $region16
      $region15: #{flow_generator_forward.11} parent=11 // pred_region
        _
      $region16: #{flow_generator_forward.11} parent=11 // pred_fallthru
        _
      // Predicated region
      $region17: #{flow_generator_forward.11} parent=11 // pred_check
        %p149 = pneg %p79
      $region18: #{flow_generator_forward.11} parent=11 // pred_check_branch
        %151 = sbr.rel (%p149) target = $region20
      $region19: #{flow_generator_forward.11} parent=11 // pred_region
        _
      $region20: #{flow_generator_forward.11} parent=11 // pred_fallthru
        _
    $region12: #{flow_generator_forward.11} parent=5 // pred_fallthru
      _
    %p152 = scmp.lt.s32.totalorder %s11, 2
    // Predicated region
    $region21: #{flow_generator_forward.11} parent=5 // pred_check
      %p153 = pneg %p152
    $region22: #{flow_generator_forward.11} parent=5 // pred_check_branch
      %155 = sbr.rel (%p153) target = $region24
    $region23: #{flow_generator_forward.11} parent=5 // pred_region
      // Predicated region
      $region25: #{flow_generator_forward.11} parent=23 // pred_check
        %p156 = pneg %p31
      $region26: #{flow_generator_forward.11} parent=23 // pred_check_branch
        %158 = sbr.rel (%p156) target = $region28
      $region27: #{flow_generator_forward.11} parent=23 // pred_region
        %p159 = scmp.lt.s32.totalorder %s11, 1
        %s160 = scalar_select %p159, %s11, 1
        %s161 = smul.addr %s160, 4
        %s162 = smul.addr %s161, 8
        %s163 = scalar_lea.vmem %s0, %s162
      $region28: #{flow_generator_forward.11} parent=23 // pred_fallthru
        _
    $region24: #{flow_generator_forward.11} parent=5 // pred_fallthru
      _
    %p164 = scmp.le.s32.totalorder 1, %s11
    %p165 = scmp.lt.s32.totalorder %s11, 3
    %p166 = pnand %p164, %p165
    %p167 = pneg %p166
    // Predicated region
    $region29: #{flow_generator_forward.11} parent=5 // pred_check
      _
    $region30: #{flow_generator_forward.11} parent=5 // pred_check_branch
      %169 = sbr.rel (%p166) target = $region32
    $region31: #{flow_generator_forward.11} parent=5 // pred_region
      %s170 = ssub.s32 %s11, 1
      %p171 = scmp.lt.s32.totalorder %s16, 1
      %s172 = scalar_select %p171, %s16, 1
      %s173 = smul.addr %s172, 4
      %s174 = smul.addr %s173, 8
      %s175 = scalar_lea.vmem %s0, %s174
      %p176 = pneg %p37
      %p177 = pneg %p34
      %p178 = pneg %p58
      %p179 = pneg %p55
      %p180 = pneg %p79
      %p181 = pneg %p76
      %p182 = pneg %p105
      %p183 = pneg %p102
      %p184 = scmp.lt.s32.totalorder %s16, 1
      %s185 = scalar_select %p184, %s16, 1
      %s186 = smul.addr %s185, 2
      %s187 = smul.addr %s186, 8
      %s188 = scalar_lea.vmem %s3, %s187
      %p189 = pneg %p131
      %p190 = pneg %p128
      %p191 = scmp.lt.s32.totalorder %s16, 1
      %s192 = scalar_select %p191, %s16, 1
      %s193 = smul.addr %s192, 8
      %s194 = scalar_lea.vmem %s4, %s193
      %p195 = scmp.lt.s32.totalorder %s16, 1
      %s196 = scalar_select %p195, %s16, 1
      %s197 = smul.addr %s196, 4
      %s198 = smul.addr %s197, 8
      %s199 = scalar_lea.vmem %s0, %s198
      %p200 = scmp.lt.s32.totalorder %s16, 1
      %s201 = scalar_select %p200, %s16, 1
      %s202 = smul.addr %s201, 2
      %s203 = smul.addr %s202, 8
      %s204 = scalar_lea.vmem %s3, %s203
      %p205 = scmp.lt.s32.totalorder %s16, 1
      %s206 = scalar_select %p205, %s16, 1
      %s207 = smul.addr %s206, 8
      %s208 = scalar_lea.vmem %s4, %s207
      %v212 = vld [vmem:[%s199] sm:$0xff]
      %v213 = vld [vmem:[%s199 + $0x8] sm:$0xff]
      %v214 = vld [vmem:[%s199 + $0x10] sm:$0xff]
      %v215 = vld [vmem:[%s199 + $0x18] sm:$0xff]
      %v216 = vlaneseq
      %v217 = vand.u32 %v216, 127
      %v218 = vadd.s32 %v217, 128
      %vm219 = vcmp.lt.s32.totalorder %v217, 0
      %v220 = vsub.s32 0, %v217
      %v221 = vsel %vm219, %v220, %v217
      %v222 = vshrl.u32 %v221, 4
      %v223 = vand.u32 %v221, 15
      %v224 = vsub.s32 0, %v223
      %v225 = vsel %vm219, %v224, %v223
      %vm226 = vcmp.lt.s32.totalorder %v218, 0
      %v227 = vsub.s32 0, %v218
      %v228 = vsel %vm226, %v227, %v218
      %v229 = vshrl.u32 %v228, 4
      %v230 = vand.u32 %v228, 15
      %v231 = vsub.s32 0, %v230
      %v232 = vsel %vm226, %v231, %v230
      %vm233 = vcmp.ne.s32.totalorder %v225, 0
      %vm234 = vcmp.ne.s32.totalorder %v232, 0
      %vm235 = vcmp.lt.s32.totalorder %v225, 0
      %vm236 = vcmp.lt.s32.totalorder %v232, 0
      %vm237 = vmand %vm235, %vm233
      %vm238 = vmand %vm236, %vm234
      %v239 = vadd.s32 %v225, 16
      %v240 = vadd.s32 %v232, 16
      %v241 = vsel %vm237, %v239, %v225
      %v242 = vsel %vm238, %v240, %v232
      %v243 = vadd.s32 %v241, 4294967295
      %v244 = vadd.s32 %v242, 4294967295
      %vm245 = vcmp.ge.s32.totalorder %v243, 0
      %vm246 = vcmp.ge.s32.totalorder %v244, 0
      %vm247 = vcmp.lt.s32.totalorder %v243, 16
      %vm248 = vcmp.lt.s32.totalorder %v244, 16
      %vm249 = vmand %vm245, %vm247
      %vm250 = vmand %vm246, %vm248
      %v251 = vadd.s32 %v241, 1
      %v252 = vadd.s32 %v242, 1
      %vm253 = vcmp.ge.s32.totalorder %v251, 0
      %vm254 = vcmp.ge.s32.totalorder %v252, 0
      %vm255 = vcmp.lt.s32.totalorder %v251, 16
      %vm256 = vcmp.lt.s32.totalorder %v252, 16
      %vm257 = vmand %vm253, %vm255
      %vm258 = vmand %vm254, %vm256
      %v259 = vpack.c.bf16 %v214, %v212
      %v260 = vpack.c.bf16 %v215, %v213
      %263 = vrot.lane.b32.xlu0 %v259, 17
      %v264 = vpop.permute.xlu0 %263
      %265 = vrot.lane.b32.xlu0 %v260, 17
      %v266 = vpop.permute.xlu0 %265
      %vm267 = vcmask 138240
      %v268 = vsel %vm267, %v264, %v266
      %vm270 = vcmask 138240
      %v273 = vsel %vm270, 0, %v264
      %v276 = vsel %vm270, %v266, 0
      %v278 = vsel %vm249, 1, 0
      %v279 = vsel %vm250, 1, 0
      %vm280 = vcmp.eq.s32.totalorder %v278, 1
      %vm281 = vcmp.eq.s32.totalorder %v279, 1
      %vm282 = vmpackc.low %vm281, %vm280
      %v283 = vsel %vm282, 65537, 0
      %v284 = vlaneseq
      %v285 = vshrl.u32 %v284, 7
      %v286 = vsub.s32 0, %v285
      %v287 = vrot.slane %v283, %v286
      %v288 = vlaneseq
      %v289 = vshrl.u32 %v288, 7
      %v290 = vsub.s32 4, %v289
      %v291 = vrot.slane %v283, %v290
      %vm292 = vcmp.ne.s16.totalorder %v287, 0
      %vm293 = vcmp.ne.s16.totalorder %v291, 0
      %v294 = vsel %vm292, %v273, 0
      %v295 = vsel %vm293, %v268, 0
      %v296 = vsel %vm257, 1, 0
      %v297 = vsel %vm258, 1, 0
      %vm298 = vcmp.eq.s32.totalorder %v296, 1
      %vm299 = vcmp.eq.s32.totalorder %v297, 1
      %vm300 = vmpackc.low %vm299, %vm298
      %v301 = vsel %vm300, 65537, 0
      %v302 = vlaneseq
      %v303 = vshrl.u32 %v302, 7
      %v304 = vsub.s32 0, %v303
      %v305 = vrot.slane %v301, %v304
      %v306 = vlaneseq
      %v307 = vshrl.u32 %v306, 7
      %v308 = vsub.s32 4, %v307
      %v309 = vrot.slane %v301, %v308
      %310 = vrot.lane.b32.xlu0 %v305, 2
      %v311 = vpop.permute.xlu0 %310
      %312 = vrot.lane.b32.xlu0 %v309, 2
      %v313 = vpop.permute.xlu0 %312
      %vm314 = vcmask 15360
      %v315 = vsel %vm314, %v311, %v313
      %vm316 = vcmp.ne.s16.totalorder %v311, 0
      %vm317 = vcmp.ne.s16.totalorder %v315, 0
      %vm318 = vcmp.ne.s16.totalorder %v313, 0
      %v319 = vsel %vm316, %v273, 0
      %v320 = vsel %vm317, %v268, 0
      %v321 = vsel %vm318, %v276, 0
      %322 = vrot.lane.b32.xlu0 %v287, 16
      %v323 = vpop.permute.xlu0 %322
      %324 = vrot.lane.b32.xlu0 %v291, 16
      %v325 = vpop.permute.xlu0 %324
      %vm326 = vcmask 130048
      %v327 = vsel %vm326, %v323, %v325
      %vm328 = vcmp.ne.s16.totalorder %v323, 0
      %vm329 = vcmp.ne.s16.totalorder %v327, 0
      %vm330 = vcmp.ne.s16.totalorder %v325, 0
      %v331 = vsel %vm328, %v273, 0
      %v332 = vsel %vm329, %v268, 0
      %v333 = vsel %vm330, %v276, 0
      %334 = vrot.lane.b32.xlu0 %v305, 18
      %v335 = vpop.permute.xlu0 %334
      %336 = vrot.lane.b32.xlu0 %v309, 18
      %v337 = vpop.permute.xlu0 %336
      %vm338 = vcmask 146432
      %v339 = vsel %vm338, %v335, %v337
      %vm340 = vcmp.ne.s16.totalorder %v335, 0
      %vm341 = vcmp.ne.s16.totalorder %v339, 0
      %vm342 = vcmp.ne.s16.totalorder %v337, 0
      %v343 = vsel %vm340, %v273, 0
      %v344 = vsel %vm341, %v268, 0
      %v345 = vsel %vm342, %v276, 0
      %346 = vrot.lane.b32.xlu0 %v287, 32
      %v347 = vpop.permute.xlu0 %346
      %348 = vrot.lane.b32.xlu0 %v291, 32
      %v349 = vpop.permute.xlu0 %348
      %vm350 = vcmask 261120
      %v351 = vsel %vm350, %v347, %v349
      %vm352 = vcmp.ne.s16.totalorder %v347, 0
      %vm353 = vcmp.ne.s16.totalorder %v351, 0
      %vm354 = vcmp.ne.s16.totalorder %v349, 0
      %v355 = vsel %vm352, %v273, 0
      %v356 = vsel %vm353, %v268, 0
      %v357 = vsel %vm354, %v276, 0
      %358 = vrot.lane.b32.xlu0 %v305, 34
      %v359 = vpop.permute.xlu0 %358
      %360 = vrot.lane.b32.xlu0 %v309, 34
      %v361 = vpop.permute.xlu0 %360
      %vm362 = vcmask 277504
      %v363 = vsel %vm362, %v359, %v361
      %vm364 = vcmp.ne.s16.totalorder %v359, 0
      %vm365 = vcmp.ne.s16.totalorder %v363, 0
      %vm366 = vcmp.ne.s16.totalorder %v361, 0
      %v367 = vsel %vm364, %v273, 0
      %v368 = vsel %vm365, %v268, 0
      %v369 = vsel %vm366, %v276, 0
      %372 = vrot.lane.b32.xlu0 %v273, 127
      %v373 = vpop.permute.xlu0 %372
      %374 = vrot.lane.b32.xlu0 %v268, 127
      %v375 = vpop.permute.xlu0 %374
      %376 = vrot.lane.b32.xlu0 %v276, 127
      %v377 = vpop.permute.xlu0 %376
      %vm378 = vcmask 1039360
      %v379 = vsel %vm378, %v373, %v375
      %v380 = vsel %vm378, %v375, %v377
      %386 = vrot.lane.b32.xlu0 %v319, 126
      %v387 = vpop.permute.xlu0 %386
      %388 = vrot.lane.b32.xlu0 %v320, 126
      %v389 = vpop.permute.xlu0 %388
      %390 = vrot.lane.b32.xlu0 %v321, 126
      %v391 = vpop.permute.xlu0 %390
      %vm392 = vcmask 1031168
      %v393 = vsel %vm392, %v387, %v389
      %v394 = vsel %vm392, %v389, %v391
      %400 = vrot.lane.b32.xlu0 %v331, 112
      %v401 = vpop.permute.xlu0 %400
      %402 = vrot.lane.b32.xlu0 %v332, 112
      %v403 = vpop.permute.xlu0 %402
      %404 = vrot.lane.b32.xlu0 %v333, 112
      %v405 = vpop.permute.xlu0 %404
      %vm406 = vcmask 916480
      %v407 = vsel %vm406, %v401, %v403
      %v408 = vsel %vm406, %v403, %v405
      %411 = vrot.lane.b32.xlu0 %v273, 111
      %v412 = vpop.permute.xlu0 %411
      %413 = vrot.lane.b32.xlu0 %v268, 111
      %v414 = vpop.permute.xlu0 %413
      %415 = vrot.lane.b32.xlu0 %v276, 111
      %v416 = vpop.permute.xlu0 %415
      %vm417 = vcmask 908288
      %v418 = vsel %vm417, %v412, %v414
      %v419 = vsel %vm417, %v414, %v416
      %425 = vrot.lane.b32.xlu0 %v343, 110
      %v426 = vpop.permute.xlu0 %425
      %427 = vrot.lane.b32.xlu0 %v344, 110
      %v428 = vpop.permute.xlu0 %427
      %429 = vrot.lane.b32.xlu0 %v345, 110
      %v430 = vpop.permute.xlu0 %429
      %vm431 = vcmask 900096
      %v432 = vsel %vm431, %v426, %v428
      %v433 = vsel %vm431, %v428, %v430
      %439 = vrot.lane.b32.xlu0 %v355, 96
      %v440 = vpop.permute.xlu0 %439
      %441 = vrot.lane.b32.xlu0 %v356, 96
      %v442 = vpop.permute.xlu0 %441
      %443 = vrot.lane.b32.xlu0 %v357, 96
      %v444 = vpop.permute.xlu0 %443
      %vm445 = vcmask 785408
      %v446 = vsel %vm445, %v440, %v442
      %v447 = vsel %vm445, %v442, %v444
      %450 = vrot.lane.b32.xlu0 %v273, 95
      %v451 = vpop.permute.xlu0 %450
      %452 = vrot.lane.b32.xlu0 %v268, 95
      %v453 = vpop.permute.xlu0 %452
      %454 = vrot.lane.b32.xlu0 %v276, 95
      %v455 = vpop.permute.xlu0 %454
      %vm456 = vcmask 777216
      %v457 = vsel %vm456, %v451, %v453
      %v458 = vsel %vm456, %v453, %v455
      %464 = vrot.lane.b32.xlu0 %v367, 94
      %v465 = vpop.permute.xlu0 %464
      %466 = vrot.lane.b32.xlu0 %v368, 94
      %v467 = vpop.permute.xlu0 %466
      %468 = vrot.lane.b32.xlu0 %v369, 94
      %v469 = vpop.permute.xlu0 %468
      %vm470 = vcmask 769024
      %v471 = vsel %vm470, %v465, %v467
      %v472 = vsel %vm470, %v467, %v469
      %v475 = vld [vmem:[%s1] sm:$0xff]
      %v476 = vld [vmem:[%s2] sm:$0xff]
      %478 = vset.pattern.permute.xlu0 0
      %479 = vperm.xlu0 %478, %v476
      %v480 = vpop.permute.xlu0 %479
      %v483 = vunpack.c.l.b16 %v475
      %v484 = vunpack.c.h.b16 %v475
      %v485 = vpack.c.b16 %v483, %v483
      %v486 = vpack.c.b16 %v484, %v484
      %vm488 = vcmask 130048
      %v490 = vsel %vm488, %v486, 0
      %492 = vmatprep.subr.bf16.mxu0 %v295
      %493 = vmatpush1.bf16.msra.mxu0 %v294
      %494 = vmatprep.subr.bf16.mxu0 %v380
      %495 = vmatpush1.bf16.msra.mxu0 %v379
      %496 = vmatprep.subr.bf16.mxu0 %v394
      %497 = vmatpush1.bf16.msra.mxu0 %v393
      %498 = vmatprep.subr.bf16.mxu0 %v408
      %499 = vmatpush1.bf16.msra.mxu0 %v407
      %500 = vmatprep.subr.bf16.mxu0 %v419
      %501 = vmatpush1.bf16.msra.mxu0 %v418
      %502 = vmatprep.subr.bf16.mxu0 %v433
      %503 = vmatpush1.bf16.msra.mxu0 %v432
      %504 = vmatprep.subr.bf16.mxu0 %v447
      %505 = vmatpush1.bf16.msra.mxu0 %v446
      %506 = vmatprep.subr.bf16.mxu0 %v458
      %507 = vmatpush1.bf16.msra.mxu0 %v457
      %508 = vmatprep.subr.bf16.mxu0 %v472
      %509 = vmatpush1.bf16.msra.mxu0 %v471
      %510 = vmatprep.subr.bf16.mxu0 0
      %511 = vmatpush1.bf16.msra.mxu0 0
      %512 = vmatprep.subr.bf16.mxu0 0
      %513 = vmatpush1.bf16.msra.mxu0 0
      %514 = vmatprep.subr.bf16.mxu0 0
      %515 = vmatpush1.bf16.msra.mxu0 0
      %516 = vmatprep.subr.bf16.mxu0 0
      %517 = vmatpush1.bf16.msra.mxu0 0
      %518 = vmatprep.subr.bf16.mxu0 0
      %519 = vmatpush1.bf16.msra.mxu0 0
      %520 = vmatprep.subr.bf16.mxu0 0
      %521 = vmatpush1.bf16.msra.mxu0 0
      %522 = vmatprep.subr.bf16.mxu0 0
      %523 = vmatpush1.bf16.msra.mxu0 0
      %524 = vmatprep.mubr.bf16.mxu0 %v490
      %525 = vmatmul.mubr.bf16.gmra.mrb[0].mxu0 %v485
      %v526 = vpop.f32.mrb[0].mxu0
      %v527 = vadd.f32 %v480, %v526
      %v528 = vpop.f32.mrb[0].mxu0
      %v529 = vadd.f32 %v480, %v528
      %v530 = vpop.f32.mrb[0].mxu0
      %v531 = vpop.f32.mrb[0].mxu0
      %532 = vdwg.mxu0
      %533 = vst [vmem:[%s204] sm:$0xff] %v527
      %534 = vst [vmem:[%s204 + $0x8] sm:$0xff] %v529
      %v535 = vadd.f32 %v527, %v529
      %536 = vadd.xlane.f32.xlu0 %v535
      %v537 = vpop.xlane.xlu0 %536
      %v538 = vmul.f32 %v527, %v527
      %v539 = vmul.f32 %v529, %v529
      %v540 = vadd.f32 %v538, %v539
      %541 = vadd.xlane.f32.xlu0 %v540
      %v542 = vpop.xlane.xlu0 %541
      %vm543 = vcmask 7168
      %v544 = vsel %vm543, %v537, %v542
      %vm545 = vcmask 15360
      %546 = vst.msk [vmem:[%s208] sm:$0xff] %vm545, %v544
      %p547 = scmp.lt.s32.totalorder %s16, 1
      %s548 = scalar_select %p547, %s16, 1
      %s549 = smul.addr %s548, 2
      %s550 = smul.addr %s549, 8
      %s551 = scalar_lea.vmem %s3, %s550
      %p552 = scmp.lt.s32.totalorder %s16, 1
      %s553 = scalar_select %p552, %s16, 1
      %s554 = smul.addr %s553, 8
      %s555 = scalar_lea.vmem %s4, %s554
      // Predicated region
      $region33: #{flow_generator_forward.11} parent=31 // pred_check
        %p556 = pneg %p102
      $region34: #{flow_generator_forward.11} parent=31 // pred_check_branch
        %558 = sbr.rel (%p556) target = $region36
      $region35: #{flow_generator_forward.11} parent=31 // pred_region
        _
      $region36: #{flow_generator_forward.11} parent=31 // pred_fallthru
        _
      // Predicated region
      $region37: #{flow_generator_forward.11} parent=31 // pred_check
        %p559 = pneg %p128
      $region38: #{flow_generator_forward.11} parent=31 // pred_check_branch
        %561 = sbr.rel (%p559) target = $region40
      $region39: #{flow_generator_forward.11} parent=31 // pred_region
        _
      $region40: #{flow_generator_forward.11} parent=31 // pred_fallthru
        _
    $region32: #{flow_generator_forward.11} parent=5 // pred_fallthru
      _
    %p562 = scmp.le.s32.totalorder 2, %s11
    // Predicated region
    $region41: #{flow_generator_forward.11} parent=5 // pred_check
      %p563 = pneg %p562
    $region42: #{flow_generator_forward.11} parent=5 // pred_check_branch
      %565 = sbr.rel (%p563) target = $region44
    $region43: #{flow_generator_forward.11} parent=5 // pred_region
      %s566 = ssub.s32 %s11, 2
      // Predicated region
      $region45: #{flow_generator_forward.11} parent=43 // pred_check
        %p567 = pneg %p108
      $region46: #{flow_generator_forward.11} parent=43 // pred_check_branch
        %569 = sbr.rel (%p567) target = $region48
      $region47: #{flow_generator_forward.11} parent=43 // pred_region
        %p570 = scmp.lt.s32.totalorder %s17, 1
        %s571 = scalar_select %p570, %s17, 1
        %s572 = smul.addr %s571, 2
        %s573 = smul.addr %s572, 8
        %s574 = scalar_lea.vmem %s3, %s573
      $region48: #{flow_generator_forward.11} parent=43 // pred_fallthru
        _
      // Predicated region
      $region49: #{flow_generator_forward.11} parent=43 // pred_check
        %p575 = pneg %p134
      $region50: #{flow_generator_forward.11} parent=43 // pred_check_branch
        %577 = sbr.rel (%p575) target = $region52
      $region51: #{flow_generator_forward.11} parent=43 // pred_region
        %p578 = scmp.lt.s32.totalorder %s17, 1
        %s579 = scalar_select %p578, %s17, 1
        %s580 = smul.addr %s579, 8
        %s581 = scalar_lea.vmem %s4, %s580
      $region52: #{flow_generator_forward.11} parent=43 // pred_fallthru
        _
    $region44: #{flow_generator_forward.11} parent=5 // pred_fallthru
      _
  $region6: #{flow_generator_forward.11} parent=0 // loop_footer
    %s15 = sadd.s32 1, %s11
  $region7: #{flow_generator_forward.11} parent=0 // loop_footer_branch
    %10 = sbr.rel target = $region3
  $region8: #{flow_generator_forward.11} parent=0 // loop_exit
    _

// kernel: flow_generator_forward.12
$region0: #{flow_generator_forward.12}
  #allocation0 [shape = 'u32[]', space=smem, size = 0x4, offset = 0x4, fixed_abs, tag = 'smem constant byte address 0x4 - core index']
  #allocation1 [shape = 'u32[144,128]{1,0:T(1,128)}', space=vmem, size = 0x12000, scoped, tag = 'internal scratch']
  %s0 = inlined_call_operand.vmem [shape: f32[2,32,64], index: 0, kind: input, shape index: {}]
  %s1 = inlined_call_operand.vmem [shape: f32[32,1], index: 1, kind: input, shape index: {}]
  %s2 = inlined_call_operand.vmem [shape: f32[32,1], index: 2, kind: input, shape index: {}]
  %s3 = inlined_call_operand.vmem [shape: bf16[16,72], index: 3, kind: input, shape index: {}]
  %s4 = inlined_call_operand.vmem [shape: f32[16,1], index: 4, kind: input, shape index: {}]
  %s5 = inlined_call_operand.vmem [shape: f32[2,16,64], index: 5, kind: output, shape index: {0}]
  %s6 = inlined_call_operand.vmem [shape: f32[2,16,2], index: 6, kind: output, shape index: {1}]
  %7 = xla_tuple %s5, %s6
  %s8 = sld [smem:[#allocation0]]
  $region61: #{flow_generator_forward.12} parent=0
    _
  %s10 = ssub.s32 1, %s8
  %s11 = scalar_select 0, %s10, %s8
  loop: start=0, step=1, limit=4
  $region2: #{flow_generator_forward.12} parent=0 // loop_pre_header
    _
  $region3: #{flow_generator_forward.12} parent=0 // loop_header
    %s13 = sphi 0, %s17
    %p14 = scmp.ge.s32.totalorder %s13, 4
    %s23 = sphi 0, %s25
    %s26 = sphi 0, %s23
    %s27 = sphi 0, %s26
    %s43 = sphi 0, %s27
    %s47 = sphi 0, %s47
    %s49 = sphi 0, %s47
    %s50 = sphi 0, %s49
    %s64 = sphi 0, %s50
    %s68 = sphi 0, %s68
    %s70 = sphi 0, %s68
    %s71 = sphi 0, %s70
    %s85 = sphi 0, %s71
    %s89 = sphi 0, %s89
    %s91 = sphi 0, %s89
    %s92 = sphi 0, %s91
    %s106 = sphi 0, %s92
    %s110 = sphi 0, %s110
    %s112 = sphi 0, %s110
    %s113 = sphi 0, %s112
    %s127 = sphi 0, %s113
    %s133 = sphi 0, %s135
    %s136 = sphi 0, %s133
    %s137 = sphi 0, %s136
    %s153 = sphi 0, %s137
    %s159 = sphi 0, %s161
    %s162 = sphi 0, %s159
    %s163 = sphi 0, %s162
    %s179 = sphi 0, %s163
  $region4: #{flow_generator_forward.12} parent=0 // loop_header_branch
    %16 = sbr.rel (%p14) target = $region8
  $region5: #{flow_generator_forward.12} parent=0 // loop_body
    %s18 = ssub.s32 %s13, 1
    %s19 = ssub.s32 %s13, 2
    %s20 = sadd.s32 %s13, 1
    %s21 = ssub.s32 %s13, %s20
    %p22 = scmp.eq.s32.totalorder %s21, 0
    %s24 = sadd.s32 %s23, 1
    %s25 = scalar_select %p22, %s23, %s24
    %p28 = pneg %p22
    %p29 = scmp.eq.s32.totalorder %s13, 1
    %p30 = por %p28, %p29
    %p31 = scmp.ne.s32.totalorder %s23, %s26
    %p32 = scmp.eq.s32.totalorder %s13, 0
    %p33 = por %p31, %p32
    %p34 = scmp.ne.s32.totalorder %s23, %s26
    %p35 = scmp.eq.s32.totalorder %s18, 1
    %p36 = por %p34, %p35
    %p37 = scmp.ne.s32.totalorder %s26, %s27
    %p38 = scmp.eq.s32.totalorder %s18, 0
    %p39 = por %p37, %p38
    %p40 = scmp.ne.s32.totalorder %s26, %s27
    %p41 = scmp.eq.s32.totalorder %s19, 1
    %p42 = por %p40, %p41
    %p44 = scmp.ne.s32.totalorder %s27, %s43
    %p45 = scmp.eq.s32.totalorder %s19, 0
    %p46 = por %p44, %p45
    %s48 = sadd.s32 %s47, 1
    %p51 = scmp.eq.s32.totalorder %s13, 1
    %p52 = scmp.ne.s32.totalorder %s47, %s49
    %p53 = scmp.eq.s32.totalorder %s13, 0
    %p54 = por %p52, %p53
    %p55 = scmp.ne.s32.totalorder %s47, %s49
    %p56 = scmp.eq.s32.totalorder %s18, 1
    %p57 = por %p55, %p56
    %p58 = scmp.ne.s32.totalorder %s49, %s50
    %p59 = scmp.eq.s32.totalorder %s18, 0
    %p60 = por %p58, %p59
    %p61 = scmp.ne.s32.totalorder %s49, %s50
    %p62 = scmp.eq.s32.totalorder %s19, 1
    %p63 = por %p61, %p62
    %p65 = scmp.ne.s32.totalorder %s50, %s64
    %p66 = scmp.eq.s32.totalorder %s19, 0
    %p67 = por %p65, %p66
    %s69 = sadd.s32 %s68, 1
    %p72 = scmp.eq.s32.totalorder %s13, 1
    %p73 = scmp.ne.s32.totalorder %s68, %s70
    %p74 = scmp.eq.s32.totalorder %s13, 0
    %p75 = por %p73, %p74
    %p76 = scmp.ne.s32.totalorder %s68, %s70
    %p77 = scmp.eq.s32.totalorder %s18, 1
    %p78 = por %p76, %p77
    %p79 = scmp.ne.s32.totalorder %s70, %s71
    %p80 = scmp.eq.s32.totalorder %s18, 0
    %p81 = por %p79, %p80
    %p82 = scmp.ne.s32.totalorder %s70, %s71
    %p83 = scmp.eq.s32.totalorder %s19, 1
    %p84 = por %p82, %p83
    %p86 = scmp.ne.s32.totalorder %s71, %s85
    %p87 = scmp.eq.s32.totalorder %s19, 0
    %p88 = por %p86, %p87
    %s90 = sadd.s32 %s89, 1
    %p93 = scmp.eq.s32.totalorder %s13, 1
    %p94 = scmp.ne.s32.totalorder %s89, %s91
    %p95 = scmp.eq.s32.totalorder %s13, 0
    %p96 = por %p94, %p95
    %p97 = scmp.ne.s32.totalorder %s89, %s91
    %p98 = scmp.eq.s32.totalorder %s18, 1
    %p99 = por %p97, %p98
    %p100 = scmp.ne.s32.totalorder %s91, %s92
    %p101 = scmp.eq.s32.totalorder %s18, 0
    %p102 = por %p100, %p101
    %p103 = scmp.ne.s32.totalorder %s91, %s92
    %p104 = scmp.eq.s32.totalorder %s19, 1
    %p105 = por %p103, %p104
    %p107 = scmp.ne.s32.totalorder %s92, %s106
    %p108 = scmp.eq.s32.totalorder %s19, 0
    %p109 = por %p107, %p108
    %s111 = sadd.s32 %s110, 1
    %p114 = scmp.eq.s32.totalorder %s13, 1
    %p115 = scmp.ne.s32.totalorder %s110, %s112
    %p116 = scmp.eq.s32.totalorder %s13, 0
    %p117 = por %p115, %p116
    %p118 = scmp.ne.s32.totalorder %s110, %s112
    %p119 = scmp.eq.s32.totalorder %s18, 1
    %p120 = por %p118, %p119
    %p121 = scmp.ne.s32.totalorder %s112, %s113
    %p122 = scmp.eq.s32.totalorder %s18, 0
    %p123 = por %p121, %p122
    %p124 = scmp.ne.s32.totalorder %s112, %s113
    %p125 = scmp.eq.s32.totalorder %s19, 1
    %p126 = por %p124, %p125
    %p128 = scmp.ne.s32.totalorder %s113, %s127
    %p129 = scmp.eq.s32.totalorder %s19, 0
    %p130 = por %p128, %p129
    %s131 = ssub.s32 %s13, %s20
    %p132 = scmp.eq.s32.totalorder %s131, 0
    %s134 = sadd.s32 %s133, 1
    %s135 = scalar_select %p132, %s133, %s134
    %p138 = pneg %p132
    %p139 = scmp.eq.s32.totalorder %s13, 1
    %p140 = por %p138, %p139
    %p141 = scmp.ne.s32.totalorder %s133, %s136
    %p142 = scmp.eq.s32.totalorder %s13, 0
    %p143 = por %p141, %p142
    %p144 = scmp.ne.s32.totalorder %s133, %s136
    %p145 = scmp.eq.s32.totalorder %s18, 1
    %p146 = por %p144, %p145
    %p147 = scmp.ne.s32.totalorder %s136, %s137
    %p148 = scmp.eq.s32.totalorder %s18, 0
    %p149 = por %p147, %p148
    %p150 = scmp.ne.s32.totalorder %s136, %s137
    %p151 = scmp.eq.s32.totalorder %s19, 1
    %p152 = por %p150, %p151
    %p154 = scmp.ne.s32.totalorder %s137, %s153
    %p155 = scmp.eq.s32.totalorder %s19, 0
    %p156 = por %p154, %p155
    %s157 = ssub.s32 %s13, %s20
    %p158 = scmp.eq.s32.totalorder %s157, 0
    %s160 = sadd.s32 %s159, 1
    %s161 = scalar_select %p158, %s159, %s160
    %p164 = pneg %p158
    %p165 = scmp.eq.s32.totalorder %s13, 1
    %p166 = por %p164, %p165
    %p167 = scmp.ne.s32.totalorder %s159, %s162
    %p168 = scmp.eq.s32.totalorder %s13, 0
    %p169 = por %p167, %p168
    %p170 = scmp.ne.s32.totalorder %s159, %s162
    %p171 = scmp.eq.s32.totalorder %s18, 1
    %p172 = por %p170, %p171
    %p173 = scmp.ne.s32.totalorder %s162, %s163
    %p174 = scmp.eq.s32.totalorder %s18, 0
    %p175 = por %p173, %p174
    %p176 = scmp.ne.s32.totalorder %s162, %s163
    %p177 = scmp.eq.s32.totalorder %s19, 1
    %p178 = por %p176, %p177
    %p180 = scmp.ne.s32.totalorder %s163, %s179
    %p181 = scmp.eq.s32.totalorder %s19, 0
    %p182 = por %p180, %p181
    %p183 = scmp.le.s32.totalorder 1, %s13
    %p184 = scmp.lt.s32.totalorder %s13, 3
    %p185 = pnand %p183, %p184
    %p186 = pneg %p185
    // Predicated region
    $region9: #{flow_generator_forward.12} parent=5 // pred_check
      _
    $region10: #{flow_generator_forward.12} parent=5 // pred_check_branch
      %188 = sbr.rel (%p185) target = $region12
    $region11: #{flow_generator_forward.12} parent=5 // pred_region
      %s189 = ssub.s32 %s13, 1
      // Predicated region
      $region13: #{flow_generator_forward.12} parent=11 // pred_check
        %p190 = pneg %p60
      $region14: #{flow_generator_forward.12} parent=11 // pred_check_branch
        %192 = sbr.rel (%p190) target = $region16
      $region15: #{flow_generator_forward.12} parent=11 // pred_region
        _
      $region16: #{flow_generator_forward.12} parent=11 // pred_fallthru
        _
      // Predicated region
      $region17: #{flow_generator_forward.12} parent=11 // pred_check
        %p193 = pneg %p81
      $region18: #{flow_generator_forward.12} parent=11 // pred_check_branch
        %195 = sbr.rel (%p193) target = $region20
      $region19: #{flow_generator_forward.12} parent=11 // pred_region
        _
      $region20: #{flow_generator_forward.12} parent=11 // pred_fallthru
        _
      // Predicated region
      $region21: #{flow_generator_forward.12} parent=11 // pred_check
        %p196 = pneg %p102
      $region22: #{flow_generator_forward.12} parent=11 // pred_check_branch
        %198 = sbr.rel (%p196) target = $region24
      $region23: #{flow_generator_forward.12} parent=11 // pred_region
        _
      $region24: #{flow_generator_forward.12} parent=11 // pred_fallthru
        _
      // Predicated region
      $region25: #{flow_generator_forward.12} parent=11 // pred_check
        %p199 = pneg %p123
      $region26: #{flow_generator_forward.12} parent=11 // pred_check_branch
        %201 = sbr.rel (%p199) target = $region28
      $region27: #{flow_generator_forward.12} parent=11 // pred_region
        _
      $region28: #{flow_generator_forward.12} parent=11 // pred_fallthru
        _
    $region12: #{flow_generator_forward.12} parent=5 // pred_fallthru
      _
    %p202 = scmp.lt.s32.totalorder %s13, 2
    // Predicated region
    $region29: #{flow_generator_forward.12} parent=5 // pred_check
      %p203 = pneg %p202
    $region30: #{flow_generator_forward.12} parent=5 // pred_check_branch
      %205 = sbr.rel (%p203) target = $region32
    $region31: #{flow_generator_forward.12} parent=5 // pred_region
      // Predicated region
      $region33: #{flow_generator_forward.12} parent=31 // pred_check
        %p206 = pneg %p33
      $region34: #{flow_generator_forward.12} parent=31 // pred_check_branch
        %208 = sbr.rel (%p206) target = $region36
      $region35: #{flow_generator_forward.12} parent=31 // pred_region
        %p209 = scmp.lt.s32.totalorder %s13, 1
        %s210 = scalar_select %p209, %s13, 1
        %s211 = smul.addr %s210, 4
        %s212 = smul.addr %s211, 8
        %s213 = scalar_lea.vmem %s0, %s212
      $region36: #{flow_generator_forward.12} parent=31 // pred_fallthru
        _
    $region32: #{flow_generator_forward.12} parent=5 // pred_fallthru
      _
    %p214 = scmp.le.s32.totalorder 1, %s13
    %p215 = scmp.lt.s32.totalorder %s13, 3
    %p216 = pnand %p214, %p215
    %p217 = pneg %p216
    // Predicated region
    $region37: #{flow_generator_forward.12} parent=5 // pred_check
      _
    $region38: #{flow_generator_forward.12} parent=5 // pred_check_branch
      %219 = sbr.rel (%p216) target = $region40
    $region39: #{flow_generator_forward.12} parent=5 // pred_region
      %s220 = ssub.s32 %s13, 1
      %p221 = scmp.lt.s32.totalorder %s18, 1
      %s222 = scalar_select %p221, %s18, 1
      %s223 = smul.addr %s222, 4
      %s224 = smul.addr %s223, 8
      %s225 = scalar_lea.vmem %s0, %s224
      %p226 = pneg %p39
      %p227 = pneg %p36
      %p228 = pneg %p60
      %p229 = pneg %p57
      %p230 = pneg %p81
      %p231 = pneg %p78
      %p232 = pneg %p102
      %p233 = pneg %p99
      %p234 = pneg %p123
      %p235 = pneg %p120
      %p236 = pneg %p149
      %p237 = pneg %p146
      %p238 = scmp.lt.s32.totalorder %s18, 1
      %s239 = scalar_select %p238, %s18, 1
      %s240 = smul.addr %s239, 2
      %s241 = smul.addr %s240, 8
      %s242 = scalar_lea.vmem %s5, %s241
      %p243 = pneg %p175
      %p244 = pneg %p172
      %p245 = scmp.lt.s32.totalorder %s18, 1
      %s246 = scalar_select %p245, %s18, 1
      %s247 = smul.addr %s246, 2
      %s248 = smul.addr %s247, 8
      %s249 = scalar_lea.vmem %s6, %s248
      %p250 = scmp.lt.s32.totalorder %s18, 1
      %s251 = scalar_select %p250, %s18, 1
      %s252 = smul.addr %s251, 4
      %s253 = smul.addr %s252, 8
      %s254 = scalar_lea.vmem %s0, %s253
      %p255 = scmp.lt.s32.totalorder %s18, 1
      %s256 = scalar_select %p255, %s18, 1
      %s257 = smul.addr %s256, 2
      %s258 = smul.addr %s257, 8
      %s259 = scalar_lea.vmem %s5, %s258
      %p260 = scmp.lt.s32.totalorder %s18, 1
      %s261 = scalar_select %p260, %s18, 1
      %s262 = smul.addr %s261, 2
      %s263 = smul.addr %s262, 8
      %s264 = scalar_lea.vmem %s6, %s263
      %v268 = vld [vmem:[%s254] sm:$0xff]
      %v269 = vld [vmem:[%s254 + $0x8] sm:$0xff]
      %v270 = vld [vmem:[%s254 + $0x10] sm:$0xff]
      %v271 = vld [vmem:[%s254 + $0x18] sm:$0xff]
      %v272 = vld [vmem:[%s1] sm:$0xff]
      %v273 = vld [vmem:[%s1 + $0x8] sm:$0xff]
      %v274 = vld [vmem:[%s1 + $0x10] sm:$0xff]
      %v275 = vld [vmem:[%s1 + $0x18] sm:$0xff]
      %277 = vset.pattern.permute.xlu0 0
      %278 = vperm.xlu0 %277, %v272
      %v279 = vpop.permute.xlu0 %278
      %282 = vset.pattern.permute.xlu0 0
      %283 = vperm.xlu0 %282, %v273
      %v284 = vpop.permute.xlu0 %283
      %287 = vset.pattern.permute.xlu0 0
      %288 = vperm.xlu0 %287, %v274
      %v289 = vpop.permute.xlu0 %288
      %292 = vset.pattern.permute.xlu0 0
      %293 = vperm.xlu0 %292, %v275
      %v294 = vpop.permute.xlu0 %293
      %v296 = vmul.f32 %v268, %v279
      %v297 = vmul.f32 %v269, %v284
      %v298 = vmul.f32 %v270, %v289
      %v299 = vmul.f32 %v271, %v294
      %v300 = vld [vmem:[%s2] sm:$0xff]
      %v301 = vld [vmem:[%s2 + $0x8] sm:$0xff]
      %v302 = vld [vmem:[%s2 + $0x10] sm:$0xff]
      %v303 = vld [vmem:[%s2 + $0x18] sm:$0xff]
      %305 = vset.pattern.permute.xlu0 0
      %306 = vperm.xlu0 %305, %v300
      %v307 = vpop.permute.xlu0 %306
      %310 = vset.pattern.permute.xlu0 0
      %311 = vperm.xlu0 %310, %v301
      %v312 = vpop.permute.xlu0 %311
      %315 = vset.pattern.permute.xlu0 0
      %316 = vperm.xlu0 %315, %v302
      %v317 = vpop.permute.xlu0 %316
      %320 = vset.pattern.permute.xlu0 0
      %321 = vperm.xlu0 %320, %v303
      %v322 = vpop.permute.xlu0 %321
      %v324 = vadd.f32 %v296, %v307
      %v325 = vadd.f32 %v297, %v312
      %v326 = vadd.f32 %v298, %v317
      %v327 = vadd.f32 %v299, %v322
      %vm328 = vcmp.ge.f32.partialorder %v324, 0.0
      %vm329 = vcmp.ge.f32.partialorder %v325, 0.0
      %vm330 = vcmp.ge.f32.partialorder %v326, 0.0
      %vm331 = vcmp.ge.f32.partialorder %v327, 0.0
      %v332 = vmul.f32 %v324, 0.2
      %v333 = vmul.f32 %v325, 0.2
      %v334 = vmul.f32 %v326, 0.2
      %v335 = vmul.f32 %v327, 0.2
      %v336 = vsel %vm328, %v324, %v332
      %v337 = vsel %vm329, %v325, %v333
      %v338 = vsel %vm330, %v326, %v334
      %v339 = vsel %vm331, %v327, %v335
      %v340 = vlaneseq
      %v341 = vand.u32 %v340, 127
      %vm342 = vcmp.lt.s32.totalorder %v341, 0
      %v343 = vsub.s32 0, %v341
      %v344 = vsel %vm342, %v343, %v341
      %v345 = vshrl.u32 %v344, 3
      %v346 = vand.u32 %v344, 7
      %v347 = vsub.s32 0, %v346
      %v348 = vsel %vm342, %v347, %v346
      %vm349 = vcmp.ne.s32.totalorder %v348, 0
      %vm350 = vcmp.lt.s32.totalorder %v348, 0
      %vm351 = vmand %vm350, %vm349
      %v352 = vadd.s32 %v348, 8
      %v353 = vsel %vm351, %v352, %v348
      %v354 = vadd.s32 %v353, 4294967295
      %vm355 = vcmp.ge.s32.totalorder %v354, 0
      %vm356 = vcmp.lt.s32.totalorder %v354, 8
      %vm357 = vmand %vm355, %vm356
      %v358 = vpack.c.bf16 %v336, %v336
      %360 = vrot.lane.b32.xlu0 %v358, 9
      %v361 = vpop.permute.xlu0 %360
      %vm362 = vcmask 72704
      %v365 = vsel %vm362, 0, %v361
      %vm366 = vcmask 596992
      %v367 = vsel %vm366, %v365, 0
      %v368 = vpack.c.bf16 %v337, %v337
      %370 = vrot.lane.b32.xlu0 %v368, 9
      %v371 = vpop.permute.xlu0 %370
      %v373 = vsel %vm362, 0, %v371
      %v374 = vsel %vm366, %v373, 0
      %v376 = vsel %vm357, 1, 0
      %vm377 = vcmp.eq.s32.totalorder %v376, 1
      %vm378 = vmpackc.low %vm377, %vm377
      %v379 = vsel %vm378, 65537, 0
      %v380 = vlaneseq
      %v381 = vshrl.u32 %v380, 7
      %v382 = vsub.s32 0, %v381
      %v383 = vrot.slane %v379, %v382
      %384 = vrot.lane.b32.xlu0 %v383, 8
      %v385 = vpop.permute.xlu0 %384
      %vm386 = vcmp.ne.s16.totalorder %v385, 0
      %v387 = vsel %vm386, %v374, 0
      %v388 = vpack.c.bf16 %v338, %v338
      %390 = vrot.lane.b32.xlu0 %v388, 9
      %v391 = vpop.permute.xlu0 %390
      %v393 = vsel %vm362, 0, %v391
      %v394 = vsel %vm366, %v393, 0
      %v395 = vpack.c.bf16 %v339, %v339
      %397 = vrot.lane.b32.xlu0 %v395, 9
      %v398 = vpop.permute.xlu0 %397
      %v400 = vsel %vm362, 0, %v398
      %v401 = vsel %vm366, %v400, 0
      %v403 = vsel %vm378, %v401, 0
      %v404 = vsel %vm386, %v401, 0
      %v406 = vrot.slane %v387, 4
      %407 = vrot.lane.b32.xlu0 %v406, 1
      %v408 = vpop.permute.xlu0 %407
      %v410 = vrot.slane %v394, 4
      %411 = vrot.lane.b32.xlu0 %v410, 8
      %v412 = vpop.permute.xlu0 %411
      %v414 = vrot.slane %v403, 4
      %415 = vrot.lane.b32.xlu0 %v414, 9
      %v416 = vpop.permute.xlu0 %415
      %418 = vrot.lane.b32.xlu0 %v401, 8
      %v419 = vpop.permute.xlu0 %418
      %v421 = vrot.slane %v404, 4
      %422 = vrot.lane.b32.xlu0 %v421, 1
      %v423 = vpop.permute.xlu0 %422
      %vm424 = vcmask 1043456
      %v426 = vsel %vm424, %v367, %v408
      %v428 = vsel %vm424, %v374, %v412
      %v430 = vsel %vm424, %v394, %v416
      %v433 = vsel %vm424, %v419, %v423
      %v434 = vld [vmem:[%s3] sm:$0xf]
      %v435 = vld [vmem:[%s3 + $0x4] sm:$0xf]
      %v436 = vld [vmem:[%s4] sm:$0xff]
      %v437 = vld [vmem:[%s4 + $0x8] sm:$0xff]
      %439 = vset.pattern.permute.xlu0 0
      %440 = vperm.xlu0 %439, %v436
      %v441 = vpop.permute.xlu0 %440
      %444 = vset.pattern.permute.xlu0 0
      %445 = vperm.xlu0 %444, %v437
      %v446 = vpop.permute.xlu0 %445
      %v450 = vunpack.c.l.b16 %v434
      %v451 = vunpack.c.l.b16 %v435
      %v452 = vpack.c.b16 %v451, %v450
      %457 = vrot.lane.b32.xlu0 %v426, 119
      %v458 = vpop.permute.xlu0 %457
      %459 = vrot.lane.b32.xlu0 %v428, 119
      %v460 = vpop.permute.xlu0 %459
      %461 = vrot.lane.b32.xlu0 %v430, 119
      %v462 = vpop.permute.xlu0 %461
      %463 = vrot.lane.b32.xlu0 %v433, 119
      %v464 = vpop.permute.xlu0 %463
      %465 = vrot.lane.b32.xlu0 %v401, 119
      %v466 = vpop.permute.xlu0 %465
      %vm471 = vcmask 588800
      %v473 = vsel %vm471, %v452, 0
      %v476 = vsel %vm424, %v466, 0
      %478 = vmatprep.subr.bf16.mxu0 0
      %479 = vmatpush1.bf16.msra.mxu0 %v458
      %480 = vmatprep.subr.bf16.mxu0 0
      %481 = vmatpush1.bf16.msra.mxu0 %v460
      %482 = vmatprep.subr.bf16.mxu0 0
      %483 = vmatpush1.bf16.msra.mxu0 %v462
      %484 = vmatprep.subr.bf16.mxu0 0
      %485 = vmatpush1.bf16.msra.mxu0 %v464
      %486 = vmatprep.subr.bf16.mxu0 0
      %487 = vmatpush1.bf16.msra.mxu0 %v476
      %488 = vmatprep.subr.bf16.mxu0 0
      %489 = vmatpush1.bf16.msra.mxu0 0
      %490 = vmatprep.subr.bf16.mxu0 0
      %491 = vmatpush1.bf16.msra.mxu0 0
      %492 = vmatprep.subr.bf16.mxu0 0
      %493 = vmatpush1.bf16.msra.mxu0 0
      %494 = vmatprep.subr.bf16.mxu0 0
      %495 = vmatpush1.bf16.msra.mxu0 0
      %496 = vmatprep.subr.bf16.mxu0 0
      %497 = vmatpush1.bf16.msra.mxu0 0
      %498 = vmatprep.subr.bf16.mxu0 0
      %499 = vmatpush1.bf16.msra.mxu0 0
      %500 = vmatprep.subr.bf16.mxu0 0
      %501 = vmatpush1.bf16.msra.mxu0 0
      %502 = vmatprep.subr.bf16.mxu0 0
      %503 = vmatpush1.bf16.msra.mxu0 0
      %504 = vmatprep.subr.bf16.mxu0 0
      %505 = vmatpush1.bf16.msra.mxu0 0
      %506 = vmatprep.subr.bf16.mxu0 0
      %507 = vmatpush1.bf16.msra.mxu0 0
      %508 = vmatprep.subr.bf16.mxu0 0
      %509 = vmatpush1.bf16.msra.mxu0 0
      %510 = vmatprep.mubr.bf16.mxu0 0
      %511 = vmatmul.mubr.bf16.gmra.mrb[0].mxu0 %v473
      %v512 = vpop.f32.mrb[0].mxu0
      %v513 = vadd.f32 %v441, %v512
      %v514 = vpop.f32.mrb[0].mxu0
      %v515 = vpop.f32.mrb[0].mxu0
      %v516 = vadd.f32 %v446, %v515
      %v517 = vpop.f32.mrb[0].mxu0
      %518 = vdwg.mxu0
      %vm519 = vcmask 523264
      %520 = vst.msk [vmem:[%s259] sm:$0xff] %vm519, %v513
      %521 = vst.msk [vmem:[%s259 + $0x8] sm:$0xff] %vm519, %v516
      %v522 = vsel %vm519, %v513, 0.0
      %523 = vadd.xlane.f32.xlu0 %v522
      %v524 = vpop.xlane.xlu0 %523
      %v525 = vsel %vm519, %v516, 0.0
      %526 = vadd.xlane.f32.xlu0 %v525
      %v527 = vpop.xlane.xlu0 %526
      %v528 = vmul.f32 %v513, %v513
      %v529 = vmul.f32 %v516, %v516
      %v530 = vsel %vm519, %v528, 0.0
      %531 = vadd.xlane.f32.xlu0 %v530
      %v532 = vpop.xlane.xlu0 %531
      %v533 = vsel %vm519, %v529, 0.0
      %534 = vadd.xlane.f32.xlu0 %v533
      %v535 = vpop.xlane.xlu0 %534
      %vm536 = vcmask 7168
      %v537 = vsel %vm536, %v524, %v532
      %v538 = vsel %vm536, %v527, %v535
      %vm539 = vcmask 15360
      %540 = vst.msk [vmem:[%s264] sm:$0xff] %vm539, %v537
      %541 = vst.msk [vmem:[%s264 + $0x8] sm:$0xff] %vm539, %v538
      %p542 = scmp.lt.s32.totalorder %s18, 1
      %s543 = scalar_select %p542, %s18, 1
      %s544 = smul.addr %s543, 2
      %s545 = smul.addr %s544, 8
      %s546 = scalar_lea.vmem %s5, %s545
      %p547 = scmp.lt.s32.totalorder %s18, 1
      %s548 = scalar_select %p547, %s18, 1
      %s549 = smul.addr %s548, 2
      %s550 = smul.addr %s549, 8
      %s551 = scalar_lea.vmem %s6, %s550
      // Predicated region
      $region41: #{flow_generator_forward.12} parent=39 // pred_check
        %p552 = pneg %p146
      $region42: #{flow_generator_forward.12} parent=39 // pred_check_branch
        %554 = sbr.rel (%p552) target = $region44
      $region43: #{flow_generator_forward.12} parent=39 // pred_region
        _
      $region44: #{flow_generator_forward.12} parent=39 // pred_fallthru
        _
      // Predicated region
      $region45: #{flow_generator_forward.12} parent=39 // pred_check
        %p555 = pneg %p172
      $region46: #{flow_generator_forward.12} parent=39 // pred_check_branch
        %557 = sbr.rel (%p555) target = $region48
      $region47: #{flow_generator_forward.12} parent=39 // pred_region
        _
      $region48: #{flow_generator_forward.12} parent=39 // pred_fallthru
        _
    $region40: #{flow_generator_forward.12} parent=5 // pred_fallthru
      _
    %p558 = scmp.le.s32.totalorder 2, %s13
    // Predicated region
    $region49: #{flow_generator_forward.12} parent=5 // pred_check
      %p559 = pneg %p558
    $region50: #{flow_generator_forward.12} parent=5 // pred_check_branch
      %561 = sbr.rel (%p559) target = $region52
    $region51: #{flow_generator_forward.12} parent=5 // pred_region
      %s562 = ssub.s32 %s13, 2
      // Predicated region
      $region53: #{flow_generator_forward.12} parent=51 // pred_check
        %p563 = pneg %p152
      $region54: #{flow_generator_forward.12} parent=51 // pred_check_branch
        %565 = sbr.rel (%p563) target = $region56
      $region55: #{flow_generator_forward.12} parent=51 // pred_region
        %p566 = scmp.lt.s32.totalorder %s19, 1
        %s567 = scalar_select %p566, %s19, 1
        %s568 = smul.addr %s567, 2
        %s569 = smul.addr %s568, 8
        %s570 = scalar_lea.vmem %s5, %s569
      $region56: #{flow_generator_forward.12} parent=51 // pred_fallthru
        _
      // Predicated region
      $region57: #{flow_generator_forward.12} parent=51 // pred_check
        %p571 = pneg %p178
      $region58: #{flow_generator_forward.12} parent=51 // pred_check_branch
        %573 = sbr.rel (%p571) target = $region60
      $region59: #{flow_generator_forward.12} parent=51 // pred_region
        %p574 = scmp.lt.s32.totalorder %s19, 1
        %s575 = scalar_select %p574, %s19, 1
        %s576 = smul.addr %s575, 2
        %s577 = smul.addr %s576, 8
        %s578 = scalar_lea.vmem %s6, %s577
      $region60: #{flow_generator_forward.12} parent=51 // pred_fallthru
        _
    $region52: #{flow_generator_forward.12} parent=5 // pred_fallthru
      _
  $region6: #{flow_generator_forward.12} parent=0 // loop_footer
    %s17 = sadd.s32 1, %s13
  $region7: #{flow_generator_forward.12} parent=0 // loop_footer_branch
    %12 = sbr.rel target = $region3
  $region8: #{flow_generator_forward.12} parent=0 // loop_exit
    _

// kernel: flow_generator_forward.13
$region0: #{flow_generator_forward.13}
  #allocation0 [shape = 'u32[]', space=smem, size = 0x4, offset = 0x4, fixed_abs, tag = 'smem constant byte address 0x4 - core index']
  #allocation1 [shape = 'u32[144,128]{1,0:T(1,128)}', space=vmem, size = 0x12000, scoped, tag = 'internal scratch']
  %s0 = inlined_call_operand.vmem [shape: f32[2,64,16], index: 0, kind: input, shape index: {}]
  %s1 = inlined_call_operand.vmem [shape: f32[64,1], index: 1, kind: input, shape index: {}]
  %s2 = inlined_call_operand.vmem [shape: f32[64,1], index: 2, kind: input, shape index: {}]
  %s3 = inlined_call_operand.vmem [shape: bf16[32,144], index: 3, kind: input, shape index: {}]
  %s4 = inlined_call_operand.vmem [shape: f32[32,1], index: 4, kind: input, shape index: {}]
  %s5 = inlined_call_operand.vmem [shape: f32[2,32,16], index: 5, kind: output, shape index: {0}]
  %s6 = inlined_call_operand.vmem [shape: f32[2,32,2], index: 6, kind: output, shape index: {1}]
  %7 = xla_tuple %s5, %s6
  %s8 = sld [smem:[#allocation0]]
  $region61: #{flow_generator_forward.13} parent=0
    _
  %s10 = ssub.s32 1, %s8
  %s11 = scalar_select 0, %s10, %s8
  loop: start=0, step=1, limit=4
  $region2: #{flow_generator_forward.13} parent=0 // loop_pre_header
    _
  $region3: #{flow_generator_forward.13} parent=0 // loop_header
    %s13 = sphi 0, %s17
    %p14 = scmp.ge.s32.totalorder %s13, 4
    %s23 = sphi 0, %s25
    %s26 = sphi 0, %s23
    %s27 = sphi 0, %s26
    %s43 = sphi 0, %s27
    %s47 = sphi 0, %s47
    %s49 = sphi 0, %s47
    %s50 = sphi 0, %s49
    %s64 = sphi 0, %s50
    %s68 = sphi 0, %s68
    %s70 = sphi 0, %s68
    %s71 = sphi 0, %s70
    %s85 = sphi 0, %s71
    %s89 = sphi 0, %s89
    %s91 = sphi 0, %s89
    %s92 = sphi 0, %s91
    %s106 = sphi 0, %s92
    %s110 = sphi 0, %s110
    %s112 = sphi 0, %s110
    %s113 = sphi 0, %s112
    %s127 = sphi 0, %s113
    %s133 = sphi 0, %s135
    %s136 = sphi 0, %s133
    %s137 = sphi 0, %s136
    %s153 = sphi 0, %s137
    %s159 = sphi 0, %s161
    %s162 = sphi 0, %s159
    %s163 = sphi 0, %s162
    %s179 = sphi 0, %s163
  $region4: #{flow_generator_forward.13} parent=0 // loop_header_branch
    %16 = sbr.rel (%p14) target = $region8
  $region5: #{flow_generator_forward.13} parent=0 // loop_body
    %s18 = ssub.s32 %s13, 1
    %s19 = ssub.s32 %s13, 2
    %s20 = sadd.s32 %s13, 1
    %s21 = ssub.s32 %s13, %s20
    %p22 = scmp.eq.s32.totalorder %s21, 0
    %s24 = sadd.s32 %s23, 1
    %s25 = scalar_select %p22, %s23, %s24
    %p28 = pneg %p22
    %p29 = scmp.eq.s32.totalorder %s13, 1
    %p30 = por %p28, %p29
    %p31 = scmp.ne.s32.totalorder %s23, %s26
    %p32 = scmp.eq.s32.totalorder %s13, 0
    %p33 = por %p31, %p32
    %p34 = scmp.ne.s32.totalorder %s23, %s26
    %p35 = scmp.eq.s32.totalorder %s18, 1
    %p36 = por %p34, %p35
    %p37 = scmp.ne.s32.totalorder %s26, %s27
    %p38 = scmp.eq.s32.totalorder %s18, 0
    %p39 = por %p37, %p38
    %p40 = scmp.ne.s32.totalorder %s26, %s27
    %p41 = scmp.eq.s32.totalorder %s19, 1
    %p42 = por %p40, %p41
    %p44 = scmp.ne.s32.totalorder %s27, %s43
    %p45 = scmp.eq.s32.totalorder %s19, 0
    %p46 = por %p44, %p45
    %s48 = sadd.s32 %s47, 1
    %p51 = scmp.eq.s32.totalorder %s13, 1
    %p52 = scmp.ne.s32.totalorder %s47, %s49
    %p53 = scmp.eq.s32.totalorder %s13, 0
    %p54 = por %p52, %p53
    %p55 = scmp.ne.s32.totalorder %s47, %s49
    %p56 = scmp.eq.s32.totalorder %s18, 1
    %p57 = por %p55, %p56
    %p58 = scmp.ne.s32.totalorder %s49, %s50
    %p59 = scmp.eq.s32.totalorder %s18, 0
    %p60 = por %p58, %p59
    %p61 = scmp.ne.s32.totalorder %s49, %s50
    %p62 = scmp.eq.s32.totalorder %s19, 1
    %p63 = por %p61, %p62
    %p65 = scmp.ne.s32.totalorder %s50, %s64
    %p66 = scmp.eq.s32.totalorder %s19, 0
    %p67 = por %p65, %p66
    %s69 = sadd.s32 %s68, 1
    %p72 = scmp.eq.s32.totalorder %s13, 1
    %p73 = scmp.ne.s32.totalorder %s68, %s70
    %p74 = scmp.eq.s32.totalorder %s13, 0
    %p75 = por %p73, %p74
    %p76 = scmp.ne.s32.totalorder %s68, %s70
    %p77 = scmp.eq.s32.totalorder %s18, 1
    %p78 = por %p76, %p77
    %p79 = scmp.ne.s32.totalorder %s70, %s71
    %p80 = scmp.eq.s32.totalorder %s18, 0
    %p81 = por %p79, %p80
    %p82 = scmp.ne.s32.totalorder %s70, %s71
    %p83 = scmp.eq.s32.totalorder %s19, 1
    %p84 = por %p82, %p83
    %p86 = scmp.ne.s32.totalorder %s71, %s85
    %p87 = scmp.eq.s32.totalorder %s19, 0
    %p88 = por %p86, %p87
    %s90 = sadd.s32 %s89, 1
    %p93 = scmp.eq.s32.totalorder %s13, 1
    %p94 = scmp.ne.s32.totalorder %s89, %s91
    %p95 = scmp.eq.s32.totalorder %s13, 0
    %p96 = por %p94, %p95
    %p97 = scmp.ne.s32.totalorder %s89, %s91
    %p98 = scmp.eq.s32.totalorder %s18, 1
    %p99 = por %p97, %p98
    %p100 = scmp.ne.s32.totalorder %s91, %s92
    %p101 = scmp.eq.s32.totalorder %s18, 0
    %p102 = por %p100, %p101
    %p103 = scmp.ne.s32.totalorder %s91, %s92
    %p104 = scmp.eq.s32.totalorder %s19, 1
    %p105 = por %p103, %p104
    %p107 = scmp.ne.s32.totalorder %s92, %s106
    %p108 = scmp.eq.s32.totalorder %s19, 0
    %p109 = por %p107, %p108
    %s111 = sadd.s32 %s110, 1
    %p114 = scmp.eq.s32.totalorder %s13, 1
    %p115 = scmp.ne.s32.totalorder %s110, %s112
    %p116 = scmp.eq.s32.totalorder %s13, 0
    %p117 = por %p115, %p116
    %p118 = scmp.ne.s32.totalorder %s110, %s112
    %p119 = scmp.eq.s32.totalorder %s18, 1
    %p120 = por %p118, %p119
    %p121 = scmp.ne.s32.totalorder %s112, %s113
    %p122 = scmp.eq.s32.totalorder %s18, 0
    %p123 = por %p121, %p122
    %p124 = scmp.ne.s32.totalorder %s112, %s113
    %p125 = scmp.eq.s32.totalorder %s19, 1
    %p126 = por %p124, %p125
    %p128 = scmp.ne.s32.totalorder %s113, %s127
    %p129 = scmp.eq.s32.totalorder %s19, 0
    %p130 = por %p128, %p129
    %s131 = ssub.s32 %s13, %s20
    %p132 = scmp.eq.s32.totalorder %s131, 0
    %s134 = sadd.s32 %s133, 1
    %s135 = scalar_select %p132, %s133, %s134
    %p138 = pneg %p132
    %p139 = scmp.eq.s32.totalorder %s13, 1
    %p140 = por %p138, %p139
    %p141 = scmp.ne.s32.totalorder %s133, %s136
    %p142 = scmp.eq.s32.totalorder %s13, 0
    %p143 = por %p141, %p142
    %p144 = scmp.ne.s32.totalorder %s133, %s136
    %p145 = scmp.eq.s32.totalorder %s18, 1
    %p146 = por %p144, %p145
    %p147 = scmp.ne.s32.totalorder %s136, %s137
    %p148 = scmp.eq.s32.totalorder %s18, 0
    %p149 = por %p147, %p148
    %p150 = scmp.ne.s32.totalorder %s136, %s137
    %p151 = scmp.eq.s32.totalorder %s19, 1
    %p152 = por %p150, %p151
    %p154 = scmp.ne.s32.totalorder %s137, %s153
    %p155 = scmp.eq.s32.totalorder %s19, 0
    %p156 = por %p154, %p155
    %s157 = ssub.s32 %s13, %s20
    %p158 = scmp.eq.s32.totalorder %s157, 0
    %s160 = sadd.s32 %s159, 1
    %s161 = scalar_select %p158, %s159, %s160
    %p164 = pneg %p158
    %p165 = scmp.eq.s32.totalorder %s13, 1
    %p166 = por %p164, %p165
    %p167 = scmp.ne.s32.totalorder %s159, %s162
    %p168 = scmp.eq.s32.totalorder %s13, 0
    %p169 = por %p167, %p168
    %p170 = scmp.ne.s32.totalorder %s159, %s162
    %p171 = scmp.eq.s32.totalorder %s18, 1
    %p172 = por %p170, %p171
    %p173 = scmp.ne.s32.totalorder %s162, %s163
    %p174 = scmp.eq.s32.totalorder %s18, 0
    %p175 = por %p173, %p174
    %p176 = scmp.ne.s32.totalorder %s162, %s163
    %p177 = scmp.eq.s32.totalorder %s19, 1
    %p178 = por %p176, %p177
    %p180 = scmp.ne.s32.totalorder %s163, %s179
    %p181 = scmp.eq.s32.totalorder %s19, 0
    %p182 = por %p180, %p181
    %p183 = scmp.le.s32.totalorder 1, %s13
    %p184 = scmp.lt.s32.totalorder %s13, 3
    %p185 = pnand %p183, %p184
    %p186 = pneg %p185
    // Predicated region
    $region9: #{flow_generator_forward.13} parent=5 // pred_check
      _
    $region10: #{flow_generator_forward.13} parent=5 // pred_check_branch
      %188 = sbr.rel (%p185) target = $region12
    $region11: #{flow_generator_forward.13} parent=5 // pred_region
      %s189 = ssub.s32 %s13, 1
      // Predicated region
      $region13: #{flow_generator_forward.13} parent=11 // pred_check
        %p190 = pneg %p60
      $region14: #{flow_generator_forward.13} parent=11 // pred_check_branch
        %192 = sbr.rel (%p190) target = $region16
      $region15: #{flow_generator_forward.13} parent=11 // pred_region
        _
      $region16: #{flow_generator_forward.13} parent=11 // pred_fallthru
        _
      // Predicated region
      $region17: #{flow_generator_forward.13} parent=11 // pred_check
        %p193 = pneg %p81
      $region18: #{flow_generator_forward.13} parent=11 // pred_check_branch
        %195 = sbr.rel (%p193) target = $region20
      $region19: #{flow_generator_forward.13} parent=11 // pred_region
        _
      $region20: #{flow_generator_forward.13} parent=11 // pred_fallthru
        _
      // Predicated region
      $region21: #{flow_generator_forward.13} parent=11 // pred_check
        %p196 = pneg %p102
      $region22: #{flow_generator_forward.13} parent=11 // pred_check_branch
        %198 = sbr.rel (%p196) target = $region24
      $region23: #{flow_generator_forward.13} parent=11 // pred_region
        _
      $region24: #{flow_generator_forward.13} parent=11 // pred_fallthru
        _
      // Predicated region
      $region25: #{flow_generator_forward.13} parent=11 // pred_check
        %p199 = pneg %p123
      $region26: #{flow_generator_forward.13} parent=11 // pred_check_branch
        %201 = sbr.rel (%p199) target = $region28
      $region27: #{flow_generator_forward.13} parent=11 // pred_region
        _
      $region28: #{flow_generator_forward.13} parent=11 // pred_fallthru
        _
    $region12: #{flow_generator_forward.13} parent=5 // pred_fallthru
      _
    %p202 = scmp.lt.s32.totalorder %s13, 2
    // Predicated region
    $region29: #{flow_generator_forward.13} parent=5 // pred_check
      %p203 = pneg %p202
    $region30: #{flow_generator_forward.13} parent=5 // pred_check_branch
      %205 = sbr.rel (%p203) target = $region32
    $region31: #{flow_generator_forward.13} parent=5 // pred_region
      // Predicated region
      $region33: #{flow_generator_forward.13} parent=31 // pred_check
        %p206 = pneg %p33
      $region34: #{flow_generator_forward.13} parent=31 // pred_check_branch
        %208 = sbr.rel (%p206) target = $region36
      $region35: #{flow_generator_forward.13} parent=31 // pred_region
        %p209 = scmp.lt.s32.totalorder %s13, 1
        %s210 = scalar_select %p209, %s13, 1
        %s211 = smul.addr %s210, 8
        %s212 = smul.addr %s211, 8
        %s213 = scalar_lea.vmem %s0, %s212
      $region36: #{flow_generator_forward.13} parent=31 // pred_fallthru
        _
    $region32: #{flow_generator_forward.13} parent=5 // pred_fallthru
      _
    %p214 = scmp.le.s32.totalorder 1, %s13
    %p215 = scmp.lt.s32.totalorder %s13, 3
    %p216 = pnand %p214, %p215
    %p217 = pneg %p216
    // Predicated region
    $region37: #{flow_generator_forward.13} parent=5 // pred_check
      _
    $region38: #{flow_generator_forward.13} parent=5 // pred_check_branch
      %219 = sbr.rel (%p216) target = $region40
    $region39: #{flow_generator_forward.13} parent=5 // pred_region
      %s220 = ssub.s32 %s13, 1
      %p221 = scmp.lt.s32.totalorder %s18, 1
      %s222 = scalar_select %p221, %s18, 1
      %s223 = smul.addr %s222, 8
      %s224 = smul.addr %s223, 8
      %s225 = scalar_lea.vmem %s0, %s224
      %p226 = pneg %p39
      %p227 = pneg %p36
      %p228 = pneg %p60
      %p229 = pneg %p57
      %p230 = pneg %p81
      %p231 = pneg %p78
      %p232 = pneg %p102
      %p233 = pneg %p99
      %p234 = pneg %p123
      %p235 = pneg %p120
      %p236 = pneg %p149
      %p237 = pneg %p146
      %p238 = scmp.lt.s32.totalorder %s18, 1
      %s239 = scalar_select %p238, %s18, 1
      %s240 = smul.addr %s239, 4
      %s241 = smul.addr %s240, 8
      %s242 = scalar_lea.vmem %s5, %s241
      %p243 = pneg %p175
      %p244 = pneg %p172
      %p245 = scmp.lt.s32.totalorder %s18, 1
      %s246 = scalar_select %p245, %s18, 1
      %s247 = smul.addr %s246, 4
      %s248 = smul.addr %s247, 8
      %s249 = scalar_lea.vmem %s6, %s248
      %p250 = scmp.lt.s32.totalorder %s18, 1
      %s251 = scalar_select %p250, %s18, 1
      %s252 = smul.addr %s251, 8
      %s253 = smul.addr %s252, 8
      %s254 = scalar_lea.vmem %s0, %s253
      %p255 = scmp.lt.s32.totalorder %s18, 1
      %s256 = scalar_select %p255, %s18, 1
      %s257 = smul.addr %s256, 4
      %s258 = smul.addr %s257, 8
      %s259 = scalar_lea.vmem %s5, %s258
      %p260 = scmp.lt.s32.totalorder %s18, 1
      %s261 = scalar_select %p260, %s18, 1
      %s262 = smul.addr %s261, 4
      %s263 = smul.addr %s262, 8
      %s264 = scalar_lea.vmem %s6, %s263
      %v268 = vld [vmem:[%s254] sm:$0xff]
      %v269 = vld [vmem:[%s254 + $0x8] sm:$0xff]
      %v270 = vld [vmem:[%s254 + $0x10] sm:$0xff]
      %v271 = vld [vmem:[%s254 + $0x18] sm:$0xff]
      %v272 = vld [vmem:[%s254 + $0x20] sm:$0xff]
      %v273 = vld [vmem:[%s254 + $0x28] sm:$0xff]
      %v274 = vld [vmem:[%s254 + $0x30] sm:$0xff]
      %v275 = vld [vmem:[%s254 + $0x38] sm:$0xff]
      %v276 = vld [vmem:[%s1] sm:$0xff]
      %v277 = vld [vmem:[%s1 + $0x8] sm:$0xff]
      %v278 = vld [vmem:[%s1 + $0x10] sm:$0xff]
      %v279 = vld [vmem:[%s1 + $0x18] sm:$0xff]
      %v280 = vld [vmem:[%s1 + $0x20] sm:$0xff]
      %v281 = vld [vmem:[%s1 + $0x28] sm:$0xff]
      %v282 = vld [vmem:[%s1 + $0x30] sm:$0xff]
      %v283 = vld [vmem:[%s1 + $0x38] sm:$0xff]
      %285 = vset.pattern.permute.xlu0 0
      %286 = vperm.xlu0 %285, %v276
      %v287 = vpop.permute.xlu0 %286
      %290 = vset.pattern.permute.xlu0 0
      %291 = vperm.xlu0 %290, %v277
      %v292 = vpop.permute.xlu0 %291
      %295 = vset.pattern.permute.xlu0 0
      %296 = vperm.xlu0 %295, %v278
      %v297 = vpop.permute.xlu0 %296
      %300 = vset.pattern.permute.xlu0 0
      %301 = vperm.xlu0 %300, %v279
      %v302 = vpop.permute.xlu0 %301
      %305 = vset.pattern.permute.xlu0 0
      %306 = vperm.xlu0 %305, %v280
      %v307 = vpop.permute.xlu0 %306
      %310 = vset.pattern.permute.xlu0 0
      %311 = vperm.xlu0 %310, %v281
      %v312 = vpop.permute.xlu0 %311
      %315 = vset.pattern.permute.xlu0 0
      %316 = vperm.xlu0 %315, %v282
      %v317 = vpop.permute.xlu0 %316
      %320 = vset.pattern.permute.xlu0 0
      %321 = vperm.xlu0 %320, %v283
      %v322 = vpop.permute.xlu0 %321
      %v324 = vmul.f32 %v268, %v287
      %v325 = vmul.f32 %v269, %v292
      %v326 = vmul.f32 %v270, %v297
      %v327 = vmul.f32 %v271, %v302
      %v328 = vmul.f32 %v272, %v307
      %v329 = vmul.f32 %v273, %v312
      %v330 = vmul.f32 %v274, %v317
      %v331 = vmul.f32 %v275, %v322
      %v332 = vld [vmem:[%s2] sm:$0xff]
      %v333 = vld [vmem:[%s2 + $0x8] sm:$0xff]
      %v334 = vld [vmem:[%s2 + $0x10] sm:$0xff]
      %v335 = vld [vmem:[%s2 + $0x18] sm:$0xff]
      %v336 = vld [vmem:[%s2 + $0x20] sm:$0xff]
      %v337 = vld [vmem:[%s2 + $0x28] sm:$0xff]
      %v338 = vld [vmem:[%s2 + $0x30] sm:$0xff]
      %v339 = vld [vmem:[%s2 + $0x38] sm:$0xff]
      %341 = vset.pattern.permute.xlu0 0
      %342 = vperm.xlu0 %341, %v332
      %v343 = vpop.permute.xlu0 %342
      %346 = vset.pattern.permute.xlu0 0
      %347 = vperm.xlu0 %346, %v333
      %v348 = vpop.permute.xlu0 %347
      %351 = vset.pattern.permute.xlu0 0
      %352 = vperm.xlu0 %351, %v334
      %v353 = vpop.permute.xlu0 %352
      %356 = vset.pattern.permute.xlu0 0
      %357 = vperm.xlu0 %356, %v335
      %v358 = vpop.permute.xlu0 %357
      %361 = vset.pattern.permute.xlu0 0
      %362 = vperm.xlu0 %361, %v336
      %v363 = vpop.permute.xlu0 %362
      %366 = vset.pattern.permute.xlu0 0
      %367 = vperm.xlu0 %366, %v337
      %v368 = vpop.permute.xlu0 %367
      %371 = vset.pattern.permute.xlu0 0
      %372 = vperm.xlu0 %371, %v338
      %v373 = vpop.permute.xlu0 %372
      %376 = vset.pattern.permute.xlu0 0
      %377 = vperm.xlu0 %376, %v339
      %v378 = vpop.permute.xlu0 %377
      %v380 = vadd.f32 %v324, %v343
      %v381 = vadd.f32 %v325, %v348
      %v382 = vadd.f32 %v326, %v353
      %v383 = vadd.f32 %v327, %v358
      %v384 = vadd.f32 %v328, %v363
      %v385 = vadd.f32 %v329, %v368
      %v386 = vadd.f32 %v330, %v373
      %v387 = vadd.f32 %v331, %v378
      %vm388 = vcmp.ge.f32.partialorder %v380, 0.0
      %vm389 = vcmp.ge.f32.partialorder %v381, 0.0
      %vm390 = vcmp.ge.f32.partialorder %v382, 0.0
      %vm391 = vcmp.ge.f32.partialorder %v383, 0.0
      %vm392 = vcmp.ge.f32.partialorder %v384, 0.0
      %vm393 = vcmp.ge.f32.partialorder %v385, 0.0
      %vm394 = vcmp.ge.f32.partialorder %v386, 0.0
      %vm395 = vcmp.ge.f32.partialorder %v387, 0.0
      %v396 = vmul.f32 %v380, 0.2
      %v397 = vmul.f32 %v381, 0.2
      %v398 = vmul.f32 %v382, 0.2
      %v399 = vmul.f32 %v383, 0.2
      %v400 = vmul.f32 %v384, 0.2
      %v401 = vmul.f32 %v385, 0.2
      %v402 = vmul.f32 %v386, 0.2
      %v403 = vmul.f32 %v387, 0.2
      %v404 = vsel %vm388, %v380, %v396
      %v405 = vsel %vm389, %v381, %v397
      %v406 = vsel %vm390, %v382, %v398
      %v407 = vsel %vm391, %v383, %v399
      %v408 = vsel %vm392, %v384, %v400
      %v409 = vsel %vm393, %v385, %v401
      %v410 = vsel %vm394, %v386, %v402
      %v411 = vsel %vm395, %v387, %v403
      %v412 = vlaneseq
      %v413 = vand.u32 %v412, 127
      %vm414 = vcmp.lt.s32.totalorder %v413, 0
      %v415 = vsub.s32 0, %v413
      %v416 = vsel %vm414, %v415, %v413
      %v417 = vshrl.u32 %v416, 2
      %v418 = vand.u32 %v416, 3
      %v419 = vsub.s32 0, %v418
      %v420 = vsel %vm414, %v419, %v418
      %vm421 = vcmp.ne.s32.totalorder %v420, 0
      %vm422 = vcmp.lt.s32.totalorder %v420, 0
      %vm423 = vmand %vm422, %vm421
      %v424 = vadd.s32 %v420, 4
      %v425 = vsel %vm423, %v424, %v420
      %v426 = vadd.s32 %v425, 4294967295
      %vm427 = vcmp.ge.s32.totalorder %v426, 0
      %vm428 = vcmp.lt.s32.totalorder %v426, 4
      %vm429 = vmand %vm427, %vm428
      %v430 = vpack.c.bf16 %v405, %v404
      %432 = vrot.lane.b32.xlu0 %v430, 5
      %v433 = vpop.permute.xlu0 %432
      %vm434 = vcmask 39936
      %v437 = vsel %vm434, 0, %v433
      %vm438 = vcmask 171008
      %v439 = vsel %vm438, %v437, 0
      %v440 = vpack.c.bf16 %v407, %v406
      %442 = vrot.lane.b32.xlu0 %v440, 5
      %v443 = vpop.permute.xlu0 %442
      %v445 = vsel %vm434, 0, %v443
      %v446 = vsel %vm438, %v445, 0
      %v448 = vsel %vm429, 1, 0
      %vm449 = vcmp.eq.s32.totalorder %v448, 1
      %vm450 = vmpackc.low %vm449, %vm449
      %v451 = vsel %vm450, 65537, 0
      %v452 = vlaneseq
      %v453 = vshrl.u32 %v452, 7
      %v454 = vsub.s32 0, %v453
      %v455 = vrot.slane %v451, %v454
      %456 = vrot.lane.b32.xlu0 %v455, 4
      %v457 = vpop.permute.xlu0 %456
      %vm458 = vcmp.ne.s16.totalorder %v457, 0
      %v459 = vsel %vm458, %v446, 0
      %v460 = vpack.c.bf16 %v409, %v408
      %462 = vrot.lane.b32.xlu0 %v460, 5
      %v463 = vpop.permute.xlu0 %462
      %v465 = vsel %vm434, 0, %v463
      %v466 = vsel %vm438, %v465, 0
      %v467 = vpack.c.bf16 %v411, %v410
      %469 = vrot.lane.b32.xlu0 %v467, 5
      %v470 = vpop.permute.xlu0 %469
      %v472 = vsel %vm434, 0, %v470
      %v473 = vsel %vm438, %v472, 0
      %vm475 = vcmp.ne.s16.totalorder %v455, 0
      %v476 = vsel %vm475, %v473, 0
      %v477 = vsel %vm458, %v473, 0
      %479 = vrot.lane.b32.xlu0 %v459, 1
      %v480 = vpop.permute.xlu0 %479
      %482 = vrot.lane.b32.xlu0 %v466, 4
      %v483 = vpop.permute.xlu0 %482
      %485 = vrot.lane.b32.xlu0 %v476, 5
      %v486 = vpop.permute.xlu0 %485
      %488 = vrot.lane.b32.xlu0 %v473, 4
      %v489 = vpop.permute.xlu0 %488
      %491 = vrot.lane.b32.xlu0 %v477, 1
      %v492 = vpop.permute.xlu0 %491
      %v493 = vld [vmem:[%s3] sm:$0xff]
      %v494 = vld [vmem:[%s3 + $0x8] sm:$0xff]
      %v495 = vld [vmem:[%s3 + $0x10] sm:$0xff]
      %v496 = vld [vmem:[%s3 + $0x18] sm:$0xff]
      %v497 = vld [vmem:[%s4] sm:$0xff]
      %v498 = vld [vmem:[%s4 + $0x8] sm:$0xff]
      %v499 = vld [vmem:[%s4 + $0x10] sm:$0xff]
      %v500 = vld [vmem:[%s4 + $0x18] sm:$0xff]
      %502 = vset.pattern.permute.xlu0 0
      %503 = vperm.xlu0 %502, %v497
      %v504 = vpop.permute.xlu0 %503
      %507 = vset.pattern.permute.xlu0 0
      %508 = vperm.xlu0 %507, %v498
      %v509 = vpop.permute.xlu0 %508
      %512 = vset.pattern.permute.xlu0 0
      %513 = vperm.xlu0 %512, %v499
      %v514 = vpop.permute.xlu0 %513
      %517 = vset.pattern.permute.xlu0 0
      %518 = vperm.xlu0 %517, %v500
      %v519 = vpop.permute.xlu0 %518
      %v525 = vunpack.c.l.b16 %v493
      %v526 = vunpack.c.h.b16 %v493
      %v527 = vunpack.c.l.b16 %v494
      %v528 = vunpack.c.h.b16 %v494
      %v529 = vunpack.c.l.b16 %v495
      %v530 = vunpack.c.h.b16 %v495
      %v531 = vunpack.c.l.b16 %v496
      %v532 = vunpack.c.h.b16 %v496
      %v533 = vpack.c.b16 %v527, %v525
      %v534 = vpack.c.b16 %v528, %v526
      %v535 = vpack.c.b16 %v531, %v529
      %v536 = vpack.c.b16 %v532, %v530
      %541 = vrot.lane.b32.xlu0 %v439, 123
      %v542 = vpop.permute.xlu0 %541
      %543 = vrot.lane.b32.xlu0 %v480, 123
      %v544 = vpop.permute.xlu0 %543
      %545 = vrot.lane.b32.xlu0 %v446, 123
      %v546 = vpop.permute.xlu0 %545
      %547 = vrot.lane.b32.xlu0 %v483, 123
      %v548 = vpop.permute.xlu0 %547
      %549 = vrot.lane.b32.xlu0 %v466, 123
      %v550 = vpop.permute.xlu0 %549
      %551 = vrot.lane.b32.xlu0 %v486, 123
      %v552 = vpop.permute.xlu0 %551
      %553 = vrot.lane.b32.xlu0 %v489, 123
      %v554 = vpop.permute.xlu0 %553
      %555 = vrot.lane.b32.xlu0 %v492, 123
      %v556 = vpop.permute.xlu0 %555
      %557 = vrot.lane.b32.xlu0 %v473, 123
      %v558 = vpop.permute.xlu0 %557
      %vm568 = vcmask 130048
      %v570 = vsel %vm568, %v534, 0
      %v573 = vsel %vm568, %v536, 0
      %575 = vmatprep.subr.bf16.mxu0 0
      %576 = vmatpush1.bf16.msra.mxu0 %v542
      %577 = vmatprep.subr.bf16.mxu0 0
      %578 = vmatpush1.bf16.msra.mxu0 %v544
      %579 = vmatprep.subr.bf16.mxu0 0
      %580 = vmatpush1.bf16.msra.mxu0 %v546
      %581 = vmatprep.subr.bf16.mxu0 0
      %582 = vmatpush1.bf16.msra.mxu0 %v548
      %583 = vmatprep.subr.bf16.mxu0 0
      %584 = vmatpush1.bf16.msra.mxu0 %v550
      %585 = vmatprep.subr.bf16.mxu0 0
      %586 = vmatpush1.bf16.msra.mxu0 %v552
      %587 = vmatprep.subr.bf16.mxu0 0
      %588 = vmatpush1.bf16.msra.mxu0 %v554
      %589 = vmatprep.subr.bf16.mxu0 0
      %590 = vmatpush1.bf16.msra.mxu0 %v556
      %591 = vmatprep.subr.bf16.mxu0 0
      %592 = vmatpush1.bf16.msra.mxu0 %v558
      %593 = vmatprep.subr.bf16.mxu0 0
      %594 = vmatpush1.bf16.msra.mxu0 0
      %595 = vmatprep.subr.bf16.mxu0 0
      %596 = vmatpush1.bf16.msra.mxu0 0
      %597 = vmatprep.subr.bf16.mxu0 0
      %598 = vmatpush1.bf16.msra.mxu0 0
      %599 = vmatprep.subr.bf16.mxu0 0
      %600 = vmatpush1.bf16.msra.mxu0 0
      %601 = vmatprep.subr.bf16.mxu0 0
      %602 = vmatpush1.bf16.msra.mxu0 0
      %603 = vmatprep.subr.bf16.mxu0 0
      %604 = vmatpush1.bf16.msra.mxu0 0
      %605 = vmatprep.subr.bf16.mxu0 0
      %606 = vmatpush1.bf16.msra.mxu0 0
      %607 = vmatprep.mubr.bf16.mxu0 %v570
      %608 = vmatmul.mubr.bf16.gmra.mrb[0].mxu0 %v533
      %v609 = vpop.f32.mrb[0].mxu0
      %v610 = vadd.f32 %v504, %v609
      %v611 = vpop.f32.mrb[0].mxu0
      %v612 = vpop.f32.mrb[0].mxu0
      %v613 = vadd.f32 %v509, %v612
      %v614 = vpop.f32.mrb[0].mxu0
      %615 = vmatprep.mubr.bf16.mxu0 %v573
      %616 = vmatmul.mubr.bf16.gmra.mrb[0].mxu0 %v535
      %v617 = vpop.f32.mrb[0].mxu0
      %v618 = vadd.f32 %v514, %v617
      %v619 = vpop.f32.mrb[0].mxu0
      %v620 = vpop.f32.mrb[0].mxu0
      %v621 = vadd.f32 %v519, %v620
      %v622 = vpop.f32.mrb[0].mxu0
      %623 = vdwg.mxu0
      %624 = vst.msk [vmem:[%s259] sm:$0xff] %vm568, %v610
      %625 = vst.msk [vmem:[%s259 + $0x8] sm:$0xff] %vm568, %v613
      %626 = vst.msk [vmem:[%s259 + $0x10] sm:$0xff] %vm568, %v618
      %627 = vst.msk [vmem:[%s259 + $0x18] sm:$0xff] %vm568, %v621
      %v628 = vsel %vm568, %v610, 0.0
      %629 = vadd.xlane.f32.xlu0 %v628
      %v630 = vpop.xlane.xlu0 %629
      %v631 = vsel %vm568, %v613, 0.0
      %632 = vadd.xlane.f32.xlu0 %v631
      %v633 = vpop.xlane.xlu0 %632
      %v634 = vsel %vm568, %v618, 0.0
      %635 = vadd.xlane.f32.xlu0 %v634
      %v636 = vpop.xlane.xlu0 %635
      %v637 = vsel %vm568, %v621, 0.0
      %638 = vadd.xlane.f32.xlu0 %v637
      %v639 = vpop.xlane.xlu0 %638
      %v640 = vmul.f32 %v610, %v610
      %v641 = vmul.f32 %v613, %v613
      %v642 = vmul.f32 %v618, %v618
      %v643 = vmul.f32 %v621, %v621
      %v644 = vsel %vm568, %v640, 0.0
      %645 = vadd.xlane.f32.xlu0 %v644
      %v646 = vpop.xlane.xlu0 %645
      %v647 = vsel %vm568, %v641, 0.0
      %648 = vadd.xlane.f32.xlu0 %v647
      %v649 = vpop.xlane.xlu0 %648
      %v650 = vsel %vm568, %v642, 0.0
      %651 = vadd.xlane.f32.xlu0 %v650
      %v652 = vpop.xlane.xlu0 %651
      %v653 = vsel %vm568, %v643, 0.0
      %654 = vadd.xlane.f32.xlu0 %v653
      %v655 = vpop.xlane.xlu0 %654
      %vm656 = vcmask 7168
      %v657 = vsel %vm656, %v630, %v646
      %v658 = vsel %vm656, %v633, %v649
      %v659 = vsel %vm656, %v636, %v652
      %v660 = vsel %vm656, %v639, %v655
      %vm661 = vcmask 15360
      %662 = vst.msk [vmem:[%s264] sm:$0xff] %vm661, %v657
      %663 = vst.msk [vmem:[%s264 + $0x8] sm:$0xff] %vm661, %v658
      %664 = vst.msk [vmem:[%s264 + $0x10] sm:$0xff] %vm661, %v659
      %665 = vst.msk [vmem:[%s264 + $0x18] sm:$0xff] %vm661, %v660
      %p666 = scmp.lt.s32.totalorder %s18, 1
      %s667 = scalar_select %p666, %s18, 1
      %s668 = smul.addr %s667, 4
      %s669 = smul.addr %s668, 8
      %s670 = scalar_lea.vmem %s5, %s669
      %p671 = scmp.lt.s32.totalorder %s18, 1
      %s672 = scalar_select %p671, %s18, 1
      %s673 = smul.addr %s672, 4
      %s674 = smul.addr %s673, 8
      %s675 = scalar_lea.vmem %s6, %s674
      // Predicated region
      $region41: #{flow_generator_forward.13} parent=39 // pred_check
        %p676 = pneg %p146
      $region42: #{flow_generator_forward.13} parent=39 // pred_check_branch
        %678 = sbr.rel (%p676) target = $region44
      $region43: #{flow_generator_forward.13} parent=39 // pred_region
        _
      $region44: #{flow_generator_forward.13} parent=39 // pred_fallthru
        _
      // Predicated region
      $region45: #{flow_generator_forward.13} parent=39 // pred_check
        %p679 = pneg %p172
      $region46: #{flow_generator_forward.13} parent=39 // pred_check_branch
        %681 = sbr.rel (%p679) target = $region48
      $region47: #{flow_generator_forward.13} parent=39 // pred_region
        _
      $region48: #{flow_generator_forward.13} parent=39 // pred_fallthru
        _
    $region40: #{flow_generator_forward.13} parent=5 // pred_fallthru
      _
    %p682 = scmp.le.s32.totalorder 2, %s13
    // Predicated region
    $region49: #{flow_generator_forward.13} parent=5 // pred_check
      %p683 = pneg %p682
    $region50: #{flow_generator_forward.13} parent=5 // pred_check_branch
      %685 = sbr.rel (%p683) target = $region52
    $region51: #{flow_generator_forward.13} parent=5 // pred_region
      %s686 = ssub.s32 %s13, 2
      // Predicated region
      $region53: #{flow_generator_forward.13} parent=51 // pred_check
        %p687 = pneg %p152
      $region54: #{flow_generator_forward.13} parent=51 // pred_check_branch
        %689 = sbr.rel (%p687) target = $region56
      $region55: #{flow_generator_forward.13} parent=51 // pred_region
        %p690 = scmp.lt.s32.totalorder %s19, 1
        %s691 = scalar_select %p690, %s19, 1
        %s692 = smul.addr %s691, 4
        %s693 = smul.addr %s692, 8
        %s694 = scalar_lea.vmem %s5, %s693
      $region56: #{flow_generator_forward.13} parent=51 // pred_fallthru
        _
      // Predicated region
      $region57: #{flow_generator_forward.13} parent=51 // pred_check
        %p695 = pneg %p178
      $region58: #{flow_generator_forward.13} parent=51 // pred_check_branch
        %697 = sbr.rel (%p695) target = $region60
      $region59: #{flow_generator_forward.13} parent=51 // pred_region
        %p698 = scmp.lt.s32.totalorder %s19, 1
        %s699 = scalar_select %p698, %s19, 1
        %s700 = smul.addr %s699, 4
        %s701 = smul.addr %s700, 8
        %s702 = scalar_lea.vmem %s6, %s701
      $region60: #{flow_generator_forward.13} parent=51 // pred_fallthru
        _
    $region52: #{flow_generator_forward.13} parent=5 // pred_fallthru
      _
  $region6: #{flow_generator_forward.13} parent=0 // loop_footer
    %s17 = sadd.s32 1, %s13
  $region7: #{flow_generator_forward.13} parent=0 // loop_footer_branch
    %12 = sbr.rel target = $region3
  $region8: #{flow_generator_forward.13} parent=0 // loop_exit
    _

// kernel: flow_generator_forward.14
$region0: #{flow_generator_forward.14}
  #allocation0 [shape = 'u32[]', space=smem, size = 0x4, offset = 0x4, fixed_abs, tag = 'smem constant byte address 0x4 - core index']
  #allocation1 [shape = 'u32[144,128]{1,0:T(1,128)}', space=vmem, size = 0x12000, scoped, tag = 'internal scratch']
  %s0 = inlined_call_operand.vmem [shape: f32[2,32,16], index: 0, kind: input, shape index: {}]
  %s1 = inlined_call_operand.vmem [shape: f32[32,1], index: 1, kind: input, shape index: {}]
  %s2 = inlined_call_operand.vmem [shape: f32[32,1], index: 2, kind: input, shape index: {}]
  %s3 = inlined_call_operand.vmem [shape: f32[2,32,16], index: 3, kind: output, shape index: {0}]
  %s4 = inlined_call_operand.vmem [shape: f32[2,32,2], index: 4, kind: output, shape index: {1}]
  %5 = xla_tuple %s3, %s4
  %s6 = sld [smem:[#allocation0]]
  $region53: #{flow_generator_forward.14} parent=0
    _
  %s8 = ssub.s32 1, %s6
  %s9 = scalar_select 0, %s8, %s6
  loop: start=0, step=1, limit=4
  $region2: #{flow_generator_forward.14} parent=0 // loop_pre_header
    _
  $region3: #{flow_generator_forward.14} parent=0 // loop_header
    %s11 = sphi 0, %s15
    %p12 = scmp.ge.s32.totalorder %s11, 4
    %s21 = sphi 0, %s23
    %s24 = sphi 0, %s21
    %s25 = sphi 0, %s24
    %s41 = sphi 0, %s25
    %s45 = sphi 0, %s45
    %s47 = sphi 0, %s45
    %s48 = sphi 0, %s47
    %s62 = sphi 0, %s48
    %s66 = sphi 0, %s66
    %s68 = sphi 0, %s66
    %s69 = sphi 0, %s68
    %s83 = sphi 0, %s69
    %s89 = sphi 0, %s91
    %s92 = sphi 0, %s89
    %s93 = sphi 0, %s92
    %s109 = sphi 0, %s93
    %s115 = sphi 0, %s117
    %s118 = sphi 0, %s115
    %s119 = sphi 0, %s118
    %s135 = sphi 0, %s119
  $region4: #{flow_generator_forward.14} parent=0 // loop_header_branch
    %14 = sbr.rel (%p12) target = $region8
  $region5: #{flow_generator_forward.14} parent=0 // loop_body
    %s16 = ssub.s32 %s11, 1
    %s17 = ssub.s32 %s11, 2
    %s18 = sadd.s32 %s11, 1
    %s19 = ssub.s32 %s11, %s18
    %p20 = scmp.eq.s32.totalorder %s19, 0
    %s22 = sadd.s32 %s21, 1
    %s23 = scalar_select %p20, %s21, %s22
    %p26 = pneg %p20
    %p27 = scmp.eq.s32.totalorder %s11, 1
    %p28 = por %p26, %p27
    %p29 = scmp.ne.s32.totalorder %s21, %s24
    %p30 = scmp.eq.s32.totalorder %s11, 0
    %p31 = por %p29, %p30
    %p32 = scmp.ne.s32.totalorder %s21, %s24
    %p33 = scmp.eq.s32.totalorder %s16, 1
    %p34 = por %p32, %p33
    %p35 = scmp.ne.s32.totalorder %s24, %s25
    %p36 = scmp.eq.s32.totalorder %s16, 0
    %p37 = por %p35, %p36
    %p38 = scmp.ne.s32.totalorder %s24, %s25
    %p39 = scmp.eq.s32.totalorder %s17, 1
    %p40 = por %p38, %p39
    %p42 = scmp.ne.s32.totalorder %s25, %s41
    %p43 = scmp.eq.s32.totalorder %s17, 0
    %p44 = por %p42, %p43
    %s46 = sadd.s32 %s45, 1
    %p49 = scmp.eq.s32.totalorder %s11, 1
    %p50 = scmp.ne.s32.totalorder %s45, %s47
    %p51 = scmp.eq.s32.totalorder %s11, 0
    %p52 = por %p50, %p51
    %p53 = scmp.ne.s32.totalorder %s45, %s47
    %p54 = scmp.eq.s32.totalorder %s16, 1
    %p55 = por %p53, %p54
    %p56 = scmp.ne.s32.totalorder %s47, %s48
    %p57 = scmp.eq.s32.totalorder %s16, 0
    %p58 = por %p56, %p57
    %p59 = scmp.ne.s32.totalorder %s47, %s48
    %p60 = scmp.eq.s32.totalorder %s17, 1
    %p61 = por %p59, %p60
    %p63 = scmp.ne.s32.totalorder %s48, %s62
    %p64 = scmp.eq.s32.totalorder %s17, 0
    %p65 = por %p63, %p64
    %s67 = sadd.s32 %s66, 1
    %p70 = scmp.eq.s32.totalorder %s11, 1
    %p71 = scmp.ne.s32.totalorder %s66, %s68
    %p72 = scmp.eq.s32.totalorder %s11, 0
    %p73 = por %p71, %p72
    %p74 = scmp.ne.s32.totalorder %s66, %s68
    %p75 = scmp.eq.s32.totalorder %s16, 1
    %p76 = por %p74, %p75
    %p77 = scmp.ne.s32.totalorder %s68, %s69
    %p78 = scmp.eq.s32.totalorder %s16, 0
    %p79 = por %p77, %p78
    %p80 = scmp.ne.s32.totalorder %s68, %s69
    %p81 = scmp.eq.s32.totalorder %s17, 1
    %p82 = por %p80, %p81
    %p84 = scmp.ne.s32.totalorder %s69, %s83
    %p85 = scmp.eq.s32.totalorder %s17, 0
    %p86 = por %p84, %p85
    %s87 = ssub.s32 %s11, %s18
    %p88 = scmp.eq.s32.totalorder %s87, 0
    %s90 = sadd.s32 %s89, 1
    %s91 = scalar_select %p88, %s89, %s90
    %p94 = pneg %p88
    %p95 = scmp.eq.s32.totalorder %s11, 1
    %p96 = por %p94, %p95
    %p97 = scmp.ne.s32.totalorder %s89, %s92
    %p98 = scmp.eq.s32.totalorder %s11, 0
    %p99 = por %p97, %p98
    %p100 = scmp.ne.s32.totalorder %s89, %s92
    %p101 = scmp.eq.s32.totalorder %s16, 1
    %p102 = por %p100, %p101
    %p103 = scmp.ne.s32.totalorder %s92, %s93
    %p104 = scmp.eq.s32.totalorder %s16, 0
    %p105 = por %p103, %p104
    %p106 = scmp.ne.s32.totalorder %s92, %s93
    %p107 = scmp.eq.s32.totalorder %s17, 1
    %p108 = por %p106, %p107
    %p110 = scmp.ne.s32.totalorder %s93, %s109
    %p111 = scmp.eq.s32.totalorder %s17, 0
    %p112 = por %p110, %p111
    %s113 = ssub.s32 %s11, %s18
    %p114 = scmp.eq.s32.totalorder %s113, 0
    %s116 = sadd.s32 %s115, 1
    %s117 = scalar_select %p114, %s115, %s116
    %p120 = pneg %p114
    %p121 = scmp.eq.s32.totalorder %s11, 1
    %p122 = por %p120, %p121
    %p123 = scmp.ne.s32.totalorder %s115, %s118
    %p124 = scmp.eq.s32.totalorder %s11, 0
    %p125 = por %p123, %p124
    %p126 = scmp.ne.s32.totalorder %s115, %s118
    %p127 = scmp.eq.s32.totalorder %s16, 1
    %p128 = por %p126, %p127
    %p129 = scmp.ne.s32.totalorder %s118, %s119
    %p130 = scmp.eq.s32.totalorder %s16, 0
    %p131 = por %p129, %p130
    %p132 = scmp.ne.s32.totalorder %s118, %s119
    %p133 = scmp.eq.s32.totalorder %s17, 1
    %p134 = por %p132, %p133
    %p136 = scmp.ne.s32.totalorder %s119, %s135
    %p137 = scmp.eq.s32.totalorder %s17, 0
    %p138 = por %p136, %p137
    %p139 = scmp.le.s32.totalorder 1, %s11
    %p140 = scmp.lt.s32.totalorder %s11, 3
    %p141 = pnand %p139, %p140
    %p142 = pneg %p141
    // Predicated region
    $region9: #{flow_generator_forward.14} parent=5 // pred_check
      _
    $region10: #{flow_generator_forward.14} parent=5 // pred_check_branch
      %144 = sbr.rel (%p141) target = $region12
    $region11: #{flow_generator_forward.14} parent=5 // pred_region
      %s145 = ssub.s32 %s11, 1
      // Predicated region
      $region13: #{flow_generator_forward.14} parent=11 // pred_check
        %p146 = pneg %p58
      $region14: #{flow_generator_forward.14} parent=11 // pred_check_branch
        %148 = sbr.rel (%p146) target = $region16
      $region15: #{flow_generator_forward.14} parent=11 // pred_region
        _
      $region16: #{flow_generator_forward.14} parent=11 // pred_fallthru
        _
      // Predicated region
      $region17: #{flow_generator_forward.14} parent=11 // pred_check
        %p149 = pneg %p79
      $region18: #{flow_generator_forward.14} parent=11 // pred_check_branch
        %151 = sbr.rel (%p149) target = $region20
      $region19: #{flow_generator_forward.14} parent=11 // pred_region
        _
      $region20: #{flow_generator_forward.14} parent=11 // pred_fallthru
        _
    $region12: #{flow_generator_forward.14} parent=5 // pred_fallthru
      _
    %p152 = scmp.lt.s32.totalorder %s11, 2
    // Predicated region
    $region21: #{flow_generator_forward.14} parent=5 // pred_check
      %p153 = pneg %p152
    $region22: #{flow_generator_forward.14} parent=5 // pred_check_branch
      %155 = sbr.rel (%p153) target = $region24
    $region23: #{flow_generator_forward.14} parent=5 // pred_region
      // Predicated region
      $region25: #{flow_generator_forward.14} parent=23 // pred_check
        %p156 = pneg %p31
      $region26: #{flow_generator_forward.14} parent=23 // pred_check_branch
        %158 = sbr.rel (%p156) target = $region28
      $region27: #{flow_generator_forward.14} parent=23 // pred_region
        %p159 = scmp.lt.s32.totalorder %s11, 1
        %s160 = scalar_select %p159, %s11, 1
        %s161 = smul.addr %s160, 4
        %s162 = smul.addr %s161, 8
        %s163 = scalar_lea.vmem %s0, %s162
      $region28: #{flow_generator_forward.14} parent=23 // pred_fallthru
        _
    $region24: #{flow_generator_forward.14} parent=5 // pred_fallthru
      _
    %p164 = scmp.le.s32.totalorder 1, %s11
    %p165 = scmp.lt.s32.totalorder %s11, 3
    %p166 = pnand %p164, %p165
    %p167 = pneg %p166
    // Predicated region
    $region29: #{flow_generator_forward.14} parent=5 // pred_check
      _
    $region30: #{flow_generator_forward.14} parent=5 // pred_check_branch
      %169 = sbr.rel (%p166) target = $region32
    $region31: #{flow_generator_forward.14} parent=5 // pred_region
      %s170 = ssub.s32 %s11, 1
      %p171 = scmp.lt.s32.totalorder %s16, 1
      %s172 = scalar_select %p171, %s16, 1
      %s173 = smul.addr %s172, 4
      %s174 = smul.addr %s173, 8
      %s175 = scalar_lea.vmem %s0, %s174
      %p176 = pneg %p37
      %p177 = pneg %p34
      %p178 = pneg %p58
      %p179 = pneg %p55
      %p180 = pneg %p79
      %p181 = pneg %p76
      %p182 = pneg %p105
      %p183 = pneg %p102
      %p184 = scmp.lt.s32.totalorder %s16, 1
      %s185 = scalar_select %p184, %s16, 1
      %s186 = smul.addr %s185, 4
      %s187 = smul.addr %s186, 8
      %s188 = scalar_lea.vmem %s3, %s187
      %p189 = pneg %p131
      %p190 = pneg %p128
      %p191 = scmp.lt.s32.totalorder %s16, 1
      %s192 = scalar_select %p191, %s16, 1
      %s193 = smul.addr %s192, 4
      %s194 = smul.addr %s193, 8
      %s195 = scalar_lea.vmem %s4, %s194
      %p196 = scmp.lt.s32.totalorder %s16, 1
      %s197 = scalar_select %p196, %s16, 1
      %s198 = smul.addr %s197, 4
      %s199 = smul.addr %s198, 8
      %s200 = scalar_lea.vmem %s0, %s199
      %p201 = scmp.lt.s32.totalorder %s16, 1
      %s202 = scalar_select %p201, %s16, 1
      %s203 = smul.addr %s202, 4
      %s204 = smul.addr %s203, 8
      %s205 = scalar_lea.vmem %s3, %s204
      %p206 = scmp.lt.s32.totalorder %s16, 1
      %s207 = scalar_select %p206, %s16, 1
      %s208 = smul.addr %s207, 4
      %s209 = smul.addr %s208, 8
      %s210 = scalar_lea.vmem %s4, %s209
      %v211 = vld [vmem:[%s200] sm:$0xff]
      %v212 = vld [vmem:[%s200 + $0x8] sm:$0xff]
      %v213 = vld [vmem:[%s200 + $0x10] sm:$0xff]
      %v214 = vld [vmem:[%s200 + $0x18] sm:$0xff]
      %v215 = vld [vmem:[%s1] sm:$0xff]
      %v216 = vld [vmem:[%s1 + $0x8] sm:$0xff]
      %v217 = vld [vmem:[%s1 + $0x10] sm:$0xff]
      %v218 = vld [vmem:[%s1 + $0x18] sm:$0xff]
      %220 = vset.pattern.permute.xlu0 0
      %221 = vperm.xlu0 %220, %v215
      %v222 = vpop.permute.xlu0 %221
      %225 = vset.pattern.permute.xlu0 0
      %226 = vperm.xlu0 %225, %v216
      %v227 = vpop.permute.xlu0 %226
      %230 = vset.pattern.permute.xlu0 0
      %231 = vperm.xlu0 %230, %v217
      %v232 = vpop.permute.xlu0 %231
      %235 = vset.pattern.permute.xlu0 0
      %236 = vperm.xlu0 %235, %v218
      %v237 = vpop.permute.xlu0 %236
      %v239 = vmul.f32 %v211, %v222
      %v240 = vmul.f32 %v212, %v227
      %v241 = vmul.f32 %v213, %v232
      %v242 = vmul.f32 %v214, %v237
      %v243 = vld [vmem:[%s2] sm:$0xff]
      %v244 = vld [vmem:[%s2 + $0x8] sm:$0xff]
      %v245 = vld [vmem:[%s2 + $0x10] sm:$0xff]
      %v246 = vld [vmem:[%s2 + $0x18] sm:$0xff]
      %248 = vset.pattern.permute.xlu0 0
      %249 = vperm.xlu0 %248, %v243
      %v250 = vpop.permute.xlu0 %249
      %253 = vset.pattern.permute.xlu0 0
      %254 = vperm.xlu0 %253, %v244
      %v255 = vpop.permute.xlu0 %254
      %258 = vset.pattern.permute.xlu0 0
      %259 = vperm.xlu0 %258, %v245
      %v260 = vpop.permute.xlu0 %259
      %263 = vset.pattern.permute.xlu0 0
      %264 = vperm.xlu0 %263, %v246
      %v265 = vpop.permute.xlu0 %264
      %v267 = vadd.f32 %v239, %v250
      %v268 = vadd.f32 %v240, %v255
      %v269 = vadd.f32 %v241, %v260
      %v270 = vadd.f32 %v242, %v265
      %vm271 = vcmp.ge.f32.partialorder %v267, 0.0
      %vm272 = vcmp.ge.f32.partialorder %v268, 0.0
      %vm273 = vcmp.ge.f32.partialorder %v269, 0.0
      %vm274 = vcmp.ge.f32.partialorder %v270, 0.0
      %v275 = vmul.f32 %v267, 0.2
      %v276 = vmul.f32 %v268, 0.2
      %v277 = vmul.f32 %v269, 0.2
      %v278 = vmul.f32 %v270, 0.2
      %v279 = vsel %vm271, %v267, %v275
      %v280 = vsel %vm272, %v268, %v276
      %v281 = vsel %vm273, %v269, %v277
      %v282 = vsel %vm274, %v270, %v278
      %vm283 = vcmask 130048
      %284 = vst.msk [vmem:[%s205] sm:$0xff] %vm283, %v279
      %285 = vst.msk [vmem:[%s205 + $0x8] sm:$0xff] %vm283, %v280
      %286 = vst.msk [vmem:[%s205 + $0x10] sm:$0xff] %vm283, %v281
      %287 = vst.msk [vmem:[%s205 + $0x18] sm:$0xff] %vm283, %v282
      %v288 = vsel %vm283, %v279, 0.0
      %289 = vadd.xlane.f32.xlu0 %v288
      %v290 = vpop.xlane.xlu0 %289
      %v291 = vsel %vm283, %v280, 0.0
      %292 = vadd.xlane.f32.xlu0 %v291
      %v293 = vpop.xlane.xlu0 %292
      %v294 = vsel %vm283, %v281, 0.0
      %295 = vadd.xlane.f32.xlu0 %v294
      %v296 = vpop.xlane.xlu0 %295
      %v297 = vsel %vm283, %v282, 0.0
      %298 = vadd.xlane.f32.xlu0 %v297
      %v299 = vpop.xlane.xlu0 %298
      %v300 = vmul.f32 %v279, %v279
      %v301 = vmul.f32 %v280, %v280
      %v302 = vmul.f32 %v281, %v281
      %v303 = vmul.f32 %v282, %v282
      %v304 = vsel %vm283, %v300, 0.0
      %305 = vadd.xlane.f32.xlu0 %v304
      %v306 = vpop.xlane.xlu0 %305
      %v307 = vsel %vm283, %v301, 0.0
      %308 = vadd.xlane.f32.xlu0 %v307
      %v309 = vpop.xlane.xlu0 %308
      %v310 = vsel %vm283, %v302, 0.0
      %311 = vadd.xlane.f32.xlu0 %v310
      %v312 = vpop.xlane.xlu0 %311
      %v313 = vsel %vm283, %v303, 0.0
      %314 = vadd.xlane.f32.xlu0 %v313
      %v315 = vpop.xlane.xlu0 %314
      %vm316 = vcmask 7168
      %v317 = vsel %vm316, %v290, %v306
      %v318 = vsel %vm316, %v293, %v309
      %v319 = vsel %vm316, %v296, %v312
      %v320 = vsel %vm316, %v299, %v315
      %vm321 = vcmask 15360
      %322 = vst.msk [vmem:[%s210] sm:$0xff] %vm321, %v317
      %323 = vst.msk [vmem:[%s210 + $0x8] sm:$0xff] %vm321, %v318
      %324 = vst.msk [vmem:[%s210 + $0x10] sm:$0xff] %vm321, %v319
      %325 = vst.msk [vmem:[%s210 + $0x18] sm:$0xff] %vm321, %v320
      %p326 = scmp.lt.s32.totalorder %s16, 1
      %s327 = scalar_select %p326, %s16, 1
      %s328 = smul.addr %s327, 4
      %s329 = smul.addr %s328, 8
      %s330 = scalar_lea.vmem %s3, %s329
      %p331 = scmp.lt.s32.totalorder %s16, 1
      %s332 = scalar_select %p331, %s16, 1
      %s333 = smul.addr %s332, 4
      %s334 = smul.addr %s333, 8
      %s335 = scalar_lea.vmem %s4, %s334
      // Predicated region
      $region33: #{flow_generator_forward.14} parent=31 // pred_check
        %p336 = pneg %p102
      $region34: #{flow_generator_forward.14} parent=31 // pred_check_branch
        %338 = sbr.rel (%p336) target = $region36
      $region35: #{flow_generator_forward.14} parent=31 // pred_region
        _
      $region36: #{flow_generator_forward.14} parent=31 // pred_fallthru
        _
      // Predicated region
      $region37: #{flow_generator_forward.14} parent=31 // pred_check
        %p339 = pneg %p128
      $region38: #{flow_generator_forward.14} parent=31 // pred_check_branch
        %341 = sbr.rel (%p339) target = $region40
      $region39: #{flow_generator_forward.14} parent=31 // pred_region
        _
      $region40: #{flow_generator_forward.14} parent=31 // pred_fallthru
        _
    $region32: #{flow_generator_forward.14} parent=5 // pred_fallthru
      _
    %p342 = scmp.le.s32.totalorder 2, %s11
    // Predicated region
    $region41: #{flow_generator_forward.14} parent=5 // pred_check
      %p343 = pneg %p342
    $region42: #{flow_generator_forward.14} parent=5 // pred_check_branch
      %345 = sbr.rel (%p343) target = $region44
    $region43: #{flow_generator_forward.14} parent=5 // pred_region
      %s346 = ssub.s32 %s11, 2
      // Predicated region
      $region45: #{flow_generator_forward.14} parent=43 // pred_check
        %p347 = pneg %p108
      $region46: #{flow_generator_forward.14} parent=43 // pred_check_branch
        %349 = sbr.rel (%p347) target = $region48
      $region47: #{flow_generator_forward.14} parent=43 // pred_region
        %p350 = scmp.lt.s32.totalorder %s17, 1
        %s351 = scalar_select %p350, %s17, 1
        %s352 = smul.addr %s351, 4
        %s353 = smul.addr %s352, 8
        %s354 = scalar_lea.vmem %s3, %s353
      $region48: #{flow_generator_forward.14} parent=43 // pred_fallthru
        _
      // Predicated region
      $region49: #{flow_generator_forward.14} parent=43 // pred_check
        %p355 = pneg %p134
      $region50: #{flow_generator_forward.14} parent=43 // pred_check_branch
        %357 = sbr.rel (%p355) target = $region52
      $region51: #{flow_generator_forward.14} parent=43 // pred_region
        %p358 = scmp.lt.s32.totalorder %s17, 1
        %s359 = scalar_select %p358, %s17, 1
        %s360 = smul.addr %s359, 4
        %s361 = smul.addr %s360, 8
        %s362 = scalar_lea.vmem %s4, %s361
      $region52: #{flow_generator_forward.14} parent=43 // pred_fallthru
        _
    $region44: #{flow_generator_forward.14} parent=5 // pred_fallthru
      _
  $region6: #{flow_generator_forward.14} parent=0 // loop_footer
    %s15 = sadd.s32 1, %s11
  $region7: #{flow_generator_forward.14} parent=0 // loop_footer_branch
    %10 = sbr.rel target = $region3
  $region8: #{flow_generator_forward.14} parent=0 // loop_exit
    _

// kernel: flow_generator_forward.15
$region0: #{flow_generator_forward.15}
  #allocation0 [shape = 'u32[]', space=smem, size = 0x4, offset = 0x4, fixed_abs, tag = 'smem constant byte address 0x4 - core index']
  #allocation1 [shape = 'u32[144,128]{1,0:T(1,128)}', space=vmem, size = 0x12000, scoped, tag = 'internal scratch']
  %s0 = inlined_call_operand.vmem [shape: f32[2,32,16], index: 0, kind: input, shape index: {}]
  %s1 = inlined_call_operand.vmem [shape: f32[32,1], index: 1, kind: input, shape index: {}]
  %s2 = inlined_call_operand.vmem [shape: f32[32,1], index: 2, kind: input, shape index: {}]
  %s3 = inlined_call_operand.vmem [shape: bf16[32,288], index: 3, kind: input, shape index: {}]
  %s4 = inlined_call_operand.vmem [shape: f32[32,1], index: 4, kind: input, shape index: {}]
  %s5 = inlined_call_operand.vmem [shape: f32[2,32,16], index: 5, kind: output, shape index: {0}]
  %s6 = inlined_call_operand.vmem [shape: f32[2,32,2], index: 6, kind: output, shape index: {1}]
  %7 = xla_tuple %s5, %s6
  %s8 = sld [smem:[#allocation0]]
  $region61: #{flow_generator_forward.15} parent=0
    _
  %s10 = ssub.s32 1, %s8
  %s11 = scalar_select 0, %s10, %s8
  loop: start=0, step=1, limit=4
  $region2: #{flow_generator_forward.15} parent=0 // loop_pre_header
    _
  $region3: #{flow_generator_forward.15} parent=0 // loop_header
    %s13 = sphi 0, %s17
    %p14 = scmp.ge.s32.totalorder %s13, 4
    %s23 = sphi 0, %s25
    %s26 = sphi 0, %s23
    %s27 = sphi 0, %s26
    %s43 = sphi 0, %s27
    %s47 = sphi 0, %s47
    %s49 = sphi 0, %s47
    %s50 = sphi 0, %s49
    %s64 = sphi 0, %s50
    %s68 = sphi 0, %s68
    %s70 = sphi 0, %s68
    %s71 = sphi 0, %s70
    %s85 = sphi 0, %s71
    %s89 = sphi 0, %s89
    %s91 = sphi 0, %s89
    %s92 = sphi 0, %s91
    %s106 = sphi 0, %s92
    %s110 = sphi 0, %s110
    %s112 = sphi 0, %s110
    %s113 = sphi 0, %s112
    %s127 = sphi 0, %s113
    %s133 = sphi 0, %s135
    %s136 = sphi 0, %s133
    %s137 = sphi 0, %s136
    %s153 = sphi 0, %s137
    %s159 = sphi 0, %s161
    %s162 = sphi 0, %s159
    %s163 = sphi 0, %s162
    %s179 = sphi 0, %s163
  $region4: #{flow_generator_forward.15} parent=0 // loop_header_branch
    %16 = sbr.rel (%p14) target = $region8
  $region5: #{flow_generator_forward.15} parent=0 // loop_body
    %s18 = ssub.s32 %s13, 1
    %s19 = ssub.s32 %s13, 2
    %s20 = sadd.s32 %s13, 1
    %s21 = ssub.s32 %s13, %s20
    %p22 = scmp.eq.s32.totalorder %s21, 0
    %s24 = sadd.s32 %s23, 1
    %s25 = scalar_select %p22, %s23, %s24
    %p28 = pneg %p22
    %p29 = scmp.eq.s32.totalorder %s13, 1
    %p30 = por %p28, %p29
    %p31 = scmp.ne.s32.totalorder %s23, %s26
    %p32 = scmp.eq.s32.totalorder %s13, 0
    %p33 = por %p31, %p32
    %p34 = scmp.ne.s32.totalorder %s23, %s26
    %p35 = scmp.eq.s32.totalorder %s18, 1
    %p36 = por %p34, %p35
    %p37 = scmp.ne.s32.totalorder %s26, %s27
    %p38 = scmp.eq.s32.totalorder %s18, 0
    %p39 = por %p37, %p38
    %p40 = scmp.ne.s32.totalorder %s26, %s27
    %p41 = scmp.eq.s32.totalorder %s19, 1
    %p42 = por %p40, %p41
    %p44 = scmp.ne.s32.totalorder %s27, %s43
    %p45 = scmp.eq.s32.totalorder %s19, 0
    %p46 = por %p44, %p45
    %s48 = sadd.s32 %s47, 1
    %p51 = scmp.eq.s32.totalorder %s13, 1
    %p52 = scmp.ne.s32.totalorder %s47, %s49
    %p53 = scmp.eq.s32.totalorder %s13, 0
    %p54 = por %p52, %p53
    %p55 = scmp.ne.s32.totalorder %s47, %s49
    %p56 = scmp.eq.s32.totalorder %s18, 1
    %p57 = por %p55, %p56
    %p58 = scmp.ne.s32.totalorder %s49, %s50
    %p59 = scmp.eq.s32.totalorder %s18, 0
    %p60 = por %p58, %p59
    %p61 = scmp.ne.s32.totalorder %s49, %s50
    %p62 = scmp.eq.s32.totalorder %s19, 1
    %p63 = por %p61, %p62
    %p65 = scmp.ne.s32.totalorder %s50, %s64
    %p66 = scmp.eq.s32.totalorder %s19, 0
    %p67 = por %p65, %p66
    %s69 = sadd.s32 %s68, 1
    %p72 = scmp.eq.s32.totalorder %s13, 1
    %p73 = scmp.ne.s32.totalorder %s68, %s70
    %p74 = scmp.eq.s32.totalorder %s13, 0
    %p75 = por %p73, %p74
    %p76 = scmp.ne.s32.totalorder %s68, %s70
    %p77 = scmp.eq.s32.totalorder %s18, 1
    %p78 = por %p76, %p77
    %p79 = scmp.ne.s32.totalorder %s70, %s71
    %p80 = scmp.eq.s32.totalorder %s18, 0
    %p81 = por %p79, %p80
    %p82 = scmp.ne.s32.totalorder %s70, %s71
    %p83 = scmp.eq.s32.totalorder %s19, 1
    %p84 = por %p82, %p83
    %p86 = scmp.ne.s32.totalorder %s71, %s85
    %p87 = scmp.eq.s32.totalorder %s19, 0
    %p88 = por %p86, %p87
    %s90 = sadd.s32 %s89, 1
    %p93 = scmp.eq.s32.totalorder %s13, 1
    %p94 = scmp.ne.s32.totalorder %s89, %s91
    %p95 = scmp.eq.s32.totalorder %s13, 0
    %p96 = por %p94, %p95
    %p97 = scmp.ne.s32.totalorder %s89, %s91
    %p98 = scmp.eq.s32.totalorder %s18, 1
    %p99 = por %p97, %p98
    %p100 = scmp.ne.s32.totalorder %s91, %s92
    %p101 = scmp.eq.s32.totalorder %s18, 0
    %p102 = por %p100, %p101
    %p103 = scmp.ne.s32.totalorder %s91, %s92
    %p104 = scmp.eq.s32.totalorder %s19, 1
    %p105 = por %p103, %p104
    %p107 = scmp.ne.s32.totalorder %s92, %s106
    %p108 = scmp.eq.s32.totalorder %s19, 0
    %p109 = por %p107, %p108
    %s111 = sadd.s32 %s110, 1
    %p114 = scmp.eq.s32.totalorder %s13, 1
    %p115 = scmp.ne.s32.totalorder %s110, %s112
    %p116 = scmp.eq.s32.totalorder %s13, 0
    %p117 = por %p115, %p116
    %p118 = scmp.ne.s32.totalorder %s110, %s112
    %p119 = scmp.eq.s32.totalorder %s18, 1
    %p120 = por %p118, %p119
    %p121 = scmp.ne.s32.totalorder %s112, %s113
    %p122 = scmp.eq.s32.totalorder %s18, 0
    %p123 = por %p121, %p122
    %p124 = scmp.ne.s32.totalorder %s112, %s113
    %p125 = scmp.eq.s32.totalorder %s19, 1
    %p126 = por %p124, %p125
    %p128 = scmp.ne.s32.totalorder %s113, %s127
    %p129 = scmp.eq.s32.totalorder %s19, 0
    %p130 = por %p128, %p129
    %s131 = ssub.s32 %s13, %s20
    %p132 = scmp.eq.s32.totalorder %s131, 0
    %s134 = sadd.s32 %s133, 1
    %s135 = scalar_select %p132, %s133, %s134
    %p138 = pneg %p132
    %p139 = scmp.eq.s32.totalorder %s13, 1
    %p140 = por %p138, %p139
    %p141 = scmp.ne.s32.totalorder %s133, %s136
    %p142 = scmp.eq.s32.totalorder %s13, 0
    %p143 = por %p141, %p142
    %p144 = scmp.ne.s32.totalorder %s133, %s136
    %p145 = scmp.eq.s32.totalorder %s18, 1
    %p146 = por %p144, %p145
    %p147 = scmp.ne.s32.totalorder %s136, %s137
    %p148 = scmp.eq.s32.totalorder %s18, 0
    %p149 = por %p147, %p148
    %p150 = scmp.ne.s32.totalorder %s136, %s137
    %p151 = scmp.eq.s32.totalorder %s19, 1
    %p152 = por %p150, %p151
    %p154 = scmp.ne.s32.totalorder %s137, %s153
    %p155 = scmp.eq.s32.totalorder %s19, 0
    %p156 = por %p154, %p155
    %s157 = ssub.s32 %s13, %s20
    %p158 = scmp.eq.s32.totalorder %s157, 0
    %s160 = sadd.s32 %s159, 1
    %s161 = scalar_select %p158, %s159, %s160
    %p164 = pneg %p158
    %p165 = scmp.eq.s32.totalorder %s13, 1
    %p166 = por %p164, %p165
    %p167 = scmp.ne.s32.totalorder %s159, %s162
    %p168 = scmp.eq.s32.totalorder %s13, 0
    %p169 = por %p167, %p168
    %p170 = scmp.ne.s32.totalorder %s159, %s162
    %p171 = scmp.eq.s32.totalorder %s18, 1
    %p172 = por %p170, %p171
    %p173 = scmp.ne.s32.totalorder %s162, %s163
    %p174 = scmp.eq.s32.totalorder %s18, 0
    %p175 = por %p173, %p174
    %p176 = scmp.ne.s32.totalorder %s162, %s163
    %p177 = scmp.eq.s32.totalorder %s19, 1
    %p178 = por %p176, %p177
    %p180 = scmp.ne.s32.totalorder %s163, %s179
    %p181 = scmp.eq.s32.totalorder %s19, 0
    %p182 = por %p180, %p181
    %p183 = scmp.le.s32.totalorder 1, %s13
    %p184 = scmp.lt.s32.totalorder %s13, 3
    %p185 = pnand %p183, %p184
    %p186 = pneg %p185
    // Predicated region
    $region9: #{flow_generator_forward.15} parent=5 // pred_check
      _
    $region10: #{flow_generator_forward.15} parent=5 // pred_check_branch
      %188 = sbr.rel (%p185) target = $region12
    $region11: #{flow_generator_forward.15} parent=5 // pred_region
      %s189 = ssub.s32 %s13, 1
      // Predicated region
      $region13: #{flow_generator_forward.15} parent=11 // pred_check
        %p190 = pneg %p60
      $region14: #{flow_generator_forward.15} parent=11 // pred_check_branch
        %192 = sbr.rel (%p190) target = $region16
      $region15: #{flow_generator_forward.15} parent=11 // pred_region
        _
      $region16: #{flow_generator_forward.15} parent=11 // pred_fallthru
        _
      // Predicated region
      $region17: #{flow_generator_forward.15} parent=11 // pred_check
        %p193 = pneg %p81
      $region18: #{flow_generator_forward.15} parent=11 // pred_check_branch
        %195 = sbr.rel (%p193) target = $region20
      $region19: #{flow_generator_forward.15} parent=11 // pred_region
        _
      $region20: #{flow_generator_forward.15} parent=11 // pred_fallthru
        _
      // Predicated region
      $region21: #{flow_generator_forward.15} parent=11 // pred_check
        %p196 = pneg %p102
      $region22: #{flow_generator_forward.15} parent=11 // pred_check_branch
        %198 = sbr.rel (%p196) target = $region24
      $region23: #{flow_generator_forward.15} parent=11 // pred_region
        _
      $region24: #{flow_generator_forward.15} parent=11 // pred_fallthru
        _
      // Predicated region
      $region25: #{flow_generator_forward.15} parent=11 // pred_check
        %p199 = pneg %p123
      $region26: #{flow_generator_forward.15} parent=11 // pred_check_branch
        %201 = sbr.rel (%p199) target = $region28
      $region27: #{flow_generator_forward.15} parent=11 // pred_region
        _
      $region28: #{flow_generator_forward.15} parent=11 // pred_fallthru
        _
    $region12: #{flow_generator_forward.15} parent=5 // pred_fallthru
      _
    %p202 = scmp.lt.s32.totalorder %s13, 2
    // Predicated region
    $region29: #{flow_generator_forward.15} parent=5 // pred_check
      %p203 = pneg %p202
    $region30: #{flow_generator_forward.15} parent=5 // pred_check_branch
      %205 = sbr.rel (%p203) target = $region32
    $region31: #{flow_generator_forward.15} parent=5 // pred_region
      // Predicated region
      $region33: #{flow_generator_forward.15} parent=31 // pred_check
        %p206 = pneg %p33
      $region34: #{flow_generator_forward.15} parent=31 // pred_check_branch
        %208 = sbr.rel (%p206) target = $region36
      $region35: #{flow_generator_forward.15} parent=31 // pred_region
        %p209 = scmp.lt.s32.totalorder %s13, 1
        %s210 = scalar_select %p209, %s13, 1
        %s211 = smul.addr %s210, 4
        %s212 = smul.addr %s211, 8
        %s213 = scalar_lea.vmem %s0, %s212
      $region36: #{flow_generator_forward.15} parent=31 // pred_fallthru
        _
    $region32: #{flow_generator_forward.15} parent=5 // pred_fallthru
      _
    %p214 = scmp.le.s32.totalorder 1, %s13
    %p215 = scmp.lt.s32.totalorder %s13, 3
    %p216 = pnand %p214, %p215
    %p217 = pneg %p216
    // Predicated region
    $region37: #{flow_generator_forward.15} parent=5 // pred_check
      _
    $region38: #{flow_generator_forward.15} parent=5 // pred_check_branch
      %219 = sbr.rel (%p216) target = $region40
    $region39: #{flow_generator_forward.15} parent=5 // pred_region
      %s220 = ssub.s32 %s13, 1
      %p221 = scmp.lt.s32.totalorder %s18, 1
      %s222 = scalar_select %p221, %s18, 1
      %s223 = smul.addr %s222, 4
      %s224 = smul.addr %s223, 8
      %s225 = scalar_lea.vmem %s0, %s224
      %p226 = pneg %p39
      %p227 = pneg %p36
      %p228 = pneg %p60
      %p229 = pneg %p57
      %p230 = pneg %p81
      %p231 = pneg %p78
      %p232 = pneg %p102
      %p233 = pneg %p99
      %p234 = pneg %p123
      %p235 = pneg %p120
      %p236 = pneg %p149
      %p237 = pneg %p146
      %p238 = scmp.lt.s32.totalorder %s18, 1
      %s239 = scalar_select %p238, %s18, 1
      %s240 = smul.addr %s239, 4
      %s241 = smul.addr %s240, 8
      %s242 = scalar_lea.vmem %s5, %s241
      %p243 = pneg %p175
      %p244 = pneg %p172
      %p245 = scmp.lt.s32.totalorder %s18, 1
      %s246 = scalar_select %p245, %s18, 1
      %s247 = smul.addr %s246, 4
      %s248 = smul.addr %s247, 8
      %s249 = scalar_lea.vmem %s6, %s248
      %p250 = scmp.lt.s32.totalorder %s18, 1
      %s251 = scalar_select %p250, %s18, 1
      %s252 = smul.addr %s251, 4
      %s253 = smul.addr %s252, 8
      %s254 = scalar_lea.vmem %s0, %s253
      %p255 = scmp.lt.s32.totalorder %s18, 1
      %s256 = scalar_select %p255, %s18, 1
      %s257 = smul.addr %s256, 4
      %s258 = smul.addr %s257, 8
      %s259 = scalar_lea.vmem %s5, %s258
      %p260 = scmp.lt.s32.totalorder %s18, 1
      %s261 = scalar_select %p260, %s18, 1
      %s262 = smul.addr %s261, 4
      %s263 = smul.addr %s262, 8
      %s264 = scalar_lea.vmem %s6, %s263
      %v268 = vld [vmem:[%s254] sm:$0xff]
      %v269 = vld [vmem:[%s254 + $0x8] sm:$0xff]
      %v270 = vld [vmem:[%s254 + $0x10] sm:$0xff]
      %v271 = vld [vmem:[%s254 + $0x18] sm:$0xff]
      %v272 = vld [vmem:[%s1] sm:$0xff]
      %v273 = vld [vmem:[%s1 + $0x8] sm:$0xff]
      %v274 = vld [vmem:[%s1 + $0x10] sm:$0xff]
      %v275 = vld [vmem:[%s1 + $0x18] sm:$0xff]
      %277 = vset.pattern.permute.xlu0 0
      %278 = vperm.xlu0 %277, %v272
      %v279 = vpop.permute.xlu0 %278
      %282 = vset.pattern.permute.xlu0 0
      %283 = vperm.xlu0 %282, %v273
      %v284 = vpop.permute.xlu0 %283
      %287 = vset.pattern.permute.xlu0 0
      %288 = vperm.xlu0 %287, %v274
      %v289 = vpop.permute.xlu0 %288
      %292 = vset.pattern.permute.xlu0 0
      %293 = vperm.xlu0 %292, %v275
      %v294 = vpop.permute.xlu0 %293
      %v296 = vmul.f32 %v268, %v279
      %v297 = vmul.f32 %v269, %v284
      %v298 = vmul.f32 %v270, %v289
      %v299 = vmul.f32 %v271, %v294
      %v300 = vld [vmem:[%s2] sm:$0xff]
      %v301 = vld [vmem:[%s2 + $0x8] sm:$0xff]
      %v302 = vld [vmem:[%s2 + $0x10] sm:$0xff]
      %v303 = vld [vmem:[%s2 + $0x18] sm:$0xff]
      %305 = vset.pattern.permute.xlu0 0
      %306 = vperm.xlu0 %305, %v300
      %v307 = vpop.permute.xlu0 %306
      %310 = vset.pattern.permute.xlu0 0
      %311 = vperm.xlu0 %310, %v301
      %v312 = vpop.permute.xlu0 %311
      %315 = vset.pattern.permute.xlu0 0
      %316 = vperm.xlu0 %315, %v302
      %v317 = vpop.permute.xlu0 %316
      %320 = vset.pattern.permute.xlu0 0
      %321 = vperm.xlu0 %320, %v303
      %v322 = vpop.permute.xlu0 %321
      %v324 = vadd.f32 %v296, %v307
      %v325 = vadd.f32 %v297, %v312
      %v326 = vadd.f32 %v298, %v317
      %v327 = vadd.f32 %v299, %v322
      %vm328 = vcmp.ge.f32.partialorder %v324, 0.0
      %vm329 = vcmp.ge.f32.partialorder %v325, 0.0
      %vm330 = vcmp.ge.f32.partialorder %v326, 0.0
      %vm331 = vcmp.ge.f32.partialorder %v327, 0.0
      %v332 = vmul.f32 %v324, 0.2
      %v333 = vmul.f32 %v325, 0.2
      %v334 = vmul.f32 %v326, 0.2
      %v335 = vmul.f32 %v327, 0.2
      %v336 = vsel %vm328, %v324, %v332
      %v337 = vsel %vm329, %v325, %v333
      %v338 = vsel %vm330, %v326, %v334
      %v339 = vsel %vm331, %v327, %v335
      %v340 = vlaneseq
      %v341 = vand.u32 %v340, 127
      %vm342 = vcmp.lt.s32.totalorder %v341, 0
      %v343 = vsub.s32 0, %v341
      %v344 = vsel %vm342, %v343, %v341
      %v345 = vshrl.u32 %v344, 2
      %v346 = vand.u32 %v344, 3
      %v347 = vsub.s32 0, %v346
      %v348 = vsel %vm342, %v347, %v346
      %vm349 = vcmp.ne.s32.totalorder %v348, 0
      %vm350 = vcmp.lt.s32.totalorder %v348, 0
      %vm351 = vmand %vm350, %vm349
      %v352 = vadd.s32 %v348, 4
      %v353 = vsel %vm351, %v352, %v348
      %v354 = vadd.s32 %v353, 4294967295
      %vm355 = vcmp.ge.s32.totalorder %v354, 0
      %vm356 = vcmp.lt.s32.totalorder %v354, 4
      %vm357 = vmand %vm355, %vm356
      %v358 = vadd.s32 %v353, 1
      %vm359 = vcmp.ge.s32.totalorder %v358, 0
      %vm360 = vcmp.lt.s32.totalorder %v358, 4
      %vm361 = vmand %vm359, %vm360
      %v362 = vpack.c.bf16 %v337, %v336
      %v363 = vpack.c.bf16 %v339, %v338
      %366 = vrot.lane.b32.xlu0 %v362, 5
      %v367 = vpop.permute.xlu0 %366
      %368 = vrot.lane.b32.xlu0 %v363, 5
      %v369 = vpop.permute.xlu0 %368
      %vm370 = vcmask 39936
      %v373 = vsel %vm370, 0, %v367
      %v375 = vsel %vm370, 0, %v369
      %vm376 = vcmask 171008
      %v377 = vsel %vm376, %v373, 0
      %v379 = vsel %vm376, %v375, 0
      %v381 = vsel %vm357, 1, 0
      %vm382 = vcmp.eq.s32.totalorder %v381, 1
      %vm383 = vmpackc.low %vm382, %vm382
      %v384 = vsel %vm383, 65537, 0
      %v385 = vlaneseq
      %v386 = vshrl.u32 %v385, 7
      %v387 = vsub.s32 0, %v386
      %v388 = vrot.slane %v384, %v387
      %vm389 = vcmp.ne.s16.totalorder %v388, 0
      %v390 = vsel %vm389, %v377, 0
      %v391 = vsel %vm389, %v379, 0
      %v392 = vsel %vm361, 1, 0
      %vm393 = vcmp.eq.s32.totalorder %v392, 1
      %vm394 = vmpackc.low %vm393, %vm393
      %v395 = vsel %vm394, 65537, 0
      %v396 = vlaneseq
      %v397 = vshrl.u32 %v396, 7
      %v398 = vsub.s32 0, %v397
      %v399 = vrot.slane %v395, %v398
      %400 = vrot.lane.b32.xlu0 %v399, 2
      %v401 = vpop.permute.xlu0 %400
      %vm402 = vcmp.ne.s16.totalorder %v401, 0
      %v403 = vsel %vm402, %v377, 0
      %v404 = vsel %vm402, %v379, 0
      %405 = vrot.lane.b32.xlu0 %v388, 4
      %v406 = vpop.permute.xlu0 %405
      %vm407 = vcmp.ne.s16.totalorder %v406, 0
      %v408 = vsel %vm407, %v377, 0
      %v409 = vsel %vm407, %v379, 0
      %410 = vrot.lane.b32.xlu0 %v399, 6
      %v411 = vpop.permute.xlu0 %410
      %vm412 = vcmp.ne.s16.totalorder %v411, 0
      %v413 = vsel %vm412, %v377, 0
      %v414 = vsel %vm412, %v379, 0
      %415 = vrot.lane.b32.xlu0 %v388, 8
      %v416 = vpop.permute.xlu0 %415
      %vm417 = vcmp.ne.s16.totalorder %v416, 0
      %v418 = vsel %vm417, %v377, 0
      %v419 = vsel %vm417, %v379, 0
      %420 = vrot.lane.b32.xlu0 %v399, 10
      %v421 = vpop.permute.xlu0 %420
      %vm422 = vcmp.ne.s16.totalorder %v421, 0
      %v423 = vsel %vm422, %v377, 0
      %v424 = vsel %vm422, %v379, 0
      %427 = vrot.lane.b32.xlu0 %v377, 127
      %v428 = vpop.permute.xlu0 %427
      %429 = vrot.lane.b32.xlu0 %v379, 127
      %v430 = vpop.permute.xlu0 %429
      %435 = vrot.lane.b32.xlu0 %v403, 126
      %v436 = vpop.permute.xlu0 %435
      %437 = vrot.lane.b32.xlu0 %v404, 126
      %v438 = vpop.permute.xlu0 %437
      %443 = vrot.lane.b32.xlu0 %v408, 124
      %v444 = vpop.permute.xlu0 %443
      %445 = vrot.lane.b32.xlu0 %v409, 124
      %v446 = vpop.permute.xlu0 %445
      %449 = vrot.lane.b32.xlu0 %v377, 123
      %v450 = vpop.permute.xlu0 %449
      %451 = vrot.lane.b32.xlu0 %v379, 123
      %v452 = vpop.permute.xlu0 %451
      %457 = vrot.lane.b32.xlu0 %v413, 122
      %v458 = vpop.permute.xlu0 %457
      %459 = vrot.lane.b32.xlu0 %v414, 122
      %v460 = vpop.permute.xlu0 %459
      %465 = vrot.lane.b32.xlu0 %v418, 120
      %v466 = vpop.permute.xlu0 %465
      %467 = vrot.lane.b32.xlu0 %v419, 120
      %v468 = vpop.permute.xlu0 %467
      %471 = vrot.lane.b32.xlu0 %v377, 119
      %v472 = vpop.permute.xlu0 %471
      %473 = vrot.lane.b32.xlu0 %v379, 119
      %v474 = vpop.permute.xlu0 %473
      %479 = vrot.lane.b32.xlu0 %v423, 118
      %v480 = vpop.permute.xlu0 %479
      %481 = vrot.lane.b32.xlu0 %v424, 118
      %v482 = vpop.permute.xlu0 %481
      %v485 = vld [vmem:[%s3] sm:$0xff]
      %v486 = vld [vmem:[%s3 + $0x8] sm:$0xf]
      %v487 = vld [vmem:[%s3 + $0xc] sm:$0xff]
      %v488 = vld [vmem:[%s3 + $0x14] sm:$0xf]
      %v489 = vld [vmem:[%s3 + $0x18] sm:$0xff]
      %v490 = vld [vmem:[%s3 + $0x20] sm:$0xf]
      %v491 = vld [vmem:[%s3 + $0x24] sm:$0xff]
      %v492 = vld [vmem:[%s3 + $0x2c] sm:$0xf]
      %v493 = vld [vmem:[%s4] sm:$0xff]
      %v494 = vld [vmem:[%s4 + $0x8] sm:$0xff]
      %v495 = vld [vmem:[%s4 + $0x10] sm:$0xff]
      %v496 = vld [vmem:[%s4 + $0x18] sm:$0xff]
      %498 = vset.pattern.permute.xlu0 0
      %499 = vperm.xlu0 %498, %v493
      %v500 = vpop.permute.xlu0 %499
      %503 = vset.pattern.permute.xlu0 0
      %504 = vperm.xlu0 %503, %v494
      %v505 = vpop.permute.xlu0 %504
      %508 = vset.pattern.permute.xlu0 0
      %509 = vperm.xlu0 %508, %v495
      %v510 = vpop.permute.xlu0 %509
      %513 = vset.pattern.permute.xlu0 0
      %514 = vperm.xlu0 %513, %v496
      %v515 = vpop.permute.xlu0 %514
      %v525 = vunpack.c.l.b16 %v485
      %v526 = vunpack.c.h.b16 %v485
      %v527 = vunpack.c.l.b16 %v486
      %v528 = vunpack.c.l.b16 %v487
      %v529 = vunpack.c.h.b16 %v487
      %v530 = vunpack.c.l.b16 %v488
      %v531 = vunpack.c.l.b16 %v489
      %v532 = vunpack.c.h.b16 %v489
      %v533 = vunpack.c.l.b16 %v490
      %v534 = vunpack.c.l.b16 %v491
      %v535 = vunpack.c.h.b16 %v491
      %v536 = vunpack.c.l.b16 %v492
      %v537 = vpack.c.b16 %v528, %v525
      %v538 = vpack.c.b16 %v529, %v526
      %v539 = vpack.c.b16 %v530, %v527
      %v540 = vpack.c.b16 %v534, %v531
      %v541 = vpack.c.b16 %v535, %v532
      %v542 = vpack.c.b16 %v536, %v533
      %vm547 = vcmask 261120
      %v549 = vsel %vm547, %v539, 0
      %v552 = vsel %vm547, %v542, 0
      %554 = vmatprep.subr.bf16.mxu0 0
      %555 = vmatpush1.bf16.msra.mxu0 %v390
      %556 = vmatprep.subr.bf16.mxu0 0
      %557 = vmatpush1.bf16.msra.mxu0 %v391
      %558 = vmatprep.subr.bf16.mxu0 0
      %559 = vmatpush1.bf16.msra.mxu0 %v428
      %560 = vmatprep.subr.bf16.mxu0 0
      %561 = vmatpush1.bf16.msra.mxu0 %v430
      %562 = vmatprep.subr.bf16.mxu0 0
      %563 = vmatpush1.bf16.msra.mxu0 %v436
      %564 = vmatprep.subr.bf16.mxu0 0
      %565 = vmatpush1.bf16.msra.mxu0 %v438
      %566 = vmatprep.subr.bf16.mxu0 0
      %567 = vmatpush1.bf16.msra.mxu0 %v444
      %568 = vmatprep.subr.bf16.mxu0 0
      %569 = vmatpush1.bf16.msra.mxu0 %v446
      %570 = vmatprep.subr.bf16.mxu0 0
      %571 = vmatpush1.bf16.msra.mxu0 %v450
      %572 = vmatprep.subr.bf16.mxu0 0
      %573 = vmatpush1.bf16.msra.mxu0 %v452
      %574 = vmatprep.subr.bf16.mxu0 0
      %575 = vmatpush1.bf16.msra.mxu0 %v458
      %576 = vmatprep.subr.bf16.mxu0 0
      %577 = vmatpush1.bf16.msra.mxu0 %v460
      %578 = vmatprep.subr.bf16.mxu0 0
      %579 = vmatpush1.bf16.msra.mxu0 %v466
      %580 = vmatprep.subr.bf16.mxu0 0
      %581 = vmatpush1.bf16.msra.mxu0 %v468
      %582 = vmatprep.subr.bf16.mxu0 0
      %583 = vmatpush1.bf16.msra.mxu0 %v472
      %584 = vmatprep.subr.bf16.mxu0 0
      %585 = vmatpush1.bf16.msra.mxu0 %v474
      %586 = vmatprep.mubr.bf16.mxu0 %v538
      %587 = vmatmul.mubr.bf16.gmra.mrb[0].mxu0 %v537
      %v588 = vpop.f32.mrb[0].mxu0
      %v589 = vadd.f32 %v500, %v588
      %v590 = vpop.f32.mrb[0].mxu0
      %v591 = vpop.f32.mrb[0].mxu0
      %v592 = vadd.f32 %v505, %v591
      %v593 = vpop.f32.mrb[0].mxu0
      %594 = vmatprep.mubr.bf16.mxu0 %v541
      %595 = vmatmul.mubr.bf16.gmra.mrb[0].mxu0 %v540
      %v596 = vpop.f32.mrb[0].mxu0
      %v597 = vadd.f32 %v510, %v596
      %v598 = vpop.f32.mrb[0].mxu0
      %v599 = vpop.f32.mrb[0].mxu0
      %v600 = vadd.f32 %v515, %v599
      %v601 = vpop.f32.mrb[0].mxu0
      %602 = vdwg.mxu0
      %603 = vmatprep.subr.bf16.mxu0 0
      %604 = vmatpush1.bf16.msra.mxu0 %v480
      %605 = vmatprep.subr.bf16.mxu0 0
      %606 = vmatpush1.bf16.msra.mxu0 %v482
      %607 = vmatprep.subr.bf16.mxu0 0
      %608 = vmatpush1.bf16.msra.mxu0 0
      %609 = vmatprep.subr.bf16.mxu0 0
      %610 = vmatpush1.bf16.msra.mxu0 0
      %611 = vmatprep.subr.bf16.mxu0 0
      %612 = vmatpush1.bf16.msra.mxu0 0
      %613 = vmatprep.subr.bf16.mxu0 0
      %614 = vmatpush1.bf16.msra.mxu0 0
      %615 = vmatprep.subr.bf16.mxu0 0
      %616 = vmatpush1.bf16.msra.mxu0 0
      %617 = vmatprep.subr.bf16.mxu0 0
      %618 = vmatpush1.bf16.msra.mxu0 0
      %619 = vmatprep.subr.bf16.mxu0 0
      %620 = vmatpush1.bf16.msra.mxu0 0
      %621 = vmatprep.subr.bf16.mxu0 0
      %622 = vmatpush1.bf16.msra.mxu0 0
      %623 = vmatprep.subr.bf16.mxu0 0
      %624 = vmatpush1.bf16.msra.mxu0 0
      %625 = vmatprep.subr.bf16.mxu0 0
      %626 = vmatpush1.bf16.msra.mxu0 0
      %627 = vmatprep.subr.bf16.mxu0 0
      %628 = vmatpush1.bf16.msra.mxu0 0
      %629 = vmatprep.subr.bf16.mxu0 0
      %630 = vmatpush1.bf16.msra.mxu0 0
      %631 = vmatprep.subr.bf16.mxu0 0
      %632 = vmatpush1.bf16.msra.mxu0 0
      %633 = vmatprep.subr.bf16.mxu0 0
      %634 = vmatpush1.bf16.msra.mxu0 0
      %635 = vmatprep.mubr.bf16.mxu0 0
      %636 = vmatmul.mubr.bf16.gmra.mrb[0].mxu0 %v549
      %v637 = vpop.f32.mrb[0].mxu0
      %v638 = vadd.f32 %v589, %v637
      %v639 = vpop.f32.mrb[0].mxu0
      %v640 = vpop.f32.mrb[0].mxu0
      %v641 = vadd.f32 %v592, %v640
      %v642 = vpop.f32.mrb[0].mxu0
      %643 = vmatprep.mubr.bf16.mxu0 0
      %644 = vmatmul.mubr.bf16.gmra.mrb[0].mxu0 %v552
      %v645 = vpop.f32.mrb[0].mxu0
      %v646 = vadd.f32 %v597, %v645
      %v647 = vpop.f32.mrb[0].mxu0
      %v648 = vpop.f32.mrb[0].mxu0
      %v649 = vadd.f32 %v600, %v648
      %v650 = vpop.f32.mrb[0].mxu0
      %651 = vdwg.mxu0
      %vm652 = vcmask 130048
      %653 = vst.msk [vmem:[%s259] sm:$0xff] %vm652, %v638
      %654 = vst.msk [vmem:[%s259 + $0x8] sm:$0xff] %vm652, %v641
      %655 = vst.msk [vmem:[%s259 + $0x10] sm:$0xff] %vm652, %v646
      %656 = vst.msk [vmem:[%s259 + $0x18] sm:$0xff] %vm652, %v649
      %v657 = vsel %vm652, %v638, 0.0
      %658 = vadd.xlane.f32.xlu0 %v657
      %v659 = vpop.xlane.xlu0 %658
      %v660 = vsel %vm652, %v641, 0.0
      %661 = vadd.xlane.f32.xlu0 %v660
      %v662 = vpop.xlane.xlu0 %661
      %v663 = vsel %vm652, %v646, 0.0
      %664 = vadd.xlane.f32.xlu0 %v663
      %v665 = vpop.xlane.xlu0 %664
      %v666 = vsel %vm652, %v649, 0.0
      %667 = vadd.xlane.f32.xlu0 %v666
      %v668 = vpop.xlane.xlu0 %667
      %v669 = vmul.f32 %v638, %v638
      %v670 = vmul.f32 %v641, %v641
      %v671 = vmul.f32 %v646, %v646
      %v672 = vmul.f32 %v649, %v649
      %v673 = vsel %vm652, %v669, 0.0
      %674 = vadd.xlane.f32.xlu0 %v673
      %v675 = vpop.xlane.xlu0 %674
      %v676 = vsel %vm652, %v670, 0.0
      %677 = vadd.xlane.f32.xlu0 %v676
      %v678 = vpop.xlane.xlu0 %677
      %v679 = vsel %vm652, %v671, 0.0
      %680 = vadd.xlane.f32.xlu0 %v679
      %v681 = vpop.xlane.xlu0 %680
      %v682 = vsel %vm652, %v672, 0.0
      %683 = vadd.xlane.f32.xlu0 %v682
      %v684 = vpop.xlane.xlu0 %683
      %vm685 = vcmask 7168
      %v686 = vsel %vm685, %v659, %v675
      %v687 = vsel %vm685, %v662, %v678
      %v688 = vsel %vm685, %v665, %v681
      %v689 = vsel %vm685, %v668, %v684
      %vm690 = vcmask 15360
      %691 = vst.msk [vmem:[%s264] sm:$0xff] %vm690, %v686
      %692 = vst.msk [vmem:[%s264 + $0x8] sm:$0xff] %vm690, %v687
      %693 = vst.msk [vmem:[%s264 + $0x10] sm:$0xff] %vm690, %v688
      %694 = vst.msk [vmem:[%s264 + $0x18] sm:$0xff] %vm690, %v689
      %p695 = scmp.lt.s32.totalorder %s18, 1
      %s696 = scalar_select %p695, %s18, 1
      %s697 = smul.addr %s696, 4
      %s698 = smul.addr %s697, 8
      %s699 = scalar_lea.vmem %s5, %s698
      %p700 = scmp.lt.s32.totalorder %s18, 1
      %s701 = scalar_select %p700, %s18, 1
      %s702 = smul.addr %s701, 4
      %s703 = smul.addr %s702, 8
      %s704 = scalar_lea.vmem %s6, %s703
      // Predicated region
      $region41: #{flow_generator_forward.15} parent=39 // pred_check
        %p705 = pneg %p146
      $region42: #{flow_generator_forward.15} parent=39 // pred_check_branch
        %707 = sbr.rel (%p705) target = $region44
      $region43: #{flow_generator_forward.15} parent=39 // pred_region
        _
      $region44: #{flow_generator_forward.15} parent=39 // pred_fallthru
        _
      // Predicated region
      $region45: #{flow_generator_forward.15} parent=39 // pred_check
        %p708 = pneg %p172
      $region46: #{flow_generator_forward.15} parent=39 // pred_check_branch
        %710 = sbr.rel (%p708) target = $region48
      $region47: #{flow_generator_forward.15} parent=39 // pred_region
        _
      $region48: #{flow_generator_forward.15} parent=39 // pred_fallthru
        _
    $region40: #{flow_generator_forward.15} parent=5 // pred_fallthru
      _
    %p711 = scmp.le.s32.totalorder 2, %s13
    // Predicated region
    $region49: #{flow_generator_forward.15} parent=5 // pred_check
      %p712 = pneg %p711
    $region50: #{flow_generator_forward.15} parent=5 // pred_check_branch
      %714 = sbr.rel (%p712) target = $region52
    $region51: #{flow_generator_forward.15} parent=5 // pred_region
      %s715 = ssub.s32 %s13, 2
      // Predicated region
      $region53: #{flow_generator_forward.15} parent=51 // pred_check
        %p716 = pneg %p152
      $region54: #{flow_generator_forward.15} parent=51 // pred_check_branch
        %718 = sbr.rel (%p716) target = $region56
      $region55: #{flow_generator_forward.15} parent=51 // pred_region
        %p719 = scmp.lt.s32.totalorder %s19, 1
        %s720 = scalar_select %p719, %s19, 1
        %s721 = smul.addr %s720, 4
        %s722 = smul.addr %s721, 8
        %s723 = scalar_lea.vmem %s5, %s722
      $region56: #{flow_generator_forward.15} parent=51 // pred_fallthru
        _
      // Predicated region
      $region57: #{flow_generator_forward.15} parent=51 // pred_check
        %p724 = pneg %p178
      $region58: #{flow_generator_forward.15} parent=51 // pred_check_branch
        %726 = sbr.rel (%p724) target = $region60
      $region59: #{flow_generator_forward.15} parent=51 // pred_region
        %p727 = scmp.lt.s32.totalorder %s19, 1
        %s728 = scalar_select %p727, %s19, 1
        %s729 = smul.addr %s728, 4
        %s730 = smul.addr %s729, 8
        %s731 = scalar_lea.vmem %s6, %s730
      $region60: #{flow_generator_forward.15} parent=51 // pred_fallthru
        _
    $region52: #{flow_generator_forward.15} parent=5 // pred_fallthru
      _
  $region6: #{flow_generator_forward.15} parent=0 // loop_footer
    %s17 = sadd.s32 1, %s13
  $region7: #{flow_generator_forward.15} parent=0 // loop_footer_branch
    %12 = sbr.rel target = $region3
  $region8: #{flow_generator_forward.15} parent=0 // loop_exit
    _

// kernel: flow_generator_forward.18
$region0: #{flow_generator_forward.18}
  #allocation0 [shape = 'u32[]', space=smem, size = 0x4, offset = 0x4, fixed_abs, tag = 'smem constant byte address 0x4 - core index']
  #allocation1 [shape = 'u32[144,128]{1,0:T(1,128)}', space=vmem, size = 0x12000, scoped, tag = 'internal scratch']
  %s0 = inlined_call_operand.vmem [shape: f32[2,32,16], index: 0, kind: input, shape index: {}]
  %s1 = inlined_call_operand.vmem [shape: f32[32,1], index: 1, kind: input, shape index: {}]
  %s2 = inlined_call_operand.vmem [shape: f32[32,1], index: 2, kind: input, shape index: {}]
  %s3 = inlined_call_operand.vmem [shape: bf16[32,288], index: 3, kind: input, shape index: {}]
  %s4 = inlined_call_operand.vmem [shape: f32[32,1], index: 4, kind: input, shape index: {}]
  %s5 = inlined_call_operand.vmem [shape: f32[2,32,16], index: 5, kind: input, shape index: {}]
  %s6 = inlined_call_operand.vmem [shape: f32[2,32,16], index: 6, kind: output, shape index: {0}]
  %s7 = inlined_call_operand.hbm [shape: f32[2,32,2], index: 7, kind: output, shape index: {1}]
  %8 = xla_tuple %s6, %s7
  %s9 = sld [smem:[#allocation0]]
  $region65: #{flow_generator_forward.18} parent=0
    _
  %s11 = ssub.s32 1, %s9
  %s12 = scalar_select 0, %s11, %s9
  $region1: #{flow_generator_forward.18} parent=0
    #allocation2 [shape = 'u8[32768]{0}', space=vmem, size = 0x8000, scoped, tag = 'output window, operand 1']
    #allocation3 [shape = 's32[2]{0}', space=sflag, size = 0x8, scoped, tag = 'scoped memory for flow_generator_forward.18']
    %13 = vsyncpa [#allocation3], 0
    %s14 = scalar_lea.sflag [#allocation3], 1
    %15 = vsyncpa %s14, 0
    loop: start=0, step=1, limit=4
    $region2: #{flow_generator_forward.18} parent=1 // loop_pre_header
      _
    $region3: #{flow_generator_forward.18} parent=1 // loop_header
      %s17 = sphi 0, %s21
      %p18 = scmp.ge.s32.totalorder %s17, 4
      %s27 = sphi 0, %s29
      %s30 = sphi 0, %s27
      %s31 = sphi 0, %s30
      %s47 = sphi 0, %s31
      %s51 = sphi 0, %s51
      %s53 = sphi 0, %s51
      %s54 = sphi 0, %s53
      %s68 = sphi 0, %s54
      %s72 = sphi 0, %s72
      %s74 = sphi 0, %s72
      %s75 = sphi 0, %s74
      %s89 = sphi 0, %s75
      %s93 = sphi 0, %s93
      %s95 = sphi 0, %s93
      %s96 = sphi 0, %s95
      %s110 = sphi 0, %s96
      %s114 = sphi 0, %s114
      %s116 = sphi 0, %s114
      %s117 = sphi 0, %s116
      %s131 = sphi 0, %s117
      %s137 = sphi 0, %s139
      %s140 = sphi 0, %s137
      %s141 = sphi 0, %s140
      %s157 = sphi 0, %s141
      %s163 = sphi 0, %s165
      %s166 = sphi 0, %s163
      %s167 = sphi 0, %s166
      %s183 = sphi 0, %s167
      %s189 = sphi 0, %s191
      %s192 = sphi 0, %s189
      %s193 = sphi 0, %s192
      %s209 = sphi 0, %s193
    $region4: #{flow_generator_forward.18} parent=1 // loop_header_branch
      %20 = sbr.rel (%p18) target = $region8
    $region5: #{flow_generator_forward.18} parent=1 // loop_body
      %s22 = ssub.s32 %s17, 1
      %s23 = ssub.s32 %s17, 2
      %s24 = sadd.s32 %s17, 1
      %s25 = ssub.s32 %s17, %s24
      %p26 = scmp.eq.s32.totalorder %s25, 0
      %s28 = sadd.s32 %s27, 1
      %s29 = scalar_select %p26, %s27, %s28
      %p32 = pneg %p26
      %p33 = scmp.eq.s32.totalorder %s17, 1
      %p34 = por %p32, %p33
      %p35 = scmp.ne.s32.totalorder %s27, %s30
      %p36 = scmp.eq.s32.totalorder %s17, 0
      %p37 = por %p35, %p36
      %p38 = scmp.ne.s32.totalorder %s27, %s30
      %p39 = scmp.eq.s32.totalorder %s22, 1
      %p40 = por %p38, %p39
      %p41 = scmp.ne.s32.totalorder %s30, %s31
      %p42 = scmp.eq.s32.totalorder %s22, 0
      %p43 = por %p41, %p42
      %p44 = scmp.ne.s32.totalorder %s30, %s31
      %p45 = scmp.eq.s32.totalorder %s23, 1
      %p46 = por %p44, %p45
      %p48 = scmp.ne.s32.totalorder %s31, %s47
      %p49 = scmp.eq.s32.totalorder %s23, 0
      %p50 = por %p48, %p49
      %s52 = sadd.s32 %s51, 1
      %p55 = scmp.eq.s32.totalorder %s17, 1
      %p56 = scmp.ne.s32.totalorder %s51, %s53
      %p57 = scmp.eq.s32.totalorder %s17, 0
      %p58 = por %p56, %p57
      %p59 = scmp.ne.s32.totalorder %s51, %s53
      %p60 = scmp.eq.s32.totalorder %s22, 1
      %p61 = por %p59, %p60
      %p62 = scmp.ne.s32.totalorder %s53, %s54
      %p63 = scmp.eq.s32.totalorder %s22, 0
      %p64 = por %p62, %p63
      %p65 = scmp.ne.s32.totalorder %s53, %s54
      %p66 = scmp.eq.s32.totalorder %s23, 1
      %p67 = por %p65, %p66
      %p69 = scmp.ne.s32.totalorder %s54, %s68
      %p70 = scmp.eq.s32.totalorder %s23, 0
      %p71 = por %p69, %p70
      %s73 = sadd.s32 %s72, 1
      %p76 = scmp.eq.s32.totalorder %s17, 1
      %p77 = scmp.ne.s32.totalorder %s72, %s74
      %p78 = scmp.eq.s32.totalorder %s17, 0
      %p79 = por %p77, %p78
      %p80 = scmp.ne.s32.totalorder %s72, %s74
      %p81 = scmp.eq.s32.totalorder %s22, 1
      %p82 = por %p80, %p81
      %p83 = scmp.ne.s32.totalorder %s74, %s75
      %p84 = scmp.eq.s32.totalorder %s22, 0
      %p85 = por %p83, %p84
      %p86 = scmp.ne.s32.totalorder %s74, %s75
      %p87 = scmp.eq.s32.totalorder %s23, 1
      %p88 = por %p86, %p87
      %p90 = scmp.ne.s32.totalorder %s75, %s89
      %p91 = scmp.eq.s32.totalorder %s23, 0
      %p92 = por %p90, %p91
      %s94 = sadd.s32 %s93, 1
      %p97 = scmp.eq.s32.totalorder %s17, 1
      %p98 = scmp.ne.s32.totalorder %s93, %s95
      %p99 = scmp.eq.s32.totalorder %s17, 0
      %p100 = por %p98, %p99
      %p101 = scmp.ne.s32.totalorder %s93, %s95
      %p102 = scmp.eq.s32.totalorder %s22, 1
      %p103 = por %p101, %p102
      %p104 = scmp.ne.s32.totalorder %s95, %s96
      %p105 = scmp.eq.s32.totalorder %s22, 0
      %p106 = por %p104, %p105
      %p107 = scmp.ne.s32.totalorder %s95, %s96
      %p108 = scmp.eq.s32.totalorder %s23, 1
      %p109 = por %p107, %p108
      %p111 = scmp.ne.s32.totalorder %s96, %s110
      %p112 = scmp.eq.s32.totalorder %s23, 0
      %p113 = por %p111, %p112
      %s115 = sadd.s32 %s114, 1
      %p118 = scmp.eq.s32.totalorder %s17, 1
      %p119 = scmp.ne.s32.totalorder %s114, %s116
      %p120 = scmp.eq.s32.totalorder %s17, 0
      %p121 = por %p119, %p120
      %p122 = scmp.ne.s32.totalorder %s114, %s116
      %p123 = scmp.eq.s32.totalorder %s22, 1
      %p124 = por %p122, %p123
      %p125 = scmp.ne.s32.totalorder %s116, %s117
      %p126 = scmp.eq.s32.totalorder %s22, 0
      %p127 = por %p125, %p126
      %p128 = scmp.ne.s32.totalorder %s116, %s117
      %p129 = scmp.eq.s32.totalorder %s23, 1
      %p130 = por %p128, %p129
      %p132 = scmp.ne.s32.totalorder %s117, %s131
      %p133 = scmp.eq.s32.totalorder %s23, 0
      %p134 = por %p132, %p133
      %s135 = ssub.s32 %s17, %s24
      %p136 = scmp.eq.s32.totalorder %s135, 0
      %s138 = sadd.s32 %s137, 1
      %s139 = scalar_select %p136, %s137, %s138
      %p142 = pneg %p136
      %p143 = scmp.eq.s32.totalorder %s17, 1
      %p144 = por %p142, %p143
      %p145 = scmp.ne.s32.totalorder %s137, %s140
      %p146 = scmp.eq.s32.totalorder %s17, 0
      %p147 = por %p145, %p146
      %p148 = scmp.ne.s32.totalorder %s137, %s140
      %p149 = scmp.eq.s32.totalorder %s22, 1
      %p150 = por %p148, %p149
      %p151 = scmp.ne.s32.totalorder %s140, %s141
      %p152 = scmp.eq.s32.totalorder %s22, 0
      %p153 = por %p151, %p152
      %p154 = scmp.ne.s32.totalorder %s140, %s141
      %p155 = scmp.eq.s32.totalorder %s23, 1
      %p156 = por %p154, %p155
      %p158 = scmp.ne.s32.totalorder %s141, %s157
      %p159 = scmp.eq.s32.totalorder %s23, 0
      %p160 = por %p158, %p159
      %s161 = ssub.s32 %s17, %s24
      %p162 = scmp.eq.s32.totalorder %s161, 0
      %s164 = sadd.s32 %s163, 1
      %s165 = scalar_select %p162, %s163, %s164
      %p168 = pneg %p162
      %p169 = scmp.eq.s32.totalorder %s17, 1
      %p170 = por %p168, %p169
      %p171 = scmp.ne.s32.totalorder %s163, %s166
      %p172 = scmp.eq.s32.totalorder %s17, 0
      %p173 = por %p171, %p172
      %p174 = scmp.ne.s32.totalorder %s163, %s166
      %p175 = scmp.eq.s32.totalorder %s22, 1
      %p176 = por %p174, %p175
      %p177 = scmp.ne.s32.totalorder %s166, %s167
      %p178 = scmp.eq.s32.totalorder %s22, 0
      %p179 = por %p177, %p178
      %p180 = scmp.ne.s32.totalorder %s166, %s167
      %p181 = scmp.eq.s32.totalorder %s23, 1
      %p182 = por %p180, %p181
      %p184 = scmp.ne.s32.totalorder %s167, %s183
      %p185 = scmp.eq.s32.totalorder %s23, 0
      %p186 = por %p184, %p185
      %s187 = ssub.s32 %s17, %s24
      %p188 = scmp.eq.s32.totalorder %s187, 0
      %s190 = sadd.s32 %s189, 1
      %s191 = scalar_select %p188, %s189, %s190
      %p194 = pneg %p188
      %p195 = scmp.eq.s32.totalorder %s17, 1
      %p196 = por %p194, %p195
      %p197 = scmp.ne.s32.totalorder %s189, %s192
      %p198 = scmp.eq.s32.totalorder %s17, 0
      %p199 = por %p197, %p198
      %p200 = scmp.ne.s32.totalorder %s189, %s192
      %p201 = scmp.eq.s32.totalorder %s22, 1
      %p202 = por %p200, %p201
      %p203 = scmp.ne.s32.totalorder %s192, %s193
      %p204 = scmp.eq.s32.totalorder %s22, 0
      %p205 = por %p203, %p204
      %p206 = scmp.ne.s32.totalorder %s192, %s193
      %p207 = scmp.eq.s32.totalorder %s23, 1
      %p208 = por %p206, %p207
      %p210 = scmp.ne.s32.totalorder %s193, %s209
      %p211 = scmp.eq.s32.totalorder %s23, 0
      %p212 = por %p210, %p211
      %p213 = scmp.le.s32.totalorder 1, %s17
      %p214 = scmp.lt.s32.totalorder %s17, 3
      %p215 = pnand %p213, %p214
      %p216 = pneg %p215
      // Predicated region
      $region9: #{flow_generator_forward.18} parent=5 // pred_check
        _
      $region10: #{flow_generator_forward.18} parent=5 // pred_check_branch
        %218 = sbr.rel (%p215) target = $region12
      $region11: #{flow_generator_forward.18} parent=5 // pred_region
        %s219 = ssub.s32 %s17, 1
        // Predicated region
        $region13: #{flow_generator_forward.18} parent=11 // pred_check
          %p220 = pneg %p64
        $region14: #{flow_generator_forward.18} parent=11 // pred_check_branch
          %222 = sbr.rel (%p220) target = $region16
        $region15: #{flow_generator_forward.18} parent=11 // pred_region
          _
        $region16: #{flow_generator_forward.18} parent=11 // pred_fallthru
          _
        // Predicated region
        $region17: #{flow_generator_forward.18} parent=11 // pred_check
          %p223 = pneg %p85
        $region18: #{flow_generator_forward.18} parent=11 // pred_check_branch
          %225 = sbr.rel (%p223) target = $region20
        $region19: #{flow_generator_forward.18} parent=11 // pred_region
          _
        $region20: #{flow_generator_forward.18} parent=11 // pred_fallthru
          _
        // Predicated region
        $region21: #{flow_generator_forward.18} parent=11 // pred_check
          %p226 = pneg %p106
        $region22: #{flow_generator_forward.18} parent=11 // pred_check_branch
          %228 = sbr.rel (%p226) target = $region24
        $region23: #{flow_generator_forward.18} parent=11 // pred_region
          _
        $region24: #{flow_generator_forward.18} parent=11 // pred_fallthru
          _
        // Predicated region
        $region25: #{flow_generator_forward.18} parent=11 // pred_check
          %p229 = pneg %p127
        $region26: #{flow_generator_forward.18} parent=11 // pred_check_branch
          %231 = sbr.rel (%p229) target = $region28
        $region27: #{flow_generator_forward.18} parent=11 // pred_region
          _
        $region28: #{flow_generator_forward.18} parent=11 // pred_fallthru
          _
      $region12: #{flow_generator_forward.18} parent=5 // pred_fallthru
        _
      %p232 = scmp.lt.s32.totalorder %s17, 2
      // Predicated region
      $region29: #{flow_generator_forward.18} parent=5 // pred_check
        %p233 = pneg %p232
      $region30: #{flow_generator_forward.18} parent=5 // pred_check_branch
        %235 = sbr.rel (%p233) target = $region32
      $region31: #{flow_generator_forward.18} parent=5 // pred_region
        // Predicated region
        $region33: #{flow_generator_forward.18} parent=31 // pred_check
          %p236 = pneg %p37
        $region34: #{flow_generator_forward.18} parent=31 // pred_check_branch
          %238 = sbr.rel (%p236) target = $region36
        $region35: #{flow_generator_forward.18} parent=31 // pred_region
          %p239 = scmp.lt.s32.totalorder %s17, 1
          %s240 = scalar_select %p239, %s17, 1
          %s241 = smul.addr %s240, 4
          %s242 = smul.addr %s241, 8
          %s243 = scalar_lea.vmem %s0, %s242
        $region36: #{flow_generator_forward.18} parent=31 // pred_fallthru
          _
        // Predicated region
        $region37: #{flow_generator_forward.18} parent=31 // pred_check
          %p244 = pneg %p147
        $region38: #{flow_generator_forward.18} parent=31 // pred_check_branch
          %246 = sbr.rel (%p244) target = $region40
        $region39: #{flow_generator_forward.18} parent=31 // pred_region
          %p247 = scmp.lt.s32.totalorder %s17, 1
          %s248 = scalar_select %p247, %s17, 1
          %s249 = smul.addr %s248, 4
          %s250 = smul.addr %s249, 8
          %s251 = scalar_lea.vmem %s5, %s250
        $region40: #{flow_generator_forward.18} parent=31 // pred_fallthru
          _
      $region32: #{flow_generator_forward.18} parent=5 // pred_fallthru
        _
      %p252 = scmp.le.s32.totalorder 1, %s17
      %p253 = scmp.lt.s32.totalorder %s17, 3
      %p254 = pnand %p252, %p253
      %p255 = pneg %p254
      // Predicated region
      $region41: #{flow_generator_forward.18} parent=5 // pred_check
        _
      $region42: #{flow_generator_forward.18} parent=5 // pred_check_branch
        %257 = sbr.rel (%p254) target = $region44
      $region43: #{flow_generator_forward.18} parent=5 // pred_region
        %s258 = ssub.s32 %s17, 1
        %p259 = scmp.lt.s32.totalorder %s22, 1
        %s260 = scalar_select %p259, %s22, 1
        %s261 = smul.addr %s260, 4
        %s262 = smul.addr %s261, 8
        %s263 = scalar_lea.vmem %s0, %s262
        %p264 = pneg %p43
        %p265 = pneg %p40
        %p266 = pneg %p64
        %p267 = pneg %p61
        %p268 = pneg %p85
        %p269 = pneg %p82
        %p270 = pneg %p106
        %p271 = pneg %p103
        %p272 = pneg %p127
        %p273 = pneg %p124
        %p274 = scmp.lt.s32.totalorder %s22, 1
        %s275 = scalar_select %p274, %s22, 1
        %s276 = smul.addr %s275, 4
        %s277 = smul.addr %s276, 8
        %s278 = scalar_lea.vmem %s5, %s277
        %p279 = pneg %p153
        %p280 = pneg %p150
        %p281 = pneg %p179
        %p282 = pneg %p176
        %p283 = scmp.lt.s32.totalorder %s22, 1
        %s284 = scalar_select %p283, %s22, 1
        %s285 = smul.addr %s284, 4
        %s286 = smul.addr %s285, 8
        %s287 = scalar_lea.vmem %s6, %s286
        %p288 = pneg %p205
        %p289 = pneg %p202
        %s290 = sand.u32 %s192, 1
        %s291 = scalar_lea.sflag [#allocation3], %s290
        %s292 = sand.u32 %s192, 1
        %s293 = smul.addr %s292, 32
        %s294 = scalar_lea.vmem [#allocation2], %s293
        %p295 = scmp.lt.s32.totalorder %s22, 1
        %s296 = scalar_select %p295, %s22, 1
        %s297 = smul.addr %s296, 4
        %s298 = smul.addr %s297, 8
        %s299 = scalar_lea.vmem %s0, %s298
        %p300 = scmp.lt.s32.totalorder %s22, 1
        %s301 = scalar_select %p300, %s22, 1
        %s302 = smul.addr %s301, 4
        %s303 = smul.addr %s302, 8
        %s304 = scalar_lea.vmem %s5, %s303
        %p305 = scmp.lt.s32.totalorder %s22, 1
        %s306 = scalar_select %p305, %s22, 1
        %s307 = smul.addr %s306, 4
        %s308 = smul.addr %s307, 8
        %s309 = scalar_lea.vmem %s6, %s308
        %v313 = vld [vmem:[%s299] sm:$0xff]
        %v314 = vld [vmem:[%s299 + $0x8] sm:$0xff]
        %v315 = vld [vmem:[%s299 + $0x10] sm:$0xff]
        %v316 = vld [vmem:[%s299 + $0x18] sm:$0xff]
        %v317 = vld [vmem:[%s1] sm:$0xff]
        %v318 = vld [vmem:[%s1 + $0x8] sm:$0xff]
        %v319 = vld [vmem:[%s1 + $0x10] sm:$0xff]
        %v320 = vld [vmem:[%s1 + $0x18] sm:$0xff]
        %322 = vset.pattern.permute.xlu0 0
        %323 = vperm.xlu0 %322, %v317
        %v324 = vpop.permute.xlu0 %323
        %327 = vset.pattern.permute.xlu0 0
        %328 = vperm.xlu0 %327, %v318
        %v329 = vpop.permute.xlu0 %328
        %332 = vset.pattern.permute.xlu0 0
        %333 = vperm.xlu0 %332, %v319
        %v334 = vpop.permute.xlu0 %333
        %337 = vset.pattern.permute.xlu0 0
        %338 = vperm.xlu0 %337, %v320
        %v339 = vpop.permute.xlu0 %338
        %v341 = vmul.f32 %v313, %v324
        %v342 = vmul.f32 %v314, %v329
        %v343 = vmul.f32 %v315, %v334
        %v344 = vmul.f32 %v316, %v339
        %v345 = vld [vmem:[%s2] sm:$0xff]
        %v346 = vld [vmem:[%s2 + $0x8] sm:$0xff]
        %v347 = vld [vmem:[%s2 + $0x10] sm:$0xff]
        %v348 = vld [vmem:[%s2 + $0x18] sm:$0xff]
        %350 = vset.pattern.permute.xlu0 0
        %351 = vperm.xlu0 %350, %v345
        %v352 = vpop.permute.xlu0 %351
        %355 = vset.pattern.permute.xlu0 0
        %356 = vperm.xlu0 %355, %v346
        %v357 = vpop.permute.xlu0 %356
        %360 = vset.pattern.permute.xlu0 0
        %361 = vperm.xlu0 %360, %v347
        %v362 = vpop.permute.xlu0 %361
        %365 = vset.pattern.permute.xlu0 0
        %366 = vperm.xlu0 %365, %v348
        %v367 = vpop.permute.xlu0 %366
        %v369 = vadd.f32 %v341, %v352
        %v370 = vadd.f32 %v342, %v357
        %v371 = vadd.f32 %v343, %v362
        %v372 = vadd.f32 %v344, %v367
        %vm373 = vcmp.ge.f32.partialorder %v369, 0.0
        %vm374 = vcmp.ge.f32.partialorder %v370, 0.0
        %vm375 = vcmp.ge.f32.partialorder %v371, 0.0
        %vm376 = vcmp.ge.f32.partialorder %v372, 0.0
        %v377 = vmul.f32 %v369, 0.2
        %v378 = vmul.f32 %v370, 0.2
        %v379 = vmul.f32 %v371, 0.2
        %v380 = vmul.f32 %v372, 0.2
        %v381 = vsel %vm373, %v369, %v377
        %v382 = vsel %vm374, %v370, %v378
        %v383 = vsel %vm375, %v371, %v379
        %v384 = vsel %vm376, %v372, %v380
        %v385 = vlaneseq
        %v386 = vand.u32 %v385, 127
        %vm387 = vcmp.lt.s32.totalorder %v386, 0
        %v388 = vsub.s32 0, %v386
        %v389 = vsel %vm387, %v388, %v386
        %v390 = vshrl.u32 %v389, 2
        %v391 = vand.u32 %v389, 3
        %v392 = vsub.s32 0, %v391
        %v393 = vsel %vm387, %v392, %v391
        %vm394 = vcmp.ne.s32.totalorder %v393, 0
        %vm395 = vcmp.lt.s32.totalorder %v393, 0
        %vm396 = vmand %vm395, %vm394
        %v397 = vadd.s32 %v393, 4
        %v398 = vsel %vm396, %v397, %v393
        %v399 = vadd.s32 %v398, 4294967295
        %vm400 = vcmp.ge.s32.totalorder %v399, 0
        %vm401 = vcmp.lt.s32.totalorder %v399, 4
        %vm402 = vmand %vm400, %vm401
        %v403 = vadd.s32 %v398, 1
        %vm404 = vcmp.ge.s32.totalorder %v403, 0
        %vm405 = vcmp.lt.s32.totalorder %v403, 4
        %vm406 = vmand %vm404, %vm405
        %v407 = vpack.c.bf16 %v382, %v381
        %v408 = vpack.c.bf16 %v384, %v383
        %411 = vrot.lane.b32.xlu0 %v407, 5
        %v412 = vpop.permute.xlu0 %411
        %413 = vrot.lane.b32.xlu0 %v408, 5
        %v414 = vpop.permute.xlu0 %413
        %vm415 = vcmask 39936
        %v418 = vsel %vm415, 0, %v412
        %v420 = vsel %vm415, 0, %v414
        %vm421 = vcmask 171008
        %v422 = vsel %vm421, %v418, 0
        %v424 = vsel %vm421, %v420, 0
        %v426 = vsel %vm402, 1, 0
        %vm427 = vcmp.eq.s32.totalorder %v426, 1
        %vm428 = vmpackc.low %vm427, %vm427
        %v429 = vsel %vm428, 65537, 0
        %v430 = vlaneseq
        %v431 = vshrl.u32 %v430, 7
        %v432 = vsub.s32 0, %v431
        %v433 = vrot.slane %v429, %v432
        %vm434 = vcmp.ne.s16.totalorder %v433, 0
        %v435 = vsel %vm434, %v422, 0
        %v436 = vsel %vm434, %v424, 0
        %v437 = vsel %vm406, 1, 0
        %vm438 = vcmp.eq.s32.totalorder %v437, 1
        %vm439 = vmpackc.low %vm438, %vm438
        %v440 = vsel %vm439, 65537, 0
        %v441 = vlaneseq
        %v442 = vshrl.u32 %v441, 7
        %v443 = vsub.s32 0, %v442
        %v444 = vrot.slane %v440, %v443
        %445 = vrot.lane.b32.xlu0 %v444, 2
        %v446 = vpop.permute.xlu0 %445
        %vm447 = vcmp.ne.s16.totalorder %v446, 0
        %v448 = vsel %vm447, %v422, 0
        %v449 = vsel %vm447, %v424, 0
        %450 = vrot.lane.b32.xlu0 %v433, 4
        %v451 = vpop.permute.xlu0 %450
        %vm452 = vcmp.ne.s16.totalorder %v451, 0
        %v453 = vsel %vm452, %v422, 0
        %v454 = vsel %vm452, %v424, 0
        %455 = vrot.lane.b32.xlu0 %v444, 6
        %v456 = vpop.permute.xlu0 %455
        %vm457 = vcmp.ne.s16.totalorder %v456, 0
        %v458 = vsel %vm457, %v422, 0
        %v459 = vsel %vm457, %v424, 0
        %460 = vrot.lane.b32.xlu0 %v433, 8
        %v461 = vpop.permute.xlu0 %460
        %vm462 = vcmp.ne.s16.totalorder %v461, 0
        %v463 = vsel %vm462, %v422, 0
        %v464 = vsel %vm462, %v424, 0
        %465 = vrot.lane.b32.xlu0 %v444, 10
        %v466 = vpop.permute.xlu0 %465
        %vm467 = vcmp.ne.s16.totalorder %v466, 0
        %v468 = vsel %vm467, %v422, 0
        %v469 = vsel %vm467, %v424, 0
        %472 = vrot.lane.b32.xlu0 %v422, 127
        %v473 = vpop.permute.xlu0 %472
        %474 = vrot.lane.b32.xlu0 %v424, 127
        %v475 = vpop.permute.xlu0 %474
        %480 = vrot.lane.b32.xlu0 %v448, 126
        %v481 = vpop.permute.xlu0 %480
        %482 = vrot.lane.b32.xlu0 %v449, 126
        %v483 = vpop.permute.xlu0 %482
        %488 = vrot.lane.b32.xlu0 %v453, 124
        %v489 = vpop.permute.xlu0 %488
        %490 = vrot.lane.b32.xlu0 %v454, 124
        %v491 = vpop.permute.xlu0 %490
        %494 = vrot.lane.b32.xlu0 %v422, 123
        %v495 = vpop.permute.xlu0 %494
        %496 = vrot.lane.b32.xlu0 %v424, 123
        %v497 = vpop.permute.xlu0 %496
        %502 = vrot.lane.b32.xlu0 %v458, 122
        %v503 = vpop.permute.xlu0 %502
        %504 = vrot.lane.b32.xlu0 %v459, 122
        %v505 = vpop.permute.xlu0 %504
        %510 = vrot.lane.b32.xlu0 %v463, 120
        %v511 = vpop.permute.xlu0 %510
        %512 = vrot.lane.b32.xlu0 %v464, 120
        %v513 = vpop.permute.xlu0 %512
        %516 = vrot.lane.b32.xlu0 %v422, 119
        %v517 = vpop.permute.xlu0 %516
        %518 = vrot.lane.b32.xlu0 %v424, 119
        %v519 = vpop.permute.xlu0 %518
        %524 = vrot.lane.b32.xlu0 %v468, 118
        %v525 = vpop.permute.xlu0 %524
        %526 = vrot.lane.b32.xlu0 %v469, 118
        %v527 = vpop.permute.xlu0 %526
        %v530 = vld [vmem:[%s3] sm:$0xff]
        %v531 = vld [vmem:[%s3 + $0x8] sm:$0xf]
        %v532 = vld [vmem:[%s3 + $0xc] sm:$0xff]
        %v533 = vld [vmem:[%s3 + $0x14] sm:$0xf]
        %v534 = vld [vmem:[%s3 + $0x18] sm:$0xff]
        %v535 = vld [vmem:[%s3 + $0x20] sm:$0xf]
        %v536 = vld [vmem:[%s3 + $0x24] sm:$0xff]
        %v537 = vld [vmem:[%s3 + $0x2c] sm:$0xf]
        %v538 = vld [vmem:[%s4] sm:$0xff]
        %v539 = vld [vmem:[%s4 + $0x8] sm:$0xff]
        %v540 = vld [vmem:[%s4 + $0x10] sm:$0xff]
        %v541 = vld [vmem:[%s4 + $0x18] sm:$0xff]
        %543 = vset.pattern.permute.xlu0 0
        %544 = vperm.xlu0 %543, %v538
        %v545 = vpop.permute.xlu0 %544
        %548 = vset.pattern.permute.xlu0 0
        %549 = vperm.xlu0 %548, %v539
        %v550 = vpop.permute.xlu0 %549
        %553 = vset.pattern.permute.xlu0 0
        %554 = vperm.xlu0 %553, %v540
        %v555 = vpop.permute.xlu0 %554
        %558 = vset.pattern.permute.xlu0 0
        %559 = vperm.xlu0 %558, %v541
        %v560 = vpop.permute.xlu0 %559
        %v570 = vunpack.c.l.b16 %v530
        %v571 = vunpack.c.h.b16 %v530
        %v572 = vunpack.c.l.b16 %v531
        %v573 = vunpack.c.l.b16 %v532
        %v574 = vunpack.c.h.b16 %v532
        %v575 = vunpack.c.l.b16 %v533
        %v576 = vunpack.c.l.b16 %v534
        %v577 = vunpack.c.h.b16 %v534
        %v578 = vunpack.c.l.b16 %v535
        %v579 = vunpack.c.l.b16 %v536
        %v580 = vunpack.c.h.b16 %v536
        %v581 = vunpack.c.l.b16 %v537
        %v582 = vpack.c.b16 %v573, %v570
        %v583 = vpack.c.b16 %v574, %v571
        %v584 = vpack.c.b16 %v575, %v572
        %v585 = vpack.c.b16 %v579, %v576
        %v586 = vpack.c.b16 %v580, %v577
        %v587 = vpack.c.b16 %v581, %v578
        %vm592 = vcmask 261120
        %v594 = vsel %vm592, %v584, 0
        %v597 = vsel %vm592, %v587, 0
        %599 = vmatprep.subr.bf16.mxu0 0
        %600 = vmatpush1.bf16.msra.mxu0 %v435
        %601 = vmatprep.subr.bf16.mxu0 0
        %602 = vmatpush1.bf16.msra.mxu0 %v436
        %603 = vmatprep.subr.bf16.mxu0 0
        %604 = vmatpush1.bf16.msra.mxu0 %v473
        %605 = vmatprep.subr.bf16.mxu0 0
        %606 = vmatpush1.bf16.msra.mxu0 %v475
        %607 = vmatprep.subr.bf16.mxu0 0
        %608 = vmatpush1.bf16.msra.mxu0 %v481
        %609 = vmatprep.subr.bf16.mxu0 0
        %610 = vmatpush1.bf16.msra.mxu0 %v483
        %611 = vmatprep.subr.bf16.mxu0 0
        %612 = vmatpush1.bf16.msra.mxu0 %v489
        %613 = vmatprep.subr.bf16.mxu0 0
        %614 = vmatpush1.bf16.msra.mxu0 %v491
        %615 = vmatprep.subr.bf16.mxu0 0
        %616 = vmatpush1.bf16.msra.mxu0 %v495
        %617 = vmatprep.subr.bf16.mxu0 0
        %618 = vmatpush1.bf16.msra.mxu0 %v497
        %619 = vmatprep.subr.bf16.mxu0 0
        %620 = vmatpush1.bf16.msra.mxu0 %v503
        %621 = vmatprep.subr.bf16.mxu0 0
        %622 = vmatpush1.bf16.msra.mxu0 %v505
        %623 = vmatprep.subr.bf16.mxu0 0
        %624 = vmatpush1.bf16.msra.mxu0 %v511
        %625 = vmatprep.subr.bf16.mxu0 0
        %626 = vmatpush1.bf16.msra.mxu0 %v513
        %627 = vmatprep.subr.bf16.mxu0 0
        %628 = vmatpush1.bf16.msra.mxu0 %v517
        %629 = vmatprep.subr.bf16.mxu0 0
        %630 = vmatpush1.bf16.msra.mxu0 %v519
        %631 = vmatprep.mubr.bf16.mxu0 %v583
        %632 = vmatmul.mubr.bf16.gmra.mrb[0].mxu0 %v582
        %v633 = vpop.f32.mrb[0].mxu0
        %v634 = vadd.f32 %v545, %v633
        %v635 = vpop.f32.mrb[0].mxu0
        %v636 = vpop.f32.mrb[0].mxu0
        %v637 = vadd.f32 %v550, %v636
        %v638 = vpop.f32.mrb[0].mxu0
        %639 = vmatprep.mubr.bf16.mxu0 %v586
        %640 = vmatmul.mubr.bf16.gmra.mrb[0].mxu0 %v585
        %v641 = vpop.f32.mrb[0].mxu0
        %v642 = vadd.f32 %v555, %v641
        %v643 = vpop.f32.mrb[0].mxu0
        %v644 = vpop.f32.mrb[0].mxu0
        %v645 = vadd.f32 %v560, %v644
        %v646 = vpop.f32.mrb[0].mxu0
        %647 = vdwg.mxu0
        %648 = vmatprep.subr.bf16.mxu0 0
        %649 = vmatpush1.bf16.msra.mxu0 %v525
        %650 = vmatprep.subr.bf16.mxu0 0
        %651 = vmatpush1.bf16.msra.mxu0 %v527
        %652 = vmatprep.subr.bf16.mxu0 0
        %653 = vmatpush1.bf16.msra.mxu0 0
        %654 = vmatprep.subr.bf16.mxu0 0
        %655 = vmatpush1.bf16.msra.mxu0 0
        %656 = vmatprep.subr.bf16.mxu0 0
        %657 = vmatpush1.bf16.msra.mxu0 0
        %658 = vmatprep.subr.bf16.mxu0 0
        %659 = vmatpush1.bf16.msra.mxu0 0
        %660 = vmatprep.subr.bf16.mxu0 0
        %661 = vmatpush1.bf16.msra.mxu0 0
        %662 = vmatprep.subr.bf16.mxu0 0
        %663 = vmatpush1.bf16.msra.mxu0 0
        %664 = vmatprep.subr.bf16.mxu0 0
        %665 = vmatpush1.bf16.msra.mxu0 0
        %666 = vmatprep.subr.bf16.mxu0 0
        %667 = vmatpush1.bf16.msra.mxu0 0
        %668 = vmatprep.subr.bf16.mxu0 0
        %669 = vmatpush1.bf16.msra.mxu0 0
        %670 = vmatprep.subr.bf16.mxu0 0
        %671 = vmatpush1.bf16.msra.mxu0 0
        %672 = vmatprep.subr.bf16.mxu0 0
        %673 = vmatpush1.bf16.msra.mxu0 0
        %674 = vmatprep.subr.bf16.mxu0 0
        %675 = vmatpush1.bf16.msra.mxu0 0
        %676 = vmatprep.subr.bf16.mxu0 0
        %677 = vmatpush1.bf16.msra.mxu0 0
        %678 = vmatprep.subr.bf16.mxu0 0
        %679 = vmatpush1.bf16.msra.mxu0 0
        %680 = vmatprep.mubr.bf16.mxu0 0
        %681 = vmatmul.mubr.bf16.gmra.mrb[0].mxu0 %v594
        %v682 = vpop.f32.mrb[0].mxu0
        %v683 = vadd.f32 %v634, %v682
        %v684 = vpop.f32.mrb[0].mxu0
        %v685 = vpop.f32.mrb[0].mxu0
        %v686 = vadd.f32 %v637, %v685
        %v687 = vpop.f32.mrb[0].mxu0
        %688 = vmatprep.mubr.bf16.mxu0 0
        %689 = vmatmul.mubr.bf16.gmra.mrb[0].mxu0 %v597
        %v690 = vpop.f32.mrb[0].mxu0
        %v691 = vadd.f32 %v642, %v690
        %v692 = vpop.f32.mrb[0].mxu0
        %v693 = vpop.f32.mrb[0].mxu0
        %v694 = vadd.f32 %v645, %v693
        %v695 = vpop.f32.mrb[0].mxu0
        %696 = vdwg.mxu0
        %v697 = vld [vmem:[%s304] sm:$0xff]
        %v698 = vld [vmem:[%s304 + $0x8] sm:$0xff]
        %v699 = vld [vmem:[%s304 + $0x10] sm:$0xff]
        %v700 = vld [vmem:[%s304 + $0x18] sm:$0xff]
        %v701 = vadd.f32 %v683, %v697
        %v702 = vadd.f32 %v686, %v698
        %v703 = vadd.f32 %v691, %v699
        %v704 = vadd.f32 %v694, %v700
        %vm705 = vcmask 130048
        %706 = vst.msk [vmem:[%s309] sm:$0xff] %vm705, %v701
        %707 = vst.msk [vmem:[%s309 + $0x8] sm:$0xff] %vm705, %v702
        %708 = vst.msk [vmem:[%s309 + $0x10] sm:$0xff] %vm705, %v703
        %709 = vst.msk [vmem:[%s309 + $0x18] sm:$0xff] %vm705, %v704
        %v710 = vsel %vm705, %v701, 0.0
        %711 = vadd.xlane.f32.xlu0 %v710
        %v712 = vpop.xlane.xlu0 %711
        %v713 = vsel %vm705, %v702, 0.0
        %714 = vadd.xlane.f32.xlu0 %v713
        %v715 = vpop.xlane.xlu0 %714
        %v716 = vsel %vm705, %v703, 0.0
        %717 = vadd.xlane.f32.xlu0 %v716
        %v718 = vpop.xlane.xlu0 %717
        %v719 = vsel %vm705, %v704, 0.0
        %720 = vadd.xlane.f32.xlu0 %v719
        %v721 = vpop.xlane.xlu0 %720
        %v722 = vmul.f32 %v701, %v701
        %v723 = vmul.f32 %v702, %v702
        %v724 = vmul.f32 %v703, %v703
        %v725 = vmul.f32 %v704, %v704
        %v726 = vsel %vm705, %v722, 0.0
        %727 = vadd.xlane.f32.xlu0 %v726
        %v728 = vpop.xlane.xlu0 %727
        %v729 = vsel %vm705, %v723, 0.0
        %730 = vadd.xlane.f32.xlu0 %v729
        %v731 = vpop.xlane.xlu0 %730
        %v732 = vsel %vm705, %v724, 0.0
        %733 = vadd.xlane.f32.xlu0 %v732
        %v734 = vpop.xlane.xlu0 %733
        %v735 = vsel %vm705, %v725, 0.0
        %736 = vadd.xlane.f32.xlu0 %v735
        %v737 = vpop.xlane.xlu0 %736
        %vm738 = vcmask 7168
        %v739 = vsel %vm738, %v712, %v728
        %v740 = vsel %vm738, %v715, %v731
        %v741 = vsel %vm738, %v718, %v734
        %v742 = vsel %vm738, %v721, %v737
        %vm743 = vcmask 15360
        %744 = vst.msk [vmem:[%s294] sm:$0xff] %vm743, %v739
        %745 = vst.msk [vmem:[%s294 + $0x8] sm:$0xff] %vm743, %v740
        %746 = vst.msk [vmem:[%s294 + $0x10] sm:$0xff] %vm743, %v741
        %747 = vst.msk [vmem:[%s294 + $0x18] sm:$0xff] %vm743, %v742
        %p748 = scmp.lt.s32.totalorder %s22, 1
        %s749 = scalar_select %p748, %s22, 1
        %s750 = smul.addr %s749, 4
        %s751 = smul.addr %s750, 8
        %s752 = scalar_lea.vmem %s6, %s751
        %s753 = sand.u32 %s192, 1
        %s754 = scalar_lea.sflag [#allocation3], %s753
        %s755 = sand.u32 %s192, 1
        %s756 = smul.addr %s755, 32
        %s757 = scalar_lea.vmem [#allocation2], %s756
        // Predicated region
        $region45: #{flow_generator_forward.18} parent=43 // pred_check
          %p758 = pneg %p176
        $region46: #{flow_generator_forward.18} parent=43 // pred_check_branch
          %760 = sbr.rel (%p758) target = $region48
        $region47: #{flow_generator_forward.18} parent=43 // pred_region
          _
        $region48: #{flow_generator_forward.18} parent=43 // pred_fallthru
          _
        // Predicated region
        $region49: #{flow_generator_forward.18} parent=43 // pred_check
          %p761 = pneg %p202
        $region50: #{flow_generator_forward.18} parent=43 // pred_check_branch
          %763 = sbr.rel (%p761) target = $region52
        $region51: #{flow_generator_forward.18} parent=43 // pred_region
          %s765 = ssub.s32 512, 512
          %766 = vsyncadd %s754, %s765
          %s767 = smul.addr %s22, 4
          %s768 = smul.addr %s767, 128
          %s769 = scalar_lea.hbm %s7, %s768
          %s770 = sshll.u32 %s757, 4
          %s771 = int_to_ptr.vmem [resolvable:$true] %s770
          %776 = dma.vmem_to_hbm [thread:$0]  %s771, 512, %s769, %s754, 128, 128, 8
        $region52: #{flow_generator_forward.18} parent=43 // pred_fallthru
          _
      $region44: #{flow_generator_forward.18} parent=5 // pred_fallthru
        _
      %p777 = scmp.le.s32.totalorder 2, %s17
      // Predicated region
      $region53: #{flow_generator_forward.18} parent=5 // pred_check
        %p778 = pneg %p777
      $region54: #{flow_generator_forward.18} parent=5 // pred_check_branch
        %780 = sbr.rel (%p778) target = $region56
      $region55: #{flow_generator_forward.18} parent=5 // pred_region
        %s781 = ssub.s32 %s17, 2
        // Predicated region
        $region57: #{flow_generator_forward.18} parent=55 // pred_check
          %p782 = pneg %p182
        $region58: #{flow_generator_forward.18} parent=55 // pred_check_branch
          %784 = sbr.rel (%p782) target = $region60
        $region59: #{flow_generator_forward.18} parent=55 // pred_region
          %p785 = scmp.lt.s32.totalorder %s23, 1
          %s786 = scalar_select %p785, %s23, 1
          %s787 = smul.addr %s786, 4
          %s788 = smul.addr %s787, 8
          %s789 = scalar_lea.vmem %s6, %s788
        $region60: #{flow_generator_forward.18} parent=55 // pred_fallthru
          _
        // Predicated region
        $region61: #{flow_generator_forward.18} parent=55 // pred_check
          %p790 = pneg %p208
        $region62: #{flow_generator_forward.18} parent=55 // pred_check_branch
          %792 = sbr.rel (%p790) target = $region64
        $region63: #{flow_generator_forward.18} parent=55 // pred_region
          %s793 = sand.u32 %s193, 1
          %s794 = scalar_lea.sflag [#allocation3], %s793
          %s795 = sand.u32 %s193, 1
          %s796 = smul.addr %s795, 32
          %s797 = scalar_lea.vmem [#allocation2], %s796
          %798 = dma.done %s794, 512
        $region64: #{flow_generator_forward.18} parent=55 // pred_fallthru
          _
      $region56: #{flow_generator_forward.18} parent=5 // pred_fallthru
        _
    $region6: #{flow_generator_forward.18} parent=1 // loop_footer
      %s21 = sadd.s32 1, %s17
    $region7: #{flow_generator_forward.18} parent=1 // loop_footer_branch
      %16 = sbr.rel target = $region3
    $region8: #{flow_generator_forward.18} parent=1 // loop_exit
      _
    %799 = vsyncpa [#allocation3], 1
    %s800 = scalar_lea.sflag [#allocation3], 1
    %801 = vsyncpa %s800, 1

// kernel: flow_generator_forward.16
$region0: #{flow_generator_forward.16}
  #allocation0 [shape = 'u32[]', space=smem, size = 0x4, offset = 0x4, fixed_abs, tag = 'smem constant byte address 0x4 - core index']
  #allocation1 [shape = 'u32[144,128]{1,0:T(1,128)}', space=vmem, size = 0x12000, scoped, tag = 'internal scratch']
  %s0 = inlined_call_operand.vmem [shape: f32[2,32,16], index: 0, kind: input, shape index: {}]
  %s1 = inlined_call_operand.vmem [shape: f32[32,1], index: 1, kind: input, shape index: {}]
  %s2 = inlined_call_operand.vmem [shape: f32[32,1], index: 2, kind: input, shape index: {}]
  %s3 = inlined_call_operand.vmem [shape: bf16[32,288], index: 3, kind: input, shape index: {}]
  %s4 = inlined_call_operand.vmem [shape: f32[32,1], index: 4, kind: input, shape index: {}]
  %s5 = inlined_call_operand.vmem [shape: f32[2,32,16], index: 5, kind: input, shape index: {}]
  %s6 = inlined_call_operand.vmem [shape: f32[2,32,16], index: 6, kind: output, shape index: {0}]
  %s7 = inlined_call_operand.vmem [shape: f32[2,32,2], index: 7, kind: output, shape index: {1}]
  %8 = xla_tuple %s6, %s7
  %s9 = sld [smem:[#allocation0]]
  $region65: #{flow_generator_forward.16} parent=0
    _
  %s11 = ssub.s32 1, %s9
  %s12 = scalar_select 0, %s11, %s9
  loop: start=0, step=1, limit=4
  $region2: #{flow_generator_forward.16} parent=0 // loop_pre_header
    _
  $region3: #{flow_generator_forward.16} parent=0 // loop_header
    %s14 = sphi 0, %s18
    %p15 = scmp.ge.s32.totalorder %s14, 4
    %s24 = sphi 0, %s26
    %s27 = sphi 0, %s24
    %s28 = sphi 0, %s27
    %s44 = sphi 0, %s28
    %s48 = sphi 0, %s48
    %s50 = sphi 0, %s48
    %s51 = sphi 0, %s50
    %s65 = sphi 0, %s51
    %s69 = sphi 0, %s69
    %s71 = sphi 0, %s69
    %s72 = sphi 0, %s71
    %s86 = sphi 0, %s72
    %s90 = sphi 0, %s90
    %s92 = sphi 0, %s90
    %s93 = sphi 0, %s92
    %s107 = sphi 0, %s93
    %s111 = sphi 0, %s111
    %s113 = sphi 0, %s111
    %s114 = sphi 0, %s113
    %s128 = sphi 0, %s114
    %s134 = sphi 0, %s136
    %s137 = sphi 0, %s134
    %s138 = sphi 0, %s137
    %s154 = sphi 0, %s138
    %s160 = sphi 0, %s162
    %s163 = sphi 0, %s160
    %s164 = sphi 0, %s163
    %s180 = sphi 0, %s164
    %s186 = sphi 0, %s188
    %s189 = sphi 0, %s186
    %s190 = sphi 0, %s189
    %s206 = sphi 0, %s190
  $region4: #{flow_generator_forward.16} parent=0 // loop_header_branch
    %17 = sbr.rel (%p15) target = $region8
  $region5: #{flow_generator_forward.16} parent=0 // loop_body
    %s19 = ssub.s32 %s14, 1
    %s20 = ssub.s32 %s14, 2
    %s21 = sadd.s32 %s14, 1
    %s22 = ssub.s32 %s14, %s21
    %p23 = scmp.eq.s32.totalorder %s22, 0
    %s25 = sadd.s32 %s24, 1
    %s26 = scalar_select %p23, %s24, %s25
    %p29 = pneg %p23
    %p30 = scmp.eq.s32.totalorder %s14, 1
    %p31 = por %p29, %p30
    %p32 = scmp.ne.s32.totalorder %s24, %s27
    %p33 = scmp.eq.s32.totalorder %s14, 0
    %p34 = por %p32, %p33
    %p35 = scmp.ne.s32.totalorder %s24, %s27
    %p36 = scmp.eq.s32.totalorder %s19, 1
    %p37 = por %p35, %p36
    %p38 = scmp.ne.s32.totalorder %s27, %s28
    %p39 = scmp.eq.s32.totalorder %s19, 0
    %p40 = por %p38, %p39
    %p41 = scmp.ne.s32.totalorder %s27, %s28
    %p42 = scmp.eq.s32.totalorder %s20, 1
    %p43 = por %p41, %p42
    %p45 = scmp.ne.s32.totalorder %s28, %s44
    %p46 = scmp.eq.s32.totalorder %s20, 0
    %p47 = por %p45, %p46
    %s49 = sadd.s32 %s48, 1
    %p52 = scmp.eq.s32.totalorder %s14, 1
    %p53 = scmp.ne.s32.totalorder %s48, %s50
    %p54 = scmp.eq.s32.totalorder %s14, 0
    %p55 = por %p53, %p54
    %p56 = scmp.ne.s32.totalorder %s48, %s50
    %p57 = scmp.eq.s32.totalorder %s19, 1
    %p58 = por %p56, %p57
    %p59 = scmp.ne.s32.totalorder %s50, %s51
    %p60 = scmp.eq.s32.totalorder %s19, 0
    %p61 = por %p59, %p60
    %p62 = scmp.ne.s32.totalorder %s50, %s51
    %p63 = scmp.eq.s32.totalorder %s20, 1
    %p64 = por %p62, %p63
    %p66 = scmp.ne.s32.totalorder %s51, %s65
    %p67 = scmp.eq.s32.totalorder %s20, 0
    %p68 = por %p66, %p67
    %s70 = sadd.s32 %s69, 1
    %p73 = scmp.eq.s32.totalorder %s14, 1
    %p74 = scmp.ne.s32.totalorder %s69, %s71
    %p75 = scmp.eq.s32.totalorder %s14, 0
    %p76 = por %p74, %p75
    %p77 = scmp.ne.s32.totalorder %s69, %s71
    %p78 = scmp.eq.s32.totalorder %s19, 1
    %p79 = por %p77, %p78
    %p80 = scmp.ne.s32.totalorder %s71, %s72
    %p81 = scmp.eq.s32.totalorder %s19, 0
    %p82 = por %p80, %p81
    %p83 = scmp.ne.s32.totalorder %s71, %s72
    %p84 = scmp.eq.s32.totalorder %s20, 1
    %p85 = por %p83, %p84
    %p87 = scmp.ne.s32.totalorder %s72, %s86
    %p88 = scmp.eq.s32.totalorder %s20, 0
    %p89 = por %p87, %p88
    %s91 = sadd.s32 %s90, 1
    %p94 = scmp.eq.s32.totalorder %s14, 1
    %p95 = scmp.ne.s32.totalorder %s90, %s92
    %p96 = scmp.eq.s32.totalorder %s14, 0
    %p97 = por %p95, %p96
    %p98 = scmp.ne.s32.totalorder %s90, %s92
    %p99 = scmp.eq.s32.totalorder %s19, 1
    %p100 = por %p98, %p99
    %p101 = scmp.ne.s32.totalorder %s92, %s93
    %p102 = scmp.eq.s32.totalorder %s19, 0
    %p103 = por %p101, %p102
    %p104 = scmp.ne.s32.totalorder %s92, %s93
    %p105 = scmp.eq.s32.totalorder %s20, 1
    %p106 = por %p104, %p105
    %p108 = scmp.ne.s32.totalorder %s93, %s107
    %p109 = scmp.eq.s32.totalorder %s20, 0
    %p110 = por %p108, %p109
    %s112 = sadd.s32 %s111, 1
    %p115 = scmp.eq.s32.totalorder %s14, 1
    %p116 = scmp.ne.s32.totalorder %s111, %s113
    %p117 = scmp.eq.s32.totalorder %s14, 0
    %p118 = por %p116, %p117
    %p119 = scmp.ne.s32.totalorder %s111, %s113
    %p120 = scmp.eq.s32.totalorder %s19, 1
    %p121 = por %p119, %p120
    %p122 = scmp.ne.s32.totalorder %s113, %s114
    %p123 = scmp.eq.s32.totalorder %s19, 0
    %p124 = por %p122, %p123
    %p125 = scmp.ne.s32.totalorder %s113, %s114
    %p126 = scmp.eq.s32.totalorder %s20, 1
    %p127 = por %p125, %p126
    %p129 = scmp.ne.s32.totalorder %s114, %s128
    %p130 = scmp.eq.s32.totalorder %s20, 0
    %p131 = por %p129, %p130
    %s132 = ssub.s32 %s14, %s21
    %p133 = scmp.eq.s32.totalorder %s132, 0
    %s135 = sadd.s32 %s134, 1
    %s136 = scalar_select %p133, %s134, %s135
    %p139 = pneg %p133
    %p140 = scmp.eq.s32.totalorder %s14, 1
    %p141 = por %p139, %p140
    %p142 = scmp.ne.s32.totalorder %s134, %s137
    %p143 = scmp.eq.s32.totalorder %s14, 0
    %p144 = por %p142, %p143
    %p145 = scmp.ne.s32.totalorder %s134, %s137
    %p146 = scmp.eq.s32.totalorder %s19, 1
    %p147 = por %p145, %p146
    %p148 = scmp.ne.s32.totalorder %s137, %s138
    %p149 = scmp.eq.s32.totalorder %s19, 0
    %p150 = por %p148, %p149
    %p151 = scmp.ne.s32.totalorder %s137, %s138
    %p152 = scmp.eq.s32.totalorder %s20, 1
    %p153 = por %p151, %p152
    %p155 = scmp.ne.s32.totalorder %s138, %s154
    %p156 = scmp.eq.s32.totalorder %s20, 0
    %p157 = por %p155, %p156
    %s158 = ssub.s32 %s14, %s21
    %p159 = scmp.eq.s32.totalorder %s158, 0
    %s161 = sadd.s32 %s160, 1
    %s162 = scalar_select %p159, %s160, %s161
    %p165 = pneg %p159
    %p166 = scmp.eq.s32.totalorder %s14, 1
    %p167 = por %p165, %p166
    %p168 = scmp.ne.s32.totalorder %s160, %s163
    %p169 = scmp.eq.s32.totalorder %s14, 0
    %p170 = por %p168, %p169
    %p171 = scmp.ne.s32.totalorder %s160, %s163
    %p172 = scmp.eq.s32.totalorder %s19, 1
    %p173 = por %p171, %p172
    %p174 = scmp.ne.s32.totalorder %s163, %s164
    %p175 = scmp.eq.s32.totalorder %s19, 0
    %p176 = por %p174, %p175
    %p177 = scmp.ne.s32.totalorder %s163, %s164
    %p178 = scmp.eq.s32.totalorder %s20, 1
    %p179 = por %p177, %p178
    %p181 = scmp.ne.s32.totalorder %s164, %s180
    %p182 = scmp.eq.s32.totalorder %s20, 0
    %p183 = por %p181, %p182
    %s184 = ssub.s32 %s14, %s21
    %p185 = scmp.eq.s32.totalorder %s184, 0
    %s187 = sadd.s32 %s186, 1
    %s188 = scalar_select %p185, %s186, %s187
    %p191 = pneg %p185
    %p192 = scmp.eq.s32.totalorder %s14, 1
    %p193 = por %p191, %p192
    %p194 = scmp.ne.s32.totalorder %s186, %s189
    %p195 = scmp.eq.s32.totalorder %s14, 0
    %p196 = por %p194, %p195
    %p197 = scmp.ne.s32.totalorder %s186, %s189
    %p198 = scmp.eq.s32.totalorder %s19, 1
    %p199 = por %p197, %p198
    %p200 = scmp.ne.s32.totalorder %s189, %s190
    %p201 = scmp.eq.s32.totalorder %s19, 0
    %p202 = por %p200, %p201
    %p203 = scmp.ne.s32.totalorder %s189, %s190
    %p204 = scmp.eq.s32.totalorder %s20, 1
    %p205 = por %p203, %p204
    %p207 = scmp.ne.s32.totalorder %s190, %s206
    %p208 = scmp.eq.s32.totalorder %s20, 0
    %p209 = por %p207, %p208
    %p210 = scmp.le.s32.totalorder 1, %s14
    %p211 = scmp.lt.s32.totalorder %s14, 3
    %p212 = pnand %p210, %p211
    %p213 = pneg %p212
    // Predicated region
    $region9: #{flow_generator_forward.16} parent=5 // pred_check
      _
    $region10: #{flow_generator_forward.16} parent=5 // pred_check_branch
      %215 = sbr.rel (%p212) target = $region12
    $region11: #{flow_generator_forward.16} parent=5 // pred_region
      %s216 = ssub.s32 %s14, 1
      // Predicated region
      $region13: #{flow_generator_forward.16} parent=11 // pred_check
        %p217 = pneg %p61
      $region14: #{flow_generator_forward.16} parent=11 // pred_check_branch
        %219 = sbr.rel (%p217) target = $region16
      $region15: #{flow_generator_forward.16} parent=11 // pred_region
        _
      $region16: #{flow_generator_forward.16} parent=11 // pred_fallthru
        _
      // Predicated region
      $region17: #{flow_generator_forward.16} parent=11 // pred_check
        %p220 = pneg %p82
      $region18: #{flow_generator_forward.16} parent=11 // pred_check_branch
        %222 = sbr.rel (%p220) target = $region20
      $region19: #{flow_generator_forward.16} parent=11 // pred_region
        _
      $region20: #{flow_generator_forward.16} parent=11 // pred_fallthru
        _
      // Predicated region
      $region21: #{flow_generator_forward.16} parent=11 // pred_check
        %p223 = pneg %p103
      $region22: #{flow_generator_forward.16} parent=11 // pred_check_branch
        %225 = sbr.rel (%p223) target = $region24
      $region23: #{flow_generator_forward.16} parent=11 // pred_region
        _
      $region24: #{flow_generator_forward.16} parent=11 // pred_fallthru
        _
      // Predicated region
      $region25: #{flow_generator_forward.16} parent=11 // pred_check
        %p226 = pneg %p124
      $region26: #{flow_generator_forward.16} parent=11 // pred_check_branch
        %228 = sbr.rel (%p226) target = $region28
      $region27: #{flow_generator_forward.16} parent=11 // pred_region
        _
      $region28: #{flow_generator_forward.16} parent=11 // pred_fallthru
        _
    $region12: #{flow_generator_forward.16} parent=5 // pred_fallthru
      _
    %p229 = scmp.lt.s32.totalorder %s14, 2
    // Predicated region
    $region29: #{flow_generator_forward.16} parent=5 // pred_check
      %p230 = pneg %p229
    $region30: #{flow_generator_forward.16} parent=5 // pred_check_branch
      %232 = sbr.rel (%p230) target = $region32
    $region31: #{flow_generator_forward.16} parent=5 // pred_region
      // Predicated region
      $region33: #{flow_generator_forward.16} parent=31 // pred_check
        %p233 = pneg %p34
      $region34: #{flow_generator_forward.16} parent=31 // pred_check_branch
        %235 = sbr.rel (%p233) target = $region36
      $region35: #{flow_generator_forward.16} parent=31 // pred_region
        %p236 = scmp.lt.s32.totalorder %s14, 1
        %s237 = scalar_select %p236, %s14, 1
        %s238 = smul.addr %s237, 4
        %s239 = smul.addr %s238, 8
        %s240 = scalar_lea.vmem %s0, %s239
      $region36: #{flow_generator_forward.16} parent=31 // pred_fallthru
        _
      // Predicated region
      $region37: #{flow_generator_forward.16} parent=31 // pred_check
        %p241 = pneg %p144
      $region38: #{flow_generator_forward.16} parent=31 // pred_check_branch
        %243 = sbr.rel (%p241) target = $region40
      $region39: #{flow_generator_forward.16} parent=31 // pred_region
        %p244 = scmp.lt.s32.totalorder %s14, 1
        %s245 = scalar_select %p244, %s14, 1
        %s246 = smul.addr %s245, 4
        %s247 = smul.addr %s246, 8
        %s248 = scalar_lea.vmem %s5, %s247
      $region40: #{flow_generator_forward.16} parent=31 // pred_fallthru
        _
    $region32: #{flow_generator_forward.16} parent=5 // pred_fallthru
      _
    %p249 = scmp.le.s32.totalorder 1, %s14
    %p250 = scmp.lt.s32.totalorder %s14, 3
    %p251 = pnand %p249, %p250
    %p252 = pneg %p251
    // Predicated region
    $region41: #{flow_generator_forward.16} parent=5 // pred_check
      _
    $region42: #{flow_generator_forward.16} parent=5 // pred_check_branch
      %254 = sbr.rel (%p251) target = $region44
    $region43: #{flow_generator_forward.16} parent=5 // pred_region
      %s255 = ssub.s32 %s14, 1
      %p256 = scmp.lt.s32.totalorder %s19, 1
      %s257 = scalar_select %p256, %s19, 1
      %s258 = smul.addr %s257, 4
      %s259 = smul.addr %s258, 8
      %s260 = scalar_lea.vmem %s0, %s259
      %p261 = pneg %p40
      %p262 = pneg %p37
      %p263 = pneg %p61
      %p264 = pneg %p58
      %p265 = pneg %p82
      %p266 = pneg %p79
      %p267 = pneg %p103
      %p268 = pneg %p100
      %p269 = pneg %p124
      %p270 = pneg %p121
      %p271 = scmp.lt.s32.totalorder %s19, 1
      %s272 = scalar_select %p271, %s19, 1
      %s273 = smul.addr %s272, 4
      %s274 = smul.addr %s273, 8
      %s275 = scalar_lea.vmem %s5, %s274
      %p276 = pneg %p150
      %p277 = pneg %p147
      %p278 = pneg %p176
      %p279 = pneg %p173
      %p280 = scmp.lt.s32.totalorder %s19, 1
      %s281 = scalar_select %p280, %s19, 1
      %s282 = smul.addr %s281, 4
      %s283 = smul.addr %s282, 8
      %s284 = scalar_lea.vmem %s6, %s283
      %p285 = pneg %p202
      %p286 = pneg %p199
      %p287 = scmp.lt.s32.totalorder %s19, 1
      %s288 = scalar_select %p287, %s19, 1
      %s289 = smul.addr %s288, 4
      %s290 = smul.addr %s289, 8
      %s291 = scalar_lea.vmem %s7, %s290
      %p292 = scmp.lt.s32.totalorder %s19, 1
      %s293 = scalar_select %p292, %s19, 1
      %s294 = smul.addr %s293, 4
      %s295 = smul.addr %s294, 8
      %s296 = scalar_lea.vmem %s0, %s295
      %p297 = scmp.lt.s32.totalorder %s19, 1
      %s298 = scalar_select %p297, %s19, 1
      %s299 = smul.addr %s298, 4
      %s300 = smul.addr %s299, 8
      %s301 = scalar_lea.vmem %s5, %s300
      %p302 = scmp.lt.s32.totalorder %s19, 1
      %s303 = scalar_select %p302, %s19, 1
      %s304 = smul.addr %s303, 4
      %s305 = smul.addr %s304, 8
      %s306 = scalar_lea.vmem %s6, %s305
      %p307 = scmp.lt.s32.totalorder %s19, 1
      %s308 = scalar_select %p307, %s19, 1
      %s309 = smul.addr %s308, 4
      %s310 = smul.addr %s309, 8
      %s311 = scalar_lea.vmem %s7, %s310
      %v315 = vld [vmem:[%s296] sm:$0xff]
      %v316 = vld [vmem:[%s296 + $0x8] sm:$0xff]
      %v317 = vld [vmem:[%s296 + $0x10] sm:$0xff]
      %v318 = vld [vmem:[%s296 + $0x18] sm:$0xff]
      %v319 = vld [vmem:[%s1] sm:$0xff]
      %v320 = vld [vmem:[%s1 + $0x8] sm:$0xff]
      %v321 = vld [vmem:[%s1 + $0x10] sm:$0xff]
      %v322 = vld [vmem:[%s1 + $0x18] sm:$0xff]
      %324 = vset.pattern.permute.xlu0 0
      %325 = vperm.xlu0 %324, %v319
      %v326 = vpop.permute.xlu0 %325
      %329 = vset.pattern.permute.xlu0 0
      %330 = vperm.xlu0 %329, %v320
      %v331 = vpop.permute.xlu0 %330
      %334 = vset.pattern.permute.xlu0 0
      %335 = vperm.xlu0 %334, %v321
      %v336 = vpop.permute.xlu0 %335
      %339 = vset.pattern.permute.xlu0 0
      %340 = vperm.xlu0 %339, %v322
      %v341 = vpop.permute.xlu0 %340
      %v343 = vmul.f32 %v315, %v326
      %v344 = vmul.f32 %v316, %v331
      %v345 = vmul.f32 %v317, %v336
      %v346 = vmul.f32 %v318, %v341
      %v347 = vld [vmem:[%s2] sm:$0xff]
      %v348 = vld [vmem:[%s2 + $0x8] sm:$0xff]
      %v349 = vld [vmem:[%s2 + $0x10] sm:$0xff]
      %v350 = vld [vmem:[%s2 + $0x18] sm:$0xff]
      %352 = vset.pattern.permute.xlu0 0
      %353 = vperm.xlu0 %352, %v347
      %v354 = vpop.permute.xlu0 %353
      %357 = vset.pattern.permute.xlu0 0
      %358 = vperm.xlu0 %357, %v348
      %v359 = vpop.permute.xlu0 %358
      %362 = vset.pattern.permute.xlu0 0
      %363 = vperm.xlu0 %362, %v349
      %v364 = vpop.permute.xlu0 %363
      %367 = vset.pattern.permute.xlu0 0
      %368 = vperm.xlu0 %367, %v350
      %v369 = vpop.permute.xlu0 %368
      %v371 = vadd.f32 %v343, %v354
      %v372 = vadd.f32 %v344, %v359
      %v373 = vadd.f32 %v345, %v364
      %v374 = vadd.f32 %v346, %v369
      %vm375 = vcmp.ge.f32.partialorder %v371, 0.0
      %vm376 = vcmp.ge.f32.partialorder %v372, 0.0
      %vm377 = vcmp.ge.f32.partialorder %v373, 0.0
      %vm378 = vcmp.ge.f32.partialorder %v374, 0.0
      %v379 = vmul.f32 %v371, 0.2
      %v380 = vmul.f32 %v372, 0.2
      %v381 = vmul.f32 %v373, 0.2
      %v382 = vmul.f32 %v374, 0.2
      %v383 = vsel %vm375, %v371, %v379
      %v384 = vsel %vm376, %v372, %v380
      %v385 = vsel %vm377, %v373, %v381
      %v386 = vsel %vm378, %v374, %v382
      %v387 = vlaneseq
      %v388 = vand.u32 %v387, 127
      %vm389 = vcmp.lt.s32.totalorder %v388, 0
      %v390 = vsub.s32 0, %v388
      %v391 = vsel %vm389, %v390, %v388
      %v392 = vshrl.u32 %v391, 2
      %v393 = vand.u32 %v391, 3
      %v394 = vsub.s32 0, %v393
      %v395 = vsel %vm389, %v394, %v393
      %vm396 = vcmp.ne.s32.totalorder %v395, 0
      %vm397 = vcmp.lt.s32.totalorder %v395, 0
      %vm398 = vmand %vm397, %vm396
      %v399 = vadd.s32 %v395, 4
      %v400 = vsel %vm398, %v399, %v395
      %v401 = vadd.s32 %v400, 4294967295
      %vm402 = vcmp.ge.s32.totalorder %v401, 0
      %vm403 = vcmp.lt.s32.totalorder %v401, 4
      %vm404 = vmand %vm402, %vm403
      %v405 = vadd.s32 %v400, 1
      %vm406 = vcmp.ge.s32.totalorder %v405, 0
      %vm407 = vcmp.lt.s32.totalorder %v405, 4
      %vm408 = vmand %vm406, %vm407
      %v409 = vpack.c.bf16 %v384, %v383
      %v410 = vpack.c.bf16 %v386, %v385
      %413 = vrot.lane.b32.xlu0 %v409, 5
      %v414 = vpop.permute.xlu0 %413
      %415 = vrot.lane.b32.xlu0 %v410, 5
      %v416 = vpop.permute.xlu0 %415
      %vm417 = vcmask 39936
      %v420 = vsel %vm417, 0, %v414
      %v422 = vsel %vm417, 0, %v416
      %vm423 = vcmask 171008
      %v424 = vsel %vm423, %v420, 0
      %v426 = vsel %vm423, %v422, 0
      %v428 = vsel %vm404, 1, 0
      %vm429 = vcmp.eq.s32.totalorder %v428, 1
      %vm430 = vmpackc.low %vm429, %vm429
      %v431 = vsel %vm430, 65537, 0
      %v432 = vlaneseq
      %v433 = vshrl.u32 %v432, 7
      %v434 = vsub.s32 0, %v433
      %v435 = vrot.slane %v431, %v434
      %vm436 = vcmp.ne.s16.totalorder %v435, 0
      %v437 = vsel %vm436, %v424, 0
      %v438 = vsel %vm436, %v426, 0
      %v439 = vsel %vm408, 1, 0
      %vm440 = vcmp.eq.s32.totalorder %v439, 1
      %vm441 = vmpackc.low %vm440, %vm440
      %v442 = vsel %vm441, 65537, 0
      %v443 = vlaneseq
      %v444 = vshrl.u32 %v443, 7
      %v445 = vsub.s32 0, %v444
      %v446 = vrot.slane %v442, %v445
      %447 = vrot.lane.b32.xlu0 %v446, 2
      %v448 = vpop.permute.xlu0 %447
      %vm449 = vcmp.ne.s16.totalorder %v448, 0
      %v450 = vsel %vm449, %v424, 0
      %v451 = vsel %vm449, %v426, 0
      %452 = vrot.lane.b32.xlu0 %v435, 4
      %v453 = vpop.permute.xlu0 %452
      %vm454 = vcmp.ne.s16.totalorder %v453, 0
      %v455 = vsel %vm454, %v424, 0
      %v456 = vsel %vm454, %v426, 0
      %457 = vrot.lane.b32.xlu0 %v446, 6
      %v458 = vpop.permute.xlu0 %457
      %vm459 = vcmp.ne.s16.totalorder %v458, 0
      %v460 = vsel %vm459, %v424, 0
      %v461 = vsel %vm459, %v426, 0
      %462 = vrot.lane.b32.xlu0 %v435, 8
      %v463 = vpop.permute.xlu0 %462
      %vm464 = vcmp.ne.s16.totalorder %v463, 0
      %v465 = vsel %vm464, %v424, 0
      %v466 = vsel %vm464, %v426, 0
      %467 = vrot.lane.b32.xlu0 %v446, 10
      %v468 = vpop.permute.xlu0 %467
      %vm469 = vcmp.ne.s16.totalorder %v468, 0
      %v470 = vsel %vm469, %v424, 0
      %v471 = vsel %vm469, %v426, 0
      %474 = vrot.lane.b32.xlu0 %v424, 127
      %v475 = vpop.permute.xlu0 %474
      %476 = vrot.lane.b32.xlu0 %v426, 127
      %v477 = vpop.permute.xlu0 %476
      %482 = vrot.lane.b32.xlu0 %v450, 126
      %v483 = vpop.permute.xlu0 %482
      %484 = vrot.lane.b32.xlu0 %v451, 126
      %v485 = vpop.permute.xlu0 %484
      %490 = vrot.lane.b32.xlu0 %v455, 124
      %v491 = vpop.permute.xlu0 %490
      %492 = vrot.lane.b32.xlu0 %v456, 124
      %v493 = vpop.permute.xlu0 %492
      %496 = vrot.lane.b32.xlu0 %v424, 123
      %v497 = vpop.permute.xlu0 %496
      %498 = vrot.lane.b32.xlu0 %v426, 123
      %v499 = vpop.permute.xlu0 %498
      %504 = vrot.lane.b32.xlu0 %v460, 122
      %v505 = vpop.permute.xlu0 %504
      %506 = vrot.lane.b32.xlu0 %v461, 122
      %v507 = vpop.permute.xlu0 %506
      %512 = vrot.lane.b32.xlu0 %v465, 120
      %v513 = vpop.permute.xlu0 %512
      %514 = vrot.lane.b32.xlu0 %v466, 120
      %v515 = vpop.permute.xlu0 %514
      %518 = vrot.lane.b32.xlu0 %v424, 119
      %v519 = vpop.permute.xlu0 %518
      %520 = vrot.lane.b32.xlu0 %v426, 119
      %v521 = vpop.permute.xlu0 %520
      %526 = vrot.lane.b32.xlu0 %v470, 118
      %v527 = vpop.permute.xlu0 %526
      %528 = vrot.lane.b32.xlu0 %v471, 118
      %v529 = vpop.permute.xlu0 %528
      %v532 = vld [vmem:[%s3] sm:$0xff]
      %v533 = vld [vmem:[%s3 + $0x8] sm:$0xf]
      %v534 = vld [vmem:[%s3 + $0xc] sm:$0xff]
      %v535 = vld [vmem:[%s3 + $0x14] sm:$0xf]
      %v536 = vld [vmem:[%s3 + $0x18] sm:$0xff]
      %v537 = vld [vmem:[%s3 + $0x20] sm:$0xf]
      %v538 = vld [vmem:[%s3 + $0x24] sm:$0xff]
      %v539 = vld [vmem:[%s3 + $0x2c] sm:$0xf]
      %v540 = vld [vmem:[%s4] sm:$0xff]
      %v541 = vld [vmem:[%s4 + $0x8] sm:$0xff]
      %v542 = vld [vmem:[%s4 + $0x10] sm:$0xff]
      %v543 = vld [vmem:[%s4 + $0x18] sm:$0xff]
      %545 = vset.pattern.permute.xlu0 0
      %546 = vperm.xlu0 %545, %v540
      %v547 = vpop.permute.xlu0 %546
      %550 = vset.pattern.permute.xlu0 0
      %551 = vperm.xlu0 %550, %v541
      %v552 = vpop.permute.xlu0 %551
      %555 = vset.pattern.permute.xlu0 0
      %556 = vperm.xlu0 %555, %v542
      %v557 = vpop.permute.xlu0 %556
      %560 = vset.pattern.permute.xlu0 0
      %561 = vperm.xlu0 %560, %v543
      %v562 = vpop.permute.xlu0 %561
      %v572 = vunpack.c.l.b16 %v532
      %v573 = vunpack.c.h.b16 %v532
      %v574 = vunpack.c.l.b16 %v533
      %v575 = vunpack.c.l.b16 %v534
      %v576 = vunpack.c.h.b16 %v534
      %v577 = vunpack.c.l.b16 %v535
      %v578 = vunpack.c.l.b16 %v536
      %v579 = vunpack.c.h.b16 %v536
      %v580 = vunpack.c.l.b16 %v537
      %v581 = vunpack.c.l.b16 %v538
      %v582 = vunpack.c.h.b16 %v538
      %v583 = vunpack.c.l.b16 %v539
      %v584 = vpack.c.b16 %v575, %v572
      %v585 = vpack.c.b16 %v576, %v573
      %v586 = vpack.c.b16 %v577, %v574
      %v587 = vpack.c.b16 %v581, %v578
      %v588 = vpack.c.b16 %v582, %v579
      %v589 = vpack.c.b16 %v583, %v580
      %vm594 = vcmask 261120
      %v596 = vsel %vm594, %v586, 0
      %v599 = vsel %vm594, %v589, 0
      %601 = vmatprep.subr.bf16.mxu0 0
      %602 = vmatpush1.bf16.msra.mxu0 %v437
      %603 = vmatprep.subr.bf16.mxu0 0
      %604 = vmatpush1.bf16.msra.mxu0 %v438
      %605 = vmatprep.subr.bf16.mxu0 0
      %606 = vmatpush1.bf16.msra.mxu0 %v475
      %607 = vmatprep.subr.bf16.mxu0 0
      %608 = vmatpush1.bf16.msra.mxu0 %v477
      %609 = vmatprep.subr.bf16.mxu0 0
      %610 = vmatpush1.bf16.msra.mxu0 %v483
      %611 = vmatprep.subr.bf16.mxu0 0
      %612 = vmatpush1.bf16.msra.mxu0 %v485
      %613 = vmatprep.subr.bf16.mxu0 0
      %614 = vmatpush1.bf16.msra.mxu0 %v491
      %615 = vmatprep.subr.bf16.mxu0 0
      %616 = vmatpush1.bf16.msra.mxu0 %v493
      %617 = vmatprep.subr.bf16.mxu0 0
      %618 = vmatpush1.bf16.msra.mxu0 %v497
      %619 = vmatprep.subr.bf16.mxu0 0
      %620 = vmatpush1.bf16.msra.mxu0 %v499
      %621 = vmatprep.subr.bf16.mxu0 0
      %622 = vmatpush1.bf16.msra.mxu0 %v505
      %623 = vmatprep.subr.bf16.mxu0 0
      %624 = vmatpush1.bf16.msra.mxu0 %v507
      %625 = vmatprep.subr.bf16.mxu0 0
      %626 = vmatpush1.bf16.msra.mxu0 %v513
      %627 = vmatprep.subr.bf16.mxu0 0
      %628 = vmatpush1.bf16.msra.mxu0 %v515
      %629 = vmatprep.subr.bf16.mxu0 0
      %630 = vmatpush1.bf16.msra.mxu0 %v519
      %631 = vmatprep.subr.bf16.mxu0 0
      %632 = vmatpush1.bf16.msra.mxu0 %v521
      %633 = vmatprep.mubr.bf16.mxu0 %v585
      %634 = vmatmul.mubr.bf16.gmra.mrb[0].mxu0 %v584
      %v635 = vpop.f32.mrb[0].mxu0
      %v636 = vadd.f32 %v547, %v635
      %v637 = vpop.f32.mrb[0].mxu0
      %v638 = vpop.f32.mrb[0].mxu0
      %v639 = vadd.f32 %v552, %v638
      %v640 = vpop.f32.mrb[0].mxu0
      %641 = vmatprep.mubr.bf16.mxu0 %v588
      %642 = vmatmul.mubr.bf16.gmra.mrb[0].mxu0 %v587
      %v643 = vpop.f32.mrb[0].mxu0
      %v644 = vadd.f32 %v557, %v643
      %v645 = vpop.f32.mrb[0].mxu0
      %v646 = vpop.f32.mrb[0].mxu0
      %v647 = vadd.f32 %v562, %v646
      %v648 = vpop.f32.mrb[0].mxu0
      %649 = vdwg.mxu0
      %650 = vmatprep.subr.bf16.mxu0 0
      %651 = vmatpush1.bf16.msra.mxu0 %v527
      %652 = vmatprep.subr.bf16.mxu0 0
      %653 = vmatpush1.bf16.msra.mxu0 %v529
      %654 = vmatprep.subr.bf16.mxu0 0
      %655 = vmatpush1.bf16.msra.mxu0 0
      %656 = vmatprep.subr.bf16.mxu0 0
      %657 = vmatpush1.bf16.msra.mxu0 0
      %658 = vmatprep.subr.bf16.mxu0 0
      %659 = vmatpush1.bf16.msra.mxu0 0
      %660 = vmatprep.subr.bf16.mxu0 0
      %661 = vmatpush1.bf16.msra.mxu0 0
      %662 = vmatprep.subr.bf16.mxu0 0
      %663 = vmatpush1.bf16.msra.mxu0 0
      %664 = vmatprep.subr.bf16.mxu0 0
      %665 = vmatpush1.bf16.msra.mxu0 0
      %666 = vmatprep.subr.bf16.mxu0 0
      %667 = vmatpush1.bf16.msra.mxu0 0
      %668 = vmatprep.subr.bf16.mxu0 0
      %669 = vmatpush1.bf16.msra.mxu0 0
      %670 = vmatprep.subr.bf16.mxu0 0
      %671 = vmatpush1.bf16.msra.mxu0 0
      %672 = vmatprep.subr.bf16.mxu0 0
      %673 = vmatpush1.bf16.msra.mxu0 0
      %674 = vmatprep.subr.bf16.mxu0 0
      %675 = vmatpush1.bf16.msra.mxu0 0
      %676 = vmatprep.subr.bf16.mxu0 0
      %677 = vmatpush1.bf16.msra.mxu0 0
      %678 = vmatprep.subr.bf16.mxu0 0
      %679 = vmatpush1.bf16.msra.mxu0 0
      %680 = vmatprep.subr.bf16.mxu0 0
      %681 = vmatpush1.bf16.msra.mxu0 0
      %682 = vmatprep.mubr.bf16.mxu0 0
      %683 = vmatmul.mubr.bf16.gmra.mrb[0].mxu0 %v596
      %v684 = vpop.f32.mrb[0].mxu0
      %v685 = vadd.f32 %v636, %v684
      %v686 = vpop.f32.mrb[0].mxu0
      %v687 = vpop.f32.mrb[0].mxu0
      %v688 = vadd.f32 %v639, %v687
      %v689 = vpop.f32.mrb[0].mxu0
      %690 = vmatprep.mubr.bf16.mxu0 0
      %691 = vmatmul.mubr.bf16.gmra.mrb[0].mxu0 %v599
      %v692 = vpop.f32.mrb[0].mxu0
      %v693 = vadd.f32 %v644, %v692
      %v694 = vpop.f32.mrb[0].mxu0
      %v695 = vpop.f32.mrb[0].mxu0
      %v696 = vadd.f32 %v647, %v695
      %v697 = vpop.f32.mrb[0].mxu0
      %698 = vdwg.mxu0
      %v699 = vld [vmem:[%s301] sm:$0xff]
      %v700 = vld [vmem:[%s301 + $0x8] sm:$0xff]
      %v701 = vld [vmem:[%s301 + $0x10] sm:$0xff]
      %v702 = vld [vmem:[%s301 + $0x18] sm:$0xff]
      %v703 = vadd.f32 %v685, %v699
      %v704 = vadd.f32 %v688, %v700
      %v705 = vadd.f32 %v693, %v701
      %v706 = vadd.f32 %v696, %v702
      %vm707 = vcmask 130048
      %708 = vst.msk [vmem:[%s306] sm:$0xff] %vm707, %v703
      %709 = vst.msk [vmem:[%s306 + $0x8] sm:$0xff] %vm707, %v704
      %710 = vst.msk [vmem:[%s306 + $0x10] sm:$0xff] %vm707, %v705
      %711 = vst.msk [vmem:[%s306 + $0x18] sm:$0xff] %vm707, %v706
      %v712 = vsel %vm707, %v703, 0.0
      %713 = vadd.xlane.f32.xlu0 %v712
      %v714 = vpop.xlane.xlu0 %713
      %v715 = vsel %vm707, %v704, 0.0
      %716 = vadd.xlane.f32.xlu0 %v715
      %v717 = vpop.xlane.xlu0 %716
      %v718 = vsel %vm707, %v705, 0.0
      %719 = vadd.xlane.f32.xlu0 %v718
      %v720 = vpop.xlane.xlu0 %719
      %v721 = vsel %vm707, %v706, 0.0
      %722 = vadd.xlane.f32.xlu0 %v721
      %v723 = vpop.xlane.xlu0 %722
      %v724 = vmul.f32 %v703, %v703
      %v725 = vmul.f32 %v704, %v704
      %v726 = vmul.f32 %v705, %v705
      %v727 = vmul.f32 %v706, %v706
      %v728 = vsel %vm707, %v724, 0.0
      %729 = vadd.xlane.f32.xlu0 %v728
      %v730 = vpop.xlane.xlu0 %729
      %v731 = vsel %vm707, %v725, 0.0
      %732 = vadd.xlane.f32.xlu0 %v731
      %v733 = vpop.xlane.xlu0 %732
      %v734 = vsel %vm707, %v726, 0.0
      %735 = vadd.xlane.f32.xlu0 %v734
      %v736 = vpop.xlane.xlu0 %735
      %v737 = vsel %vm707, %v727, 0.0
      %738 = vadd.xlane.f32.xlu0 %v737
      %v739 = vpop.xlane.xlu0 %738
      %vm740 = vcmask 7168
      %v741 = vsel %vm740, %v714, %v730
      %v742 = vsel %vm740, %v717, %v733
      %v743 = vsel %vm740, %v720, %v736
      %v744 = vsel %vm740, %v723, %v739
      %vm745 = vcmask 15360
      %746 = vst.msk [vmem:[%s311] sm:$0xff] %vm745, %v741
      %747 = vst.msk [vmem:[%s311 + $0x8] sm:$0xff] %vm745, %v742
      %748 = vst.msk [vmem:[%s311 + $0x10] sm:$0xff] %vm745, %v743
      %749 = vst.msk [vmem:[%s311 + $0x18] sm:$0xff] %vm745, %v744
      %p750 = scmp.lt.s32.totalorder %s19, 1
      %s751 = scalar_select %p750, %s19, 1
      %s752 = smul.addr %s751, 4
      %s753 = smul.addr %s752, 8
      %s754 = scalar_lea.vmem %s6, %s753
      %p755 = scmp.lt.s32.totalorder %s19, 1
      %s756 = scalar_select %p755, %s19, 1
      %s757 = smul.addr %s756, 4
      %s758 = smul.addr %s757, 8
      %s759 = scalar_lea.vmem %s7, %s758
      // Predicated region
      $region45: #{flow_generator_forward.16} parent=43 // pred_check
        %p760 = pneg %p173
      $region46: #{flow_generator_forward.16} parent=43 // pred_check_branch
        %762 = sbr.rel (%p760) target = $region48
      $region47: #{flow_generator_forward.16} parent=43 // pred_region
        _
      $region48: #{flow_generator_forward.16} parent=43 // pred_fallthru
        _
      // Predicated region
      $region49: #{flow_generator_forward.16} parent=43 // pred_check
        %p763 = pneg %p199
      $region50: #{flow_generator_forward.16} parent=43 // pred_check_branch
        %765 = sbr.rel (%p763) target = $region52
      $region51: #{flow_generator_forward.16} parent=43 // pred_region
        _
      $region52: #{flow_generator_forward.16} parent=43 // pred_fallthru
        _
    $region44: #{flow_generator_forward.16} parent=5 // pred_fallthru
      _
    %p766 = scmp.le.s32.totalorder 2, %s14
    // Predicated region
    $region53: #{flow_generator_forward.16} parent=5 // pred_check
      %p767 = pneg %p766
    $region54: #{flow_generator_forward.16} parent=5 // pred_check_branch
      %769 = sbr.rel (%p767) target = $region56
    $region55: #{flow_generator_forward.16} parent=5 // pred_region
      %s770 = ssub.s32 %s14, 2
      // Predicated region
      $region57: #{flow_generator_forward.16} parent=55 // pred_check
        %p771 = pneg %p179
      $region58: #{flow_generator_forward.16} parent=55 // pred_check_branch
        %773 = sbr.rel (%p771) target = $region60
      $region59: #{flow_generator_forward.16} parent=55 // pred_region
        %p774 = scmp.lt.s32.totalorder %s20, 1
        %s775 = scalar_select %p774, %s20, 1
        %s776 = smul.addr %s775, 4
        %s777 = smul.addr %s776, 8
        %s778 = scalar_lea.vmem %s6, %s777
      $region60: #{flow_generator_forward.16} parent=55 // pred_fallthru
        _
      // Predicated region
      $region61: #{flow_generator_forward.16} parent=55 // pred_check
        %p779 = pneg %p205
      $region62: #{flow_generator_forward.16} parent=55 // pred_check_branch
        %781 = sbr.rel (%p779) target = $region64
      $region63: #{flow_generator_forward.16} parent=55 // pred_region
        %p782 = scmp.lt.s32.totalorder %s20, 1
        %s783 = scalar_select %p782, %s20, 1
        %s784 = smul.addr %s783, 4
        %s785 = smul.addr %s784, 8
        %s786 = scalar_lea.vmem %s7, %s785
      $region64: #{flow_generator_forward.16} parent=55 // pred_fallthru
        _
    $region56: #{flow_generator_forward.16} parent=5 // pred_fallthru
      _
  $region6: #{flow_generator_forward.16} parent=0 // loop_footer
    %s18 = sadd.s32 1, %s14
  $region7: #{flow_generator_forward.16} parent=0 // loop_footer_branch
    %13 = sbr.rel target = $region3
  $region8: #{flow_generator_forward.16} parent=0 // loop_exit
    _

// kernel: flow_generator_forward.19
$region0: #{flow_generator_forward.19}
  #allocation0 [shape = 'u32[]', space=smem, size = 0x4, offset = 0x4, fixed_abs, tag = 'smem constant byte address 0x4 - core index']
  #allocation1 [shape = 'u32[144,128]{1,0:T(1,128)}', space=vmem, size = 0x12000, scoped, tag = 'internal scratch']
  %s0 = inlined_call_operand.vmem [shape: f32[2,32,16], index: 0, kind: input, shape index: {}]
  %s1 = inlined_call_operand.vmem [shape: bf16[64,288], index: 1, kind: input, shape index: {}]
  %s2 = inlined_call_operand.vmem [shape: f32[64,1], index: 2, kind: input, shape index: {}]
  %s3 = inlined_call_operand.vmem [shape: f32[2,64,16], index: 3, kind: output, shape index: {0}]
  %s4 = inlined_call_operand.vmem [shape: f32[2,64,2], index: 4, kind: output, shape index: {1}]
  %5 = xla_tuple %s3, %s4
  %s6 = sld [smem:[#allocation0]]
  $region53: #{flow_generator_forward.19} parent=0
    _
  %s8 = ssub.s32 1, %s6
  %s9 = scalar_select 0, %s8, %s6
  loop: start=0, step=1, limit=4
  $region2: #{flow_generator_forward.19} parent=0 // loop_pre_header
    _
  $region3: #{flow_generator_forward.19} parent=0 // loop_header
    %s11 = sphi 0, %s15
    %p12 = scmp.ge.s32.totalorder %s11, 4
    %s21 = sphi 0, %s23
    %s24 = sphi 0, %s21
    %s25 = sphi 0, %s24
    %s41 = sphi 0, %s25
    %s45 = sphi 0, %s45
    %s47 = sphi 0, %s45
    %s48 = sphi 0, %s47
    %s62 = sphi 0, %s48
    %s66 = sphi 0, %s66
    %s68 = sphi 0, %s66
    %s69 = sphi 0, %s68
    %s83 = sphi 0, %s69
    %s89 = sphi 0, %s91
    %s92 = sphi 0, %s89
    %s93 = sphi 0, %s92
    %s109 = sphi 0, %s93
    %s115 = sphi 0, %s117
    %s118 = sphi 0, %s115
    %s119 = sphi 0, %s118
    %s135 = sphi 0, %s119
  $region4: #{flow_generator_forward.19} parent=0 // loop_header_branch
    %14 = sbr.rel (%p12) target = $region8
  $region5: #{flow_generator_forward.19} parent=0 // loop_body
    %s16 = ssub.s32 %s11, 1
    %s17 = ssub.s32 %s11, 2
    %s18 = sadd.s32 %s11, 1
    %s19 = ssub.s32 %s11, %s18
    %p20 = scmp.eq.s32.totalorder %s19, 0
    %s22 = sadd.s32 %s21, 1
    %s23 = scalar_select %p20, %s21, %s22
    %p26 = pneg %p20
    %p27 = scmp.eq.s32.totalorder %s11, 1
    %p28 = por %p26, %p27
    %p29 = scmp.ne.s32.totalorder %s21, %s24
    %p30 = scmp.eq.s32.totalorder %s11, 0
    %p31 = por %p29, %p30
    %p32 = scmp.ne.s32.totalorder %s21, %s24
    %p33 = scmp.eq.s32.totalorder %s16, 1
    %p34 = por %p32, %p33
    %p35 = scmp.ne.s32.totalorder %s24, %s25
    %p36 = scmp.eq.s32.totalorder %s16, 0
    %p37 = por %p35, %p36
    %p38 = scmp.ne.s32.totalorder %s24, %s25
    %p39 = scmp.eq.s32.totalorder %s17, 1
    %p40 = por %p38, %p39
    %p42 = scmp.ne.s32.totalorder %s25, %s41
    %p43 = scmp.eq.s32.totalorder %s17, 0
    %p44 = por %p42, %p43
    %s46 = sadd.s32 %s45, 1
    %p49 = scmp.eq.s32.totalorder %s11, 1
    %p50 = scmp.ne.s32.totalorder %s45, %s47
    %p51 = scmp.eq.s32.totalorder %s11, 0
    %p52 = por %p50, %p51
    %p53 = scmp.ne.s32.totalorder %s45, %s47
    %p54 = scmp.eq.s32.totalorder %s16, 1
    %p55 = por %p53, %p54
    %p56 = scmp.ne.s32.totalorder %s47, %s48
    %p57 = scmp.eq.s32.totalorder %s16, 0
    %p58 = por %p56, %p57
    %p59 = scmp.ne.s32.totalorder %s47, %s48
    %p60 = scmp.eq.s32.totalorder %s17, 1
    %p61 = por %p59, %p60
    %p63 = scmp.ne.s32.totalorder %s48, %s62
    %p64 = scmp.eq.s32.totalorder %s17, 0
    %p65 = por %p63, %p64
    %s67 = sadd.s32 %s66, 1
    %p70 = scmp.eq.s32.totalorder %s11, 1
    %p71 = scmp.ne.s32.totalorder %s66, %s68
    %p72 = scmp.eq.s32.totalorder %s11, 0
    %p73 = por %p71, %p72
    %p74 = scmp.ne.s32.totalorder %s66, %s68
    %p75 = scmp.eq.s32.totalorder %s16, 1
    %p76 = por %p74, %p75
    %p77 = scmp.ne.s32.totalorder %s68, %s69
    %p78 = scmp.eq.s32.totalorder %s16, 0
    %p79 = por %p77, %p78
    %p80 = scmp.ne.s32.totalorder %s68, %s69
    %p81 = scmp.eq.s32.totalorder %s17, 1
    %p82 = por %p80, %p81
    %p84 = scmp.ne.s32.totalorder %s69, %s83
    %p85 = scmp.eq.s32.totalorder %s17, 0
    %p86 = por %p84, %p85
    %s87 = ssub.s32 %s11, %s18
    %p88 = scmp.eq.s32.totalorder %s87, 0
    %s90 = sadd.s32 %s89, 1
    %s91 = scalar_select %p88, %s89, %s90
    %p94 = pneg %p88
    %p95 = scmp.eq.s32.totalorder %s11, 1
    %p96 = por %p94, %p95
    %p97 = scmp.ne.s32.totalorder %s89, %s92
    %p98 = scmp.eq.s32.totalorder %s11, 0
    %p99 = por %p97, %p98
    %p100 = scmp.ne.s32.totalorder %s89, %s92
    %p101 = scmp.eq.s32.totalorder %s16, 1
    %p102 = por %p100, %p101
    %p103 = scmp.ne.s32.totalorder %s92, %s93
    %p104 = scmp.eq.s32.totalorder %s16, 0
    %p105 = por %p103, %p104
    %p106 = scmp.ne.s32.totalorder %s92, %s93
    %p107 = scmp.eq.s32.totalorder %s17, 1
    %p108 = por %p106, %p107
    %p110 = scmp.ne.s32.totalorder %s93, %s109
    %p111 = scmp.eq.s32.totalorder %s17, 0
    %p112 = por %p110, %p111
    %s113 = ssub.s32 %s11, %s18
    %p114 = scmp.eq.s32.totalorder %s113, 0
    %s116 = sadd.s32 %s115, 1
    %s117 = scalar_select %p114, %s115, %s116
    %p120 = pneg %p114
    %p121 = scmp.eq.s32.totalorder %s11, 1
    %p122 = por %p120, %p121
    %p123 = scmp.ne.s32.totalorder %s115, %s118
    %p124 = scmp.eq.s32.totalorder %s11, 0
    %p125 = por %p123, %p124
    %p126 = scmp.ne.s32.totalorder %s115, %s118
    %p127 = scmp.eq.s32.totalorder %s16, 1
    %p128 = por %p126, %p127
    %p129 = scmp.ne.s32.totalorder %s118, %s119
    %p130 = scmp.eq.s32.totalorder %s16, 0
    %p131 = por %p129, %p130
    %p132 = scmp.ne.s32.totalorder %s118, %s119
    %p133 = scmp.eq.s32.totalorder %s17, 1
    %p134 = por %p132, %p133
    %p136 = scmp.ne.s32.totalorder %s119, %s135
    %p137 = scmp.eq.s32.totalorder %s17, 0
    %p138 = por %p136, %p137
    %p139 = scmp.le.s32.totalorder 1, %s11
    %p140 = scmp.lt.s32.totalorder %s11, 3
    %p141 = pnand %p139, %p140
    %p142 = pneg %p141
    // Predicated region
    $region9: #{flow_generator_forward.19} parent=5 // pred_check
      _
    $region10: #{flow_generator_forward.19} parent=5 // pred_check_branch
      %144 = sbr.rel (%p141) target = $region12
    $region11: #{flow_generator_forward.19} parent=5 // pred_region
      %s145 = ssub.s32 %s11, 1
      // Predicated region
      $region13: #{flow_generator_forward.19} parent=11 // pred_check
        %p146 = pneg %p58
      $region14: #{flow_generator_forward.19} parent=11 // pred_check_branch
        %148 = sbr.rel (%p146) target = $region16
      $region15: #{flow_generator_forward.19} parent=11 // pred_region
        _
      $region16: #{flow_generator_forward.19} parent=11 // pred_fallthru
        _
      // Predicated region
      $region17: #{flow_generator_forward.19} parent=11 // pred_check
        %p149 = pneg %p79
      $region18: #{flow_generator_forward.19} parent=11 // pred_check_branch
        %151 = sbr.rel (%p149) target = $region20
      $region19: #{flow_generator_forward.19} parent=11 // pred_region
        _
      $region20: #{flow_generator_forward.19} parent=11 // pred_fallthru
        _
    $region12: #{flow_generator_forward.19} parent=5 // pred_fallthru
      _
    %p152 = scmp.lt.s32.totalorder %s11, 2
    // Predicated region
    $region21: #{flow_generator_forward.19} parent=5 // pred_check
      %p153 = pneg %p152
    $region22: #{flow_generator_forward.19} parent=5 // pred_check_branch
      %155 = sbr.rel (%p153) target = $region24
    $region23: #{flow_generator_forward.19} parent=5 // pred_region
      // Predicated region
      $region25: #{flow_generator_forward.19} parent=23 // pred_check
        %p156 = pneg %p31
      $region26: #{flow_generator_forward.19} parent=23 // pred_check_branch
        %158 = sbr.rel (%p156) target = $region28
      $region27: #{flow_generator_forward.19} parent=23 // pred_region
        %p159 = scmp.lt.s32.totalorder %s11, 1
        %s160 = scalar_select %p159, %s11, 1
        %s161 = smul.addr %s160, 4
        %s162 = smul.addr %s161, 8
        %s163 = scalar_lea.vmem %s0, %s162
      $region28: #{flow_generator_forward.19} parent=23 // pred_fallthru
        _
    $region24: #{flow_generator_forward.19} parent=5 // pred_fallthru
      _
    %p164 = scmp.le.s32.totalorder 1, %s11
    %p165 = scmp.lt.s32.totalorder %s11, 3
    %p166 = pnand %p164, %p165
    %p167 = pneg %p166
    // Predicated region
    $region29: #{flow_generator_forward.19} parent=5 // pred_check
      _
    $region30: #{flow_generator_forward.19} parent=5 // pred_check_branch
      %169 = sbr.rel (%p166) target = $region32
    $region31: #{flow_generator_forward.19} parent=5 // pred_region
      %s170 = ssub.s32 %s11, 1
      %p171 = scmp.lt.s32.totalorder %s16, 1
      %s172 = scalar_select %p171, %s16, 1
      %s173 = smul.addr %s172, 4
      %s174 = smul.addr %s173, 8
      %s175 = scalar_lea.vmem %s0, %s174
      %p176 = pneg %p37
      %p177 = pneg %p34
      %p178 = pneg %p58
      %p179 = pneg %p55
      %p180 = pneg %p79
      %p181 = pneg %p76
      %p182 = pneg %p105
      %p183 = pneg %p102
      %p184 = scmp.lt.s32.totalorder %s16, 1
      %s185 = scalar_select %p184, %s16, 1
      %s186 = smul.addr %s185, 8
      %s187 = smul.addr %s186, 8
      %s188 = scalar_lea.vmem %s3, %s187
      %p189 = pneg %p131
      %p190 = pneg %p128
      %p191 = scmp.lt.s32.totalorder %s16, 1
      %s192 = scalar_select %p191, %s16, 1
      %s193 = smul.addr %s192, 8
      %s194 = smul.addr %s193, 8
      %s195 = scalar_lea.vmem %s4, %s194
      %p196 = scmp.lt.s32.totalorder %s16, 1
      %s197 = scalar_select %p196, %s16, 1
      %s198 = smul.addr %s197, 4
      %s199 = smul.addr %s198, 8
      %s200 = scalar_lea.vmem %s0, %s199
      %p201 = scmp.lt.s32.totalorder %s16, 1
      %s202 = scalar_select %p201, %s16, 1
      %s203 = smul.addr %s202, 8
      %s204 = smul.addr %s203, 8
      %s205 = scalar_lea.vmem %s3, %s204
      %p206 = scmp.lt.s32.totalorder %s16, 1
      %s207 = scalar_select %p206, %s16, 1
      %s208 = smul.addr %s207, 8
      %s209 = smul.addr %s208, 8
      %s210 = scalar_lea.vmem %s4, %s209
      %v214 = vld [vmem:[%s200] sm:$0xff]
      %v215 = vld [vmem:[%s200 + $0x8] sm:$0xff]
      %v216 = vld [vmem:[%s200 + $0x10] sm:$0xff]
      %v217 = vld [vmem:[%s200 + $0x18] sm:$0xff]
      %v218 = vlaneseq
      %v219 = vand.u32 %v218, 127
      %vm220 = vcmp.lt.s32.totalorder %v219, 0
      %v221 = vsub.s32 0, %v219
      %v222 = vsel %vm220, %v221, %v219
      %v223 = vshrl.u32 %v222, 2
      %v224 = vand.u32 %v222, 3
      %v225 = vsub.s32 0, %v224
      %v226 = vsel %vm220, %v225, %v224
      %vm227 = vcmp.ne.s32.totalorder %v226, 0
      %vm228 = vcmp.lt.s32.totalorder %v226, 0
      %vm229 = vmand %vm228, %vm227
      %v230 = vadd.s32 %v226, 4
      %v231 = vsel %vm229, %v230, %v226
      %v232 = vadd.s32 %v231, 4294967295
      %vm233 = vcmp.ge.s32.totalorder %v232, 0
      %vm234 = vcmp.lt.s32.totalorder %v232, 4
      %vm235 = vmand %vm233, %vm234
      %v236 = vadd.s32 %v231, 1
      %vm237 = vcmp.ge.s32.totalorder %v236, 0
      %vm238 = vcmp.lt.s32.totalorder %v236, 4
      %vm239 = vmand %vm237, %vm238
      %v240 = vpack.c.bf16 %v215, %v214
      %v241 = vpack.c.bf16 %v217, %v216
      %244 = vrot.lane.b32.xlu0 %v240, 5
      %v245 = vpop.permute.xlu0 %244
      %246 = vrot.lane.b32.xlu0 %v241, 5
      %v247 = vpop.permute.xlu0 %246
      %vm248 = vcmask 39936
      %v251 = vsel %vm248, 0, %v245
      %v253 = vsel %vm248, 0, %v247
      %vm254 = vcmask 171008
      %v255 = vsel %vm254, %v251, 0
      %v257 = vsel %vm254, %v253, 0
      %v259 = vsel %vm235, 1, 0
      %vm260 = vcmp.eq.s32.totalorder %v259, 1
      %vm261 = vmpackc.low %vm260, %vm260
      %v262 = vsel %vm261, 65537, 0
      %v263 = vlaneseq
      %v264 = vshrl.u32 %v263, 7
      %v265 = vsub.s32 0, %v264
      %v266 = vrot.slane %v262, %v265
      %vm267 = vcmp.ne.s16.totalorder %v266, 0
      %v268 = vsel %vm267, %v255, 0
      %v269 = vsel %vm267, %v257, 0
      %v270 = vsel %vm239, 1, 0
      %vm271 = vcmp.eq.s32.totalorder %v270, 1
      %vm272 = vmpackc.low %vm271, %vm271
      %v273 = vsel %vm272, 65537, 0
      %v274 = vlaneseq
      %v275 = vshrl.u32 %v274, 7
      %v276 = vsub.s32 0, %v275
      %v277 = vrot.slane %v273, %v276
      %278 = vrot.lane.b32.xlu0 %v277, 2
      %v279 = vpop.permute.xlu0 %278
      %vm280 = vcmp.ne.s16.totalorder %v279, 0
      %v281 = vsel %vm280, %v255, 0
      %v282 = vsel %vm280, %v257, 0
      %283 = vrot.lane.b32.xlu0 %v266, 4
      %v284 = vpop.permute.xlu0 %283
      %vm285 = vcmp.ne.s16.totalorder %v284, 0
      %v286 = vsel %vm285, %v255, 0
      %v287 = vsel %vm285, %v257, 0
      %288 = vrot.lane.b32.xlu0 %v277, 6
      %v289 = vpop.permute.xlu0 %288
      %vm290 = vcmp.ne.s16.totalorder %v289, 0
      %v291 = vsel %vm290, %v255, 0
      %v292 = vsel %vm290, %v257, 0
      %293 = vrot.lane.b32.xlu0 %v266, 8
      %v294 = vpop.permute.xlu0 %293
      %vm295 = vcmp.ne.s16.totalorder %v294, 0
      %v296 = vsel %vm295, %v255, 0
      %v297 = vsel %vm295, %v257, 0
      %298 = vrot.lane.b32.xlu0 %v277, 10
      %v299 = vpop.permute.xlu0 %298
      %vm300 = vcmp.ne.s16.totalorder %v299, 0
      %v301 = vsel %vm300, %v255, 0
      %v302 = vsel %vm300, %v257, 0
      %305 = vrot.lane.b32.xlu0 %v255, 127
      %v306 = vpop.permute.xlu0 %305
      %307 = vrot.lane.b32.xlu0 %v257, 127
      %v308 = vpop.permute.xlu0 %307
      %313 = vrot.lane.b32.xlu0 %v281, 126
      %v314 = vpop.permute.xlu0 %313
      %315 = vrot.lane.b32.xlu0 %v282, 126
      %v316 = vpop.permute.xlu0 %315
      %321 = vrot.lane.b32.xlu0 %v286, 124
      %v322 = vpop.permute.xlu0 %321
      %323 = vrot.lane.b32.xlu0 %v287, 124
      %v324 = vpop.permute.xlu0 %323
      %327 = vrot.lane.b32.xlu0 %v255, 123
      %v328 = vpop.permute.xlu0 %327
      %329 = vrot.lane.b32.xlu0 %v257, 123
      %v330 = vpop.permute.xlu0 %329
      %335 = vrot.lane.b32.xlu0 %v291, 122
      %v336 = vpop.permute.xlu0 %335
      %337 = vrot.lane.b32.xlu0 %v292, 122
      %v338 = vpop.permute.xlu0 %337
      %343 = vrot.lane.b32.xlu0 %v296, 120
      %v344 = vpop.permute.xlu0 %343
      %345 = vrot.lane.b32.xlu0 %v297, 120
      %v346 = vpop.permute.xlu0 %345
      %349 = vrot.lane.b32.xlu0 %v255, 119
      %v350 = vpop.permute.xlu0 %349
      %351 = vrot.lane.b32.xlu0 %v257, 119
      %v352 = vpop.permute.xlu0 %351
      %357 = vrot.lane.b32.xlu0 %v301, 118
      %v358 = vpop.permute.xlu0 %357
      %359 = vrot.lane.b32.xlu0 %v302, 118
      %v360 = vpop.permute.xlu0 %359
      %v363 = vld [vmem:[%s1] sm:$0xff]
      %v364 = vld [vmem:[%s1 + $0x8] sm:$0xf]
      %v365 = vld [vmem:[%s1 + $0xc] sm:$0xff]
      %v366 = vld [vmem:[%s1 + $0x14] sm:$0xf]
      %v367 = vld [vmem:[%s1 + $0x18] sm:$0xff]
      %v368 = vld [vmem:[%s1 + $0x20] sm:$0xf]
      %v369 = vld [vmem:[%s1 + $0x24] sm:$0xff]
      %v370 = vld [vmem:[%s1 + $0x2c] sm:$0xf]
      %v371 = vld [vmem:[%s1 + $0x30] sm:$0xff]
      %v372 = vld [vmem:[%s1 + $0x38] sm:$0xf]
      %v373 = vld [vmem:[%s1 + $0x3c] sm:$0xff]
      %v374 = vld [vmem:[%s1 + $0x44] sm:$0xf]
      %v375 = vld [vmem:[%s1 + $0x48] sm:$0xff]
      %v376 = vld [vmem:[%s1 + $0x50] sm:$0xf]
      %v377 = vld [vmem:[%s1 + $0x54] sm:$0xff]
      %v378 = vld [vmem:[%s1 + $0x5c] sm:$0xf]
      %v379 = vld [vmem:[%s2] sm:$0xff]
      %v380 = vld [vmem:[%s2 + $0x8] sm:$0xff]
      %v381 = vld [vmem:[%s2 + $0x10] sm:$0xff]
      %v382 = vld [vmem:[%s2 + $0x18] sm:$0xff]
      %v383 = vld [vmem:[%s2 + $0x20] sm:$0xff]
      %v384 = vld [vmem:[%s2 + $0x28] sm:$0xff]
      %v385 = vld [vmem:[%s2 + $0x30] sm:$0xff]
      %v386 = vld [vmem:[%s2 + $0x38] sm:$0xff]
      %388 = vset.pattern.permute.xlu0 0
      %389 = vperm.xlu0 %388, %v379
      %v390 = vpop.permute.xlu0 %389
      %393 = vset.pattern.permute.xlu0 0
      %394 = vperm.xlu0 %393, %v380
      %v395 = vpop.permute.xlu0 %394
      %398 = vset.pattern.permute.xlu0 0
      %399 = vperm.xlu0 %398, %v381
      %v400 = vpop.permute.xlu0 %399
      %403 = vset.pattern.permute.xlu0 0
      %404 = vperm.xlu0 %403, %v382
      %v405 = vpop.permute.xlu0 %404
      %408 = vset.pattern.permute.xlu0 0
      %409 = vperm.xlu0 %408, %v383
      %v410 = vpop.permute.xlu0 %409
      %413 = vset.pattern.permute.xlu0 0
      %414 = vperm.xlu0 %413, %v384
      %v415 = vpop.permute.xlu0 %414
      %418 = vset.pattern.permute.xlu0 0
      %419 = vperm.xlu0 %418, %v385
      %v420 = vpop.permute.xlu0 %419
      %423 = vset.pattern.permute.xlu0 0
      %424 = vperm.xlu0 %423, %v386
      %v425 = vpop.permute.xlu0 %424
      %v443 = vunpack.c.l.b16 %v363
      %v444 = vunpack.c.h.b16 %v363
      %v445 = vunpack.c.l.b16 %v364
      %v446 = vunpack.c.l.b16 %v365
      %v447 = vunpack.c.h.b16 %v365
      %v448 = vunpack.c.l.b16 %v366
      %v449 = vunpack.c.l.b16 %v367
      %v450 = vunpack.c.h.b16 %v367
      %v451 = vunpack.c.l.b16 %v368
      %v452 = vunpack.c.l.b16 %v369
      %v453 = vunpack.c.h.b16 %v369
      %v454 = vunpack.c.l.b16 %v370
      %v455 = vunpack.c.l.b16 %v371
      %v456 = vunpack.c.h.b16 %v371
      %v457 = vunpack.c.l.b16 %v372
      %v458 = vunpack.c.l.b16 %v373
      %v459 = vunpack.c.h.b16 %v373
      %v460 = vunpack.c.l.b16 %v374
      %v461 = vunpack.c.l.b16 %v375
      %v462 = vunpack.c.h.b16 %v375
      %v463 = vunpack.c.l.b16 %v376
      %v464 = vunpack.c.l.b16 %v377
      %v465 = vunpack.c.h.b16 %v377
      %v466 = vunpack.c.l.b16 %v378
      %v467 = vpack.c.b16 %v446, %v443
      %v468 = vpack.c.b16 %v447, %v444
      %v469 = vpack.c.b16 %v448, %v445
      %v470 = vpack.c.b16 %v452, %v449
      %v471 = vpack.c.b16 %v453, %v450
      %v472 = vpack.c.b16 %v454, %v451
      %v473 = vpack.c.b16 %v458, %v455
      %v474 = vpack.c.b16 %v459, %v456
      %v475 = vpack.c.b16 %v460, %v457
      %v476 = vpack.c.b16 %v464, %v461
      %v477 = vpack.c.b16 %v465, %v462
      %v478 = vpack.c.b16 %v466, %v463
      %vm487 = vcmask 261120
      %v489 = vsel %vm487, %v469, 0
      %v492 = vsel %vm487, %v472, 0
      %v495 = vsel %vm487, %v475, 0
      %v498 = vsel %vm487, %v478, 0
      %500 = vmatprep.subr.bf16.mxu0 0
      %501 = vmatpush1.bf16.msra.mxu0 %v268
      %502 = vmatprep.subr.bf16.mxu0 0
      %503 = vmatpush1.bf16.msra.mxu0 %v269
      %504 = vmatprep.subr.bf16.mxu0 0
      %505 = vmatpush1.bf16.msra.mxu0 %v306
      %506 = vmatprep.subr.bf16.mxu0 0
      %507 = vmatpush1.bf16.msra.mxu0 %v308
      %508 = vmatprep.subr.bf16.mxu0 0
      %509 = vmatpush1.bf16.msra.mxu0 %v314
      %510 = vmatprep.subr.bf16.mxu0 0
      %511 = vmatpush1.bf16.msra.mxu0 %v316
      %512 = vmatprep.subr.bf16.mxu0 0
      %513 = vmatpush1.bf16.msra.mxu0 %v322
      %514 = vmatprep.subr.bf16.mxu0 0
      %515 = vmatpush1.bf16.msra.mxu0 %v324
      %516 = vmatprep.subr.bf16.mxu0 0
      %517 = vmatpush1.bf16.msra.mxu0 %v328
      %518 = vmatprep.subr.bf16.mxu0 0
      %519 = vmatpush1.bf16.msra.mxu0 %v330
      %520 = vmatprep.subr.bf16.mxu0 0
      %521 = vmatpush1.bf16.msra.mxu0 %v336
      %522 = vmatprep.subr.bf16.mxu0 0
      %523 = vmatpush1.bf16.msra.mxu0 %v338
      %524 = vmatprep.subr.bf16.mxu0 0
      %525 = vmatpush1.bf16.msra.mxu0 %v344
      %526 = vmatprep.subr.bf16.mxu0 0
      %527 = vmatpush1.bf16.msra.mxu0 %v346
      %528 = vmatprep.subr.bf16.mxu0 0
      %529 = vmatpush1.bf16.msra.mxu0 %v350
      %530 = vmatprep.subr.bf16.mxu0 0
      %531 = vmatpush1.bf16.msra.mxu0 %v352
      %532 = vmatprep.mubr.bf16.mxu0 %v468
      %533 = vmatmul.mubr.bf16.gmra.mrb[0].mxu0 %v467
      %v534 = vpop.f32.mrb[0].mxu0
      %v535 = vadd.f32 %v390, %v534
      %v536 = vpop.f32.mrb[0].mxu0
      %v537 = vpop.f32.mrb[0].mxu0
      %v538 = vadd.f32 %v395, %v537
      %v539 = vpop.f32.mrb[0].mxu0
      %540 = vmatprep.mubr.bf16.mxu0 %v471
      %541 = vmatmul.mubr.bf16.gmra.mrb[0].mxu0 %v470
      %v542 = vpop.f32.mrb[0].mxu0
      %v543 = vadd.f32 %v400, %v542
      %v544 = vpop.f32.mrb[0].mxu0
      %v545 = vpop.f32.mrb[0].mxu0
      %v546 = vadd.f32 %v405, %v545
      %v547 = vpop.f32.mrb[0].mxu0
      %548 = vmatprep.mubr.bf16.mxu0 %v474
      %549 = vmatmul.mubr.bf16.gmra.mrb[0].mxu0 %v473
      %v550 = vpop.f32.mrb[0].mxu0
      %v551 = vadd.f32 %v410, %v550
      %v552 = vpop.f32.mrb[0].mxu0
      %v553 = vpop.f32.mrb[0].mxu0
      %v554 = vadd.f32 %v415, %v553
      %v555 = vpop.f32.mrb[0].mxu0
      %556 = vmatprep.mubr.bf16.mxu0 %v477
      %557 = vmatmul.mubr.bf16.gmra.mrb[0].mxu0 %v476
      %v558 = vpop.f32.mrb[0].mxu0
      %v559 = vadd.f32 %v420, %v558
      %v560 = vpop.f32.mrb[0].mxu0
      %v561 = vpop.f32.mrb[0].mxu0
      %v562 = vadd.f32 %v425, %v561
      %v563 = vpop.f32.mrb[0].mxu0
      %564 = vdwg.mxu0
      %565 = vmatprep.subr.bf16.mxu0 0
      %566 = vmatpush1.bf16.msra.mxu0 %v358
      %567 = vmatprep.subr.bf16.mxu0 0
      %568 = vmatpush1.bf16.msra.mxu0 %v360
      %569 = vmatprep.subr.bf16.mxu0 0
      %570 = vmatpush1.bf16.msra.mxu0 0
      %571 = vmatprep.subr.bf16.mxu0 0
      %572 = vmatpush1.bf16.msra.mxu0 0
      %573 = vmatprep.subr.bf16.mxu0 0
      %574 = vmatpush1.bf16.msra.mxu0 0
      %575 = vmatprep.subr.bf16.mxu0 0
      %576 = vmatpush1.bf16.msra.mxu0 0
      %577 = vmatprep.subr.bf16.mxu0 0
      %578 = vmatpush1.bf16.msra.mxu0 0
      %579 = vmatprep.subr.bf16.mxu0 0
      %580 = vmatpush1.bf16.msra.mxu0 0
      %581 = vmatprep.subr.bf16.mxu0 0
      %582 = vmatpush1.bf16.msra.mxu0 0
      %583 = vmatprep.subr.bf16.mxu0 0
      %584 = vmatpush1.bf16.msra.mxu0 0
      %585 = vmatprep.subr.bf16.mxu0 0
      %586 = vmatpush1.bf16.msra.mxu0 0
      %587 = vmatprep.subr.bf16.mxu0 0
      %588 = vmatpush1.bf16.msra.mxu0 0
      %589 = vmatprep.subr.bf16.mxu0 0
      %590 = vmatpush1.bf16.msra.mxu0 0
      %591 = vmatprep.subr.bf16.mxu0 0
      %592 = vmatpush1.bf16.msra.mxu0 0
      %593 = vmatprep.subr.bf16.mxu0 0
      %594 = vmatpush1.bf16.msra.mxu0 0
      %595 = vmatprep.subr.bf16.mxu0 0
      %596 = vmatpush1.bf16.msra.mxu0 0
      %597 = vmatprep.mubr.bf16.mxu0 0
      %598 = vmatmul.mubr.bf16.gmra.mrb[0].mxu0 %v489
      %v599 = vpop.f32.mrb[0].mxu0
      %v600 = vadd.f32 %v535, %v599
      %v601 = vpop.f32.mrb[0].mxu0
      %v602 = vpop.f32.mrb[0].mxu0
      %v603 = vadd.f32 %v538, %v602
      %v604 = vpop.f32.mrb[0].mxu0
      %605 = vmatprep.mubr.bf16.mxu0 0
      %606 = vmatmul.mubr.bf16.gmra.mrb[0].mxu0 %v492
      %v607 = vpop.f32.mrb[0].mxu0
      %v608 = vadd.f32 %v543, %v607
      %v609 = vpop.f32.mrb[0].mxu0
      %v610 = vpop.f32.mrb[0].mxu0
      %v611 = vadd.f32 %v546, %v610
      %v612 = vpop.f32.mrb[0].mxu0
      %613 = vmatprep.mubr.bf16.mxu0 0
      %614 = vmatmul.mubr.bf16.gmra.mrb[0].mxu0 %v495
      %v615 = vpop.f32.mrb[0].mxu0
      %v616 = vadd.f32 %v551, %v615
      %v617 = vpop.f32.mrb[0].mxu0
      %v618 = vpop.f32.mrb[0].mxu0
      %v619 = vadd.f32 %v554, %v618
      %v620 = vpop.f32.mrb[0].mxu0
      %621 = vmatprep.mubr.bf16.mxu0 0
      %622 = vmatmul.mubr.bf16.gmra.mrb[0].mxu0 %v498
      %v623 = vpop.f32.mrb[0].mxu0
      %v624 = vadd.f32 %v559, %v623
      %v625 = vpop.f32.mrb[0].mxu0
      %v626 = vpop.f32.mrb[0].mxu0
      %v627 = vadd.f32 %v562, %v626
      %v628 = vpop.f32.mrb[0].mxu0
      %629 = vdwg.mxu0
      %vm630 = vcmask 130048
      %631 = vst.msk [vmem:[%s205] sm:$0xff] %vm630, %v600
      %632 = vst.msk [vmem:[%s205 + $0x8] sm:$0xff] %vm630, %v603
      %633 = vst.msk [vmem:[%s205 + $0x10] sm:$0xff] %vm630, %v608
      %634 = vst.msk [vmem:[%s205 + $0x18] sm:$0xff] %vm630, %v611
      %635 = vst.msk [vmem:[%s205 + $0x20] sm:$0xff] %vm630, %v616
      %636 = vst.msk [vmem:[%s205 + $0x28] sm:$0xff] %vm630, %v619
      %637 = vst.msk [vmem:[%s205 + $0x30] sm:$0xff] %vm630, %v624
      %638 = vst.msk [vmem:[%s205 + $0x38] sm:$0xff] %vm630, %v627
      %v639 = vsel %vm630, %v600, 0.0
      %640 = vadd.xlane.f32.xlu0 %v639
      %v641 = vpop.xlane.xlu0 %640
      %v642 = vsel %vm630, %v603, 0.0
      %643 = vadd.xlane.f32.xlu0 %v642
      %v644 = vpop.xlane.xlu0 %643
      %v645 = vsel %vm630, %v608, 0.0
      %646 = vadd.xlane.f32.xlu0 %v645
      %v647 = vpop.xlane.xlu0 %646
      %v648 = vsel %vm630, %v611, 0.0
      %649 = vadd.xlane.f32.xlu0 %v648
      %v650 = vpop.xlane.xlu0 %649
      %v651 = vsel %vm630, %v616, 0.0
      %652 = vadd.xlane.f32.xlu0 %v651
      %v653 = vpop.xlane.xlu0 %652
      %v654 = vsel %vm630, %v619, 0.0
      %655 = vadd.xlane.f32.xlu0 %v654
      %v656 = vpop.xlane.xlu0 %655
      %v657 = vsel %vm630, %v624, 0.0
      %658 = vadd.xlane.f32.xlu0 %v657
      %v659 = vpop.xlane.xlu0 %658
      %v660 = vsel %vm630, %v627, 0.0
      %661 = vadd.xlane.f32.xlu0 %v660
      %v662 = vpop.xlane.xlu0 %661
      %v663 = vmul.f32 %v600, %v600
      %v664 = vmul.f32 %v603, %v603
      %v665 = vmul.f32 %v608, %v608
      %v666 = vmul.f32 %v611, %v611
      %v667 = vmul.f32 %v616, %v616
      %v668 = vmul.f32 %v619, %v619
      %v669 = vmul.f32 %v624, %v624
      %v670 = vmul.f32 %v627, %v627
      %v671 = vsel %vm630, %v663, 0.0
      %672 = vadd.xlane.f32.xlu0 %v671
      %v673 = vpop.xlane.xlu0 %672
      %v674 = vsel %vm630, %v664, 0.0
      %675 = vadd.xlane.f32.xlu0 %v674
      %v676 = vpop.xlane.xlu0 %675
      %v677 = vsel %vm630, %v665, 0.0
      %678 = vadd.xlane.f32.xlu0 %v677
      %v679 = vpop.xlane.xlu0 %678
      %v680 = vsel %vm630, %v666, 0.0
      %681 = vadd.xlane.f32.xlu0 %v680
      %v682 = vpop.xlane.xlu0 %681
      %v683 = vsel %vm630, %v667, 0.0
      %684 = vadd.xlane.f32.xlu0 %v683
      %v685 = vpop.xlane.xlu0 %684
      %v686 = vsel %vm630, %v668, 0.0
      %687 = vadd.xlane.f32.xlu0 %v686
      %v688 = vpop.xlane.xlu0 %687
      %v689 = vsel %vm630, %v669, 0.0
      %690 = vadd.xlane.f32.xlu0 %v689
      %v691 = vpop.xlane.xlu0 %690
      %v692 = vsel %vm630, %v670, 0.0
      %693 = vadd.xlane.f32.xlu0 %v692
      %v694 = vpop.xlane.xlu0 %693
      %vm695 = vcmask 7168
      %v696 = vsel %vm695, %v641, %v673
      %v697 = vsel %vm695, %v644, %v676
      %v698 = vsel %vm695, %v647, %v679
      %v699 = vsel %vm695, %v650, %v682
      %v700 = vsel %vm695, %v653, %v685
      %v701 = vsel %vm695, %v656, %v688
      %v702 = vsel %vm695, %v659, %v691
      %v703 = vsel %vm695, %v662, %v694
      %vm704 = vcmask 15360
      %705 = vst.msk [vmem:[%s210] sm:$0xff] %vm704, %v696
      %706 = vst.msk [vmem:[%s210 + $0x8] sm:$0xff] %vm704, %v697
      %707 = vst.msk [vmem:[%s210 + $0x10] sm:$0xff] %vm704, %v698
      %708 = vst.msk [vmem:[%s210 + $0x18] sm:$0xff] %vm704, %v699
      %709 = vst.msk [vmem:[%s210 + $0x20] sm:$0xff] %vm704, %v700
      %710 = vst.msk [vmem:[%s210 + $0x28] sm:$0xff] %vm704, %v701
      %711 = vst.msk [vmem:[%s210 + $0x30] sm:$0xff] %vm704, %v702
      %712 = vst.msk [vmem:[%s210 + $0x38] sm:$0xff] %vm704, %v703
      %p713 = scmp.lt.s32.totalorder %s16, 1
      %s714 = scalar_select %p713, %s16, 1
      %s715 = smul.addr %s714, 8
      %s716 = smul.addr %s715, 8
      %s717 = scalar_lea.vmem %s3, %s716
      %p718 = scmp.lt.s32.totalorder %s16, 1
      %s719 = scalar_select %p718, %s16, 1
      %s720 = smul.addr %s719, 8
      %s721 = smul.addr %s720, 8
      %s722 = scalar_lea.vmem %s4, %s721
      // Predicated region
      $region33: #{flow_generator_forward.19} parent=31 // pred_check
        %p723 = pneg %p102
      $region34: #{flow_generator_forward.19} parent=31 // pred_check_branch
        %725 = sbr.rel (%p723) target = $region36
      $region35: #{flow_generator_forward.19} parent=31 // pred_region
        _
      $region36: #{flow_generator_forward.19} parent=31 // pred_fallthru
        _
      // Predicated region
      $region37: #{flow_generator_forward.19} parent=31 // pred_check
        %p726 = pneg %p128
      $region38: #{flow_generator_forward.19} parent=31 // pred_check_branch
        %728 = sbr.rel (%p726) target = $region40
      $region39: #{flow_generator_forward.19} parent=31 // pred_region
        _
      $region40: #{flow_generator_forward.19} parent=31 // pred_fallthru
        _
    $region32: #{flow_generator_forward.19} parent=5 // pred_fallthru
      _
    %p729 = scmp.le.s32.totalorder 2, %s11
    // Predicated region
    $region41: #{flow_generator_forward.19} parent=5 // pred_check
      %p730 = pneg %p729
    $region42: #{flow_generator_forward.19} parent=5 // pred_check_branch
      %732 = sbr.rel (%p730) target = $region44
    $region43: #{flow_generator_forward.19} parent=5 // pred_region
      %s733 = ssub.s32 %s11, 2
      // Predicated region
      $region45: #{flow_generator_forward.19} parent=43 // pred_check
        %p734 = pneg %p108
      $region46: #{flow_generator_forward.19} parent=43 // pred_check_branch
        %736 = sbr.rel (%p734) target = $region48
      $region47: #{flow_generator_forward.19} parent=43 // pred_region
        %p737 = scmp.lt.s32.totalorder %s17, 1
        %s738 = scalar_select %p737, %s17, 1
        %s739 = smul.addr %s738, 8
        %s740 = smul.addr %s739, 8
        %s741 = scalar_lea.vmem %s3, %s740
      $region48: #{flow_generator_forward.19} parent=43 // pred_fallthru
        _
      // Predicated region
      $region49: #{flow_generator_forward.19} parent=43 // pred_check
        %p742 = pneg %p134
      $region50: #{flow_generator_forward.19} parent=43 // pred_check_branch
        %744 = sbr.rel (%p742) target = $region52
      $region51: #{flow_generator_forward.19} parent=43 // pred_region
        %p745 = scmp.lt.s32.totalorder %s17, 1
        %s746 = scalar_select %p745, %s17, 1
        %s747 = smul.addr %s746, 8
        %s748 = smul.addr %s747, 8
        %s749 = scalar_lea.vmem %s4, %s748
      $region52: #{flow_generator_forward.19} parent=43 // pred_fallthru
        _
    $region44: #{flow_generator_forward.19} parent=5 // pred_fallthru
      _
  $region6: #{flow_generator_forward.19} parent=0 // loop_footer
    %s15 = sadd.s32 1, %s11
  $region7: #{flow_generator_forward.19} parent=0 // loop_footer_branch
    %10 = sbr.rel target = $region3
  $region8: #{flow_generator_forward.19} parent=0 // loop_exit
    _

// kernel: flow_generator_forward.20
$region0: #{flow_generator_forward.20}
  #allocation0 [shape = 'u32[]', space=smem, size = 0x4, offset = 0x4, fixed_abs, tag = 'smem constant byte address 0x4 - core index']
  #allocation1 [shape = 'u32[144,128]{1,0:T(1,128)}', space=vmem, size = 0x12000, scoped, tag = 'internal scratch']
  %s0 = inlined_call_operand.vmem [shape: f32[2,16,64], index: 0, kind: input, shape index: {}]
  %s1 = inlined_call_operand.vmem [shape: f32[16,1], index: 1, kind: input, shape index: {}]
  %s2 = inlined_call_operand.vmem [shape: f32[16,1], index: 2, kind: input, shape index: {}]
  %s3 = inlined_call_operand.vmem [shape: bf16[32,144], index: 3, kind: input, shape index: {}]
  %s4 = inlined_call_operand.vmem [shape: f32[32,1], index: 4, kind: input, shape index: {}]
  %s5 = inlined_call_operand.vmem [shape: f32[2,32,64], index: 5, kind: output, shape index: {0}]
  %s6 = inlined_call_operand.vmem [shape: f32[2,32,2], index: 6, kind: output, shape index: {1}]
  %7 = xla_tuple %s5, %s6
  %s8 = sld [smem:[#allocation0]]
  $region61: #{flow_generator_forward.20} parent=0
    _
  %s10 = ssub.s32 1, %s8
  %s11 = scalar_select 0, %s10, %s8
  loop: start=0, step=1, limit=4
  $region2: #{flow_generator_forward.20} parent=0 // loop_pre_header
    _
  $region3: #{flow_generator_forward.20} parent=0 // loop_header
    %s13 = sphi 0, %s17
    %p14 = scmp.ge.s32.totalorder %s13, 4
    %s23 = sphi 0, %s25
    %s26 = sphi 0, %s23
    %s27 = sphi 0, %s26
    %s43 = sphi 0, %s27
    %s47 = sphi 0, %s47
    %s49 = sphi 0, %s47
    %s50 = sphi 0, %s49
    %s64 = sphi 0, %s50
    %s68 = sphi 0, %s68
    %s70 = sphi 0, %s68
    %s71 = sphi 0, %s70
    %s85 = sphi 0, %s71
    %s89 = sphi 0, %s89
    %s91 = sphi 0, %s89
    %s92 = sphi 0, %s91
    %s106 = sphi 0, %s92
    %s110 = sphi 0, %s110
    %s112 = sphi 0, %s110
    %s113 = sphi 0, %s112
    %s127 = sphi 0, %s113
    %s133 = sphi 0, %s135
    %s136 = sphi 0, %s133
    %s137 = sphi 0, %s136
    %s153 = sphi 0, %s137
    %s159 = sphi 0, %s161
    %s162 = sphi 0, %s159
    %s163 = sphi 0, %s162
    %s179 = sphi 0, %s163
  $region4: #{flow_generator_forward.20} parent=0 // loop_header_branch
    %16 = sbr.rel (%p14) target = $region8
  $region5: #{flow_generator_forward.20} parent=0 // loop_body
    %s18 = ssub.s32 %s13, 1
    %s19 = ssub.s32 %s13, 2
    %s20 = sadd.s32 %s13, 1
    %s21 = ssub.s32 %s13, %s20
    %p22 = scmp.eq.s32.totalorder %s21, 0
    %s24 = sadd.s32 %s23, 1
    %s25 = scalar_select %p22, %s23, %s24
    %p28 = pneg %p22
    %p29 = scmp.eq.s32.totalorder %s13, 1
    %p30 = por %p28, %p29
    %p31 = scmp.ne.s32.totalorder %s23, %s26
    %p32 = scmp.eq.s32.totalorder %s13, 0
    %p33 = por %p31, %p32
    %p34 = scmp.ne.s32.totalorder %s23, %s26
    %p35 = scmp.eq.s32.totalorder %s18, 1
    %p36 = por %p34, %p35
    %p37 = scmp.ne.s32.totalorder %s26, %s27
    %p38 = scmp.eq.s32.totalorder %s18, 0
    %p39 = por %p37, %p38
    %p40 = scmp.ne.s32.totalorder %s26, %s27
    %p41 = scmp.eq.s32.totalorder %s19, 1
    %p42 = por %p40, %p41
    %p44 = scmp.ne.s32.totalorder %s27, %s43
    %p45 = scmp.eq.s32.totalorder %s19, 0
    %p46 = por %p44, %p45
    %s48 = sadd.s32 %s47, 1
    %p51 = scmp.eq.s32.totalorder %s13, 1
    %p52 = scmp.ne.s32.totalorder %s47, %s49
    %p53 = scmp.eq.s32.totalorder %s13, 0
    %p54 = por %p52, %p53
    %p55 = scmp.ne.s32.totalorder %s47, %s49
    %p56 = scmp.eq.s32.totalorder %s18, 1
    %p57 = por %p55, %p56
    %p58 = scmp.ne.s32.totalorder %s49, %s50
    %p59 = scmp.eq.s32.totalorder %s18, 0
    %p60 = por %p58, %p59
    %p61 = scmp.ne.s32.totalorder %s49, %s50
    %p62 = scmp.eq.s32.totalorder %s19, 1
    %p63 = por %p61, %p62
    %p65 = scmp.ne.s32.totalorder %s50, %s64
    %p66 = scmp.eq.s32.totalorder %s19, 0
    %p67 = por %p65, %p66
    %s69 = sadd.s32 %s68, 1
    %p72 = scmp.eq.s32.totalorder %s13, 1
    %p73 = scmp.ne.s32.totalorder %s68, %s70
    %p74 = scmp.eq.s32.totalorder %s13, 0
    %p75 = por %p73, %p74
    %p76 = scmp.ne.s32.totalorder %s68, %s70
    %p77 = scmp.eq.s32.totalorder %s18, 1
    %p78 = por %p76, %p77
    %p79 = scmp.ne.s32.totalorder %s70, %s71
    %p80 = scmp.eq.s32.totalorder %s18, 0
    %p81 = por %p79, %p80
    %p82 = scmp.ne.s32.totalorder %s70, %s71
    %p83 = scmp.eq.s32.totalorder %s19, 1
    %p84 = por %p82, %p83
    %p86 = scmp.ne.s32.totalorder %s71, %s85
    %p87 = scmp.eq.s32.totalorder %s19, 0
    %p88 = por %p86, %p87
    %s90 = sadd.s32 %s89, 1
    %p93 = scmp.eq.s32.totalorder %s13, 1
    %p94 = scmp.ne.s32.totalorder %s89, %s91
    %p95 = scmp.eq.s32.totalorder %s13, 0
    %p96 = por %p94, %p95
    %p97 = scmp.ne.s32.totalorder %s89, %s91
    %p98 = scmp.eq.s32.totalorder %s18, 1
    %p99 = por %p97, %p98
    %p100 = scmp.ne.s32.totalorder %s91, %s92
    %p101 = scmp.eq.s32.totalorder %s18, 0
    %p102 = por %p100, %p101
    %p103 = scmp.ne.s32.totalorder %s91, %s92
    %p104 = scmp.eq.s32.totalorder %s19, 1
    %p105 = por %p103, %p104
    %p107 = scmp.ne.s32.totalorder %s92, %s106
    %p108 = scmp.eq.s32.totalorder %s19, 0
    %p109 = por %p107, %p108
    %s111 = sadd.s32 %s110, 1
    %p114 = scmp.eq.s32.totalorder %s13, 1
    %p115 = scmp.ne.s32.totalorder %s110, %s112
    %p116 = scmp.eq.s32.totalorder %s13, 0
    %p117 = por %p115, %p116
    %p118 = scmp.ne.s32.totalorder %s110, %s112
    %p119 = scmp.eq.s32.totalorder %s18, 1
    %p120 = por %p118, %p119
    %p121 = scmp.ne.s32.totalorder %s112, %s113
    %p122 = scmp.eq.s32.totalorder %s18, 0
    %p123 = por %p121, %p122
    %p124 = scmp.ne.s32.totalorder %s112, %s113
    %p125 = scmp.eq.s32.totalorder %s19, 1
    %p126 = por %p124, %p125
    %p128 = scmp.ne.s32.totalorder %s113, %s127
    %p129 = scmp.eq.s32.totalorder %s19, 0
    %p130 = por %p128, %p129
    %s131 = ssub.s32 %s13, %s20
    %p132 = scmp.eq.s32.totalorder %s131, 0
    %s134 = sadd.s32 %s133, 1
    %s135 = scalar_select %p132, %s133, %s134
    %p138 = pneg %p132
    %p139 = scmp.eq.s32.totalorder %s13, 1
    %p140 = por %p138, %p139
    %p141 = scmp.ne.s32.totalorder %s133, %s136
    %p142 = scmp.eq.s32.totalorder %s13, 0
    %p143 = por %p141, %p142
    %p144 = scmp.ne.s32.totalorder %s133, %s136
    %p145 = scmp.eq.s32.totalorder %s18, 1
    %p146 = por %p144, %p145
    %p147 = scmp.ne.s32.totalorder %s136, %s137
    %p148 = scmp.eq.s32.totalorder %s18, 0
    %p149 = por %p147, %p148
    %p150 = scmp.ne.s32.totalorder %s136, %s137
    %p151 = scmp.eq.s32.totalorder %s19, 1
    %p152 = por %p150, %p151
    %p154 = scmp.ne.s32.totalorder %s137, %s153
    %p155 = scmp.eq.s32.totalorder %s19, 0
    %p156 = por %p154, %p155
    %s157 = ssub.s32 %s13, %s20
    %p158 = scmp.eq.s32.totalorder %s157, 0
    %s160 = sadd.s32 %s159, 1
    %s161 = scalar_select %p158, %s159, %s160
    %p164 = pneg %p158
    %p165 = scmp.eq.s32.totalorder %s13, 1
    %p166 = por %p164, %p165
    %p167 = scmp.ne.s32.totalorder %s159, %s162
    %p168 = scmp.eq.s32.totalorder %s13, 0
    %p169 = por %p167, %p168
    %p170 = scmp.ne.s32.totalorder %s159, %s162
    %p171 = scmp.eq.s32.totalorder %s18, 1
    %p172 = por %p170, %p171
    %p173 = scmp.ne.s32.totalorder %s162, %s163
    %p174 = scmp.eq.s32.totalorder %s18, 0
    %p175 = por %p173, %p174
    %p176 = scmp.ne.s32.totalorder %s162, %s163
    %p177 = scmp.eq.s32.totalorder %s19, 1
    %p178 = por %p176, %p177
    %p180 = scmp.ne.s32.totalorder %s163, %s179
    %p181 = scmp.eq.s32.totalorder %s19, 0
    %p182 = por %p180, %p181
    %p183 = scmp.le.s32.totalorder 1, %s13
    %p184 = scmp.lt.s32.totalorder %s13, 3
    %p185 = pnand %p183, %p184
    %p186 = pneg %p185
    // Predicated region
    $region9: #{flow_generator_forward.20} parent=5 // pred_check
      _
    $region10: #{flow_generator_forward.20} parent=5 // pred_check_branch
      %188 = sbr.rel (%p185) target = $region12
    $region11: #{flow_generator_forward.20} parent=5 // pred_region
      %s189 = ssub.s32 %s13, 1
      // Predicated region
      $region13: #{flow_generator_forward.20} parent=11 // pred_check
        %p190 = pneg %p60
      $region14: #{flow_generator_forward.20} parent=11 // pred_check_branch
        %192 = sbr.rel (%p190) target = $region16
      $region15: #{flow_generator_forward.20} parent=11 // pred_region
        _
      $region16: #{flow_generator_forward.20} parent=11 // pred_fallthru
        _
      // Predicated region
      $region17: #{flow_generator_forward.20} parent=11 // pred_check
        %p193 = pneg %p81
      $region18: #{flow_generator_forward.20} parent=11 // pred_check_branch
        %195 = sbr.rel (%p193) target = $region20
      $region19: #{flow_generator_forward.20} parent=11 // pred_region
        _
      $region20: #{flow_generator_forward.20} parent=11 // pred_fallthru
        _
      // Predicated region
      $region21: #{flow_generator_forward.20} parent=11 // pred_check
        %p196 = pneg %p102
      $region22: #{flow_generator_forward.20} parent=11 // pred_check_branch
        %198 = sbr.rel (%p196) target = $region24
      $region23: #{flow_generator_forward.20} parent=11 // pred_region
        _
      $region24: #{flow_generator_forward.20} parent=11 // pred_fallthru
        _
      // Predicated region
      $region25: #{flow_generator_forward.20} parent=11 // pred_check
        %p199 = pneg %p123
      $region26: #{flow_generator_forward.20} parent=11 // pred_check_branch
        %201 = sbr.rel (%p199) target = $region28
      $region27: #{flow_generator_forward.20} parent=11 // pred_region
        _
      $region28: #{flow_generator_forward.20} parent=11 // pred_fallthru
        _
    $region12: #{flow_generator_forward.20} parent=5 // pred_fallthru
      _
    %p202 = scmp.lt.s32.totalorder %s13, 2
    // Predicated region
    $region29: #{flow_generator_forward.20} parent=5 // pred_check
      %p203 = pneg %p202
    $region30: #{flow_generator_forward.20} parent=5 // pred_check_branch
      %205 = sbr.rel (%p203) target = $region32
    $region31: #{flow_generator_forward.20} parent=5 // pred_region
      // Predicated region
      $region33: #{flow_generator_forward.20} parent=31 // pred_check
        %p206 = pneg %p33
      $region34: #{flow_generator_forward.20} parent=31 // pred_check_branch
        %208 = sbr.rel (%p206) target = $region36
      $region35: #{flow_generator_forward.20} parent=31 // pred_region
        %p209 = scmp.lt.s32.totalorder %s13, 1
        %s210 = scalar_select %p209, %s13, 1
        %s211 = smul.addr %s210, 2
        %s212 = smul.addr %s211, 8
        %s213 = scalar_lea.vmem %s0, %s212
      $region36: #{flow_generator_forward.20} parent=31 // pred_fallthru
        _
    $region32: #{flow_generator_forward.20} parent=5 // pred_fallthru
      _
    %p214 = scmp.le.s32.totalorder 1, %s13
    %p215 = scmp.lt.s32.totalorder %s13, 3
    %p216 = pnand %p214, %p215
    %p217 = pneg %p216
    // Predicated region
    $region37: #{flow_generator_forward.20} parent=5 // pred_check
      _
    $region38: #{flow_generator_forward.20} parent=5 // pred_check_branch
      %219 = sbr.rel (%p216) target = $region40
    $region39: #{flow_generator_forward.20} parent=5 // pred_region
      %s220 = ssub.s32 %s13, 1
      %p221 = scmp.lt.s32.totalorder %s18, 1
      %s222 = scalar_select %p221, %s18, 1
      %s223 = smul.addr %s222, 2
      %s224 = smul.addr %s223, 8
      %s225 = scalar_lea.vmem %s0, %s224
      %p226 = pneg %p39
      %p227 = pneg %p36
      %p228 = pneg %p60
      %p229 = pneg %p57
      %p230 = pneg %p81
      %p231 = pneg %p78
      %p232 = pneg %p102
      %p233 = pneg %p99
      %p234 = pneg %p123
      %p235 = pneg %p120
      %p236 = pneg %p149
      %p237 = pneg %p146
      %p238 = scmp.lt.s32.totalorder %s18, 1
      %s239 = scalar_select %p238, %s18, 1
      %s240 = smul.addr %s239, 4
      %s241 = smul.addr %s240, 8
      %s242 = scalar_lea.vmem %s5, %s241
      %p243 = pneg %p175
      %p244 = pneg %p172
      %p245 = scmp.lt.s32.totalorder %s18, 1
      %s246 = scalar_select %p245, %s18, 1
      %s247 = smul.addr %s246, 4
      %s248 = smul.addr %s247, 8
      %s249 = scalar_lea.vmem %s6, %s248
      %p250 = scmp.lt.s32.totalorder %s18, 1
      %s251 = scalar_select %p250, %s18, 1
      %s252 = smul.addr %s251, 2
      %s253 = smul.addr %s252, 8
      %s254 = scalar_lea.vmem %s0, %s253
      %p255 = scmp.lt.s32.totalorder %s18, 1
      %s256 = scalar_select %p255, %s18, 1
      %s257 = smul.addr %s256, 4
      %s258 = smul.addr %s257, 8
      %s259 = scalar_lea.vmem %s5, %s258
      %p260 = scmp.lt.s32.totalorder %s18, 1
      %s261 = scalar_select %p260, %s18, 1
      %s262 = smul.addr %s261, 4
      %s263 = smul.addr %s262, 8
      %s264 = scalar_lea.vmem %s6, %s263
      %v268 = vld [vmem:[%s254] sm:$0xff]
      %v269 = vld [vmem:[%s254 + $0x8] sm:$0xff]
      %v270 = vld [vmem:[%s1] sm:$0xff]
      %v271 = vld [vmem:[%s1 + $0x8] sm:$0xff]
      %273 = vset.pattern.permute.xlu0 0
      %274 = vperm.xlu0 %273, %v270
      %v275 = vpop.permute.xlu0 %274
      %278 = vset.pattern.permute.xlu0 0
      %279 = vperm.xlu0 %278, %v271
      %v280 = vpop.permute.xlu0 %279
      %v282 = vmul.f32 %v268, %v275
      %v283 = vmul.f32 %v269, %v280
      %v284 = vld [vmem:[%s2] sm:$0xff]
      %v285 = vld [vmem:[%s2 + $0x8] sm:$0xff]
      %287 = vset.pattern.permute.xlu0 0
      %288 = vperm.xlu0 %287, %v284
      %v289 = vpop.permute.xlu0 %288
      %292 = vset.pattern.permute.xlu0 0
      %293 = vperm.xlu0 %292, %v285
      %v294 = vpop.permute.xlu0 %293
      %v296 = vadd.f32 %v282, %v289
      %v297 = vadd.f32 %v283, %v294
      %vm298 = vcmp.ge.f32.partialorder %v296, 0.0
      %vm299 = vcmp.ge.f32.partialorder %v297, 0.0
      %v300 = vmul.f32 %v296, 0.2
      %v301 = vmul.f32 %v297, 0.2
      %v302 = vsel %vm298, %v296, %v300
      %v303 = vsel %vm299, %v297, %v301
      %v304 = vlaneseq
      %v305 = vand.u32 %v304, 127
      %vm306 = vcmp.lt.s32.totalorder %v305, 0
      %v307 = vsub.s32 0, %v305
      %v308 = vsel %vm306, %v307, %v305
      %v309 = vshrl.u32 %v308, 3
      %v310 = vand.u32 %v308, 7
      %v311 = vsub.s32 0, %v310
      %v312 = vsel %vm306, %v311, %v310
      %vm313 = vcmp.ne.s32.totalorder %v312, 0
      %vm314 = vcmp.lt.s32.totalorder %v312, 0
      %vm315 = vmand %vm314, %vm313
      %v316 = vadd.s32 %v312, 8
      %v317 = vsel %vm315, %v316, %v312
      %v318 = vadd.s32 %v317, 4294967295
      %vm319 = vcmp.ge.s32.totalorder %v318, 0
      %vm320 = vcmp.lt.s32.totalorder %v318, 8
      %vm321 = vmand %vm319, %vm320
      %v322 = vadd.s32 %v317, 1
      %vm323 = vcmp.ge.s32.totalorder %v322, 0
      %vm324 = vcmp.lt.s32.totalorder %v322, 8
      %vm325 = vmand %vm323, %vm324
      %v326 = vpack.c.bf16 %v303, %v302
      %328 = vrot.lane.b32.xlu0 %v326, 9
      %v329 = vpop.permute.xlu0 %328
      %vm330 = vcmask 72704
      %v333 = vsel %vm330, 0, %v329
      %vm334 = vcmask 596992
      %v335 = vsel %vm334, %v333, 0
      %v337 = vsel %vm321, 1, 0
      %vm338 = vcmp.eq.s32.totalorder %v337, 1
      %vm339 = vmpackc.low %vm338, %vm338
      %v340 = vsel %vm339, 65537, 0
      %v341 = vlaneseq
      %v342 = vshrl.u32 %v341, 7
      %v343 = vsub.s32 0, %v342
      %v344 = vrot.slane %v340, %v343
      %vm345 = vcmp.ne.s16.totalorder %v344, 0
      %v346 = vsel %vm345, %v335, 0
      %v347 = vsel %vm325, 1, 0
      %vm348 = vcmp.eq.s32.totalorder %v347, 1
      %vm349 = vmpackc.low %vm348, %vm348
      %v350 = vsel %vm349, 65537, 0
      %v351 = vlaneseq
      %v352 = vshrl.u32 %v351, 7
      %v353 = vsub.s32 0, %v352
      %v354 = vrot.slane %v350, %v353
      %355 = vrot.lane.b32.xlu0 %v354, 2
      %v356 = vpop.permute.xlu0 %355
      %vm357 = vcmp.ne.s16.totalorder %v356, 0
      %v358 = vsel %vm357, %v335, 0
      %359 = vrot.lane.b32.xlu0 %v344, 8
      %v360 = vpop.permute.xlu0 %359
      %vm361 = vcmp.ne.s16.totalorder %v360, 0
      %v362 = vsel %vm361, %v335, 0
      %363 = vrot.lane.b32.xlu0 %v354, 10
      %v364 = vpop.permute.xlu0 %363
      %vm365 = vcmp.ne.s16.totalorder %v364, 0
      %v366 = vsel %vm365, %v335, 0
      %367 = vrot.lane.b32.xlu0 %v344, 16
      %v368 = vpop.permute.xlu0 %367
      %vm369 = vcmp.ne.s16.totalorder %v368, 0
      %v370 = vsel %vm369, %v335, 0
      %371 = vrot.lane.b32.xlu0 %v354, 18
      %v372 = vpop.permute.xlu0 %371
      %vm373 = vcmp.ne.s16.totalorder %v372, 0
      %v374 = vsel %vm373, %v335, 0
      %376 = vrot.lane.b32.xlu0 %v335, 127
      %v377 = vpop.permute.xlu0 %376
      %380 = vrot.lane.b32.xlu0 %v358, 126
      %v381 = vpop.permute.xlu0 %380
      %384 = vrot.lane.b32.xlu0 %v362, 120
      %v385 = vpop.permute.xlu0 %384
      %387 = vrot.lane.b32.xlu0 %v335, 119
      %v388 = vpop.permute.xlu0 %387
      %391 = vrot.lane.b32.xlu0 %v366, 118
      %v392 = vpop.permute.xlu0 %391
      %395 = vrot.lane.b32.xlu0 %v370, 112
      %v396 = vpop.permute.xlu0 %395
      %398 = vrot.lane.b32.xlu0 %v335, 111
      %v399 = vpop.permute.xlu0 %398
      %402 = vrot.lane.b32.xlu0 %v374, 110
      %v403 = vpop.permute.xlu0 %402
      %v405 = vld [vmem:[%s3] sm:$0xff]
      %v406 = vld [vmem:[%s3 + $0x8] sm:$0xff]
      %v407 = vld [vmem:[%s3 + $0x10] sm:$0xff]
      %v408 = vld [vmem:[%s3 + $0x18] sm:$0xff]
      %v409 = vld [vmem:[%s4] sm:$0xff]
      %v410 = vld [vmem:[%s4 + $0x8] sm:$0xff]
      %v411 = vld [vmem:[%s4 + $0x10] sm:$0xff]
      %v412 = vld [vmem:[%s4 + $0x18] sm:$0xff]
      %414 = vset.pattern.permute.xlu0 0
      %415 = vperm.xlu0 %414, %v409
      %v416 = vpop.permute.xlu0 %415
      %419 = vset.pattern.permute.xlu0 0
      %420 = vperm.xlu0 %419, %v410
      %v421 = vpop.permute.xlu0 %420
      %424 = vset.pattern.permute.xlu0 0
      %425 = vperm.xlu0 %424, %v411
      %v426 = vpop.permute.xlu0 %425
      %429 = vset.pattern.permute.xlu0 0
      %430 = vperm.xlu0 %429, %v412
      %v431 = vpop.permute.xlu0 %430
      %v437 = vunpack.c.l.b16 %v405
      %v438 = vunpack.c.h.b16 %v405
      %v439 = vunpack.c.l.b16 %v406
      %v440 = vunpack.c.h.b16 %v406
      %v441 = vunpack.c.l.b16 %v407
      %v442 = vunpack.c.h.b16 %v407
      %v443 = vunpack.c.l.b16 %v408
      %v444 = vunpack.c.h.b16 %v408
      %v445 = vpack.c.b16 %v439, %v437
      %v446 = vpack.c.b16 %v440, %v438
      %v447 = vpack.c.b16 %v443, %v441
      %v448 = vpack.c.b16 %v444, %v442
      %vm451 = vcmask 130048
      %v453 = vsel %vm451, %v446, 0
      %v456 = vsel %vm451, %v448, 0
      %458 = vmatprep.subr.bf16.mxu0 0
      %459 = vmatpush1.bf16.msra.mxu0 %v346
      %460 = vmatprep.subr.bf16.mxu0 0
      %461 = vmatpush1.bf16.msra.mxu0 %v377
      %462 = vmatprep.subr.bf16.mxu0 0
      %463 = vmatpush1.bf16.msra.mxu0 %v381
      %464 = vmatprep.subr.bf16.mxu0 0
      %465 = vmatpush1.bf16.msra.mxu0 %v385
      %466 = vmatprep.subr.bf16.mxu0 0
      %467 = vmatpush1.bf16.msra.mxu0 %v388
      %468 = vmatprep.subr.bf16.mxu0 0
      %469 = vmatpush1.bf16.msra.mxu0 %v392
      %470 = vmatprep.subr.bf16.mxu0 0
      %471 = vmatpush1.bf16.msra.mxu0 %v396
      %472 = vmatprep.subr.bf16.mxu0 0
      %473 = vmatpush1.bf16.msra.mxu0 %v399
      %474 = vmatprep.subr.bf16.mxu0 0
      %475 = vmatpush1.bf16.msra.mxu0 %v403
      %476 = vmatprep.subr.bf16.mxu0 0
      %477 = vmatpush1.bf16.msra.mxu0 0
      %478 = vmatprep.subr.bf16.mxu0 0
      %479 = vmatpush1.bf16.msra.mxu0 0
      %480 = vmatprep.subr.bf16.mxu0 0
      %481 = vmatpush1.bf16.msra.mxu0 0
      %482 = vmatprep.subr.bf16.mxu0 0
      %483 = vmatpush1.bf16.msra.mxu0 0
      %484 = vmatprep.subr.bf16.mxu0 0
      %485 = vmatpush1.bf16.msra.mxu0 0
      %486 = vmatprep.subr.bf16.mxu0 0
      %487 = vmatpush1.bf16.msra.mxu0 0
      %488 = vmatprep.subr.bf16.mxu0 0
      %489 = vmatpush1.bf16.msra.mxu0 0
      %490 = vmatprep.mubr.bf16.mxu0 %v453
      %491 = vmatmul.mubr.bf16.gmra.mrb[0].mxu0 %v445
      %v492 = vpop.f32.mrb[0].mxu0
      %v493 = vadd.f32 %v416, %v492
      %v494 = vpop.f32.mrb[0].mxu0
      %v495 = vpop.f32.mrb[0].mxu0
      %v496 = vadd.f32 %v421, %v495
      %v497 = vpop.f32.mrb[0].mxu0
      %498 = vmatprep.mubr.bf16.mxu0 %v456
      %499 = vmatmul.mubr.bf16.gmra.mrb[0].mxu0 %v447
      %v500 = vpop.f32.mrb[0].mxu0
      %v501 = vadd.f32 %v426, %v500
      %v502 = vpop.f32.mrb[0].mxu0
      %v503 = vpop.f32.mrb[0].mxu0
      %v504 = vadd.f32 %v431, %v503
      %v505 = vpop.f32.mrb[0].mxu0
      %506 = vdwg.mxu0
      %vm507 = vcmask 523264
      %508 = vst.msk [vmem:[%s259] sm:$0xff] %vm507, %v493
      %509 = vst.msk [vmem:[%s259 + $0x8] sm:$0xff] %vm507, %v496
      %510 = vst.msk [vmem:[%s259 + $0x10] sm:$0xff] %vm507, %v501
      %511 = vst.msk [vmem:[%s259 + $0x18] sm:$0xff] %vm507, %v504
      %v512 = vsel %vm507, %v493, 0.0
      %513 = vadd.xlane.f32.xlu0 %v512
      %v514 = vpop.xlane.xlu0 %513
      %v515 = vsel %vm507, %v496, 0.0
      %516 = vadd.xlane.f32.xlu0 %v515
      %v517 = vpop.xlane.xlu0 %516
      %v518 = vsel %vm507, %v501, 0.0
      %519 = vadd.xlane.f32.xlu0 %v518
      %v520 = vpop.xlane.xlu0 %519
      %v521 = vsel %vm507, %v504, 0.0
      %522 = vadd.xlane.f32.xlu0 %v521
      %v523 = vpop.xlane.xlu0 %522
      %v524 = vmul.f32 %v493, %v493
      %v525 = vmul.f32 %v496, %v496
      %v526 = vmul.f32 %v501, %v501
      %v527 = vmul.f32 %v504, %v504
      %v528 = vsel %vm507, %v524, 0.0
      %529 = vadd.xlane.f32.xlu0 %v528
      %v530 = vpop.xlane.xlu0 %529
      %v531 = vsel %vm507, %v525, 0.0
      %532 = vadd.xlane.f32.xlu0 %v531
      %v533 = vpop.xlane.xlu0 %532
      %v534 = vsel %vm507, %v526, 0.0
      %535 = vadd.xlane.f32.xlu0 %v534
      %v536 = vpop.xlane.xlu0 %535
      %v537 = vsel %vm507, %v527, 0.0
      %538 = vadd.xlane.f32.xlu0 %v537
      %v539 = vpop.xlane.xlu0 %538
      %vm540 = vcmask 7168
      %v541 = vsel %vm540, %v514, %v530
      %v542 = vsel %vm540, %v517, %v533
      %v543 = vsel %vm540, %v520, %v536
      %v544 = vsel %vm540, %v523, %v539
      %vm545 = vcmask 15360
      %546 = vst.msk [vmem:[%s264] sm:$0xff] %vm545, %v541
      %547 = vst.msk [vmem:[%s264 + $0x8] sm:$0xff] %vm545, %v542
      %548 = vst.msk [vmem:[%s264 + $0x10] sm:$0xff] %vm545, %v543
      %549 = vst.msk [vmem:[%s264 + $0x18] sm:$0xff] %vm545, %v544
      %p550 = scmp.lt.s32.totalorder %s18, 1
      %s551 = scalar_select %p550, %s18, 1
      %s552 = smul.addr %s551, 4
      %s553 = smul.addr %s552, 8
      %s554 = scalar_lea.vmem %s5, %s553
      %p555 = scmp.lt.s32.totalorder %s18, 1
      %s556 = scalar_select %p555, %s18, 1
      %s557 = smul.addr %s556, 4
      %s558 = smul.addr %s557, 8
      %s559 = scalar_lea.vmem %s6, %s558
      // Predicated region
      $region41: #{flow_generator_forward.20} parent=39 // pred_check
        %p560 = pneg %p146
      $region42: #{flow_generator_forward.20} parent=39 // pred_check_branch
        %562 = sbr.rel (%p560) target = $region44
      $region43: #{flow_generator_forward.20} parent=39 // pred_region
        _
      $region44: #{flow_generator_forward.20} parent=39 // pred_fallthru
        _
      // Predicated region
      $region45: #{flow_generator_forward.20} parent=39 // pred_check
        %p563 = pneg %p172
      $region46: #{flow_generator_forward.20} parent=39 // pred_check_branch
        %565 = sbr.rel (%p563) target = $region48
      $region47: #{flow_generator_forward.20} parent=39 // pred_region
        _
      $region48: #{flow_generator_forward.20} parent=39 // pred_fallthru
        _
    $region40: #{flow_generator_forward.20} parent=5 // pred_fallthru
      _
    %p566 = scmp.le.s32.totalorder 2, %s13
    // Predicated region
    $region49: #{flow_generator_forward.20} parent=5 // pred_check
      %p567 = pneg %p566
    $region50: #{flow_generator_forward.20} parent=5 // pred_check_branch
      %569 = sbr.rel (%p567) target = $region52
    $region51: #{flow_generator_forward.20} parent=5 // pred_region
      %s570 = ssub.s32 %s13, 2
      // Predicated region
      $region53: #{flow_generator_forward.20} parent=51 // pred_check
        %p571 = pneg %p152
      $region54: #{flow_generator_forward.20} parent=51 // pred_check_branch
        %573 = sbr.rel (%p571) target = $region56
      $region55: #{flow_generator_forward.20} parent=51 // pred_region
        %p574 = scmp.lt.s32.totalorder %s19, 1
        %s575 = scalar_select %p574, %s19, 1
        %s576 = smul.addr %s575, 4
        %s577 = smul.addr %s576, 8
        %s578 = scalar_lea.vmem %s5, %s577
      $region56: #{flow_generator_forward.20} parent=51 // pred_fallthru
        _
      // Predicated region
      $region57: #{flow_generator_forward.20} parent=51 // pred_check
        %p579 = pneg %p178
      $region58: #{flow_generator_forward.20} parent=51 // pred_check_branch
        %581 = sbr.rel (%p579) target = $region60
      $region59: #{flow_generator_forward.20} parent=51 // pred_region
        %p582 = scmp.lt.s32.totalorder %s19, 1
        %s583 = scalar_select %p582, %s19, 1
        %s584 = smul.addr %s583, 4
        %s585 = smul.addr %s584, 8
        %s586 = scalar_lea.vmem %s6, %s585
      $region60: #{flow_generator_forward.20} parent=51 // pred_fallthru
        _
    $region52: #{flow_generator_forward.20} parent=5 // pred_fallthru
      _
  $region6: #{flow_generator_forward.20} parent=0 // loop_footer
    %s17 = sadd.s32 1, %s13
  $region7: #{flow_generator_forward.20} parent=0 // loop_footer_branch
    %12 = sbr.rel target = $region3
  $region8: #{flow_generator_forward.20} parent=0 // loop_exit
    _

// kernel: flow_generator_forward.21
$region0: #{flow_generator_forward.21}
  #allocation0 [shape = 'u32[]', space=smem, size = 0x4, offset = 0x4, fixed_abs, tag = 'smem constant byte address 0x4 - core index']
  #allocation1 [shape = 'u32[144,128]{1,0:T(1,128)}', space=vmem, size = 0x12000, scoped, tag = 'internal scratch']
  %s0 = inlined_call_operand.vmem [shape: f32[2,8,256], index: 0, kind: input, shape index: {}]
  %s1 = inlined_call_operand.vmem [shape: f32[8,1], index: 1, kind: input, shape index: {}]
  %s2 = inlined_call_operand.vmem [shape: f32[8,1], index: 2, kind: input, shape index: {}]
  %s3 = inlined_call_operand.vmem [shape: bf16[8,72], index: 3, kind: input, shape index: {}]
  %s4 = inlined_call_operand.vmem [shape: f32[8,1], index: 4, kind: input, shape index: {}]
  %s5 = inlined_call_operand.vmem [shape: f32[2,8,256], index: 5, kind: output, shape index: {}]
  %s6 = sld [smem:[#allocation0]]
  $region53: #{flow_generator_forward.21} parent=0
    _
  %s8 = ssub.s32 1, %s6
  %s9 = scalar_select 0, %s8, %s6
  loop: start=0, step=1, limit=4
  $region2: #{flow_generator_forward.21} parent=0 // loop_pre_header
    _
  $region3: #{flow_generator_forward.21} parent=0 // loop_header
    %s11 = sphi 0, %s15
    %p12 = scmp.ge.s32.totalorder %s11, 4
    %s21 = sphi 0, %s23
    %s24 = sphi 0, %s21
    %s25 = sphi 0, %s24
    %s41 = sphi 0, %s25
    %s45 = sphi 0, %s45
    %s47 = sphi 0, %s45
    %s48 = sphi 0, %s47
    %s62 = sphi 0, %s48
    %s66 = sphi 0, %s66
    %s68 = sphi 0, %s66
    %s69 = sphi 0, %s68
    %s83 = sphi 0, %s69
    %s87 = sphi 0, %s87
    %s89 = sphi 0, %s87
    %s90 = sphi 0, %s89
    %s104 = sphi 0, %s90
    %s108 = sphi 0, %s108
    %s110 = sphi 0, %s108
    %s111 = sphi 0, %s110
    %s125 = sphi 0, %s111
    %s131 = sphi 0, %s133
    %s134 = sphi 0, %s131
    %s135 = sphi 0, %s134
    %s151 = sphi 0, %s135
  $region4: #{flow_generator_forward.21} parent=0 // loop_header_branch
    %14 = sbr.rel (%p12) target = $region8
  $region5: #{flow_generator_forward.21} parent=0 // loop_body
    %s16 = ssub.s32 %s11, 1
    %s17 = ssub.s32 %s11, 2
    %s18 = sadd.s32 %s11, 1
    %s19 = ssub.s32 %s11, %s18
    %p20 = scmp.eq.s32.totalorder %s19, 0
    %s22 = sadd.s32 %s21, 1
    %s23 = scalar_select %p20, %s21, %s22
    %p26 = pneg %p20
    %p27 = scmp.eq.s32.totalorder %s11, 1
    %p28 = por %p26, %p27
    %p29 = scmp.ne.s32.totalorder %s21, %s24
    %p30 = scmp.eq.s32.totalorder %s11, 0
    %p31 = por %p29, %p30
    %p32 = scmp.ne.s32.totalorder %s21, %s24
    %p33 = scmp.eq.s32.totalorder %s16, 1
    %p34 = por %p32, %p33
    %p35 = scmp.ne.s32.totalorder %s24, %s25
    %p36 = scmp.eq.s32.totalorder %s16, 0
    %p37 = por %p35, %p36
    %p38 = scmp.ne.s32.totalorder %s24, %s25
    %p39 = scmp.eq.s32.totalorder %s17, 1
    %p40 = por %p38, %p39
    %p42 = scmp.ne.s32.totalorder %s25, %s41
    %p43 = scmp.eq.s32.totalorder %s17, 0
    %p44 = por %p42, %p43
    %s46 = sadd.s32 %s45, 1
    %p49 = scmp.eq.s32.totalorder %s11, 1
    %p50 = scmp.ne.s32.totalorder %s45, %s47
    %p51 = scmp.eq.s32.totalorder %s11, 0
    %p52 = por %p50, %p51
    %p53 = scmp.ne.s32.totalorder %s45, %s47
    %p54 = scmp.eq.s32.totalorder %s16, 1
    %p55 = por %p53, %p54
    %p56 = scmp.ne.s32.totalorder %s47, %s48
    %p57 = scmp.eq.s32.totalorder %s16, 0
    %p58 = por %p56, %p57
    %p59 = scmp.ne.s32.totalorder %s47, %s48
    %p60 = scmp.eq.s32.totalorder %s17, 1
    %p61 = por %p59, %p60
    %p63 = scmp.ne.s32.totalorder %s48, %s62
    %p64 = scmp.eq.s32.totalorder %s17, 0
    %p65 = por %p63, %p64
    %s67 = sadd.s32 %s66, 1
    %p70 = scmp.eq.s32.totalorder %s11, 1
    %p71 = scmp.ne.s32.totalorder %s66, %s68
    %p72 = scmp.eq.s32.totalorder %s11, 0
    %p73 = por %p71, %p72
    %p74 = scmp.ne.s32.totalorder %s66, %s68
    %p75 = scmp.eq.s32.totalorder %s16, 1
    %p76 = por %p74, %p75
    %p77 = scmp.ne.s32.totalorder %s68, %s69
    %p78 = scmp.eq.s32.totalorder %s16, 0
    %p79 = por %p77, %p78
    %p80 = scmp.ne.s32.totalorder %s68, %s69
    %p81 = scmp.eq.s32.totalorder %s17, 1
    %p82 = por %p80, %p81
    %p84 = scmp.ne.s32.totalorder %s69, %s83
    %p85 = scmp.eq.s32.totalorder %s17, 0
    %p86 = por %p84, %p85
    %s88 = sadd.s32 %s87, 1
    %p91 = scmp.eq.s32.totalorder %s11, 1
    %p92 = scmp.ne.s32.totalorder %s87, %s89
    %p93 = scmp.eq.s32.totalorder %s11, 0
    %p94 = por %p92, %p93
    %p95 = scmp.ne.s32.totalorder %s87, %s89
    %p96 = scmp.eq.s32.totalorder %s16, 1
    %p97 = por %p95, %p96
    %p98 = scmp.ne.s32.totalorder %s89, %s90
    %p99 = scmp.eq.s32.totalorder %s16, 0
    %p100 = por %p98, %p99
    %p101 = scmp.ne.s32.totalorder %s89, %s90
    %p102 = scmp.eq.s32.totalorder %s17, 1
    %p103 = por %p101, %p102
    %p105 = scmp.ne.s32.totalorder %s90, %s104
    %p106 = scmp.eq.s32.totalorder %s17, 0
    %p107 = por %p105, %p106
    %s109 = sadd.s32 %s108, 1
    %p112 = scmp.eq.s32.totalorder %s11, 1
    %p113 = scmp.ne.s32.totalorder %s108, %s110
    %p114 = scmp.eq.s32.totalorder %s11, 0
    %p115 = por %p113, %p114
    %p116 = scmp.ne.s32.totalorder %s108, %s110
    %p117 = scmp.eq.s32.totalorder %s16, 1
    %p118 = por %p116, %p117
    %p119 = scmp.ne.s32.totalorder %s110, %s111
    %p120 = scmp.eq.s32.totalorder %s16, 0
    %p121 = por %p119, %p120
    %p122 = scmp.ne.s32.totalorder %s110, %s111
    %p123 = scmp.eq.s32.totalorder %s17, 1
    %p124 = por %p122, %p123
    %p126 = scmp.ne.s32.totalorder %s111, %s125
    %p127 = scmp.eq.s32.totalorder %s17, 0
    %p128 = por %p126, %p127
    %s129 = ssub.s32 %s11, %s18
    %p130 = scmp.eq.s32.totalorder %s129, 0
    %s132 = sadd.s32 %s131, 1
    %s133 = scalar_select %p130, %s131, %s132
    %p136 = pneg %p130
    %p137 = scmp.eq.s32.totalorder %s11, 1
    %p138 = por %p136, %p137
    %p139 = scmp.ne.s32.totalorder %s131, %s134
    %p140 = scmp.eq.s32.totalorder %s11, 0
    %p141 = por %p139, %p140
    %p142 = scmp.ne.s32.totalorder %s131, %s134
    %p143 = scmp.eq.s32.totalorder %s16, 1
    %p144 = por %p142, %p143
    %p145 = scmp.ne.s32.totalorder %s134, %s135
    %p146 = scmp.eq.s32.totalorder %s16, 0
    %p147 = por %p145, %p146
    %p148 = scmp.ne.s32.totalorder %s134, %s135
    %p149 = scmp.eq.s32.totalorder %s17, 1
    %p150 = por %p148, %p149
    %p152 = scmp.ne.s32.totalorder %s135, %s151
    %p153 = scmp.eq.s32.totalorder %s17, 0
    %p154 = por %p152, %p153
    %p155 = scmp.le.s32.totalorder 1, %s11
    %p156 = scmp.lt.s32.totalorder %s11, 3
    %p157 = pnand %p155, %p156
    %p158 = pneg %p157
    // Predicated region
    $region9: #{flow_generator_forward.21} parent=5 // pred_check
      _
    $region10: #{flow_generator_forward.21} parent=5 // pred_check_branch
      %160 = sbr.rel (%p157) target = $region12
    $region11: #{flow_generator_forward.21} parent=5 // pred_region
      %s161 = ssub.s32 %s11, 1
      // Predicated region
      $region13: #{flow_generator_forward.21} parent=11 // pred_check
        %p162 = pneg %p58
      $region14: #{flow_generator_forward.21} parent=11 // pred_check_branch
        %164 = sbr.rel (%p162) target = $region16
      $region15: #{flow_generator_forward.21} parent=11 // pred_region
        _
      $region16: #{flow_generator_forward.21} parent=11 // pred_fallthru
        _
      // Predicated region
      $region17: #{flow_generator_forward.21} parent=11 // pred_check
        %p165 = pneg %p79
      $region18: #{flow_generator_forward.21} parent=11 // pred_check_branch
        %167 = sbr.rel (%p165) target = $region20
      $region19: #{flow_generator_forward.21} parent=11 // pred_region
        _
      $region20: #{flow_generator_forward.21} parent=11 // pred_fallthru
        _
      // Predicated region
      $region21: #{flow_generator_forward.21} parent=11 // pred_check
        %p168 = pneg %p100
      $region22: #{flow_generator_forward.21} parent=11 // pred_check_branch
        %170 = sbr.rel (%p168) target = $region24
      $region23: #{flow_generator_forward.21} parent=11 // pred_region
        _
      $region24: #{flow_generator_forward.21} parent=11 // pred_fallthru
        _
      // Predicated region
      $region25: #{flow_generator_forward.21} parent=11 // pred_check
        %p171 = pneg %p121
      $region26: #{flow_generator_forward.21} parent=11 // pred_check_branch
        %173 = sbr.rel (%p171) target = $region28
      $region27: #{flow_generator_forward.21} parent=11 // pred_region
        _
      $region28: #{flow_generator_forward.21} parent=11 // pred_fallthru
        _
    $region12: #{flow_generator_forward.21} parent=5 // pred_fallthru
      _
    %p174 = scmp.lt.s32.totalorder %s11, 2
    // Predicated region
    $region29: #{flow_generator_forward.21} parent=5 // pred_check
      %p175 = pneg %p174
    $region30: #{flow_generator_forward.21} parent=5 // pred_check_branch
      %177 = sbr.rel (%p175) target = $region32
    $region31: #{flow_generator_forward.21} parent=5 // pred_region
      // Predicated region
      $region33: #{flow_generator_forward.21} parent=31 // pred_check
        %p178 = pneg %p31
      $region34: #{flow_generator_forward.21} parent=31 // pred_check_branch
        %180 = sbr.rel (%p178) target = $region36
      $region35: #{flow_generator_forward.21} parent=31 // pred_region
        %p181 = scmp.lt.s32.totalorder %s11, 1
        %s182 = scalar_select %p181, %s11, 1
        %s183 = smul.addr %s182, 2
        %s184 = smul.addr %s183, 8
        %s185 = scalar_lea.vmem %s0, %s184
      $region36: #{flow_generator_forward.21} parent=31 // pred_fallthru
        _
    $region32: #{flow_generator_forward.21} parent=5 // pred_fallthru
      _
    %p186 = scmp.le.s32.totalorder 1, %s11
    %p187 = scmp.lt.s32.totalorder %s11, 3
    %p188 = pnand %p186, %p187
    %p189 = pneg %p188
    // Predicated region
    $region37: #{flow_generator_forward.21} parent=5 // pred_check
      _
    $region38: #{flow_generator_forward.21} parent=5 // pred_check_branch
      %191 = sbr.rel (%p188) target = $region40
    $region39: #{flow_generator_forward.21} parent=5 // pred_region
      %s192 = ssub.s32 %s11, 1
      %p193 = scmp.lt.s32.totalorder %s16, 1
      %s194 = scalar_select %p193, %s16, 1
      %s195 = smul.addr %s194, 2
      %s196 = smul.addr %s195, 8
      %s197 = scalar_lea.vmem %s0, %s196
      %p198 = pneg %p37
      %p199 = pneg %p34
      %p200 = pneg %p58
      %p201 = pneg %p55
      %p202 = pneg %p79
      %p203 = pneg %p76
      %p204 = pneg %p100
      %p205 = pneg %p97
      %p206 = pneg %p121
      %p207 = pneg %p118
      %p208 = pneg %p147
      %p209 = pneg %p144
      %p210 = scmp.lt.s32.totalorder %s16, 1
      %s211 = scalar_select %p210, %s16, 1
      %s212 = smul.addr %s211, 2
      %s213 = smul.addr %s212, 8
      %s214 = scalar_lea.vmem %s5, %s213
      %p215 = scmp.lt.s32.totalorder %s16, 1
      %s216 = scalar_select %p215, %s16, 1
      %s217 = smul.addr %s216, 2
      %s218 = smul.addr %s217, 8
      %s219 = scalar_lea.vmem %s0, %s218
      %p220 = scmp.lt.s32.totalorder %s16, 1
      %s221 = scalar_select %p220, %s16, 1
      %s222 = smul.addr %s221, 2
      %s223 = smul.addr %s222, 8
      %s224 = scalar_lea.vmem %s5, %s223
      %v228 = vld [vmem:[%s219] sm:$0xff]
      %v229 = vld [vmem:[%s219 + $0x8] sm:$0xff]
      %v230 = vld [vmem:[%s1] sm:$0xff]
      %232 = vset.pattern.permute.xlu0 0
      %233 = vperm.xlu0 %232, %v230
      %v234 = vpop.permute.xlu0 %233
      %v236 = vmul.f32 %v228, %v234
      %v237 = vmul.f32 %v229, %v234
      %v238 = vld [vmem:[%s2] sm:$0xff]
      %240 = vset.pattern.permute.xlu0 0
      %241 = vperm.xlu0 %240, %v238
      %v242 = vpop.permute.xlu0 %241
      %v244 = vadd.f32 %v236, %v242
      %v245 = vadd.f32 %v237, %v242
      %vm246 = vcmp.ge.f32.partialorder %v244, 0.0
      %vm247 = vcmp.ge.f32.partialorder %v245, 0.0
      %v248 = vmul.f32 %v244, 0.2
      %v249 = vmul.f32 %v245, 0.2
      %v250 = vsel %vm246, %v244, %v248
      %v251 = vsel %vm247, %v245, %v249
      %v252 = vlaneseq
      %v253 = vand.u32 %v252, 127
      %v254 = vadd.s32 %v253, 128
      %vm255 = vcmp.lt.s32.totalorder %v253, 0
      %v256 = vsub.s32 0, %v253
      %v257 = vsel %vm255, %v256, %v253
      %v258 = vshrl.u32 %v257, 4
      %v259 = vand.u32 %v257, 15
      %v260 = vsub.s32 0, %v259
      %v261 = vsel %vm255, %v260, %v259
      %vm262 = vcmp.lt.s32.totalorder %v254, 0
      %v263 = vsub.s32 0, %v254
      %v264 = vsel %vm262, %v263, %v254
      %v265 = vshrl.u32 %v264, 4
      %v266 = vand.u32 %v264, 15
      %v267 = vsub.s32 0, %v266
      %v268 = vsel %vm262, %v267, %v266
      %vm269 = vcmp.ne.s32.totalorder %v261, 0
      %vm270 = vcmp.ne.s32.totalorder %v268, 0
      %vm271 = vcmp.lt.s32.totalorder %v261, 0
      %vm272 = vcmp.lt.s32.totalorder %v268, 0
      %vm273 = vmand %vm271, %vm269
      %vm274 = vmand %vm272, %vm270
      %v275 = vadd.s32 %v261, 16
      %v276 = vadd.s32 %v268, 16
      %v277 = vsel %vm273, %v275, %v261
      %v278 = vsel %vm274, %v276, %v268
      %v279 = vadd.s32 %v277, 4294967295
      %v280 = vadd.s32 %v278, 4294967295
      %vm281 = vcmp.ge.s32.totalorder %v279, 0
      %vm282 = vcmp.ge.s32.totalorder %v280, 0
      %vm283 = vcmp.lt.s32.totalorder %v279, 16
      %vm284 = vcmp.lt.s32.totalorder %v280, 16
      %vm285 = vmand %vm281, %vm283
      %vm286 = vmand %vm282, %vm284
      %v287 = vadd.s32 %v277, 1
      %v288 = vadd.s32 %v278, 1
      %vm289 = vcmp.ge.s32.totalorder %v287, 0
      %vm290 = vcmp.ge.s32.totalorder %v288, 0
      %vm291 = vcmp.lt.s32.totalorder %v287, 16
      %vm292 = vcmp.lt.s32.totalorder %v288, 16
      %vm293 = vmand %vm289, %vm291
      %vm294 = vmand %vm290, %vm292
      %v295 = vpack.c.bf16 %v250, %v250
      %v296 = vpack.c.bf16 %v251, %v251
      %299 = vrot.lane.b32.xlu0 %v295, 17
      %v300 = vpop.permute.xlu0 %299
      %301 = vrot.lane.b32.xlu0 %v296, 17
      %v302 = vpop.permute.xlu0 %301
      %vm303 = vcmask 138240
      %v304 = vsel %vm303, %v300, %v302
      %vm306 = vcmask 138240
      %v309 = vsel %vm306, 0, %v300
      %v312 = vsel %vm306, %v302, 0
      %v314 = vsel %vm285, 1, 0
      %v315 = vsel %vm286, 1, 0
      %vm316 = vcmp.eq.s32.totalorder %v314, 1
      %vm317 = vcmp.eq.s32.totalorder %v315, 1
      %vm318 = vmpackc.low %vm317, %vm316
      %v319 = vsel %vm318, 65537, 0
      %v320 = vlaneseq
      %v321 = vshrl.u32 %v320, 7
      %v322 = vsub.s32 0, %v321
      %v323 = vrot.slane %v319, %v322
      %v324 = vlaneseq
      %v325 = vshrl.u32 %v324, 7
      %v326 = vsub.s32 4, %v325
      %v327 = vrot.slane %v319, %v326
      %vm328 = vcmp.ne.s16.totalorder %v323, 0
      %vm329 = vcmp.ne.s16.totalorder %v327, 0
      %v330 = vsel %vm328, %v309, 0
      %v331 = vsel %vm329, %v304, 0
      %v332 = vsel %vm293, 1, 0
      %v333 = vsel %vm294, 1, 0
      %vm334 = vcmp.eq.s32.totalorder %v332, 1
      %vm335 = vcmp.eq.s32.totalorder %v333, 1
      %vm336 = vmpackc.low %vm335, %vm334
      %v337 = vsel %vm336, 65537, 0
      %v338 = vlaneseq
      %v339 = vshrl.u32 %v338, 7
      %v340 = vsub.s32 0, %v339
      %v341 = vrot.slane %v337, %v340
      %v342 = vlaneseq
      %v343 = vshrl.u32 %v342, 7
      %v344 = vsub.s32 4, %v343
      %v345 = vrot.slane %v337, %v344
      %346 = vrot.lane.b32.xlu0 %v341, 2
      %v347 = vpop.permute.xlu0 %346
      %348 = vrot.lane.b32.xlu0 %v345, 2
      %v349 = vpop.permute.xlu0 %348
      %vm350 = vcmask 15360
      %v351 = vsel %vm350, %v347, %v349
      %vm352 = vcmp.ne.s16.totalorder %v347, 0
      %vm353 = vcmp.ne.s16.totalorder %v351, 0
      %vm354 = vcmp.ne.s16.totalorder %v349, 0
      %v355 = vsel %vm352, %v309, 0
      %v356 = vsel %vm353, %v304, 0
      %v357 = vsel %vm354, %v312, 0
      %358 = vrot.lane.b32.xlu0 %v323, 16
      %v359 = vpop.permute.xlu0 %358
      %360 = vrot.lane.b32.xlu0 %v327, 16
      %v361 = vpop.permute.xlu0 %360
      %vm362 = vcmask 130048
      %v363 = vsel %vm362, %v359, %v361
      %vm364 = vcmp.ne.s16.totalorder %v359, 0
      %vm365 = vcmp.ne.s16.totalorder %v363, 0
      %vm366 = vcmp.ne.s16.totalorder %v361, 0
      %v367 = vsel %vm364, %v309, 0
      %v368 = vsel %vm365, %v304, 0
      %v369 = vsel %vm366, %v312, 0
      %370 = vrot.lane.b32.xlu0 %v341, 18
      %v371 = vpop.permute.xlu0 %370
      %372 = vrot.lane.b32.xlu0 %v345, 18
      %v373 = vpop.permute.xlu0 %372
      %vm374 = vcmask 146432
      %v375 = vsel %vm374, %v371, %v373
      %vm376 = vcmp.ne.s16.totalorder %v371, 0
      %vm377 = vcmp.ne.s16.totalorder %v375, 0
      %vm378 = vcmp.ne.s16.totalorder %v373, 0
      %v379 = vsel %vm376, %v309, 0
      %v380 = vsel %vm377, %v304, 0
      %v381 = vsel %vm378, %v312, 0
      %382 = vrot.lane.b32.xlu0 %v323, 32
      %v383 = vpop.permute.xlu0 %382
      %384 = vrot.lane.b32.xlu0 %v327, 32
      %v385 = vpop.permute.xlu0 %384
      %vm386 = vcmask 261120
      %v387 = vsel %vm386, %v383, %v385
      %vm388 = vcmp.ne.s16.totalorder %v383, 0
      %vm389 = vcmp.ne.s16.totalorder %v387, 0
      %vm390 = vcmp.ne.s16.totalorder %v385, 0
      %v391 = vsel %vm388, %v309, 0
      %v392 = vsel %vm389, %v304, 0
      %v393 = vsel %vm390, %v312, 0
      %394 = vrot.lane.b32.xlu0 %v341, 34
      %v395 = vpop.permute.xlu0 %394
      %396 = vrot.lane.b32.xlu0 %v345, 34
      %v397 = vpop.permute.xlu0 %396
      %vm398 = vcmask 277504
      %v399 = vsel %vm398, %v395, %v397
      %vm400 = vcmp.ne.s16.totalorder %v395, 0
      %vm401 = vcmp.ne.s16.totalorder %v399, 0
      %vm402 = vcmp.ne.s16.totalorder %v397, 0
      %v403 = vsel %vm400, %v309, 0
      %v404 = vsel %vm401, %v304, 0
      %v405 = vsel %vm402, %v312, 0
      %v408 = vrot.slane %v309, 4
      %v409 = vrot.slane %v304, 4
      %v410 = vrot.slane %v312, 4
      %411 = vrot.lane.b32.xlu0 %v408, 127
      %v412 = vpop.permute.xlu0 %411
      %413 = vrot.lane.b32.xlu0 %v409, 127
      %v414 = vpop.permute.xlu0 %413
      %415 = vrot.lane.b32.xlu0 %v410, 127
      %v416 = vpop.permute.xlu0 %415
      %vm417 = vcmask 1039360
      %v418 = vsel %vm417, %v412, %v414
      %v419 = vsel %vm417, %v414, %v416
      %423 = vrot.lane.b32.xlu0 %v355, 126
      %v424 = vpop.permute.xlu0 %423
      %425 = vrot.lane.b32.xlu0 %v356, 126
      %v426 = vpop.permute.xlu0 %425
      %427 = vrot.lane.b32.xlu0 %v357, 126
      %v428 = vpop.permute.xlu0 %427
      %vm429 = vcmask 1031168
      %v430 = vsel %vm429, %v424, %v426
      %v431 = vsel %vm429, %v426, %v428
      %v435 = vrot.slane %v367, 4
      %v436 = vrot.slane %v368, 4
      %v437 = vrot.slane %v369, 4
      %438 = vrot.lane.b32.xlu0 %v435, 112
      %v439 = vpop.permute.xlu0 %438
      %440 = vrot.lane.b32.xlu0 %v436, 112
      %v441 = vpop.permute.xlu0 %440
      %442 = vrot.lane.b32.xlu0 %v437, 112
      %v443 = vpop.permute.xlu0 %442
      %vm444 = vcmask 916480
      %v445 = vsel %vm444, %v439, %v441
      %v446 = vsel %vm444, %v441, %v443
      %447 = vrot.lane.b32.xlu0 %v309, 111
      %v448 = vpop.permute.xlu0 %447
      %449 = vrot.lane.b32.xlu0 %v304, 111
      %v450 = vpop.permute.xlu0 %449
      %451 = vrot.lane.b32.xlu0 %v312, 111
      %v452 = vpop.permute.xlu0 %451
      %vm453 = vcmask 908288
      %v454 = vsel %vm453, %v448, %v450
      %v455 = vsel %vm453, %v450, %v452
      %v459 = vrot.slane %v379, 4
      %v460 = vrot.slane %v380, 4
      %v461 = vrot.slane %v381, 4
      %462 = vrot.lane.b32.xlu0 %v459, 110
      %v463 = vpop.permute.xlu0 %462
      %464 = vrot.lane.b32.xlu0 %v460, 110
      %v465 = vpop.permute.xlu0 %464
      %466 = vrot.lane.b32.xlu0 %v461, 110
      %v467 = vpop.permute.xlu0 %466
      %vm468 = vcmask 900096
      %v469 = vsel %vm468, %v463, %v465
      %v470 = vsel %vm468, %v465, %v467
      %474 = vrot.lane.b32.xlu0 %v391, 96
      %v475 = vpop.permute.xlu0 %474
      %476 = vrot.lane.b32.xlu0 %v392, 96
      %v477 = vpop.permute.xlu0 %476
      %478 = vrot.lane.b32.xlu0 %v393, 96
      %v479 = vpop.permute.xlu0 %478
      %vm480 = vcmask 785408
      %v481 = vsel %vm480, %v475, %v477
      %v482 = vsel %vm480, %v477, %v479
      %483 = vrot.lane.b32.xlu0 %v408, 95
      %v484 = vpop.permute.xlu0 %483
      %485 = vrot.lane.b32.xlu0 %v409, 95
      %v486 = vpop.permute.xlu0 %485
      %487 = vrot.lane.b32.xlu0 %v410, 95
      %v488 = vpop.permute.xlu0 %487
      %vm489 = vcmask 777216
      %v490 = vsel %vm489, %v484, %v486
      %v491 = vsel %vm489, %v486, %v488
      %495 = vrot.lane.b32.xlu0 %v403, 94
      %v496 = vpop.permute.xlu0 %495
      %497 = vrot.lane.b32.xlu0 %v404, 94
      %v498 = vpop.permute.xlu0 %497
      %499 = vrot.lane.b32.xlu0 %v405, 94
      %v500 = vpop.permute.xlu0 %499
      %vm501 = vcmask 769024
      %v502 = vsel %vm501, %v496, %v498
      %v503 = vsel %vm501, %v498, %v500
      %vm504 = vcmask 1043456
      %v507 = vsel %vm504, %v330, %v418
      %v511 = vsel %vm504, %v331, %v419
      %v515 = vsel %vm504, %v430, %v445
      %v519 = vsel %vm504, %v431, %v446
      %v523 = vsel %vm504, %v454, %v469
      %v527 = vsel %vm504, %v455, %v470
      %v531 = vsel %vm504, %v481, %v490
      %v535 = vsel %vm504, %v482, %v491
      %v537 = vld [vmem:[%s3] sm:$0xf]
      %v538 = vld [vmem:[%s4] sm:$0xff]
      %540 = vset.pattern.permute.xlu0 0
      %541 = vperm.xlu0 %540, %v538
      %v542 = vpop.permute.xlu0 %541
      %vm544 = vcmask 588800
      %v546 = vsel %vm544, %v537, 0
      %v549 = vsel %vm504, %v502, 0
      %v552 = vsel %vm504, %v503, 0
      %554 = vmatprep.subr.bf16.mxu0 %v511
      %555 = vmatpush1.bf16.msra.mxu0 %v507
      %556 = vmatprep.subr.bf16.mxu0 %v519
      %557 = vmatpush1.bf16.msra.mxu0 %v515
      %558 = vmatprep.subr.bf16.mxu0 %v527
      %559 = vmatpush1.bf16.msra.mxu0 %v523
      %560 = vmatprep.subr.bf16.mxu0 %v535
      %561 = vmatpush1.bf16.msra.mxu0 %v531
      %562 = vmatprep.subr.bf16.mxu0 %v552
      %563 = vmatpush1.bf16.msra.mxu0 %v549
      %564 = vmatprep.subr.bf16.mxu0 0
      %565 = vmatpush1.bf16.msra.mxu0 0
      %566 = vmatprep.subr.bf16.mxu0 0
      %567 = vmatpush1.bf16.msra.mxu0 0
      %568 = vmatprep.subr.bf16.mxu0 0
      %569 = vmatpush1.bf16.msra.mxu0 0
      %570 = vmatprep.subr.bf16.mxu0 0
      %571 = vmatpush1.bf16.msra.mxu0 0
      %572 = vmatprep.subr.bf16.mxu0 0
      %573 = vmatpush1.bf16.msra.mxu0 0
      %574 = vmatprep.subr.bf16.mxu0 0
      %575 = vmatpush1.bf16.msra.mxu0 0
      %576 = vmatprep.subr.bf16.mxu0 0
      %577 = vmatpush1.bf16.msra.mxu0 0
      %578 = vmatprep.subr.bf16.mxu0 0
      %579 = vmatpush1.bf16.msra.mxu0 0
      %580 = vmatprep.subr.bf16.mxu0 0
      %581 = vmatpush1.bf16.msra.mxu0 0
      %582 = vmatprep.subr.bf16.mxu0 0
      %583 = vmatpush1.bf16.msra.mxu0 0
      %584 = vmatprep.subr.bf16.mxu0 0
      %585 = vmatpush1.bf16.msra.mxu0 0
      %586 = vmatprep.mubr.bf16.mxu0 0
      %587 = vmatmul.mubr.bf16.gmra.mrb[0].mxu0 %v546
      %v588 = vpop.f32.mrb[0].mxu0
      %v589 = vadd.f32 %v542, %v588
      %v590 = vpop.f32.mrb[0].mxu0
      %v591 = vadd.f32 %v542, %v590
      %v592 = vpop.f32.mrb[0].mxu0
      %v593 = vpop.f32.mrb[0].mxu0
      %594 = vdwg.mxu0
      %v595 = vlaneseq
      %v596 = vshrl.u32 %v595, 7
      %vm597 = vcmp.lt.s32.totalorder %v596, 2
      %v598 = vmul.f32 %v589, 20.0
      %v599 = vmul.f32 %v591, 20.0
      %vm600 = vcmp.eq.s32.totalorder %v596, 2
      %v601 = vxor.u32 %v589, 2147483648
      %v602 = vxor.u32 %v591, 2147483648
      %v603 = vmul.f32 %v601, 1.442695
      %v604 = vpow.pop %v603
      %v605 = vmul.f32 %v602, 1.442695
      %v606 = vpow.pop %v605
      %v607 = vadd.f32 %v604, 1.0
      %v608 = vadd.f32 %v606, 1.0
      %v609 = vrcp.pop %v607
      %v610 = vmul.f32 1.0, %v609
      %v611 = vrcp.pop %v608
      %v612 = vmul.f32 1.0, %v611
      %v613 = vsel %vm600, %v610, %v589
      %v614 = vsel %vm600, %v612, %v591
      %v615 = vsel %vm597, %v598, %v613
      %v616 = vsel %vm597, %v599, %v614
      %617 = vst [vmem:[%s224] sm:$0xff] %v615
      %618 = vst [vmem:[%s224 + $0x8] sm:$0xff] %v616
      %p619 = scmp.lt.s32.totalorder %s16, 1
      %s620 = scalar_select %p619, %s16, 1
      %s621 = smul.addr %s620, 2
      %s622 = smul.addr %s621, 8
      %s623 = scalar_lea.vmem %s5, %s622
      // Predicated region
      $region41: #{flow_generator_forward.21} parent=39 // pred_check
        %p624 = pneg %p144
      $region42: #{flow_generator_forward.21} parent=39 // pred_check_branch
        %626 = sbr.rel (%p624) target = $region44
      $region43: #{flow_generator_forward.21} parent=39 // pred_region
        _
      $region44: #{flow_generator_forward.21} parent=39 // pred_fallthru
        _
    $region40: #{flow_generator_forward.21} parent=5 // pred_fallthru
      _
    %p627 = scmp.le.s32.totalorder 2, %s11
    // Predicated region
    $region45: #{flow_generator_forward.21} parent=5 // pred_check
      %p628 = pneg %p627
    $region46: #{flow_generator_forward.21} parent=5 // pred_check_branch
      %630 = sbr.rel (%p628) target = $region48
    $region47: #{flow_generator_forward.21} parent=5 // pred_region
      %s631 = ssub.s32 %s11, 2
      // Predicated region
      $region49: #{flow_generator_forward.21} parent=47 // pred_check
        %p632 = pneg %p150
      $region50: #{flow_generator_forward.21} parent=47 // pred_check_branch
        %634 = sbr.rel (%p632) target = $region52
      $region51: #{flow_generator_forward.21} parent=47 // pred_region
        %p635 = scmp.lt.s32.totalorder %s17, 1
        %s636 = scalar_select %p635, %s17, 1
        %s637 = smul.addr %s636, 2
        %s638 = smul.addr %s637, 8
        %s639 = scalar_lea.vmem %s5, %s638
      $region52: #{flow_generator_forward.21} parent=47 // pred_fallthru
        _
    $region48: #{flow_generator_forward.21} parent=5 // pred_fallthru
      _
  $region6: #{flow_generator_forward.21} parent=0 // loop_footer
    %s15 = sadd.s32 1, %s11
  $region7: #{flow_generator_forward.21} parent=0 // loop_footer_branch
    %10 = sbr.rel target = $region3
  $region8: #{flow_generator_forward.21} parent=0 // loop_exit
    _

</llo_original>
